<compile_context>
chip_gen: v7x
topology: tpu7x:2x2x1
jax: 0.10.0
libtpu: 0.0.40
codegen_flags: <defaults>
</compile_context>

<pallas_src>
import math
import functools

import jax
import jax.numpy as jnp
from jax.experimental import pallas as pl
from jax.experimental.pallas import tpu as pltpu

EMBED_SIZE = 384
HEADS = 32
HEAD_DIM = EMBED_SIZE // HEADS  # 12

# Default tile caps, sized so all live VMEM (double-buffered inputs, weights,
# per-head intermediates, the (H,TQ,TK) f32 score tile and accumulators) stays
# well under v7x's 64 MiB physical VMEM (and v5e/v6e scoped budgets).
TQ_MAX = 128
TK_MAX = 128


# ------------------------------ fused kernel -------------------------------

def _mha_kernel(q_ref, k_ref, v_ref,
                wq_ref, wk_ref, wv_ref,
                bq_ref, bk_ref, bv_ref,
                wo_ref, bo_ref,
                o_ref,
                q_dense, qh, k_dense, v_dense, kh, vh,
                m_scr, l_scr, acc_scr, o_stage,
                *, kv_len, tk):
    """Grid = (batch, q-tile, k-tile).  One invocation = one (q-tile, k-tile)."""
    H, D = HEADS, HEAD_DIM
    ki = pl.program_id(2)
    n_k = pl.num_programs(2)

    # ---- once per q tile: dense Q projection (full-width MXU), head split,
    # ---- flash-softmax state init.
    @pl.when(ki == 0)
    def _init():
        xq = q_ref[0].astype(jnp.bfloat16)                                # (TQ, E)
        q_proj = jnp.dot(xq, wq_ref[...],
                         preferred_element_type=jnp.float32) + bq_ref[...]
        q_dense[...] = q_proj.astype(jnp.bfloat16)                        # (TQ, E)
        for h in range(H):                                                # head split
            qh[h] = q_dense[:, h * D:(h + 1) * D]                         # (TQ, D)
        m_scr[...] = jnp.full_like(m_scr, -jnp.inf)
        l_scr[...] = jnp.zeros_like(l_scr)
        acc_scr[...] = jnp.zeros_like(acc_scr)

    # ---- every k tile: dense K/V projections, head split, online softmax.
    xk = k_ref[0].astype(jnp.bfloat16)                                    # (TK, E)
    xv = v_ref[0].astype(jnp.bfloat16)
    k_dense[...] = (jnp.dot(xk, wk_ref[...], preferred_element_type=jnp.float32)
                    + bk_ref[...]).astype(jnp.bfloat16)
    v_dense[...] = (jnp.dot(xv, wv_ref[...], preferred_element_type=jnp.float32)
                    + bv_ref[...]).astype(jnp.bfloat16)
    for h in range(H):
        kh[h] = k_dense[:, h * D:(h + 1) * D]                             # (TK, D)
        vh[h] = v_dense[:, h * D:(h + 1) * D]

    # Scores (H, TQ, TK); 1/sqrt(D) is already folded into wq/bq.
    s = jnp.einsum('hqd,hkd->hqk', qh[...], kh[...],
                   preferred_element_type=jnp.float32)

    if kv_len % tk != 0:
        # Only possible on the (single) partial key tile created by padding.
        key_pos = ki * tk + jax.lax.broadcasted_iota(jnp.int32, s.shape, 2)
        s = jnp.where(key_pos < kv_len, s, -1e30)

    # Online softmax update (all f32).
    m_prev = m_scr[...]                                                   # (H, TQ, 1)
    m_new = jnp.maximum(m_prev, jnp.max(s, axis=-1, keepdims=True))
    alpha = jnp.exp(m_prev - m_new)
    p = jnp.exp(s - m_new)                                                # (H, TQ, TK)
    l_scr[...] = alpha * l_scr[...] + jnp.sum(p, axis=-1, keepdims=True)
    acc_scr[...] = alpha * acc_scr[...] + jnp.einsum(
        'hqk,hkd->hqd', p.astype(jnp.bfloat16), vh[...],
        preferred_element_type=jnp.float32)
    m_scr[...] = m_new

    # ---- last k tile: exact normalization, concat heads (lane-dense),
    # ---- single dense fc_out matmul, lane-dense store.
    @pl.when(ki == n_k - 1)
    def _finalize():
        for h in range(H):
            ctx_h = acc_scr[h] / l_scr[h]                                 # (TQ, D)
            o_stage[:, h * D:(h + 1) * D] = ctx_h.astype(jnp.bfloat16)
        out = jnp.dot(o_stage[...], wo_ref[...],
                      preferred_element_type=jnp.float32) + bo_ref[...]
        o_ref[0] = out


# ------------------------------ module wrapper ------------------------------

def init_params(key):
    """torch.nn.Linear-style init, weights stored as (E_in, E_out)."""
    bound = 1.0 / math.sqrt(EMBED_SIZE)
    params = {}
    names = ["values", "keys", "queries", "fc_out"]
    ks = jax.random.split(key, 2 * len(names))
    for i, name in enumerate(names):
        wk, bk = ks[2 * i], ks[2 * i + 1]
        params[f"w_{name}"] = jax.random.uniform(
            wk, (EMBED_SIZE, EMBED_SIZE), jnp.float32, -bound, bound)
        params[f"b_{name}"] = jax.random.uniform(
            bk, (EMBED_SIZE,), jnp.float32, -bound, bound)
    return params


def prepare_params(params):
    """One-time (off hot path): dense bf16 weight copies, f32 biases,
    1/sqrt(head_dim) folded into the query weight/bias."""
    scale = 1.0 / math.sqrt(HEAD_DIM)
    return {
        "wq": (params["w_queries"] * scale).astype(jnp.bfloat16),
        "wk": params["w_keys"].astype(jnp.bfloat16),
        "wv": params["w_values"].astype(jnp.bfloat16),
        "bq": (params["b_queries"] * scale).reshape(1, EMBED_SIZE).astype(jnp.float32),
        "bk": params["b_keys"].reshape(1, EMBED_SIZE).astype(jnp.float32),
        "bv": params["b_values"].reshape(1, EMBED_SIZE).astype(jnp.float32),
        "wo": params["w_fc_out"].astype(jnp.bfloat16),
        "bo": params["b_fc_out"].reshape(1, EMBED_SIZE).astype(jnp.float32),
    }


def _pick_tile(length, max_tile):
    """Returns (tile, padded_length)."""
    if length <= max_tile:
        return length, length            # full-dim block (divisibility exempt)
    padded = ((length + max_tile - 1) // max_tile) * max_tile
    return max_tile, padded


def multi_head_attention(prepared, values, keys, queries, mask=None,
                         tq_max=TQ_MAX, tk_max=TK_MAX):
    """Forward pass matching MultiHeadAttention.forward (mask=None path)."""
    # TODO(synk): user-supplied attention mask not implemented.
    assert mask is None, "mask path not implemented"
    N, q_len, E = queries.shape
    kv_len = keys.shape[1]
    assert E == EMBED_SIZE and keys.shape[2] == E and values.shape[2] == E
    assert values.shape[1] == kv_len

    TQ, q_pad = _pick_tile(q_len, tq_max)
    TK, kv_pad = _pick_tile(kv_len, tk_max)

    if q_pad != q_len:       # padded query rows produce garbage rows; sliced off
        queries = jnp.pad(queries, ((0, 0), (0, q_pad - q_len), (0, 0)))
    if kv_pad != kv_len:     # padded key positions are masked inside the kernel
        keys = jnp.pad(keys, ((0, 0), (0, kv_pad - kv_len), (0, 0)))
        values = jnp.pad(values, ((0, 0), (0, kv_pad - kv_len), (0, 0)))

    n_q = q_pad // TQ
    n_k = kv_pad // TK
    H, D = HEADS, HEAD_DIM

    kernel = functools.partial(_mha_kernel, kv_len=kv_len, tk=TK)
    w_spec = pl.BlockSpec((E, E), lambda n, qi, ki: (0, 0))
    b_spec = pl.BlockSpec((1, E), lambda n, qi, ki: (0, 0))

    out = pl.pallas_call(
        kernel,
        out_shape=jax.ShapeDtypeStruct((N, q_pad, E), jnp.float32),
        grid=(N, n_q, n_k),
        in_specs=[
            pl.BlockSpec((1, TQ, E), lambda n, qi, ki: (n, qi, 0)),   # queries
            pl.BlockSpec((1, TK, E), lambda n, qi, ki: (n, ki, 0)),   # keys
            pl.BlockSpec((1, TK, E), lambda n, qi, ki: (n, ki, 0)),   # values
            w_spec, w_spec, w_spec,                                   # wq, wk, wv
            b_spec, b_spec, b_spec,                                   # bq, bk, bv
            w_spec, b_spec,                                           # wo, bo
        ],
        out_specs=pl.BlockSpec((1, TQ, E), lambda n, qi, ki: (n, qi, 0)),
        scratch_shapes=[
            pltpu.VMEM((TQ, E), jnp.bfloat16),       # q_dense
            pltpu.VMEM((H, TQ, D), jnp.bfloat16),    # qh
            pltpu.VMEM((TK, E), jnp.bfloat16),       # k_dense
            pltpu.VMEM((TK, E), jnp.bfloat16),       # v_dense
            pltpu.VMEM((H, TK, D), jnp.bfloat16),    # kh
            pltpu.VMEM((H, TK, D), jnp.bfloat16),    # vh
            pltpu.VMEM((H, TQ, 1), jnp.float32),     # m (running max)
            pltpu.VMEM((H, TQ, 1), jnp.float32),     # l (running denom)
            pltpu.VMEM((H, TQ, D), jnp.float32),     # acc (running context)
            pltpu.VMEM((TQ, E), jnp.bfloat16),       # o_stage (concat heads)
        ],
        compiler_params=pltpu.CompilerParams(
            dimension_semantics=("parallel", "parallel", "arbitrary"),
            vmem_limit_bytes=48 * 1024 * 1024),
    )(queries, keys, values,
      prepared["wq"], prepared["wk"], prepared["wv"],
      prepared["bq"], prepared["bk"], prepared["bv"],
      prepared["wo"], prepared["bo"])

    if q_pad != q_len:
        out = out[:, :q_len, :]
    return out


def multi_head_attention_ref(params, values, keys, queries):
    """Pure-JAX f32 reference for correctness checking."""
    N, q_len, E = queries.shape
    v_p = (values @ params["w_values"] + params["b_values"]).reshape(N, -1, HEADS, HEAD_DIM)
    k_p = (keys @ params["w_keys"] + params["b_keys"]).reshape(N, -1, HEADS, HEAD_DIM)
    q_p = (queries @ params["w_queries"] + params["b_queries"]).reshape(N, q_len, HEADS, HEAD_DIM)
    energy = jnp.einsum("nqhd,nkhd->nhqk", q_p, k_p)
    attn = jax.nn.softmax(energy / math.sqrt(HEAD_DIM), axis=-1)
    out = jnp.einsum("nhql,nlhd->nqhd", attn, v_p).reshape(N, q_len, E)
    return out @ params["w_fc_out"] + params["b_fc_out"]


if __name__ == "__main__":
    key = jax.random.PRNGKey(0)
    pkey, vkey, kkey, qkey = jax.random.split(key, 4)

    params = init_params(pkey)
    prepared = prepare_params(params)

    # --- test 1: small shapes, single tile per axis --------------------------
    N, SEQ = 2, 8
    values = jax.random.normal(vkey, (N, SEQ, EMBED_SIZE), jnp.float32)
    keys = jax.random.normal(kkey, (N, SEQ, EMBED_SIZE), jnp.float32)
    queries = jax.random.normal(qkey, (N, SEQ, EMBED_SIZE), jnp.float32)

    out = jax.block_until_ready(multi_head_attention(prepared, values, keys, queries))
    ref = multi_head_attention_ref(params, values, keys, queries)
    assert out.shape == (N, SEQ, EMBED_SIZE)
    err1 = float(jnp.max(jnp.abs(out - ref)))
    assert jnp.allclose(out, ref, atol=3e-2, rtol=3e-2), f"test1 max abs err {err1}"

    # --- test 2: exercises q/k tiling, q padding and kv-length masking -------
    QL, KL = 20, 24
    v2 = jax.random.normal(jax.random.PRNGKey(7), (N, KL, EMBED_SIZE), jnp.float32)
    k2 = jax.random.normal(jax.random.PRNGKey(8), (N, KL, EMBED_SIZE), jnp.float32)
    q2 = jax.random.normal(jax.random.PRNGKey(9), (N, QL, EMBED_SIZE), jnp.float32)

    out2 = jax.block_until_ready(
        multi_head_attention(prepared, v2, k2, q2, tq_max=8, tk_max=16))
    ref2 = multi_head_attention_ref(params, v2, k2, q2)
    assert out2.shape == (N, QL, EMBED_SIZE)
    err2 = float(jnp.max(jnp.abs(out2 - ref2)))
    assert jnp.allclose(out2, ref2, atol=3e-2, rtol=3e-2), f"test2 max abs err {err2}"

    print("KERNEL_OK")
</pallas_src>

<mosaic_0001>
module attributes {stable_mosaic.version = 11 : i64} {
  func.func @_mha_kernel(%arg0: i32, %arg1: i32, %arg2: i32, %arg3: memref<1x8x384xf32, #tpu.memory_space<vmem>>, %arg4: memref<1x8x384xf32, #tpu.memory_space<vmem>>, %arg5: memref<1x8x384xf32, #tpu.memory_space<vmem>>, %arg6: memref<384x384xbf16, #tpu.memory_space<vmem>>, %arg7: memref<384x384xbf16, #tpu.memory_space<vmem>>, %arg8: memref<384x384xbf16, #tpu.memory_space<vmem>>, %arg9: memref<1x384xf32, #tpu.memory_space<vmem>>, %arg10: memref<1x384xf32, #tpu.memory_space<vmem>>, %arg11: memref<1x384xf32, #tpu.memory_space<vmem>>, %arg12: memref<384x384xbf16, #tpu.memory_space<vmem>>, %arg13: memref<1x384xf32, #tpu.memory_space<vmem>>, %arg14: memref<1x8x384xf32, #tpu.memory_space<vmem>>, %arg15: memref<8x384xbf16, #tpu.memory_space<vmem>>, %arg16: memref<32x8x12xbf16, #tpu.memory_space<vmem>>, %arg17: memref<8x384xbf16, #tpu.memory_space<vmem>>, %arg18: memref<8x384xbf16, #tpu.memory_space<vmem>>, %arg19: memref<32x8x12xbf16, #tpu.memory_space<vmem>>, %arg20: memref<32x8x12xbf16, #tpu.memory_space<vmem>>, %arg21: memref<32x8x1xf32, #tpu.memory_space<vmem>>, %arg22: memref<32x8x1xf32, #tpu.memory_space<vmem>>, %arg23: memref<32x8x12xf32, #tpu.memory_space<vmem>>, %arg24: memref<8x384xbf16, #tpu.memory_space<vmem>>) attributes {dimension_semantics = [#tpu.dimension_semantics<parallel>, #tpu.dimension_semantics<parallel>, #tpu.dimension_semantics<arbitrary>], iteration_bounds = array<i64: 2, 1, 1>, scalar_prefetch = 0 : i64, scratch_operands = 10 : i64, tpu.core_type = #tpu.core_type<tc>, window_params = [{transform_indices = @transform_0, window_bounds = array<i64: 1, 8, 384>}, {transform_indices = @transform_1, window_bounds = array<i64: 1, 8, 384>}, {transform_indices = @transform_2, window_bounds = array<i64: 1, 8, 384>}, {pipeline_mode = #tpu.pipeline_mode<synchronous>, transform_indices = @transform_3, window_bounds = array<i64: 384, 384>}, {pipeline_mode = #tpu.pipeline_mode<synchronous>, transform_indices = @transform_4, window_bounds = array<i64: 384, 384>}, {pipeline_mode = #tpu.pipeline_mode<synchronous>, transform_indices = @transform_5, window_bounds = array<i64: 384, 384>}, {pipeline_mode = #tpu.pipeline_mode<synchronous>, transform_indices = @transform_6, window_bounds = array<i64: 1, 384>}, {pipeline_mode = #tpu.pipeline_mode<synchronous>, transform_indices = @transform_7, window_bounds = array<i64: 1, 384>}, {pipeline_mode = #tpu.pipeline_mode<synchronous>, transform_indices = @transform_8, window_bounds = array<i64: 1, 384>}, {pipeline_mode = #tpu.pipeline_mode<synchronous>, transform_indices = @transform_9, window_bounds = array<i64: 384, 384>}, {pipeline_mode = #tpu.pipeline_mode<synchronous>, transform_indices = @transform_10, window_bounds = array<i64: 1, 384>}, {transform_indices = @transform_11, window_bounds = array<i64: 1, 8, 384>}]} {
    %c0_i32 = arith.constant 0 : i32
    %0 = arith.cmpi eq, %arg2, %c0_i32 : i32
    %1 = arith.extui %0 : i1 to i32
    %c0_i32_0 = arith.constant 0 : i32
    %2 = arith.cmpi ne, %1, %c0_i32_0 : i32
    scf.if %2 {
      %c0_312 = arith.constant 0 : index
      %c0_313 = arith.constant 0 : index
      %c0_314 = arith.constant 0 : index
      %309 = vector.load %arg3[%c0_312, %c0_313, %c0_314] : memref<1x8x384xf32, #tpu.memory_space<vmem>>, vector<1x8x384xf32>
      %310 = vector.shape_cast %309 : vector<1x8x384xf32> to vector<8x384xf32>
      %311 = arith.truncf %310 : vector<8x384xf32> to vector<8x384xbf16>
      %c0_315 = arith.constant 0 : index
      %c0_316 = arith.constant 0 : index
      %312 = vector.load %arg6[%c0_315, %c0_316] : memref<384x384xbf16, #tpu.memory_space<vmem>>, vector<384x384xbf16>
      %cst_317 = arith.constant dense<0.000000e+00> : vector<8x384xf32>
      %313 = tpu.matmul %311, %312, %cst_317 {dimension_numbers = #tpu.dot_dimension_numbers<[1], [0], [0], [1], [0, 0, 1, 1], [], []>} : vector<8x384xbf16>, vector<384x384xbf16>, vector<8x384xf32> -> vector<8x384xf32>
      %c0_318 = arith.constant 0 : index
      %c0_319 = arith.constant 0 : index
      %314 = vector.load %arg9[%c0_318, %c0_319] : memref<1x384xf32, #tpu.memory_space<vmem>>, vector<1x384xf32>
      %315 = vector.broadcast %314 : vector<1x384xf32> to vector<8x384xf32>
      %316 = arith.addf %313, %315 : vector<8x384xf32>
      %317 = arith.truncf %316 : vector<8x384xf32> to vector<8x384xbf16>
      %c0_320 = arith.constant 0 : index
      %c0_321 = arith.constant 0 : index
      %318 = vector.load %arg15[%c0_320, %c0_321] : memref<8x384xbf16, #tpu.memory_space<vmem>>, vector<8x384xbf16>
      tpu.vector_store %arg15[%c0_320, %c0_321], %317 {strides = array<i32>} : memref<8x384xbf16, #tpu.memory_space<vmem>>, vector<8x384xbf16>,
      %c0_322 = arith.constant 0 : index
      %c0_323 = arith.constant 0 : index
      %319 = vector.load %arg15[%c0_322, %c0_323] : memref<8x384xbf16, #tpu.memory_space<vmem>>, vector<8x12xbf16>
      %c0_324 = arith.constant 0 : index
      %c0_325 = arith.constant 0 : index
      %c0_326 = arith.constant 0 : index
      %320 = vector.load %arg16[%c0_324, %c0_325, %c0_326] : memref<32x8x12xbf16, #tpu.memory_space<vmem>>, vector<1x8x12xbf16>
      %321 = vector.shape_cast %320 : vector<1x8x12xbf16> to vector<8x12xbf16>
      %322 = vector.shape_cast %319 : vector<8x12xbf16> to vector<1x8x12xbf16>
      tpu.vector_store %arg16[%c0_324, %c0_325, %c0_326], %322 {strides = array<i32>} : memref<32x8x12xbf16, #tpu.memory_space<vmem>>, vector<1x8x12xbf16>,
      %c0_327 = arith.constant 0 : index
      %c12_328 = arith.constant 12 : index
      %323 = vector.load %arg15[%c0_327, %c12_328] : memref<8x384xbf16, #tpu.memory_space<vmem>>, vector<8x12xbf16>
      %c1_329 = arith.constant 1 : index
      %c0_330 = arith.constant 0 : index
      %c0_331 = arith.constant 0 : index
      %324 = vector.load %arg16[%c1_329, %c0_330, %c0_331] : memref<32x8x12xbf16, #tpu.memory_space<vmem>>, vector<1x8x12xbf16>
      %325 = vector.shape_cast %324 : vector<1x8x12xbf16> to vector<8x12xbf16>
      %326 = vector.shape_cast %323 : vector<8x12xbf16> to vector<1x8x12xbf16>
      tpu.vector_store %arg16[%c1_329, %c0_330, %c0_331], %326 {strides = array<i32>} : memref<32x8x12xbf16, #tpu.memory_space<vmem>>, vector<1x8x12xbf16>,
      %c0_332 = arith.constant 0 : index
      %c24_333 = arith.constant 24 : index
      %327 = vector.load %arg15[%c0_332, %c24_333] : memref<8x384xbf16, #tpu.memory_space<vmem>>, vector<8x12xbf16>
      %c2_334 = arith.constant 2 : index
      %c0_335 = arith.constant 0 : index
      %c0_336 = arith.constant 0 : index
      %328 = vector.load %arg16[%c2_334, %c0_335, %c0_336] : memref<32x8x12xbf16, #tpu.memory_space<vmem>>, vector<1x8x12xbf16>
      %329 = vector.shape_cast %328 : vector<1x8x12xbf16> to vector<8x12xbf16>
      %330 = vector.shape_cast %327 : vector<8x12xbf16> to vector<1x8x12xbf16>
      tpu.vector_store %arg16[%c2_334, %c0_335, %c0_336], %330 {strides = array<i32>} : memref<32x8x12xbf16, #tpu.memory_space<vmem>>, vector<1x8x12xbf16>,
      %c0_337 = arith.constant 0 : index
      %c36_338 = arith.constant 36 : index
      %331 = vector.load %arg15[%c0_337, %c36_338] : memref<8x384xbf16, #tpu.memory_space<vmem>>, vector<8x12xbf16>
      %c3_339 = arith.constant 3 : index
      %c0_340 = arith.constant 0 : index
      %c0_341 = arith.constant 0 : index
      %332 = vector.load %arg16[%c3_339, %c0_340, %c0_341] : memref<32x8x12xbf16, #tpu.memory_space<vmem>>, vector<1x8x12xbf16>
      %333 = vector.shape_cast %332 : vector<1x8x12xbf16> to vector<8x12xbf16>
      %334 = vector.shape_cast %331 : vector<8x12xbf16> to vector<1x8x12xbf16>
      tpu.vector_store %arg16[%c3_339, %c0_340, %c0_341], %334 {strides = array<i32>} : memref<32x8x12xbf16, #tpu.memory_space<vmem>>, vector<1x8x12xbf16>,
      %c0_342 = arith.constant 0 : index
      %c48_343 = arith.constant 48 : index
      %335 = vector.load %arg15[%c0_342, %c48_343] : memref<8x384xbf16, #tpu.memory_space<vmem>>, vector<8x12xbf16>
      %c4_344 = arith.constant 4 : index
      %c0_345 = arith.constant 0 : index
      %c0_346 = arith.constant 0 : index
      %336 = vector.load %arg16[%c4_344, %c0_345, %c0_346] : memref<32x8x12xbf16, #tpu.memory_space<vmem>>, vector<1x8x12xbf16>
      %337 = vector.shape_cast %336 : vector<1x8x12xbf16> to vector<8x12xbf16>
      %338 = vector.shape_cast %335 : vector<8x12xbf16> to vector<1x8x12xbf16>
      tpu.vector_store %arg16[%c4_344, %c0_345, %c0_346], %338 {strides = array<i32>} : memref<32x8x12xbf16, #tpu.memory_space<vmem>>, vector<1x8x12xbf16>,
      %c0_347 = arith.constant 0 : index
      %c60_348 = arith.constant 60 : index
      %339 = vector.load %arg15[%c0_347, %c60_348] : memref<8x384xbf16, #tpu.memory_space<vmem>>, vector<8x12xbf16>
      %c5_349 = arith.constant 5 : index
      %c0_350 = arith.constant 0 : index
      %c0_351 = arith.constant 0 : index
      %340 = vector.load %arg16[%c5_349, %c0_350, %c0_351] : memref<32x8x12xbf16, #tpu.memory_space<vmem>>, vector<1x8x12xbf16>
      %341 = vector.shape_cast %340 : vector<1x8x12xbf16> to vector<8x12xbf16>
      %342 = vector.shape_cast %339 : vector<8x12xbf16> to vector<1x8x12xbf16>
      tpu.vector_store %arg16[%c5_349, %c0_350, %c0_351], %342 {strides = array<i32>} : memref<32x8x12xbf16, #tpu.memory_space<vmem>>, vector<1x8x12xbf16>,
      %c0_352 = arith.constant 0 : index
      %c72_353 = arith.constant 72 : index
      %343 = vector.load %arg15[%c0_352, %c72_353] : memref<8x384xbf16, #tpu.memory_space<vmem>>, vector<8x12xbf16>
      %c6_354 = arith.constant 6 : index
      %c0_355 = arith.constant 0 : index
      %c0_356 = arith.constant 0 : index
      %344 = vector.load %arg16[%c6_354, %c0_355, %c0_356] : memref<32x8x12xbf16, #tpu.memory_space<vmem>>, vector<1x8x12xbf16>
      %345 = vector.shape_cast %344 : vector<1x8x12xbf16> to vector<8x12xbf16>
      %346 = vector.shape_cast %343 : vector<8x12xbf16> to vector<1x8x12xbf16>
      tpu.vector_store %arg16[%c6_354, %c0_355, %c0_356], %346 {strides = array<i32>} : memref<32x8x12xbf16, #tpu.memory_space<vmem>>, vector<1x8x12xbf16>,
      %c0_357 = arith.constant 0 : index
      %c84_358 = arith.constant 84 : index
      %347 = vector.load %arg15[%c0_357, %c84_358] : memref<8x384xbf16, #tpu.memory_space<vmem>>, vector<8x12xbf16>
      %c7_359 = arith.constant 7 : index
      %c0_360 = arith.constant 0 : index
      %c0_361 = arith.constant 0 : index
      %348 = vector.load %arg16[%c7_359, %c0_360, %c0_361] : memref<32x8x12xbf16, #tpu.memory_space<vmem>>, vector<1x8x12xbf16>
      %349 = vector.shape_cast %348 : vector<1x8x12xbf16> to vector<8x12xbf16>
      %350 = vector.shape_cast %347 : vector<8x12xbf16> to vector<1x8x12xbf16>
      tpu.vector_store %arg16[%c7_359, %c0_360, %c0_361], %350 {strides = array<i32>} : memref<32x8x12xbf16, #tpu.memory_space<vmem>>, vector<1x8x12xbf16>,
      %c0_362 = arith.constant 0 : index
      %c96_363 = arith.constant 96 : index
      %351 = vector.load %arg15[%c0_362, %c96_363] : memref<8x384xbf16, #tpu.memory_space<vmem>>, vector<8x12xbf16>
      %c8_364 = arith.constant 8 : index
      %c0_365 = arith.constant 0 : index
      %c0_366 = arith.constant 0 : index
      %352 = vector.load %arg16[%c8_364, %c0_365, %c0_366] : memref<32x8x12xbf16, #tpu.memory_space<vmem>>, vector<1x8x12xbf16>
      %353 = vector.shape_cast %352 : vector<1x8x12xbf16> to vector<8x12xbf16>
      %354 = vector.shape_cast %351 : vector<8x12xbf16> to vector<1x8x12xbf16>
      tpu.vector_store %arg16[%c8_364, %c0_365, %c0_366], %354 {strides = array<i32>} : memref<32x8x12xbf16, #tpu.memory_space<vmem>>, vector<1x8x12xbf16>,
      %c0_367 = arith.constant 0 : index
      %c108_368 = arith.constant 108 : index
      %355 = vector.load %arg15[%c0_367, %c108_368] : memref<8x384xbf16, #tpu.memory_space<vmem>>, vector<8x12xbf16>
      %c9_369 = arith.constant 9 : index
      %c0_370 = arith.constant 0 : index
      %c0_371 = arith.constant 0 : index
      %356 = vector.load %arg16[%c9_369, %c0_370, %c0_371] : memref<32x8x12xbf16, #tpu.memory_space<vmem>>, vector<1x8x12xbf16>
      %357 = vector.shape_cast %356 : vector<1x8x12xbf16> to vector<8x12xbf16>
      %358 = vector.shape_cast %355 : vector<8x12xbf16> to vector<1x8x12xbf16>
      tpu.vector_store %arg16[%c9_369, %c0_370, %c0_371], %358 {strides = array<i32>} : memref<32x8x12xbf16, #tpu.memory_space<vmem>>, vector<1x8x12xbf16>,
      %c0_372 = arith.constant 0 : index
      %c120_373 = arith.constant 120 : index
      %359 = vector.load %arg15[%c0_372, %c120_373] : memref<8x384xbf16, #tpu.memory_space<vmem>>, vector<8x12xbf16>
      %c10_374 = arith.constant 10 : index
      %c0_375 = arith.constant 0 : index
      %c0_376 = arith.constant 0 : index
      %360 = vector.load %arg16[%c10_374, %c0_375, %c0_376] : memref<32x8x12xbf16, #tpu.memory_space<vmem>>, vector<1x8x12xbf16>
      %361 = vector.shape_cast %360 : vector<1x8x12xbf16> to vector<8x12xbf16>
      %362 = vector.shape_cast %359 : vector<8x12xbf16> to vector<1x8x12xbf16>
      tpu.vector_store %arg16[%c10_374, %c0_375, %c0_376], %362 {strides = array<i32>} : memref<32x8x12xbf16, #tpu.memory_space<vmem>>, vector<1x8x12xbf16>,
      %c0_377 = arith.constant 0 : index
      %c132_378 = arith.constant 132 : index
      %363 = vector.load %arg15[%c0_377, %c132_378] : memref<8x384xbf16, #tpu.memory_space<vmem>>, vector<8x12xbf16>
      %c11_379 = arith.constant 11 : index
      %c0_380 = arith.constant 0 : index
      %c0_381 = arith.constant 0 : index
      %364 = vector.load %arg16[%c11_379, %c0_380, %c0_381] : memref<32x8x12xbf16, #tpu.memory_space<vmem>>, vector<1x8x12xbf16>
      %365 = vector.shape_cast %364 : vector<1x8x12xbf16> to vector<8x12xbf16>
      %366 = vector.shape_cast %363 : vector<8x12xbf16> to vector<1x8x12xbf16>
      tpu.vector_store %arg16[%c11_379, %c0_380, %c0_381], %366 {strides = array<i32>} : memref<32x8x12xbf16, #tpu.memory_space<vmem>>, vector<1x8x12xbf16>,
      %c0_382 = arith.constant 0 : index
      %c144_383 = arith.constant 144 : index
      %367 = vector.load %arg15[%c0_382, %c144_383] : memref<8x384xbf16, #tpu.memory_space<vmem>>, vector<8x12xbf16>
      %c12_384 = arith.constant 12 : index
      %c0_385 = arith.constant 0 : index
      %c0_386 = arith.constant 0 : index
      %368 = vector.load %arg16[%c12_384, %c0_385, %c0_386] : memref<32x8x12xbf16, #tpu.memory_space<vmem>>, vector<1x8x12xbf16>
      %369 = vector.shape_cast %368 : vector<1x8x12xbf16> to vector<8x12xbf16>
      %370 = vector.shape_cast %367 : vector<8x12xbf16> to vector<1x8x12xbf16>
      tpu.vector_store %arg16[%c12_384, %c0_385, %c0_386], %370 {strides = array<i32>} : memref<32x8x12xbf16, #tpu.memory_space<vmem>>, vector<1x8x12xbf16>,
      %c0_387 = arith.constant 0 : index
      %c156_388 = arith.constant 156 : index
      %371 = vector.load %arg15[%c0_387, %c156_388] : memref<8x384xbf16, #tpu.memory_space<vmem>>, vector<8x12xbf16>
      %c13_389 = arith.constant 13 : index
      %c0_390 = arith.constant 0 : index
      %c0_391 = arith.constant 0 : index
      %372 = vector.load %arg16[%c13_389, %c0_390, %c0_391] : memref<32x8x12xbf16, #tpu.memory_space<vmem>>, vector<1x8x12xbf16>
      %373 = vector.shape_cast %372 : vector<1x8x12xbf16> to vector<8x12xbf16>
      %374 = vector.shape_cast %371 : vector<8x12xbf16> to vector<1x8x12xbf16>
      tpu.vector_store %arg16[%c13_389, %c0_390, %c0_391], %374 {strides = array<i32>} : memref<32x8x12xbf16, #tpu.memory_space<vmem>>, vector<1x8x12xbf16>,
      %c0_392 = arith.constant 0 : index
      %c168_393 = arith.constant 168 : index
      %375 = vector.load %arg15[%c0_392, %c168_393] : memref<8x384xbf16, #tpu.memory_space<vmem>>, vector<8x12xbf16>
      %c14_394 = arith.constant 14 : index
      %c0_395 = arith.constant 0 : index
      %c0_396 = arith.constant 0 : index
      %376 = vector.load %arg16[%c14_394, %c0_395, %c0_396] : memref<32x8x12xbf16, #tpu.memory_space<vmem>>, vector<1x8x12xbf16>
      %377 = vector.shape_cast %376 : vector<1x8x12xbf16> to vector<8x12xbf16>
      %378 = vector.shape_cast %375 : vector<8x12xbf16> to vector<1x8x12xbf16>
      tpu.vector_store %arg16[%c14_394, %c0_395, %c0_396], %378 {strides = array<i32>} : memref<32x8x12xbf16, #tpu.memory_space<vmem>>, vector<1x8x12xbf16>,
      %c0_397 = arith.constant 0 : index
      %c180_398 = arith.constant 180 : index
      %379 = vector.load %arg15[%c0_397, %c180_398] : memref<8x384xbf16, #tpu.memory_space<vmem>>, vector<8x12xbf16>
      %c15_399 = arith.constant 15 : index
      %c0_400 = arith.constant 0 : index
      %c0_401 = arith.constant 0 : index
      %380 = vector.load %arg16[%c15_399, %c0_400, %c0_401] : memref<32x8x12xbf16, #tpu.memory_space<vmem>>, vector<1x8x12xbf16>
      %381 = vector.shape_cast %380 : vector<1x8x12xbf16> to vector<8x12xbf16>
      %382 = vector.shape_cast %379 : vector<8x12xbf16> to vector<1x8x12xbf16>
      tpu.vector_store %arg16[%c15_399, %c0_400, %c0_401], %382 {strides = array<i32>} : memref<32x8x12xbf16, #tpu.memory_space<vmem>>, vector<1x8x12xbf16>,
      %c0_402 = arith.constant 0 : index
      %c192_403 = arith.constant 192 : index
      %383 = vector.load %arg15[%c0_402, %c192_403] : memref<8x384xbf16, #tpu.memory_space<vmem>>, vector<8x12xbf16>
      %c16_404 = arith.constant 16 : index
      %c0_405 = arith.constant 0 : index
      %c0_406 = arith.constant 0 : index
      %384 = vector.load %arg16[%c16_404, %c0_405, %c0_406] : memref<32x8x12xbf16, #tpu.memory_space<vmem>>, vector<1x8x12xbf16>
      %385 = vector.shape_cast %384 : vector<1x8x12xbf16> to vector<8x12xbf16>
      %386 = vector.shape_cast %383 : vector<8x12xbf16> to vector<1x8x12xbf16>
      tpu.vector_store %arg16[%c16_404, %c0_405, %c0_406], %386 {strides = array<i32>} : memref<32x8x12xbf16, #tpu.memory_space<vmem>>, vector<1x8x12xbf16>,
      %c0_407 = arith.constant 0 : index
      %c204_408 = arith.constant 204 : index
      %387 = vector.load %arg15[%c0_407, %c204_408] : memref<8x384xbf16, #tpu.memory_space<vmem>>, vector<8x12xbf16>
      %c17_409 = arith.constant 17 : index
      %c0_410 = arith.constant 0 : index
      %c0_411 = arith.constant 0 : index
      %388 = vector.load %arg16[%c17_409, %c0_410, %c0_411] : memref<32x8x12xbf16, #tpu.memory_space<vmem>>, vector<1x8x12xbf16>
      %389 = vector.shape_cast %388 : vector<1x8x12xbf16> to vector<8x12xbf16>
      %390 = vector.shape_cast %387 : vector<8x12xbf16> to vector<1x8x12xbf16>
      tpu.vector_store %arg16[%c17_409, %c0_410, %c0_411], %390 {strides = array<i32>} : memref<32x8x12xbf16, #tpu.memory_space<vmem>>, vector<1x8x12xbf16>,
      %c0_412 = arith.constant 0 : index
      %c216_413 = arith.constant 216 : index
      %391 = vector.load %arg15[%c0_412, %c216_413] : memref<8x384xbf16, #tpu.memory_space<vmem>>, vector<8x12xbf16>
      %c18_414 = arith.constant 18 : index
      %c0_415 = arith.constant 0 : index
      %c0_416 = arith.constant 0 : index
      %392 = vector.load %arg16[%c18_414, %c0_415, %c0_416] : memref<32x8x12xbf16, #tpu.memory_space<vmem>>, vector<1x8x12xbf16>
      %393 = vector.shape_cast %392 : vector<1x8x12xbf16> to vector<8x12xbf16>
      %394 = vector.shape_cast %391 : vector<8x12xbf16> to vector<1x8x12xbf16>
      tpu.vector_store %arg16[%c18_414, %c0_415, %c0_416], %394 {strides = array<i32>} : memref<32x8x12xbf16, #tpu.memory_space<vmem>>, vector<1x8x12xbf16>,
      %c0_417 = arith.constant 0 : index
      %c228_418 = arith.constant 228 : index
      %395 = vector.load %arg15[%c0_417, %c228_418] : memref<8x384xbf16, #tpu.memory_space<vmem>>, vector<8x12xbf16>
      %c19_419 = arith.constant 19 : index
      %c0_420 = arith.constant 0 : index
      %c0_421 = arith.constant 0 : index
      %396 = vector.load %arg16[%c19_419, %c0_420, %c0_421] : memref<32x8x12xbf16, #tpu.memory_space<vmem>>, vector<1x8x12xbf16>
      %397 = vector.shape_cast %396 : vector<1x8x12xbf16> to vector<8x12xbf16>
      %398 = vector.shape_cast %395 : vector<8x12xbf16> to vector<1x8x12xbf16>
      tpu.vector_store %arg16[%c19_419, %c0_420, %c0_421], %398 {strides = array<i32>} : memref<32x8x12xbf16, #tpu.memory_space<vmem>>, vector<1x8x12xbf16>,
      %c0_422 = arith.constant 0 : index
      %c240_423 = arith.constant 240 : index
      %399 = vector.load %arg15[%c0_422, %c240_423] : memref<8x384xbf16, #tpu.memory_space<vmem>>, vector<8x12xbf16>
      %c20_424 = arith.constant 20 : index
      %c0_425 = arith.constant 0 : index
      %c0_426 = arith.constant 0 : index
      %400 = vector.load %arg16[%c20_424, %c0_425, %c0_426] : memref<32x8x12xbf16, #tpu.memory_space<vmem>>, vector<1x8x12xbf16>
      %401 = vector.shape_cast %400 : vector<1x8x12xbf16> to vector<8x12xbf16>
      %402 = vector.shape_cast %399 : vector<8x12xbf16> to vector<1x8x12xbf16>
      tpu.vector_store %arg16[%c20_424, %c0_425, %c0_426], %402 {strides = array<i32>} : memref<32x8x12xbf16, #tpu.memory_space<vmem>>, vector<1x8x12xbf16>,
      %c0_427 = arith.constant 0 : index
      %c252_428 = arith.constant 252 : index
      %403 = vector.load %arg15[%c0_427, %c252_428] : memref<8x384xbf16, #tpu.memory_space<vmem>>, vector<8x12xbf16>
      %c21_429 = arith.constant 21 : index
      %c0_430 = arith.constant 0 : index
      %c0_431 = arith.constant 0 : index
      %404 = vector.load %arg16[%c21_429, %c0_430, %c0_431] : memref<32x8x12xbf16, #tpu.memory_space<vmem>>, vector<1x8x12xbf16>
      %405 = vector.shape_cast %404 : vector<1x8x12xbf16> to vector<8x12xbf16>
      %406 = vector.shape_cast %403 : vector<8x12xbf16> to vector<1x8x12xbf16>
      tpu.vector_store %arg16[%c21_429, %c0_430, %c0_431], %406 {strides = array<i32>} : memref<32x8x12xbf16, #tpu.memory_space<vmem>>, vector<1x8x12xbf16>,
      %c0_432 = arith.constant 0 : index
      %c264_433 = arith.constant 264 : index
      %407 = vector.load %arg15[%c0_432, %c264_433] : memref<8x384xbf16, #tpu.memory_space<vmem>>, vector<8x12xbf16>
      %c22_434 = arith.constant 22 : index
      %c0_435 = arith.constant 0 : index
      %c0_436 = arith.constant 0 : index
      %408 = vector.load %arg16[%c22_434, %c0_435, %c0_436] : memref<32x8x12xbf16, #tpu.memory_space<vmem>>, vector<1x8x12xbf16>
      %409 = vector.shape_cast %408 : vector<1x8x12xbf16> to vector<8x12xbf16>
      %410 = vector.shape_cast %407 : vector<8x12xbf16> to vector<1x8x12xbf16>
      tpu.vector_store %arg16[%c22_434, %c0_435, %c0_436], %410 {strides = array<i32>} : memref<32x8x12xbf16, #tpu.memory_space<vmem>>, vector<1x8x12xbf16>,
      %c0_437 = arith.constant 0 : index
      %c276_438 = arith.constant 276 : index
      %411 = vector.load %arg15[%c0_437, %c276_438] : memref<8x384xbf16, #tpu.memory_space<vmem>>, vector<8x12xbf16>
      %c23_439 = arith.constant 23 : index
      %c0_440 = arith.constant 0 : index
      %c0_441 = arith.constant 0 : index
      %412 = vector.load %arg16[%c23_439, %c0_440, %c0_441] : memref<32x8x12xbf16, #tpu.memory_space<vmem>>, vector<1x8x12xbf16>
      %413 = vector.shape_cast %412 : vector<1x8x12xbf16> to vector<8x12xbf16>
      %414 = vector.shape_cast %411 : vector<8x12xbf16> to vector<1x8x12xbf16>
      tpu.vector_store %arg16[%c23_439, %c0_440, %c0_441], %414 {strides = array<i32>} : memref<32x8x12xbf16, #tpu.memory_space<vmem>>, vector<1x8x12xbf16>,
      %c0_442 = arith.constant 0 : index
      %c288_443 = arith.constant 288 : index
      %415 = vector.load %arg15[%c0_442, %c288_443] : memref<8x384xbf16, #tpu.memory_space<vmem>>, vector<8x12xbf16>
      %c24_444 = arith.constant 24 : index
      %c0_445 = arith.constant 0 : index
      %c0_446 = arith.constant 0 : index
      %416 = vector.load %arg16[%c24_444, %c0_445, %c0_446] : memref<32x8x12xbf16, #tpu.memory_space<vmem>>, vector<1x8x12xbf16>
      %417 = vector.shape_cast %416 : vector<1x8x12xbf16> to vector<8x12xbf16>
      %418 = vector.shape_cast %415 : vector<8x12xbf16> to vector<1x8x12xbf16>
      tpu.vector_store %arg16[%c24_444, %c0_445, %c0_446], %418 {strides = array<i32>} : memref<32x8x12xbf16, #tpu.memory_space<vmem>>, vector<1x8x12xbf16>,
      %c0_447 = arith.constant 0 : index
      %c300_448 = arith.constant 300 : index
      %419 = vector.load %arg15[%c0_447, %c300_448] : memref<8x384xbf16, #tpu.memory_space<vmem>>, vector<8x12xbf16>
      %c25_449 = arith.constant 25 : index
      %c0_450 = arith.constant 0 : index
      %c0_451 = arith.constant 0 : index
      %420 = vector.load %arg16[%c25_449, %c0_450, %c0_451] : memref<32x8x12xbf16, #tpu.memory_space<vmem>>, vector<1x8x12xbf16>
      %421 = vector.shape_cast %420 : vector<1x8x12xbf16> to vector<8x12xbf16>
      %422 = vector.shape_cast %419 : vector<8x12xbf16> to vector<1x8x12xbf16>
      tpu.vector_store %arg16[%c25_449, %c0_450, %c0_451], %422 {strides = array<i32>} : memref<32x8x12xbf16, #tpu.memory_space<vmem>>, vector<1x8x12xbf16>,
      %c0_452 = arith.constant 0 : index
      %c312_453 = arith.constant 312 : index
      %423 = vector.load %arg15[%c0_452, %c312_453] : memref<8x384xbf16, #tpu.memory_space<vmem>>, vector<8x12xbf16>
      %c26_454 = arith.constant 26 : index
      %c0_455 = arith.constant 0 : index
      %c0_456 = arith.constant 0 : index
      %424 = vector.load %arg16[%c26_454, %c0_455, %c0_456] : memref<32x8x12xbf16, #tpu.memory_space<vmem>>, vector<1x8x12xbf16>
      %425 = vector.shape_cast %424 : vector<1x8x12xbf16> to vector<8x12xbf16>
      %426 = vector.shape_cast %423 : vector<8x12xbf16> to vector<1x8x12xbf16>
      tpu.vector_store %arg16[%c26_454, %c0_455, %c0_456], %426 {strides = array<i32>} : memref<32x8x12xbf16, #tpu.memory_space<vmem>>, vector<1x8x12xbf16>,
      %c0_457 = arith.constant 0 : index
      %c324_458 = arith.constant 324 : index
      %427 = vector.load %arg15[%c0_457, %c324_458] : memref<8x384xbf16, #tpu.memory_space<vmem>>, vector<8x12xbf16>
      %c27_459 = arith.constant 27 : index
      %c0_460 = arith.constant 0 : index
      %c0_461 = arith.constant 0 : index
      %428 = vector.load %arg16[%c27_459, %c0_460, %c0_461] : memref<32x8x12xbf16, #tpu.memory_space<vmem>>, vector<1x8x12xbf16>
      %429 = vector.shape_cast %428 : vector<1x8x12xbf16> to vector<8x12xbf16>
      %430 = vector.shape_cast %427 : vector<8x12xbf16> to vector<1x8x12xbf16>
      tpu.vector_store %arg16[%c27_459, %c0_460, %c0_461], %430 {strides = array<i32>} : memref<32x8x12xbf16, #tpu.memory_space<vmem>>, vector<1x8x12xbf16>,
      %c0_462 = arith.constant 0 : index
      %c336_463 = arith.constant 336 : index
      %431 = vector.load %arg15[%c0_462, %c336_463] : memref<8x384xbf16, #tpu.memory_space<vmem>>, vector<8x12xbf16>
      %c28_464 = arith.constant 28 : index
      %c0_465 = arith.constant 0 : index
      %c0_466 = arith.constant 0 : index
      %432 = vector.load %arg16[%c28_464, %c0_465, %c0_466] : memref<32x8x12xbf16, #tpu.memory_space<vmem>>, vector<1x8x12xbf16>
      %433 = vector.shape_cast %432 : vector<1x8x12xbf16> to vector<8x12xbf16>
      %434 = vector.shape_cast %431 : vector<8x12xbf16> to vector<1x8x12xbf16>
      tpu.vector_store %arg16[%c28_464, %c0_465, %c0_466], %434 {strides = array<i32>} : memref<32x8x12xbf16, #tpu.memory_space<vmem>>, vector<1x8x12xbf16>,
      %c0_467 = arith.constant 0 : index
      %c348_468 = arith.constant 348 : index
      %435 = vector.load %arg15[%c0_467, %c348_468] : memref<8x384xbf16, #tpu.memory_space<vmem>>, vector<8x12xbf16>
      %c29_469 = arith.constant 29 : index
      %c0_470 = arith.constant 0 : index
      %c0_471 = arith.constant 0 : index
      %436 = vector.load %arg16[%c29_469, %c0_470, %c0_471] : memref<32x8x12xbf16, #tpu.memory_space<vmem>>, vector<1x8x12xbf16>
      %437 = vector.shape_cast %436 : vector<1x8x12xbf16> to vector<8x12xbf16>
      %438 = vector.shape_cast %435 : vector<8x12xbf16> to vector<1x8x12xbf16>
      tpu.vector_store %arg16[%c29_469, %c0_470, %c0_471], %438 {strides = array<i32>} : memref<32x8x12xbf16, #tpu.memory_space<vmem>>, vector<1x8x12xbf16>,
      %c0_472 = arith.constant 0 : index
      %c360_473 = arith.constant 360 : index
      %439 = vector.load %arg15[%c0_472, %c360_473] : memref<8x384xbf16, #tpu.memory_space<vmem>>, vector<8x12xbf16>
      %c30_474 = arith.constant 30 : index
      %c0_475 = arith.constant 0 : index
      %c0_476 = arith.constant 0 : index
      %440 = vector.load %arg16[%c30_474, %c0_475, %c0_476] : memref<32x8x12xbf16, #tpu.memory_space<vmem>>, vector<1x8x12xbf16>
      %441 = vector.shape_cast %440 : vector<1x8x12xbf16> to vector<8x12xbf16>
      %442 = vector.shape_cast %439 : vector<8x12xbf16> to vector<1x8x12xbf16>
      tpu.vector_store %arg16[%c30_474, %c0_475, %c0_476], %442 {strides = array<i32>} : memref<32x8x12xbf16, #tpu.memory_space<vmem>>, vector<1x8x12xbf16>,
      %c0_477 = arith.constant 0 : index
      %c372_478 = arith.constant 372 : index
      %443 = vector.load %arg15[%c0_477, %c372_478] : memref<8x384xbf16, #tpu.memory_space<vmem>>, vector<8x12xbf16>
      %c31_479 = arith.constant 31 : index
      %c0_480 = arith.constant 0 : index
      %c0_481 = arith.constant 0 : index
      %444 = vector.load %arg16[%c31_479, %c0_480, %c0_481] : memref<32x8x12xbf16, #tpu.memory_space<vmem>>, vector<1x8x12xbf16>
      %445 = vector.shape_cast %444 : vector<1x8x12xbf16> to vector<8x12xbf16>
      %446 = vector.shape_cast %443 : vector<8x12xbf16> to vector<1x8x12xbf16>
      tpu.vector_store %arg16[%c31_479, %c0_480, %c0_481], %446 {strides = array<i32>} : memref<32x8x12xbf16, #tpu.memory_space<vmem>>, vector<1x8x12xbf16>,
      %cst_482 = arith.constant 0xFF800000 : f32
      %447 = vector.broadcast %cst_482 : f32 to vector<32x8x1xf32>
      %c0_483 = arith.constant 0 : index
      %c0_484 = arith.constant 0 : index
      %c0_485 = arith.constant 0 : index
      %448 = vector.load %arg21[%c0_483, %c0_484, %c0_485] : memref<32x8x1xf32, #tpu.memory_space<vmem>>, vector<32x8x1xf32>
      tpu.vector_store %arg21[%c0_483, %c0_484, %c0_485], %447 {strides = array<i32>} : memref<32x8x1xf32, #tpu.memory_space<vmem>>, vector<32x8x1xf32>,
      %cst_486 = arith.constant 0.000000e+00 : f32
      %449 = vector.broadcast %cst_486 : f32 to vector<32x8x1xf32>
      %c0_487 = arith.constant 0 : index
      %c0_488 = arith.constant 0 : index
      %c0_489 = arith.constant 0 : index
      %450 = vector.load %arg22[%c0_487, %c0_488, %c0_489] : memref<32x8x1xf32, #tpu.memory_space<vmem>>, vector<32x8x1xf32>
      tpu.vector_store %arg22[%c0_487, %c0_488, %c0_489], %449 {strides = array<i32>} : memref<32x8x1xf32, #tpu.memory_space<vmem>>, vector<32x8x1xf32>,
      %cst_490 = arith.constant 0.000000e+00 : f32
      %451 = vector.broadcast %cst_490 : f32 to vector<32x8x12xf32>
      %c0_491 = arith.constant 0 : index
      %c0_492 = arith.constant 0 : index
      %c0_493 = arith.constant 0 : index
      %452 = vector.load %arg23[%c0_491, %c0_492, %c0_493] : memref<32x8x12xf32, #tpu.memory_space<vmem>>, vector<32x8x12xf32>
      tpu.vector_store %arg23[%c0_491, %c0_492, %c0_493], %451 {strides = array<i32>} : memref<32x8x12xf32, #tpu.memory_space<vmem>>, vector<32x8x12xf32>,
    } else {
    }
    %c0 = arith.constant 0 : index
    %c0_1 = arith.constant 0 : index
    %c0_2 = arith.constant 0 : index
    %3 = vector.load %arg4[%c0, %c0_1, %c0_2] : memref<1x8x384xf32, #tpu.memory_space<vmem>>, vector<1x8x384xf32>
    %4 = vector.shape_cast %3 : vector<1x8x384xf32> to vector<8x384xf32>
    %5 = arith.truncf %4 : vector<8x384xf32> to vector<8x384xbf16>
    %c0_3 = arith.constant 0 : index
    %c0_4 = arith.constant 0 : index
    %c0_5 = arith.constant 0 : index
    %6 = vector.load %arg5[%c0_3, %c0_4, %c0_5] : memref<1x8x384xf32, #tpu.memory_space<vmem>>, vector<1x8x384xf32>
    %7 = vector.shape_cast %6 : vector<1x8x384xf32> to vector<8x384xf32>
    %8 = arith.truncf %7 : vector<8x384xf32> to vector<8x384xbf16>
    %c0_6 = arith.constant 0 : index
    %c0_7 = arith.constant 0 : index
    %9 = vector.load %arg7[%c0_6, %c0_7] : memref<384x384xbf16, #tpu.memory_space<vmem>>, vector<384x384xbf16>
    %cst = arith.constant dense<0.000000e+00> : vector<8x384xf32>
    %10 = tpu.matmul %5, %9, %cst {dimension_numbers = #tpu.dot_dimension_numbers<[1], [0], [0], [1], [0, 0, 1, 1], [], []>} : vector<8x384xbf16>, vector<384x384xbf16>, vector<8x384xf32> -> vector<8x384xf32>
    %c0_8 = arith.constant 0 : index
    %c0_9 = arith.constant 0 : index
    %11 = vector.load %arg10[%c0_8, %c0_9] : memref<1x384xf32, #tpu.memory_space<vmem>>, vector<1x384xf32>
    %12 = vector.broadcast %11 : vector<1x384xf32> to vector<8x384xf32>
    %13 = arith.addf %10, %12 : vector<8x384xf32>
    %14 = arith.truncf %13 : vector<8x384xf32> to vector<8x384xbf16>
    %c0_10 = arith.constant 0 : index
    %c0_11 = arith.constant 0 : index
    %15 = vector.load %arg17[%c0_10, %c0_11] : memref<8x384xbf16, #tpu.memory_space<vmem>>, vector<8x384xbf16>
    tpu.vector_store %arg17[%c0_10, %c0_11], %14 {strides = array<i32>} : memref<8x384xbf16, #tpu.memory_space<vmem>>, vector<8x384xbf16>,
    %c0_12 = arith.constant 0 : index
    %c0_13 = arith.constant 0 : index
    %16 = vector.load %arg8[%c0_12, %c0_13] : memref<384x384xbf16, #tpu.memory_space<vmem>>, vector<384x384xbf16>
    %cst_14 = arith.constant dense<0.000000e+00> : vector<8x384xf32>
    %17 = tpu.matmul %8, %16, %cst_14 {dimension_numbers = #tpu.dot_dimension_numbers<[1], [0], [0], [1], [0, 0, 1, 1], [], []>} : vector<8x384xbf16>, vector<384x384xbf16>, vector<8x384xf32> -> vector<8x384xf32>
    %c0_15 = arith.constant 0 : index
    %c0_16 = arith.constant 0 : index
    %18 = vector.load %arg11[%c0_15, %c0_16] : memref<1x384xf32, #tpu.memory_space<vmem>>, vector<1x384xf32>
    %19 = vector.broadcast %18 : vector<1x384xf32> to vector<8x384xf32>
    %20 = arith.addf %17, %19 : vector<8x384xf32>
    %21 = arith.truncf %20 : vector<8x384xf32> to vector<8x384xbf16>
    %c0_17 = arith.constant 0 : index
    %c0_18 = arith.constant 0 : index
    %22 = vector.load %arg18[%c0_17, %c0_18] : memref<8x384xbf16, #tpu.memory_space<vmem>>, vector<8x384xbf16>
    tpu.vector_store %arg18[%c0_17, %c0_18], %21 {strides = array<i32>} : memref<8x384xbf16, #tpu.memory_space<vmem>>, vector<8x384xbf16>,
    %c0_19 = arith.constant 0 : index
    %c0_20 = arith.constant 0 : index
    %23 = vector.load %arg17[%c0_19, %c0_20] : memref<8x384xbf16, #tpu.memory_space<vmem>>, vector<8x12xbf16>
    %c0_21 = arith.constant 0 : index
    %c0_22 = arith.constant 0 : index
    %c0_23 = arith.constant 0 : index
    %24 = vector.load %arg19[%c0_21, %c0_22, %c0_23] : memref<32x8x12xbf16, #tpu.memory_space<vmem>>, vector<1x8x12xbf16>
    %25 = vector.shape_cast %24 : vector<1x8x12xbf16> to vector<8x12xbf16>
    %26 = vector.shape_cast %23 : vector<8x12xbf16> to vector<1x8x12xbf16>
    tpu.vector_store %arg19[%c0_21, %c0_22, %c0_23], %26 {strides = array<i32>} : memref<32x8x12xbf16, #tpu.memory_space<vmem>>, vector<1x8x12xbf16>,
    %c0_24 = arith.constant 0 : index
    %c0_25 = arith.constant 0 : index
    %27 = vector.load %arg18[%c0_24, %c0_25] : memref<8x384xbf16, #tpu.memory_space<vmem>>, vector<8x12xbf16>
    %c0_26 = arith.constant 0 : index
    %c0_27 = arith.constant 0 : index
    %c0_28 = arith.constant 0 : index
    %28 = vector.load %arg20[%c0_26, %c0_27, %c0_28] : memref<32x8x12xbf16, #tpu.memory_space<vmem>>, vector<1x8x12xbf16>
    %29 = vector.shape_cast %28 : vector<1x8x12xbf16> to vector<8x12xbf16>
    %30 = vector.shape_cast %27 : vector<8x12xbf16> to vector<1x8x12xbf16>
    tpu.vector_store %arg20[%c0_26, %c0_27, %c0_28], %30 {strides = array<i32>} : memref<32x8x12xbf16, #tpu.memory_space<vmem>>, vector<1x8x12xbf16>,
    %c0_29 = arith.constant 0 : index
    %c12 = arith.constant 12 : index
    %31 = vector.load %arg17[%c0_29, %c12] : memref<8x384xbf16, #tpu.memory_space<vmem>>, vector<8x12xbf16>
    %c1 = arith.constant 1 : index
    %c0_30 = arith.constant 0 : index
    %c0_31 = arith.constant 0 : index
    %32 = vector.load %arg19[%c1, %c0_30, %c0_31] : memref<32x8x12xbf16, #tpu.memory_space<vmem>>, vector<1x8x12xbf16>
    %33 = vector.shape_cast %32 : vector<1x8x12xbf16> to vector<8x12xbf16>
    %34 = vector.shape_cast %31 : vector<8x12xbf16> to vector<1x8x12xbf16>
    tpu.vector_store %arg19[%c1, %c0_30, %c0_31], %34 {strides = array<i32>} : memref<32x8x12xbf16, #tpu.memory_space<vmem>>, vector<1x8x12xbf16>,
    %c0_32 = arith.constant 0 : index
    %c12_33 = arith.constant 12 : index
    %35 = vector.load %arg18[%c0_32, %c12_33] : memref<8x384xbf16, #tpu.memory_space<vmem>>, vector<8x12xbf16>
    %c1_34 = arith.constant 1 : index
    %c0_35 = arith.constant 0 : index
    %c0_36 = arith.constant 0 : index
    %36 = vector.load %arg20[%c1_34, %c0_35, %c0_36] : memref<32x8x12xbf16, #tpu.memory_space<vmem>>, vector<1x8x12xbf16>
    %37 = vector.shape_cast %36 : vector<1x8x12xbf16> to vector<8x12xbf16>
    %38 = vector.shape_cast %35 : vector<8x12xbf16> to vector<1x8x12xbf16>
    tpu.vector_store %arg20[%c1_34, %c0_35, %c0_36], %38 {strides = array<i32>} : memref<32x8x12xbf16, #tpu.memory_space<vmem>>, vector<1x8x12xbf16>,
    %c0_37 = arith.constant 0 : index
    %c24 = arith.constant 24 : index
    %39 = vector.load %arg17[%c0_37, %c24] : memref<8x384xbf16, #tpu.memory_space<vmem>>, vector<8x12xbf16>
    %c2 = arith.constant 2 : index
    %c0_38 = arith.constant 0 : index
    %c0_39 = arith.constant 0 : index
    %40 = vector.load %arg19[%c2, %c0_38, %c0_39] : memref<32x8x12xbf16, #tpu.memory_space<vmem>>, vector<1x8x12xbf16>
    %41 = vector.shape_cast %40 : vector<1x8x12xbf16> to vector<8x12xbf16>
    %42 = vector.shape_cast %39 : vector<8x12xbf16> to vector<1x8x12xbf16>
    tpu.vector_store %arg19[%c2, %c0_38, %c0_39], %42 {strides = array<i32>} : memref<32x8x12xbf16, #tpu.memory_space<vmem>>, vector<1x8x12xbf16>,
    %c0_40 = arith.constant 0 : index
    %c24_41 = arith.constant 24 : index
    %43 = vector.load %arg18[%c0_40, %c24_41] : memref<8x384xbf16, #tpu.memory_space<vmem>>, vector<8x12xbf16>
    %c2_42 = arith.constant 2 : index
    %c0_43 = arith.constant 0 : index
    %c0_44 = arith.constant 0 : index
    %44 = vector.load %arg20[%c2_42, %c0_43, %c0_44] : memref<32x8x12xbf16, #tpu.memory_space<vmem>>, vector<1x8x12xbf16>
    %45 = vector.shape_cast %44 : vector<1x8x12xbf16> to vector<8x12xbf16>
    %46 = vector.shape_cast %43 : vector<8x12xbf16> to vector<1x8x12xbf16>
    tpu.vector_store %arg20[%c2_42, %c0_43, %c0_44], %46 {strides = array<i32>} : memref<32x8x12xbf16, #tpu.memory_space<vmem>>, vector<1x8x12xbf16>,
    %c0_45 = arith.constant 0 : index
    %c36 = arith.constant 36 : index
    %47 = vector.load %arg17[%c0_45, %c36] : memref<8x384xbf16, #tpu.memory_space<vmem>>, vector<8x12xbf16>
    %c3 = arith.constant 3 : index
    %c0_46 = arith.constant 0 : index
    %c0_47 = arith.constant 0 : index
    %48 = vector.load %arg19[%c3, %c0_46, %c0_47] : memref<32x8x12xbf16, #tpu.memory_space<vmem>>, vector<1x8x12xbf16>
    %49 = vector.shape_cast %48 : vector<1x8x12xbf16> to vector<8x12xbf16>
    %50 = vector.shape_cast %47 : vector<8x12xbf16> to vector<1x8x12xbf16>
    tpu.vector_store %arg19[%c3, %c0_46, %c0_47], %50 {strides = array<i32>} : memref<32x8x12xbf16, #tpu.memory_space<vmem>>, vector<1x8x12xbf16>,
    %c0_48 = arith.constant 0 : index
    %c36_49 = arith.constant 36 : index
    %51 = vector.load %arg18[%c0_48, %c36_49] : memref<8x384xbf16, #tpu.memory_space<vmem>>, vector<8x12xbf16>
    %c3_50 = arith.constant 3 : index
    %c0_51 = arith.constant 0 : index
    %c0_52 = arith.constant 0 : index
    %52 = vector.load %arg20[%c3_50, %c0_51, %c0_52] : memref<32x8x12xbf16, #tpu.memory_space<vmem>>, vector<1x8x12xbf16>
    %53 = vector.shape_cast %52 : vector<1x8x12xbf16> to vector<8x12xbf16>
    %54 = vector.shape_cast %51 : vector<8x12xbf16> to vector<1x8x12xbf16>
    tpu.vector_store %arg20[%c3_50, %c0_51, %c0_52], %54 {strides = array<i32>} : memref<32x8x12xbf16, #tpu.memory_space<vmem>>, vector<1x8x12xbf16>,
    %c0_53 = arith.constant 0 : index
    %c48 = arith.constant 48 : index
    %55 = vector.load %arg17[%c0_53, %c48] : memref<8x384xbf16, #tpu.memory_space<vmem>>, vector<8x12xbf16>
    %c4 = arith.constant 4 : index
    %c0_54 = arith.constant 0 : index
    %c0_55 = arith.constant 0 : index
    %56 = vector.load %arg19[%c4, %c0_54, %c0_55] : memref<32x8x12xbf16, #tpu.memory_space<vmem>>, vector<1x8x12xbf16>
    %57 = vector.shape_cast %56 : vector<1x8x12xbf16> to vector<8x12xbf16>
    %58 = vector.shape_cast %55 : vector<8x12xbf16> to vector<1x8x12xbf16>
    tpu.vector_store %arg19[%c4, %c0_54, %c0_55], %58 {strides = array<i32>} : memref<32x8x12xbf16, #tpu.memory_space<vmem>>, vector<1x8x12xbf16>,
    %c0_56 = arith.constant 0 : index
    %c48_57 = arith.constant 48 : index
    %59 = vector.load %arg18[%c0_56, %c48_57] : memref<8x384xbf16, #tpu.memory_space<vmem>>, vector<8x12xbf16>
    %c4_58 = arith.constant 4 : index
    %c0_59 = arith.constant 0 : index
    %c0_60 = arith.constant 0 : index
    %60 = vector.load %arg20[%c4_58, %c0_59, %c0_60] : memref<32x8x12xbf16, #tpu.memory_space<vmem>>, vector<1x8x12xbf16>
    %61 = vector.shape_cast %60 : vector<1x8x12xbf16> to vector<8x12xbf16>
    %62 = vector.shape_cast %59 : vector<8x12xbf16> to vector<1x8x12xbf16>
    tpu.vector_store %arg20[%c4_58, %c0_59, %c0_60], %62 {strides = array<i32>} : memref<32x8x12xbf16, #tpu.memory_space<vmem>>, vector<1x8x12xbf16>,
    %c0_61 = arith.constant 0 : index
    %c60 = arith.constant 60 : index
    %63 = vector.load %arg17[%c0_61, %c60] : memref<8x384xbf16, #tpu.memory_space<vmem>>, vector<8x12xbf16>
    %c5 = arith.constant 5 : index
    %c0_62 = arith.constant 0 : index
    %c0_63 = arith.constant 0 : index
    %64 = vector.load %arg19[%c5, %c0_62, %c0_63] : memref<32x8x12xbf16, #tpu.memory_space<vmem>>, vector<1x8x12xbf16>
    %65 = vector.shape_cast %64 : vector<1x8x12xbf16> to vector<8x12xbf16>
    %66 = vector.shape_cast %63 : vector<8x12xbf16> to vector<1x8x12xbf16>
    tpu.vector_store %arg19[%c5, %c0_62, %c0_63], %66 {strides = array<i32>} : memref<32x8x12xbf16, #tpu.memory_space<vmem>>, vector<1x8x12xbf16>,
    %c0_64 = arith.constant 0 : index
    %c60_65 = arith.constant 60 : index
    %67 = vector.load %arg18[%c0_64, %c60_65] : memref<8x384xbf16, #tpu.memory_space<vmem>>, vector<8x12xbf16>
    %c5_66 = arith.constant 5 : index
    %c0_67 = arith.constant 0 : index
    %c0_68 = arith.constant 0 : index
    %68 = vector.load %arg20[%c5_66, %c0_67, %c0_68] : memref<32x8x12xbf16, #tpu.memory_space<vmem>>, vector<1x8x12xbf16>
    %69 = vector.shape_cast %68 : vector<1x8x12xbf16> to vector<8x12xbf16>
    %70 = vector.shape_cast %67 : vector<8x12xbf16> to vector<1x8x12xbf16>
    tpu.vector_store %arg20[%c5_66, %c0_67, %c0_68], %70 {strides = array<i32>} : memref<32x8x12xbf16, #tpu.memory_space<vmem>>, vector<1x8x12xbf16>,
    %c0_69 = arith.constant 0 : index
    %c72 = arith.constant 72 : index
    %71 = vector.load %arg17[%c0_69, %c72] : memref<8x384xbf16, #tpu.memory_space<vmem>>, vector<8x12xbf16>
    %c6 = arith.constant 6 : index
    %c0_70 = arith.constant 0 : index
    %c0_71 = arith.constant 0 : index
    %72 = vector.load %arg19[%c6, %c0_70, %c0_71] : memref<32x8x12xbf16, #tpu.memory_space<vmem>>, vector<1x8x12xbf16>
    %73 = vector.shape_cast %72 : vector<1x8x12xbf16> to vector<8x12xbf16>
    %74 = vector.shape_cast %71 : vector<8x12xbf16> to vector<1x8x12xbf16>
    tpu.vector_store %arg19[%c6, %c0_70, %c0_71], %74 {strides = array<i32>} : memref<32x8x12xbf16, #tpu.memory_space<vmem>>, vector<1x8x12xbf16>,
    %c0_72 = arith.constant 0 : index
    %c72_73 = arith.constant 72 : index
    %75 = vector.load %arg18[%c0_72, %c72_73] : memref<8x384xbf16, #tpu.memory_space<vmem>>, vector<8x12xbf16>
    %c6_74 = arith.constant 6 : index
    %c0_75 = arith.constant 0 : index
    %c0_76 = arith.constant 0 : index
    %76 = vector.load %arg20[%c6_74, %c0_75, %c0_76] : memref<32x8x12xbf16, #tpu.memory_space<vmem>>, vector<1x8x12xbf16>
    %77 = vector.shape_cast %76 : vector<1x8x12xbf16> to vector<8x12xbf16>
    %78 = vector.shape_cast %75 : vector<8x12xbf16> to vector<1x8x12xbf16>
    tpu.vector_store %arg20[%c6_74, %c0_75, %c0_76], %78 {strides = array<i32>} : memref<32x8x12xbf16, #tpu.memory_space<vmem>>, vector<1x8x12xbf16>,
    %c0_77 = arith.constant 0 : index
    %c84 = arith.constant 84 : index
    %79 = vector.load %arg17[%c0_77, %c84] : memref<8x384xbf16, #tpu.memory_space<vmem>>, vector<8x12xbf16>
    %c7 = arith.constant 7 : index
    %c0_78 = arith.constant 0 : index
    %c0_79 = arith.constant 0 : index
    %80 = vector.load %arg19[%c7, %c0_78, %c0_79] : memref<32x8x12xbf16, #tpu.memory_space<vmem>>, vector<1x8x12xbf16>
    %81 = vector.shape_cast %80 : vector<1x8x12xbf16> to vector<8x12xbf16>
    %82 = vector.shape_cast %79 : vector<8x12xbf16> to vector<1x8x12xbf16>
    tpu.vector_store %arg19[%c7, %c0_78, %c0_79], %82 {strides = array<i32>} : memref<32x8x12xbf16, #tpu.memory_space<vmem>>, vector<1x8x12xbf16>,
    %c0_80 = arith.constant 0 : index
    %c84_81 = arith.constant 84 : index
    %83 = vector.load %arg18[%c0_80, %c84_81] : memref<8x384xbf16, #tpu.memory_space<vmem>>, vector<8x12xbf16>
    %c7_82 = arith.constant 7 : index
    %c0_83 = arith.constant 0 : index
    %c0_84 = arith.constant 0 : index
    %84 = vector.load %arg20[%c7_82, %c0_83, %c0_84] : memref<32x8x12xbf16, #tpu.memory_space<vmem>>, vector<1x8x12xbf16>
    %85 = vector.shape_cast %84 : vector<1x8x12xbf16> to vector<8x12xbf16>
    %86 = vector.shape_cast %83 : vector<8x12xbf16> to vector<1x8x12xbf16>
    tpu.vector_store %arg20[%c7_82, %c0_83, %c0_84], %86 {strides = array<i32>} : memref<32x8x12xbf16, #tpu.memory_space<vmem>>, vector<1x8x12xbf16>,
    %c0_85 = arith.constant 0 : index
    %c96 = arith.constant 96 : index
    %87 = vector.load %arg17[%c0_85, %c96] : memref<8x384xbf16, #tpu.memory_space<vmem>>, vector<8x12xbf16>
    %c8 = arith.constant 8 : index
    %c0_86 = arith.constant 0 : index
    %c0_87 = arith.constant 0 : index
    %88 = vector.load %arg19[%c8, %c0_86, %c0_87] : memref<32x8x12xbf16, #tpu.memory_space<vmem>>, vector<1x8x12xbf16>
    %89 = vector.shape_cast %88 : vector<1x8x12xbf16> to vector<8x12xbf16>
    %90 = vector.shape_cast %87 : vector<8x12xbf16> to vector<1x8x12xbf16>
    tpu.vector_store %arg19[%c8, %c0_86, %c0_87], %90 {strides = array<i32>} : memref<32x8x12xbf16, #tpu.memory_space<vmem>>, vector<1x8x12xbf16>,
    %c0_88 = arith.constant 0 : index
    %c96_89 = arith.constant 96 : index
    %91 = vector.load %arg18[%c0_88, %c96_89] : memref<8x384xbf16, #tpu.memory_space<vmem>>, vector<8x12xbf16>
    %c8_90 = arith.constant 8 : index
    %c0_91 = arith.constant 0 : index
    %c0_92 = arith.constant 0 : index
    %92 = vector.load %arg20[%c8_90, %c0_91, %c0_92] : memref<32x8x12xbf16, #tpu.memory_space<vmem>>, vector<1x8x12xbf16>
    %93 = vector.shape_cast %92 : vector<1x8x12xbf16> to vector<8x12xbf16>
    %94 = vector.shape_cast %91 : vector<8x12xbf16> to vector<1x8x12xbf16>
    tpu.vector_store %arg20[%c8_90, %c0_91, %c0_92], %94 {strides = array<i32>} : memref<32x8x12xbf16, #tpu.memory_space<vmem>>, vector<1x8x12xbf16>,
    %c0_93 = arith.constant 0 : index
    %c108 = arith.constant 108 : index
    %95 = vector.load %arg17[%c0_93, %c108] : memref<8x384xbf16, #tpu.memory_space<vmem>>, vector<8x12xbf16>
    %c9 = arith.constant 9 : index
    %c0_94 = arith.constant 0 : index
    %c0_95 = arith.constant 0 : index
    %96 = vector.load %arg19[%c9, %c0_94, %c0_95] : memref<32x8x12xbf16, #tpu.memory_space<vmem>>, vector<1x8x12xbf16>
    %97 = vector.shape_cast %96 : vector<1x8x12xbf16> to vector<8x12xbf16>
    %98 = vector.shape_cast %95 : vector<8x12xbf16> to vector<1x8x12xbf16>
    tpu.vector_store %arg19[%c9, %c0_94, %c0_95], %98 {strides = array<i32>} : memref<32x8x12xbf16, #tpu.memory_space<vmem>>, vector<1x8x12xbf16>,
    %c0_96 = arith.constant 0 : index
    %c108_97 = arith.constant 108 : index
    %99 = vector.load %arg18[%c0_96, %c108_97] : memref<8x384xbf16, #tpu.memory_space<vmem>>, vector<8x12xbf16>
    %c9_98 = arith.constant 9 : index
    %c0_99 = arith.constant 0 : index
    %c0_100 = arith.constant 0 : index
    %100 = vector.load %arg20[%c9_98, %c0_99, %c0_100] : memref<32x8x12xbf16, #tpu.memory_space<vmem>>, vector<1x8x12xbf16>
    %101 = vector.shape_cast %100 : vector<1x8x12xbf16> to vector<8x12xbf16>
    %102 = vector.shape_cast %99 : vector<8x12xbf16> to vector<1x8x12xbf16>
    tpu.vector_store %arg20[%c9_98, %c0_99, %c0_100], %102 {strides = array<i32>} : memref<32x8x12xbf16, #tpu.memory_space<vmem>>, vector<1x8x12xbf16>,
    %c0_101 = arith.constant 0 : index
    %c120 = arith.constant 120 : index
    %103 = vector.load %arg17[%c0_101, %c120] : memref<8x384xbf16, #tpu.memory_space<vmem>>, vector<8x12xbf16>
    %c10 = arith.constant 10 : index
    %c0_102 = arith.constant 0 : index
    %c0_103 = arith.constant 0 : index
    %104 = vector.load %arg19[%c10, %c0_102, %c0_103] : memref<32x8x12xbf16, #tpu.memory_space<vmem>>, vector<1x8x12xbf16>
    %105 = vector.shape_cast %104 : vector<1x8x12xbf16> to vector<8x12xbf16>
    %106 = vector.shape_cast %103 : vector<8x12xbf16> to vector<1x8x12xbf16>
    tpu.vector_store %arg19[%c10, %c0_102, %c0_103], %106 {strides = array<i32>} : memref<32x8x12xbf16, #tpu.memory_space<vmem>>, vector<1x8x12xbf16>,
    %c0_104 = arith.constant 0 : index
    %c120_105 = arith.constant 120 : index
    %107 = vector.load %arg18[%c0_104, %c120_105] : memref<8x384xbf16, #tpu.memory_space<vmem>>, vector<8x12xbf16>
    %c10_106 = arith.constant 10 : index
    %c0_107 = arith.constant 0 : index
    %c0_108 = arith.constant 0 : index
    %108 = vector.load %arg20[%c10_106, %c0_107, %c0_108] : memref<32x8x12xbf16, #tpu.memory_space<vmem>>, vector<1x8x12xbf16>
    %109 = vector.shape_cast %108 : vector<1x8x12xbf16> to vector<8x12xbf16>
    %110 = vector.shape_cast %107 : vector<8x12xbf16> to vector<1x8x12xbf16>
    tpu.vector_store %arg20[%c10_106, %c0_107, %c0_108], %110 {strides = array<i32>} : memref<32x8x12xbf16, #tpu.memory_space<vmem>>, vector<1x8x12xbf16>,
    %c0_109 = arith.constant 0 : index
    %c132 = arith.constant 132 : index
    %111 = vector.load %arg17[%c0_109, %c132] : memref<8x384xbf16, #tpu.memory_space<vmem>>, vector<8x12xbf16>
    %c11 = arith.constant 11 : index
    %c0_110 = arith.constant 0 : index
    %c0_111 = arith.constant 0 : index
    %112 = vector.load %arg19[%c11, %c0_110, %c0_111] : memref<32x8x12xbf16, #tpu.memory_space<vmem>>, vector<1x8x12xbf16>
    %113 = vector.shape_cast %112 : vector<1x8x12xbf16> to vector<8x12xbf16>
    %114 = vector.shape_cast %111 : vector<8x12xbf16> to vector<1x8x12xbf16>
    tpu.vector_store %arg19[%c11, %c0_110, %c0_111], %114 {strides = array<i32>} : memref<32x8x12xbf16, #tpu.memory_space<vmem>>, vector<1x8x12xbf16>,
    %c0_112 = arith.constant 0 : index
    %c132_113 = arith.constant 132 : index
    %115 = vector.load %arg18[%c0_112, %c132_113] : memref<8x384xbf16, #tpu.memory_space<vmem>>, vector<8x12xbf16>
    %c11_114 = arith.constant 11 : index
    %c0_115 = arith.constant 0 : index
    %c0_116 = arith.constant 0 : index
    %116 = vector.load %arg20[%c11_114, %c0_115, %c0_116] : memref<32x8x12xbf16, #tpu.memory_space<vmem>>, vector<1x8x12xbf16>
    %117 = vector.shape_cast %116 : vector<1x8x12xbf16> to vector<8x12xbf16>
    %118 = vector.shape_cast %115 : vector<8x12xbf16> to vector<1x8x12xbf16>
    tpu.vector_store %arg20[%c11_114, %c0_115, %c0_116], %118 {strides = array<i32>} : memref<32x8x12xbf16, #tpu.memory_space<vmem>>, vector<1x8x12xbf16>,
    %c0_117 = arith.constant 0 : index
    %c144 = arith.constant 144 : index
    %119 = vector.load %arg17[%c0_117, %c144] : memref<8x384xbf16, #tpu.memory_space<vmem>>, vector<8x12xbf16>
    %c12_118 = arith.constant 12 : index
    %c0_119 = arith.constant 0 : index
    %c0_120 = arith.constant 0 : index
    %120 = vector.load %arg19[%c12_118, %c0_119, %c0_120] : memref<32x8x12xbf16, #tpu.memory_space<vmem>>, vector<1x8x12xbf16>
    %121 = vector.shape_cast %120 : vector<1x8x12xbf16> to vector<8x12xbf16>
    %122 = vector.shape_cast %119 : vector<8x12xbf16> to vector<1x8x12xbf16>
    tpu.vector_store %arg19[%c12_118, %c0_119, %c0_120], %122 {strides = array<i32>} : memref<32x8x12xbf16, #tpu.memory_space<vmem>>, vector<1x8x12xbf16>,
    %c0_121 = arith.constant 0 : index
    %c144_122 = arith.constant 144 : index
    %123 = vector.load %arg18[%c0_121, %c144_122] : memref<8x384xbf16, #tpu.memory_space<vmem>>, vector<8x12xbf16>
    %c12_123 = arith.constant 12 : index
    %c0_124 = arith.constant 0 : index
    %c0_125 = arith.constant 0 : index
    %124 = vector.load %arg20[%c12_123, %c0_124, %c0_125] : memref<32x8x12xbf16, #tpu.memory_space<vmem>>, vector<1x8x12xbf16>
    %125 = vector.shape_cast %124 : vector<1x8x12xbf16> to vector<8x12xbf16>
    %126 = vector.shape_cast %123 : vector<8x12xbf16> to vector<1x8x12xbf16>
    tpu.vector_store %arg20[%c12_123, %c0_124, %c0_125], %126 {strides = array<i32>} : memref<32x8x12xbf16, #tpu.memory_space<vmem>>, vector<1x8x12xbf16>,
    %c0_126 = arith.constant 0 : index
    %c156 = arith.constant 156 : index
    %127 = vector.load %arg17[%c0_126, %c156] : memref<8x384xbf16, #tpu.memory_space<vmem>>, vector<8x12xbf16>
    %c13 = arith.constant 13 : index
    %c0_127 = arith.constant 0 : index
    %c0_128 = arith.constant 0 : index
    %128 = vector.load %arg19[%c13, %c0_127, %c0_128] : memref<32x8x12xbf16, #tpu.memory_space<vmem>>, vector<1x8x12xbf16>
    %129 = vector.shape_cast %128 : vector<1x8x12xbf16> to vector<8x12xbf16>
    %130 = vector.shape_cast %127 : vector<8x12xbf16> to vector<1x8x12xbf16>
    tpu.vector_store %arg19[%c13, %c0_127, %c0_128], %130 {strides = array<i32>} : memref<32x8x12xbf16, #tpu.memory_space<vmem>>, vector<1x8x12xbf16>,
    %c0_129 = arith.constant 0 : index
    %c156_130 = arith.constant 156 : index
    %131 = vector.load %arg18[%c0_129, %c156_130] : memref<8x384xbf16, #tpu.memory_space<vmem>>, vector<8x12xbf16>
    %c13_131 = arith.constant 13 : index
    %c0_132 = arith.constant 0 : index
    %c0_133 = arith.constant 0 : index
    %132 = vector.load %arg20[%c13_131, %c0_132, %c0_133] : memref<32x8x12xbf16, #tpu.memory_space<vmem>>, vector<1x8x12xbf16>
    %133 = vector.shape_cast %132 : vector<1x8x12xbf16> to vector<8x12xbf16>
    %134 = vector.shape_cast %131 : vector<8x12xbf16> to vector<1x8x12xbf16>
    tpu.vector_store %arg20[%c13_131, %c0_132, %c0_133], %134 {strides = array<i32>} : memref<32x8x12xbf16, #tpu.memory_space<vmem>>, vector<1x8x12xbf16>,
    %c0_134 = arith.constant 0 : index
    %c168 = arith.constant 168 : index
    %135 = vector.load %arg17[%c0_134, %c168] : memref<8x384xbf16, #tpu.memory_space<vmem>>, vector<8x12xbf16>
    %c14 = arith.constant 14 : index
    %c0_135 = arith.constant 0 : index
    %c0_136 = arith.constant 0 : index
    %136 = vector.load %arg19[%c14, %c0_135, %c0_136] : memref<32x8x12xbf16, #tpu.memory_space<vmem>>, vector<1x8x12xbf16>
    %137 = vector.shape_cast %136 : vector<1x8x12xbf16> to vector<8x12xbf16>
    %138 = vector.shape_cast %135 : vector<8x12xbf16> to vector<1x8x12xbf16>
    tpu.vector_store %arg19[%c14, %c0_135, %c0_136], %138 {strides = array<i32>} : memref<32x8x12xbf16, #tpu.memory_space<vmem>>, vector<1x8x12xbf16>,
    %c0_137 = arith.constant 0 : index
    %c168_138 = arith.constant 168 : index
    %139 = vector.load %arg18[%c0_137, %c168_138] : memref<8x384xbf16, #tpu.memory_space<vmem>>, vector<8x12xbf16>
    %c14_139 = arith.constant 14 : index
    %c0_140 = arith.constant 0 : index
    %c0_141 = arith.constant 0 : index
    %140 = vector.load %arg20[%c14_139, %c0_140, %c0_141] : memref<32x8x12xbf16, #tpu.memory_space<vmem>>, vector<1x8x12xbf16>
    %141 = vector.shape_cast %140 : vector<1x8x12xbf16> to vector<8x12xbf16>
    %142 = vector.shape_cast %139 : vector<8x12xbf16> to vector<1x8x12xbf16>
    tpu.vector_store %arg20[%c14_139, %c0_140, %c0_141], %142 {strides = array<i32>} : memref<32x8x12xbf16, #tpu.memory_space<vmem>>, vector<1x8x12xbf16>,
    %c0_142 = arith.constant 0 : index
    %c180 = arith.constant 180 : index
    %143 = vector.load %arg17[%c0_142, %c180] : memref<8x384xbf16, #tpu.memory_space<vmem>>, vector<8x12xbf16>
    %c15 = arith.constant 15 : index
    %c0_143 = arith.constant 0 : index
    %c0_144 = arith.constant 0 : index
    %144 = vector.load %arg19[%c15, %c0_143, %c0_144] : memref<32x8x12xbf16, #tpu.memory_space<vmem>>, vector<1x8x12xbf16>
    %145 = vector.shape_cast %144 : vector<1x8x12xbf16> to vector<8x12xbf16>
    %146 = vector.shape_cast %143 : vector<8x12xbf16> to vector<1x8x12xbf16>
    tpu.vector_store %arg19[%c15, %c0_143, %c0_144], %146 {strides = array<i32>} : memref<32x8x12xbf16, #tpu.memory_space<vmem>>, vector<1x8x12xbf16>,
    %c0_145 = arith.constant 0 : index
    %c180_146 = arith.constant 180 : index
    %147 = vector.load %arg18[%c0_145, %c180_146] : memref<8x384xbf16, #tpu.memory_space<vmem>>, vector<8x12xbf16>
    %c15_147 = arith.constant 15 : index
    %c0_148 = arith.constant 0 : index
    %c0_149 = arith.constant 0 : index
    %148 = vector.load %arg20[%c15_147, %c0_148, %c0_149] : memref<32x8x12xbf16, #tpu.memory_space<vmem>>, vector<1x8x12xbf16>
    %149 = vector.shape_cast %148 : vector<1x8x12xbf16> to vector<8x12xbf16>
    %150 = vector.shape_cast %147 : vector<8x12xbf16> to vector<1x8x12xbf16>
    tpu.vector_store %arg20[%c15_147, %c0_148, %c0_149], %150 {strides = array<i32>} : memref<32x8x12xbf16, #tpu.memory_space<vmem>>, vector<1x8x12xbf16>,
    %c0_150 = arith.constant 0 : index
    %c192 = arith.constant 192 : index
    %151 = vector.load %arg17[%c0_150, %c192] : memref<8x384xbf16, #tpu.memory_space<vmem>>, vector<8x12xbf16>
    %c16 = arith.constant 16 : index
    %c0_151 = arith.constant 0 : index
    %c0_152 = arith.constant 0 : index
    %152 = vector.load %arg19[%c16, %c0_151, %c0_152] : memref<32x8x12xbf16, #tpu.memory_space<vmem>>, vector<1x8x12xbf16>
    %153 = vector.shape_cast %152 : vector<1x8x12xbf16> to vector<8x12xbf16>
    %154 = vector.shape_cast %151 : vector<8x12xbf16> to vector<1x8x12xbf16>
    tpu.vector_store %arg19[%c16, %c0_151, %c0_152], %154 {strides = array<i32>} : memref<32x8x12xbf16, #tpu.memory_space<vmem>>, vector<1x8x12xbf16>,
    %c0_153 = arith.constant 0 : index
    %c192_154 = arith.constant 192 : index
    %155 = vector.load %arg18[%c0_153, %c192_154] : memref<8x384xbf16, #tpu.memory_space<vmem>>, vector<8x12xbf16>
    %c16_155 = arith.constant 16 : index
    %c0_156 = arith.constant 0 : index
    %c0_157 = arith.constant 0 : index
    %156 = vector.load %arg20[%c16_155, %c0_156, %c0_157] : memref<32x8x12xbf16, #tpu.memory_space<vmem>>, vector<1x8x12xbf16>
    %157 = vector.shape_cast %156 : vector<1x8x12xbf16> to vector<8x12xbf16>
    %158 = vector.shape_cast %155 : vector<8x12xbf16> to vector<1x8x12xbf16>
    tpu.vector_store %arg20[%c16_155, %c0_156, %c0_157], %158 {strides = array<i32>} : memref<32x8x12xbf16, #tpu.memory_space<vmem>>, vector<1x8x12xbf16>,
    %c0_158 = arith.constant 0 : index
    %c204 = arith.constant 204 : index
    %159 = vector.load %arg17[%c0_158, %c204] : memref<8x384xbf16, #tpu.memory_space<vmem>>, vector<8x12xbf16>
    %c17 = arith.constant 17 : index
    %c0_159 = arith.constant 0 : index
    %c0_160 = arith.constant 0 : index
    %160 = vector.load %arg19[%c17, %c0_159, %c0_160] : memref<32x8x12xbf16, #tpu.memory_space<vmem>>, vector<1x8x12xbf16>
    %161 = vector.shape_cast %160 : vector<1x8x12xbf16> to vector<8x12xbf16>
    %162 = vector.shape_cast %159 : vector<8x12xbf16> to vector<1x8x12xbf16>
    tpu.vector_store %arg19[%c17, %c0_159, %c0_160], %162 {strides = array<i32>} : memref<32x8x12xbf16, #tpu.memory_space<vmem>>, vector<1x8x12xbf16>,
    %c0_161 = arith.constant 0 : index
    %c204_162 = arith.constant 204 : index
    %163 = vector.load %arg18[%c0_161, %c204_162] : memref<8x384xbf16, #tpu.memory_space<vmem>>, vector<8x12xbf16>
    %c17_163 = arith.constant 17 : index
    %c0_164 = arith.constant 0 : index
    %c0_165 = arith.constant 0 : index
    %164 = vector.load %arg20[%c17_163, %c0_164, %c0_165] : memref<32x8x12xbf16, #tpu.memory_space<vmem>>, vector<1x8x12xbf16>
    %165 = vector.shape_cast %164 : vector<1x8x12xbf16> to vector<8x12xbf16>
    %166 = vector.shape_cast %163 : vector<8x12xbf16> to vector<1x8x12xbf16>
    tpu.vector_store %arg20[%c17_163, %c0_164, %c0_165], %166 {strides = array<i32>} : memref<32x8x12xbf16, #tpu.memory_space<vmem>>, vector<1x8x12xbf16>,
    %c0_166 = arith.constant 0 : index
    %c216 = arith.constant 216 : index
    %167 = vector.load %arg17[%c0_166, %c216] : memref<8x384xbf16, #tpu.memory_space<vmem>>, vector<8x12xbf16>
    %c18 = arith.constant 18 : index
    %c0_167 = arith.constant 0 : index
    %c0_168 = arith.constant 0 : index
    %168 = vector.load %arg19[%c18, %c0_167, %c0_168] : memref<32x8x12xbf16, #tpu.memory_space<vmem>>, vector<1x8x12xbf16>
    %169 = vector.shape_cast %168 : vector<1x8x12xbf16> to vector<8x12xbf16>
    %170 = vector.shape_cast %167 : vector<8x12xbf16> to vector<1x8x12xbf16>
    tpu.vector_store %arg19[%c18, %c0_167, %c0_168], %170 {strides = array<i32>} : memref<32x8x12xbf16, #tpu.memory_space<vmem>>, vector<1x8x12xbf16>,
    %c0_169 = arith.constant 0 : index
    %c216_170 = arith.constant 216 : index
    %171 = vector.load %arg18[%c0_169, %c216_170] : memref<8x384xbf16, #tpu.memory_space<vmem>>, vector<8x12xbf16>
    %c18_171 = arith.constant 18 : index
    %c0_172 = arith.constant 0 : index
    %c0_173 = arith.constant 0 : index
    %172 = vector.load %arg20[%c18_171, %c0_172, %c0_173] : memref<32x8x12xbf16, #tpu.memory_space<vmem>>, vector<1x8x12xbf16>
    %173 = vector.shape_cast %172 : vector<1x8x12xbf16> to vector<8x12xbf16>
    %174 = vector.shape_cast %171 : vector<8x12xbf16> to vector<1x8x12xbf16>
    tpu.vector_store %arg20[%c18_171, %c0_172, %c0_173], %174 {strides = array<i32>} : memref<32x8x12xbf16, #tpu.memory_space<vmem>>, vector<1x8x12xbf16>,
    %c0_174 = arith.constant 0 : index
    %c228 = arith.constant 228 : index
    %175 = vector.load %arg17[%c0_174, %c228] : memref<8x384xbf16, #tpu.memory_space<vmem>>, vector<8x12xbf16>
    %c19 = arith.constant 19 : index
    %c0_175 = arith.constant 0 : index
    %c0_176 = arith.constant 0 : index
    %176 = vector.load %arg19[%c19, %c0_175, %c0_176] : memref<32x8x12xbf16, #tpu.memory_space<vmem>>, vector<1x8x12xbf16>
    %177 = vector.shape_cast %176 : vector<1x8x12xbf16> to vector<8x12xbf16>
    %178 = vector.shape_cast %175 : vector<8x12xbf16> to vector<1x8x12xbf16>
    tpu.vector_store %arg19[%c19, %c0_175, %c0_176], %178 {strides = array<i32>} : memref<32x8x12xbf16, #tpu.memory_space<vmem>>, vector<1x8x12xbf16>,
    %c0_177 = arith.constant 0 : index
    %c228_178 = arith.constant 228 : index
    %179 = vector.load %arg18[%c0_177, %c228_178] : memref<8x384xbf16, #tpu.memory_space<vmem>>, vector<8x12xbf16>
    %c19_179 = arith.constant 19 : index
    %c0_180 = arith.constant 0 : index
    %c0_181 = arith.constant 0 : index
    %180 = vector.load %arg20[%c19_179, %c0_180, %c0_181] : memref<32x8x12xbf16, #tpu.memory_space<vmem>>, vector<1x8x12xbf16>
    %181 = vector.shape_cast %180 : vector<1x8x12xbf16> to vector<8x12xbf16>
    %182 = vector.shape_cast %179 : vector<8x12xbf16> to vector<1x8x12xbf16>
    tpu.vector_store %arg20[%c19_179, %c0_180, %c0_181], %182 {strides = array<i32>} : memref<32x8x12xbf16, #tpu.memory_space<vmem>>, vector<1x8x12xbf16>,
    %c0_182 = arith.constant 0 : index
    %c240 = arith.constant 240 : index
    %183 = vector.load %arg17[%c0_182, %c240] : memref<8x384xbf16, #tpu.memory_space<vmem>>, vector<8x12xbf16>
    %c20 = arith.constant 20 : index
    %c0_183 = arith.constant 0 : index
    %c0_184 = arith.constant 0 : index
    %184 = vector.load %arg19[%c20, %c0_183, %c0_184] : memref<32x8x12xbf16, #tpu.memory_space<vmem>>, vector<1x8x12xbf16>
    %185 = vector.shape_cast %184 : vector<1x8x12xbf16> to vector<8x12xbf16>
    %186 = vector.shape_cast %183 : vector<8x12xbf16> to vector<1x8x12xbf16>
    tpu.vector_store %arg19[%c20, %c0_183, %c0_184], %186 {strides = array<i32>} : memref<32x8x12xbf16, #tpu.memory_space<vmem>>, vector<1x8x12xbf16>,
    %c0_185 = arith.constant 0 : index
    %c240_186 = arith.constant 240 : index
    %187 = vector.load %arg18[%c0_185, %c240_186] : memref<8x384xbf16, #tpu.memory_space<vmem>>, vector<8x12xbf16>
    %c20_187 = arith.constant 20 : index
    %c0_188 = arith.constant 0 : index
    %c0_189 = arith.constant 0 : index
    %188 = vector.load %arg20[%c20_187, %c0_188, %c0_189] : memref<32x8x12xbf16, #tpu.memory_space<vmem>>, vector<1x8x12xbf16>
    %189 = vector.shape_cast %188 : vector<1x8x12xbf16> to vector<8x12xbf16>
    %190 = vector.shape_cast %187 : vector<8x12xbf16> to vector<1x8x12xbf16>
    tpu.vector_store %arg20[%c20_187, %c0_188, %c0_189], %190 {strides = array<i32>} : memref<32x8x12xbf16, #tpu.memory_space<vmem>>, vector<1x8x12xbf16>,
    %c0_190 = arith.constant 0 : index
    %c252 = arith.constant 252 : index
    %191 = vector.load %arg17[%c0_190, %c252] : memref<8x384xbf16, #tpu.memory_space<vmem>>, vector<8x12xbf16>
    %c21 = arith.constant 21 : index
    %c0_191 = arith.constant 0 : index
    %c0_192 = arith.constant 0 : index
    %192 = vector.load %arg19[%c21, %c0_191, %c0_192] : memref<32x8x12xbf16, #tpu.memory_space<vmem>>, vector<1x8x12xbf16>
    %193 = vector.shape_cast %192 : vector<1x8x12xbf16> to vector<8x12xbf16>
    %194 = vector.shape_cast %191 : vector<8x12xbf16> to vector<1x8x12xbf16>
    tpu.vector_store %arg19[%c21, %c0_191, %c0_192], %194 {strides = array<i32>} : memref<32x8x12xbf16, #tpu.memory_space<vmem>>, vector<1x8x12xbf16>,
    %c0_193 = arith.constant 0 : index
    %c252_194 = arith.constant 252 : index
    %195 = vector.load %arg18[%c0_193, %c252_194] : memref<8x384xbf16, #tpu.memory_space<vmem>>, vector<8x12xbf16>
    %c21_195 = arith.constant 21 : index
    %c0_196 = arith.constant 0 : index
    %c0_197 = arith.constant 0 : index
    %196 = vector.load %arg20[%c21_195, %c0_196, %c0_197] : memref<32x8x12xbf16, #tpu.memory_space<vmem>>, vector<1x8x12xbf16>
    %197 = vector.shape_cast %196 : vector<1x8x12xbf16> to vector<8x12xbf16>
    %198 = vector.shape_cast %195 : vector<8x12xbf16> to vector<1x8x12xbf16>
    tpu.vector_store %arg20[%c21_195, %c0_196, %c0_197], %198 {strides = array<i32>} : memref<32x8x12xbf16, #tpu.memory_space<vmem>>, vector<1x8x12xbf16>,
    %c0_198 = arith.constant 0 : index
    %c264 = arith.constant 264 : index
    %199 = vector.load %arg17[%c0_198, %c264] : memref<8x384xbf16, #tpu.memory_space<vmem>>, vector<8x12xbf16>
    %c22 = arith.constant 22 : index
    %c0_199 = arith.constant 0 : index
    %c0_200 = arith.constant 0 : index
    %200 = vector.load %arg19[%c22, %c0_199, %c0_200] : memref<32x8x12xbf16, #tpu.memory_space<vmem>>, vector<1x8x12xbf16>
    %201 = vector.shape_cast %200 : vector<1x8x12xbf16> to vector<8x12xbf16>
    %202 = vector.shape_cast %199 : vector<8x12xbf16> to vector<1x8x12xbf16>
    tpu.vector_store %arg19[%c22, %c0_199, %c0_200], %202 {strides = array<i32>} : memref<32x8x12xbf16, #tpu.memory_space<vmem>>, vector<1x8x12xbf16>,
    %c0_201 = arith.constant 0 : index
    %c264_202 = arith.constant 264 : index
    %203 = vector.load %arg18[%c0_201, %c264_202] : memref<8x384xbf16, #tpu.memory_space<vmem>>, vector<8x12xbf16>
    %c22_203 = arith.constant 22 : index
    %c0_204 = arith.constant 0 : index
    %c0_205 = arith.constant 0 : index
    %204 = vector.load %arg20[%c22_203, %c0_204, %c0_205] : memref<32x8x12xbf16, #tpu.memory_space<vmem>>, vector<1x8x12xbf16>
    %205 = vector.shape_cast %204 : vector<1x8x12xbf16> to vector<8x12xbf16>
    %206 = vector.shape_cast %203 : vector<8x12xbf16> to vector<1x8x12xbf16>
    tpu.vector_store %arg20[%c22_203, %c0_204, %c0_205], %206 {strides = array<i32>} : memref<32x8x12xbf16, #tpu.memory_space<vmem>>, vector<1x8x12xbf16>,
    %c0_206 = arith.constant 0 : index
    %c276 = arith.constant 276 : index
    %207 = vector.load %arg17[%c0_206, %c276] : memref<8x384xbf16, #tpu.memory_space<vmem>>, vector<8x12xbf16>
    %c23 = arith.constant 23 : index
    %c0_207 = arith.constant 0 : index
    %c0_208 = arith.constant 0 : index
    %208 = vector.load %arg19[%c23, %c0_207, %c0_208] : memref<32x8x12xbf16, #tpu.memory_space<vmem>>, vector<1x8x12xbf16>
    %209 = vector.shape_cast %208 : vector<1x8x12xbf16> to vector<8x12xbf16>
    %210 = vector.shape_cast %207 : vector<8x12xbf16> to vector<1x8x12xbf16>
    tpu.vector_store %arg19[%c23, %c0_207, %c0_208], %210 {strides = array<i32>} : memref<32x8x12xbf16, #tpu.memory_space<vmem>>, vector<1x8x12xbf16>,
    %c0_209 = arith.constant 0 : index
    %c276_210 = arith.constant 276 : index
    %211 = vector.load %arg18[%c0_209, %c276_210] : memref<8x384xbf16, #tpu.memory_space<vmem>>, vector<8x12xbf16>
    %c23_211 = arith.constant 23 : index
    %c0_212 = arith.constant 0 : index
    %c0_213 = arith.constant 0 : index
    %212 = vector.load %arg20[%c23_211, %c0_212, %c0_213] : memref<32x8x12xbf16, #tpu.memory_space<vmem>>, vector<1x8x12xbf16>
    %213 = vector.shape_cast %212 : vector<1x8x12xbf16> to vector<8x12xbf16>
    %214 = vector.shape_cast %211 : vector<8x12xbf16> to vector<1x8x12xbf16>
    tpu.vector_store %arg20[%c23_211, %c0_212, %c0_213], %214 {strides = array<i32>} : memref<32x8x12xbf16, #tpu.memory_space<vmem>>, vector<1x8x12xbf16>,
    %c0_214 = arith.constant 0 : index
    %c288 = arith.constant 288 : index
    %215 = vector.load %arg17[%c0_214, %c288] : memref<8x384xbf16, #tpu.memory_space<vmem>>, vector<8x12xbf16>
    %c24_215 = arith.constant 24 : index
    %c0_216 = arith.constant 0 : index
    %c0_217 = arith.constant 0 : index
    %216 = vector.load %arg19[%c24_215, %c0_216, %c0_217] : memref<32x8x12xbf16, #tpu.memory_space<vmem>>, vector<1x8x12xbf16>
    %217 = vector.shape_cast %216 : vector<1x8x12xbf16> to vector<8x12xbf16>
    %218 = vector.shape_cast %215 : vector<8x12xbf16> to vector<1x8x12xbf16>
    tpu.vector_store %arg19[%c24_215, %c0_216, %c0_217], %218 {strides = array<i32>} : memref<32x8x12xbf16, #tpu.memory_space<vmem>>, vector<1x8x12xbf16>,
    %c0_218 = arith.constant 0 : index
    %c288_219 = arith.constant 288 : index
    %219 = vector.load %arg18[%c0_218, %c288_219] : memref<8x384xbf16, #tpu.memory_space<vmem>>, vector<8x12xbf16>
    %c24_220 = arith.constant 24 : index
    %c0_221 = arith.constant 0 : index
    %c0_222 = arith.constant 0 : index
    %220 = vector.load %arg20[%c24_220, %c0_221, %c0_222] : memref<32x8x12xbf16, #tpu.memory_space<vmem>>, vector<1x8x12xbf16>
    %221 = vector.shape_cast %220 : vector<1x8x12xbf16> to vector<8x12xbf16>
    %222 = vector.shape_cast %219 : vector<8x12xbf16> to vector<1x8x12xbf16>
    tpu.vector_store %arg20[%c24_220, %c0_221, %c0_222], %222 {strides = array<i32>} : memref<32x8x12xbf16, #tpu.memory_space<vmem>>, vector<1x8x12xbf16>,
    %c0_223 = arith.constant 0 : index
    %c300 = arith.constant 300 : index
    %223 = vector.load %arg17[%c0_223, %c300] : memref<8x384xbf16, #tpu.memory_space<vmem>>, vector<8x12xbf16>
    %c25 = arith.constant 25 : index
    %c0_224 = arith.constant 0 : index
    %c0_225 = arith.constant 0 : index
    %224 = vector.load %arg19[%c25, %c0_224, %c0_225] : memref<32x8x12xbf16, #tpu.memory_space<vmem>>, vector<1x8x12xbf16>
    %225 = vector.shape_cast %224 : vector<1x8x12xbf16> to vector<8x12xbf16>
    %226 = vector.shape_cast %223 : vector<8x12xbf16> to vector<1x8x12xbf16>
    tpu.vector_store %arg19[%c25, %c0_224, %c0_225], %226 {strides = array<i32>} : memref<32x8x12xbf16, #tpu.memory_space<vmem>>, vector<1x8x12xbf16>,
    %c0_226 = arith.constant 0 : index
    %c300_227 = arith.constant 300 : index
    %227 = vector.load %arg18[%c0_226, %c300_227] : memref<8x384xbf16, #tpu.memory_space<vmem>>, vector<8x12xbf16>
    %c25_228 = arith.constant 25 : index
    %c0_229 = arith.constant 0 : index
    %c0_230 = arith.constant 0 : index
    %228 = vector.load %arg20[%c25_228, %c0_229, %c0_230] : memref<32x8x12xbf16, #tpu.memory_space<vmem>>, vector<1x8x12xbf16>
    %229 = vector.shape_cast %228 : vector<1x8x12xbf16> to vector<8x12xbf16>
    %230 = vector.shape_cast %227 : vector<8x12xbf16> to vector<1x8x12xbf16>
    tpu.vector_store %arg20[%c25_228, %c0_229, %c0_230], %230 {strides = array<i32>} : memref<32x8x12xbf16, #tpu.memory_space<vmem>>, vector<1x8x12xbf16>,
    %c0_231 = arith.constant 0 : index
    %c312 = arith.constant 312 : index
    %231 = vector.load %arg17[%c0_231, %c312] : memref<8x384xbf16, #tpu.memory_space<vmem>>, vector<8x12xbf16>
    %c26 = arith.constant 26 : index
    %c0_232 = arith.constant 0 : index
    %c0_233 = arith.constant 0 : index
    %232 = vector.load %arg19[%c26, %c0_232, %c0_233] : memref<32x8x12xbf16, #tpu.memory_space<vmem>>, vector<1x8x12xbf16>
    %233 = vector.shape_cast %232 : vector<1x8x12xbf16> to vector<8x12xbf16>
    %234 = vector.shape_cast %231 : vector<8x12xbf16> to vector<1x8x12xbf16>
    tpu.vector_store %arg19[%c26, %c0_232, %c0_233], %234 {strides = array<i32>} : memref<32x8x12xbf16, #tpu.memory_space<vmem>>, vector<1x8x12xbf16>,
    %c0_234 = arith.constant 0 : index
    %c312_235 = arith.constant 312 : index
    %235 = vector.load %arg18[%c0_234, %c312_235] : memref<8x384xbf16, #tpu.memory_space<vmem>>, vector<8x12xbf16>
    %c26_236 = arith.constant 26 : index
    %c0_237 = arith.constant 0 : index
    %c0_238 = arith.constant 0 : index
    %236 = vector.load %arg20[%c26_236, %c0_237, %c0_238] : memref<32x8x12xbf16, #tpu.memory_space<vmem>>, vector<1x8x12xbf16>
    %237 = vector.shape_cast %236 : vector<1x8x12xbf16> to vector<8x12xbf16>
    %238 = vector.shape_cast %235 : vector<8x12xbf16> to vector<1x8x12xbf16>
    tpu.vector_store %arg20[%c26_236, %c0_237, %c0_238], %238 {strides = array<i32>} : memref<32x8x12xbf16, #tpu.memory_space<vmem>>, vector<1x8x12xbf16>,
    %c0_239 = arith.constant 0 : index
    %c324 = arith.constant 324 : index
    %239 = vector.load %arg17[%c0_239, %c324] : memref<8x384xbf16, #tpu.memory_space<vmem>>, vector<8x12xbf16>
    %c27 = arith.constant 27 : index
    %c0_240 = arith.constant 0 : index
    %c0_241 = arith.constant 0 : index
    %240 = vector.load %arg19[%c27, %c0_240, %c0_241] : memref<32x8x12xbf16, #tpu.memory_space<vmem>>, vector<1x8x12xbf16>
    %241 = vector.shape_cast %240 : vector<1x8x12xbf16> to vector<8x12xbf16>
    %242 = vector.shape_cast %239 : vector<8x12xbf16> to vector<1x8x12xbf16>
    tpu.vector_store %arg19[%c27, %c0_240, %c0_241], %242 {strides = array<i32>} : memref<32x8x12xbf16, #tpu.memory_space<vmem>>, vector<1x8x12xbf16>,
    %c0_242 = arith.constant 0 : index
    %c324_243 = arith.constant 324 : index
    %243 = vector.load %arg18[%c0_242, %c324_243] : memref<8x384xbf16, #tpu.memory_space<vmem>>, vector<8x12xbf16>
    %c27_244 = arith.constant 27 : index
    %c0_245 = arith.constant 0 : index
    %c0_246 = arith.constant 0 : index
    %244 = vector.load %arg20[%c27_244, %c0_245, %c0_246] : memref<32x8x12xbf16, #tpu.memory_space<vmem>>, vector<1x8x12xbf16>
    %245 = vector.shape_cast %244 : vector<1x8x12xbf16> to vector<8x12xbf16>
    %246 = vector.shape_cast %243 : vector<8x12xbf16> to vector<1x8x12xbf16>
    tpu.vector_store %arg20[%c27_244, %c0_245, %c0_246], %246 {strides = array<i32>} : memref<32x8x12xbf16, #tpu.memory_space<vmem>>, vector<1x8x12xbf16>,
    %c0_247 = arith.constant 0 : index
    %c336 = arith.constant 336 : index
    %247 = vector.load %arg17[%c0_247, %c336] : memref<8x384xbf16, #tpu.memory_space<vmem>>, vector<8x12xbf16>
    %c28 = arith.constant 28 : index
    %c0_248 = arith.constant 0 : index
    %c0_249 = arith.constant 0 : index
    %248 = vector.load %arg19[%c28, %c0_248, %c0_249] : memref<32x8x12xbf16, #tpu.memory_space<vmem>>, vector<1x8x12xbf16>
    %249 = vector.shape_cast %248 : vector<1x8x12xbf16> to vector<8x12xbf16>
    %250 = vector.shape_cast %247 : vector<8x12xbf16> to vector<1x8x12xbf16>
    tpu.vector_store %arg19[%c28, %c0_248, %c0_249], %250 {strides = array<i32>} : memref<32x8x12xbf16, #tpu.memory_space<vmem>>, vector<1x8x12xbf16>,
    %c0_250 = arith.constant 0 : index
    %c336_251 = arith.constant 336 : index
    %251 = vector.load %arg18[%c0_250, %c336_251] : memref<8x384xbf16, #tpu.memory_space<vmem>>, vector<8x12xbf16>
    %c28_252 = arith.constant 28 : index
    %c0_253 = arith.constant 0 : index
    %c0_254 = arith.constant 0 : index
    %252 = vector.load %arg20[%c28_252, %c0_253, %c0_254] : memref<32x8x12xbf16, #tpu.memory_space<vmem>>, vector<1x8x12xbf16>
    %253 = vector.shape_cast %252 : vector<1x8x12xbf16> to vector<8x12xbf16>
    %254 = vector.shape_cast %251 : vector<8x12xbf16> to vector<1x8x12xbf16>
    tpu.vector_store %arg20[%c28_252, %c0_253, %c0_254], %254 {strides = array<i32>} : memref<32x8x12xbf16, #tpu.memory_space<vmem>>, vector<1x8x12xbf16>,
    %c0_255 = arith.constant 0 : index
    %c348 = arith.constant 348 : index
    %255 = vector.load %arg17[%c0_255, %c348] : memref<8x384xbf16, #tpu.memory_space<vmem>>, vector<8x12xbf16>
    %c29 = arith.constant 29 : index
    %c0_256 = arith.constant 0 : index
    %c0_257 = arith.constant 0 : index
    %256 = vector.load %arg19[%c29, %c0_256, %c0_257] : memref<32x8x12xbf16, #tpu.memory_space<vmem>>, vector<1x8x12xbf16>
    %257 = vector.shape_cast %256 : vector<1x8x12xbf16> to vector<8x12xbf16>
    %258 = vector.shape_cast %255 : vector<8x12xbf16> to vector<1x8x12xbf16>
    tpu.vector_store %arg19[%c29, %c0_256, %c0_257], %258 {strides = array<i32>} : memref<32x8x12xbf16, #tpu.memory_space<vmem>>, vector<1x8x12xbf16>,
    %c0_258 = arith.constant 0 : index
    %c348_259 = arith.constant 348 : index
    %259 = vector.load %arg18[%c0_258, %c348_259] : memref<8x384xbf16, #tpu.memory_space<vmem>>, vector<8x12xbf16>
    %c29_260 = arith.constant 29 : index
    %c0_261 = arith.constant 0 : index
    %c0_262 = arith.constant 0 : index
    %260 = vector.load %arg20[%c29_260, %c0_261, %c0_262] : memref<32x8x12xbf16, #tpu.memory_space<vmem>>, vector<1x8x12xbf16>
    %261 = vector.shape_cast %260 : vector<1x8x12xbf16> to vector<8x12xbf16>
    %262 = vector.shape_cast %259 : vector<8x12xbf16> to vector<1x8x12xbf16>
    tpu.vector_store %arg20[%c29_260, %c0_261, %c0_262], %262 {strides = array<i32>} : memref<32x8x12xbf16, #tpu.memory_space<vmem>>, vector<1x8x12xbf16>,
    %c0_263 = arith.constant 0 : index
    %c360 = arith.constant 360 : index
    %263 = vector.load %arg17[%c0_263, %c360] : memref<8x384xbf16, #tpu.memory_space<vmem>>, vector<8x12xbf16>
    %c30 = arith.constant 30 : index
    %c0_264 = arith.constant 0 : index
    %c0_265 = arith.constant 0 : index
    %264 = vector.load %arg19[%c30, %c0_264, %c0_265] : memref<32x8x12xbf16, #tpu.memory_space<vmem>>, vector<1x8x12xbf16>
    %265 = vector.shape_cast %264 : vector<1x8x12xbf16> to vector<8x12xbf16>
    %266 = vector.shape_cast %263 : vector<8x12xbf16> to vector<1x8x12xbf16>
    tpu.vector_store %arg19[%c30, %c0_264, %c0_265], %266 {strides = array<i32>} : memref<32x8x12xbf16, #tpu.memory_space<vmem>>, vector<1x8x12xbf16>,
    %c0_266 = arith.constant 0 : index
    %c360_267 = arith.constant 360 : index
    %267 = vector.load %arg18[%c0_266, %c360_267] : memref<8x384xbf16, #tpu.memory_space<vmem>>, vector<8x12xbf16>
    %c30_268 = arith.constant 30 : index
    %c0_269 = arith.constant 0 : index
    %c0_270 = arith.constant 0 : index
    %268 = vector.load %arg20[%c30_268, %c0_269, %c0_270] : memref<32x8x12xbf16, #tpu.memory_space<vmem>>, vector<1x8x12xbf16>
    %269 = vector.shape_cast %268 : vector<1x8x12xbf16> to vector<8x12xbf16>
    %270 = vector.shape_cast %267 : vector<8x12xbf16> to vector<1x8x12xbf16>
    tpu.vector_store %arg20[%c30_268, %c0_269, %c0_270], %270 {strides = array<i32>} : memref<32x8x12xbf16, #tpu.memory_space<vmem>>, vector<1x8x12xbf16>,
    %c0_271 = arith.constant 0 : index
    %c372 = arith.constant 372 : index
    %271 = vector.load %arg17[%c0_271, %c372] : memref<8x384xbf16, #tpu.memory_space<vmem>>, vector<8x12xbf16>
    %c31 = arith.constant 31 : index
    %c0_272 = arith.constant 0 : index
    %c0_273 = arith.constant 0 : index
    %272 = vector.load %arg19[%c31, %c0_272, %c0_273] : memref<32x8x12xbf16, #tpu.memory_space<vmem>>, vector<1x8x12xbf16>
    %273 = vector.shape_cast %272 : vector<1x8x12xbf16> to vector<8x12xbf16>
    %274 = vector.shape_cast %271 : vector<8x12xbf16> to vector<1x8x12xbf16>
    tpu.vector_store %arg19[%c31, %c0_272, %c0_273], %274 {strides = array<i32>} : memref<32x8x12xbf16, #tpu.memory_space<vmem>>, vector<1x8x12xbf16>,
    %c0_274 = arith.constant 0 : index
    %c372_275 = arith.constant 372 : index
    %275 = vector.load %arg18[%c0_274, %c372_275] : memref<8x384xbf16, #tpu.memory_space<vmem>>, vector<8x12xbf16>
    %c31_276 = arith.constant 31 : index
    %c0_277 = arith.constant 0 : index
    %c0_278 = arith.constant 0 : index
    %276 = vector.load %arg20[%c31_276, %c0_277, %c0_278] : memref<32x8x12xbf16, #tpu.memory_space<vmem>>, vector<1x8x12xbf16>
    %277 = vector.shape_cast %276 : vector<1x8x12xbf16> to vector<8x12xbf16>
    %278 = vector.shape_cast %275 : vector<8x12xbf16> to vector<1x8x12xbf16>
    tpu.vector_store %arg20[%c31_276, %c0_277, %c0_278], %278 {strides = array<i32>} : memref<32x8x12xbf16, #tpu.memory_space<vmem>>, vector<1x8x12xbf16>,
    %c0_279 = arith.constant 0 : index
    %c0_280 = arith.constant 0 : index
    %c0_281 = arith.constant 0 : index
    %279 = vector.load %arg16[%c0_279, %c0_280, %c0_281] : memref<32x8x12xbf16, #tpu.memory_space<vmem>>, vector<32x8x12xbf16>
    %c0_282 = arith.constant 0 : index
    %c0_283 = arith.constant 0 : index
    %c0_284 = arith.constant 0 : index
    %280 = vector.load %arg19[%c0_282, %c0_283, %c0_284] : memref<32x8x12xbf16, #tpu.memory_space<vmem>>, vector<32x8x12xbf16>
    "tpu.trace_start"() <{level = 10 : i32, message = "hqd,hkd->hqk"}> : () -> ()
    %cst_285 = arith.constant dense<0.000000e+00> : vector<32x8x8xf32>
    %281 = tpu.matmul %279, %280, %cst_285 {dimension_numbers = #tpu.dot_dimension_numbers<[2], [2], [1], [1], [0, 0, 0, 1, 1, 1], [0], [0]>} : vector<32x8x12xbf16>, vector<32x8x12xbf16>, vector<32x8x8xf32> -> vector<32x8x8xf32>
    "tpu.trace_stop"() : () -> ()
    %c0_286 = arith.constant 0 : index
    %c0_287 = arith.constant 0 : index
    %c0_288 = arith.constant 0 : index
    %282 = vector.load %arg21[%c0_286, %c0_287, %c0_288] : memref<32x8x1xf32, #tpu.memory_space<vmem>>, vector<32x8x1xf32>
    %cst_289 = arith.constant dense<0xFF800000> : vector<32x8xf32>
    %283 = vector.multi_reduction <maximumf>, %281, %cst_289 [2] : vector<32x8x8xf32> to vector<32x8xf32>
    %284 = vector.shape_cast %283 : vector<32x8xf32> to vector<32x8x1xf32>
    %285 = arith.maximumf %282, %284 : vector<32x8x1xf32>
    %286 = arith.subf %282, %285 : vector<32x8x1xf32>
    %287 = math.exp %286 : vector<32x8x1xf32>
    %288 = vector.broadcast %285 : vector<32x8x1xf32> to vector<32x8x8xf32>
    %289 = arith.subf %281, %288 : vector<32x8x8xf32>
    %290 = math.exp %289 : vector<32x8x8xf32>
    %c0_290 = arith.constant 0 : index
    %c0_291 = arith.constant 0 : index
    %c0_292 = arith.constant 0 : index
    %291 = vector.load %arg22[%c0_290, %c0_291, %c0_292] : memref<32x8x1xf32, #tpu.memory_space<vmem>>, vector<32x8x1xf32>
    %292 = arith.mulf %287, %291 : vector<32x8x1xf32>
    %cst_293 = arith.constant dense<0.000000e+00> : vector<32x8xf32>
    %293 = vector.multi_reduction <add>, %290, %cst_293 [2] : vector<32x8x8xf32> to vector<32x8xf32>
    %294 = vector.shape_cast %293 : vector<32x8xf32> to vector<32x8x1xf32>
    %295 = arith.addf %292, %294 : vector<32x8x1xf32>
    %c0_294 = arith.constant 0 : index
    %c0_295 = arith.constant 0 : index
    %c0_296 = arith.constant 0 : index
    %296 = vector.load %arg22[%c0_294, %c0_295, %c0_296] : memref<32x8x1xf32, #tpu.memory_space<vmem>>, vector<32x8x1xf32>
    tpu.vector_store %arg22[%c0_294, %c0_295, %c0_296], %295 {strides = array<i32>} : memref<32x8x1xf32, #tpu.memory_space<vmem>>, vector<32x8x1xf32>,
    %c0_297 = arith.constant 0 : index
    %c0_298 = arith.constant 0 : index
    %c0_299 = arith.constant 0 : index
    %297 = vector.load %arg23[%c0_297, %c0_298, %c0_299] : memref<32x8x12xf32, #tpu.memory_space<vmem>>, vector<32x8x12xf32>
    %298 = vector.broadcast %287 : vector<32x8x1xf32> to vector<32x8x12xf32>
    %299 = arith.mulf %298, %297 : vector<32x8x12xf32>
    %300 = arith.truncf %290 : vector<32x8x8xf32> to vector<32x8x8xbf16>
    %c0_300 = arith.constant 0 : index
    %c0_301 = arith.constant 0 : index
    %c0_302 = arith.constant 0 : index
    %301 = vector.load %arg20[%c0_300, %c0_301, %c0_302] : memref<32x8x12xbf16, #tpu.memory_space<vmem>>, vector<32x8x12xbf16>
    "tpu.trace_start"() <{level = 10 : i32, message = "hqk,hkd->hqd"}> : () -> ()
    %cst_303 = arith.constant dense<0.000000e+00> : vector<32x8x12xf32>
    %302 = tpu.matmul %300, %301, %cst_303 {dimension_numbers = #tpu.dot_dimension_numbers<[2], [1], [1], [2], [0, 0, 0, 1, 1, 2], [0], [0]>} : vector<32x8x8xbf16>, vector<32x8x12xbf16>, vector<32x8x12xf32> -> vector<32x8x12xf32>
    "tpu.trace_stop"() : () -> ()
    %303 = arith.addf %299, %302 : vector<32x8x12xf32>
    %c0_304 = arith.constant 0 : index
    %c0_305 = arith.constant 0 : index
    %c0_306 = arith.constant 0 : index
    %304 = vector.load %arg23[%c0_304, %c0_305, %c0_306] : memref<32x8x12xf32, #tpu.memory_space<vmem>>, vector<32x8x12xf32>
    tpu.vector_store %arg23[%c0_304, %c0_305, %c0_306], %303 {strides = array<i32>} : memref<32x8x12xf32, #tpu.memory_space<vmem>>, vector<32x8x12xf32>,
    %c0_307 = arith.constant 0 : index
    %c0_308 = arith.constant 0 : index
    %c0_309 = arith.constant 0 : index
    %305 = vector.load %arg21[%c0_307, %c0_308, %c0_309] : memref<32x8x1xf32, #tpu.memory_space<vmem>>, vector<32x8x1xf32>
    tpu.vector_store %arg21[%c0_307, %c0_308, %c0_309], %285 {strides = array<i32>} : memref<32x8x1xf32, #tpu.memory_space<vmem>>, vector<32x8x1xf32>,
    %c0_i32_310 = arith.constant 0 : i32
    %306 = arith.cmpi eq, %arg2, %c0_i32_310 : i32
    %307 = arith.extui %306 : i1 to i32
    %c0_i32_311 = arith.constant 0 : i32
    %308 = arith.cmpi ne, %307, %c0_i32_311 : i32
    scf.if %308 {
      %c0_312 = arith.constant 0 : index
      %c0_313 = arith.constant 0 : index
      %c0_314 = arith.constant 0 : index
      %309 = vector.load %arg23[%c0_312, %c0_313, %c0_314] : memref<32x8x12xf32, #tpu.memory_space<vmem>>, vector<1x8x12xf32>
      %310 = vector.shape_cast %309 : vector<1x8x12xf32> to vector<8x12xf32>
      %c0_315 = arith.constant 0 : index
      %c0_316 = arith.constant 0 : index
      %c0_317 = arith.constant 0 : index
      %311 = vector.load %arg22[%c0_315, %c0_316, %c0_317] : memref<32x8x1xf32, #tpu.memory_space<vmem>>, vector<1x8x1xf32>
      %312 = vector.shape_cast %311 : vector<1x8x1xf32> to vector<8x1xf32>
      %313 = vector.broadcast %312 : vector<8x1xf32> to vector<8x12xf32>
      %314 = arith.divf %310, %313 : vector<8x12xf32>
      %315 = arith.truncf %314 : vector<8x12xf32> to vector<8x12xbf16>
      %c0_318 = arith.constant 0 : index
      %c0_319 = arith.constant 0 : index
      %316 = vector.load %arg24[%c0_318, %c0_319] : memref<8x384xbf16, #tpu.memory_space<vmem>>, vector<8x12xbf16>
      tpu.vector_store %arg24[%c0_318, %c0_319], %315 {strides = array<i32>} : memref<8x384xbf16, #tpu.memory_space<vmem>>, vector<8x12xbf16>,
      %c1_320 = arith.constant 1 : index
      %c0_321 = arith.constant 0 : index
      %c0_322 = arith.constant 0 : index
      %317 = vector.load %arg23[%c1_320, %c0_321, %c0_322] : memref<32x8x12xf32, #tpu.memory_space<vmem>>, vector<1x8x12xf32>
      %318 = vector.shape_cast %317 : vector<1x8x12xf32> to vector<8x12xf32>
      %c1_323 = arith.constant 1 : index
      %c0_324 = arith.constant 0 : index
      %c0_325 = arith.constant 0 : index
      %319 = vector.load %arg22[%c1_323, %c0_324, %c0_325] : memref<32x8x1xf32, #tpu.memory_space<vmem>>, vector<1x8x1xf32>
      %320 = vector.shape_cast %319 : vector<1x8x1xf32> to vector<8x1xf32>
      %321 = vector.broadcast %320 : vector<8x1xf32> to vector<8x12xf32>
      %322 = arith.divf %318, %321 : vector<8x12xf32>
      %323 = arith.truncf %322 : vector<8x12xf32> to vector<8x12xbf16>
      %c0_326 = arith.constant 0 : index
      %c12_327 = arith.constant 12 : index
      %324 = vector.load %arg24[%c0_326, %c12_327] : memref<8x384xbf16, #tpu.memory_space<vmem>>, vector<8x12xbf16>
      tpu.vector_store %arg24[%c0_326, %c12_327], %323 {strides = array<i32>} : memref<8x384xbf16, #tpu.memory_space<vmem>>, vector<8x12xbf16>,
      %c2_328 = arith.constant 2 : index
      %c0_329 = arith.constant 0 : index
      %c0_330 = arith.constant 0 : index
      %325 = vector.load %arg23[%c2_328, %c0_329, %c0_330] : memref<32x8x12xf32, #tpu.memory_space<vmem>>, vector<1x8x12xf32>
      %326 = vector.shape_cast %325 : vector<1x8x12xf32> to vector<8x12xf32>
      %c2_331 = arith.constant 2 : index
      %c0_332 = arith.constant 0 : index
      %c0_333 = arith.constant 0 : index
      %327 = vector.load %arg22[%c2_331, %c0_332, %c0_333] : memref<32x8x1xf32, #tpu.memory_space<vmem>>, vector<1x8x1xf32>
      %328 = vector.shape_cast %327 : vector<1x8x1xf32> to vector<8x1xf32>
      %329 = vector.broadcast %328 : vector<8x1xf32> to vector<8x12xf32>
      %330 = arith.divf %326, %329 : vector<8x12xf32>
      %331 = arith.truncf %330 : vector<8x12xf32> to vector<8x12xbf16>
      %c0_334 = arith.constant 0 : index
      %c24_335 = arith.constant 24 : index
      %332 = vector.load %arg24[%c0_334, %c24_335] : memref<8x384xbf16, #tpu.memory_space<vmem>>, vector<8x12xbf16>
      tpu.vector_store %arg24[%c0_334, %c24_335], %331 {strides = array<i32>} : memref<8x384xbf16, #tpu.memory_space<vmem>>, vector<8x12xbf16>,
      %c3_336 = arith.constant 3 : index
      %c0_337 = arith.constant 0 : index
      %c0_338 = arith.constant 0 : index
      %333 = vector.load %arg23[%c3_336, %c0_337, %c0_338] : memref<32x8x12xf32, #tpu.memory_space<vmem>>, vector<1x8x12xf32>
      %334 = vector.shape_cast %333 : vector<1x8x12xf32> to vector<8x12xf32>
      %c3_339 = arith.constant 3 : index
      %c0_340 = arith.constant 0 : index
      %c0_341 = arith.constant 0 : index
      %335 = vector.load %arg22[%c3_339, %c0_340, %c0_341] : memref<32x8x1xf32, #tpu.memory_space<vmem>>, vector<1x8x1xf32>
      %336 = vector.shape_cast %335 : vector<1x8x1xf32> to vector<8x1xf32>
      %337 = vector.broadcast %336 : vector<8x1xf32> to vector<8x12xf32>
      %338 = arith.divf %334, %337 : vector<8x12xf32>
      %339 = arith.truncf %338 : vector<8x12xf32> to vector<8x12xbf16>
      %c0_342 = arith.constant 0 : index
      %c36_343 = arith.constant 36 : index
      %340 = vector.load %arg24[%c0_342, %c36_343] : memref<8x384xbf16, #tpu.memory_space<vmem>>, vector<8x12xbf16>
      tpu.vector_store %arg24[%c0_342, %c36_343], %339 {strides = array<i32>} : memref<8x384xbf16, #tpu.memory_space<vmem>>, vector<8x12xbf16>,
      %c4_344 = arith.constant 4 : index
      %c0_345 = arith.constant 0 : index
      %c0_346 = arith.constant 0 : index
      %341 = vector.load %arg23[%c4_344, %c0_345, %c0_346] : memref<32x8x12xf32, #tpu.memory_space<vmem>>, vector<1x8x12xf32>
      %342 = vector.shape_cast %341 : vector<1x8x12xf32> to vector<8x12xf32>
      %c4_347 = arith.constant 4 : index
      %c0_348 = arith.constant 0 : index
      %c0_349 = arith.constant 0 : index
      %343 = vector.load %arg22[%c4_347, %c0_348, %c0_349] : memref<32x8x1xf32, #tpu.memory_space<vmem>>, vector<1x8x1xf32>
      %344 = vector.shape_cast %343 : vector<1x8x1xf32> to vector<8x1xf32>
      %345 = vector.broadcast %344 : vector<8x1xf32> to vector<8x12xf32>
      %346 = arith.divf %342, %345 : vector<8x12xf32>
      %347 = arith.truncf %346 : vector<8x12xf32> to vector<8x12xbf16>
      %c0_350 = arith.constant 0 : index
      %c48_351 = arith.constant 48 : index
      %348 = vector.load %arg24[%c0_350, %c48_351] : memref<8x384xbf16, #tpu.memory_space<vmem>>, vector<8x12xbf16>
      tpu.vector_store %arg24[%c0_350, %c48_351], %347 {strides = array<i32>} : memref<8x384xbf16, #tpu.memory_space<vmem>>, vector<8x12xbf16>,
      %c5_352 = arith.constant 5 : index
      %c0_353 = arith.constant 0 : index
      %c0_354 = arith.constant 0 : index
      %349 = vector.load %arg23[%c5_352, %c0_353, %c0_354] : memref<32x8x12xf32, #tpu.memory_space<vmem>>, vector<1x8x12xf32>
      %350 = vector.shape_cast %349 : vector<1x8x12xf32> to vector<8x12xf32>
      %c5_355 = arith.constant 5 : index
      %c0_356 = arith.constant 0 : index
      %c0_357 = arith.constant 0 : index
      %351 = vector.load %arg22[%c5_355, %c0_356, %c0_357] : memref<32x8x1xf32, #tpu.memory_space<vmem>>, vector<1x8x1xf32>
      %352 = vector.shape_cast %351 : vector<1x8x1xf32> to vector<8x1xf32>
      %353 = vector.broadcast %352 : vector<8x1xf32> to vector<8x12xf32>
      %354 = arith.divf %350, %353 : vector<8x12xf32>
      %355 = arith.truncf %354 : vector<8x12xf32> to vector<8x12xbf16>
      %c0_358 = arith.constant 0 : index
      %c60_359 = arith.constant 60 : index
      %356 = vector.load %arg24[%c0_358, %c60_359] : memref<8x384xbf16, #tpu.memory_space<vmem>>, vector<8x12xbf16>
      tpu.vector_store %arg24[%c0_358, %c60_359], %355 {strides = array<i32>} : memref<8x384xbf16, #tpu.memory_space<vmem>>, vector<8x12xbf16>,
      %c6_360 = arith.constant 6 : index
      %c0_361 = arith.constant 0 : index
      %c0_362 = arith.constant 0 : index
      %357 = vector.load %arg23[%c6_360, %c0_361, %c0_362] : memref<32x8x12xf32, #tpu.memory_space<vmem>>, vector<1x8x12xf32>
      %358 = vector.shape_cast %357 : vector<1x8x12xf32> to vector<8x12xf32>
      %c6_363 = arith.constant 6 : index
      %c0_364 = arith.constant 0 : index
      %c0_365 = arith.constant 0 : index
      %359 = vector.load %arg22[%c6_363, %c0_364, %c0_365] : memref<32x8x1xf32, #tpu.memory_space<vmem>>, vector<1x8x1xf32>
      %360 = vector.shape_cast %359 : vector<1x8x1xf32> to vector<8x1xf32>
      %361 = vector.broadcast %360 : vector<8x1xf32> to vector<8x12xf32>
      %362 = arith.divf %358, %361 : vector<8x12xf32>
      %363 = arith.truncf %362 : vector<8x12xf32> to vector<8x12xbf16>
      %c0_366 = arith.constant 0 : index
      %c72_367 = arith.constant 72 : index
      %364 = vector.load %arg24[%c0_366, %c72_367] : memref<8x384xbf16, #tpu.memory_space<vmem>>, vector<8x12xbf16>
      tpu.vector_store %arg24[%c0_366, %c72_367], %363 {strides = array<i32>} : memref<8x384xbf16, #tpu.memory_space<vmem>>, vector<8x12xbf16>,
      %c7_368 = arith.constant 7 : index
      %c0_369 = arith.constant 0 : index
      %c0_370 = arith.constant 0 : index
      %365 = vector.load %arg23[%c7_368, %c0_369, %c0_370] : memref<32x8x12xf32, #tpu.memory_space<vmem>>, vector<1x8x12xf32>
      %366 = vector.shape_cast %365 : vector<1x8x12xf32> to vector<8x12xf32>
      %c7_371 = arith.constant 7 : index
      %c0_372 = arith.constant 0 : index
      %c0_373 = arith.constant 0 : index
      %367 = vector.load %arg22[%c7_371, %c0_372, %c0_373] : memref<32x8x1xf32, #tpu.memory_space<vmem>>, vector<1x8x1xf32>
      %368 = vector.shape_cast %367 : vector<1x8x1xf32> to vector<8x1xf32>
      %369 = vector.broadcast %368 : vector<8x1xf32> to vector<8x12xf32>
      %370 = arith.divf %366, %369 : vector<8x12xf32>
      %371 = arith.truncf %370 : vector<8x12xf32> to vector<8x12xbf16>
      %c0_374 = arith.constant 0 : index
      %c84_375 = arith.constant 84 : index
      %372 = vector.load %arg24[%c0_374, %c84_375] : memref<8x384xbf16, #tpu.memory_space<vmem>>, vector<8x12xbf16>
      tpu.vector_store %arg24[%c0_374, %c84_375], %371 {strides = array<i32>} : memref<8x384xbf16, #tpu.memory_space<vmem>>, vector<8x12xbf16>,
      %c8_376 = arith.constant 8 : index
      %c0_377 = arith.constant 0 : index
      %c0_378 = arith.constant 0 : index
      %373 = vector.load %arg23[%c8_376, %c0_377, %c0_378] : memref<32x8x12xf32, #tpu.memory_space<vmem>>, vector<1x8x12xf32>
      %374 = vector.shape_cast %373 : vector<1x8x12xf32> to vector<8x12xf32>
      %c8_379 = arith.constant 8 : index
      %c0_380 = arith.constant 0 : index
      %c0_381 = arith.constant 0 : index
      %375 = vector.load %arg22[%c8_379, %c0_380, %c0_381] : memref<32x8x1xf32, #tpu.memory_space<vmem>>, vector<1x8x1xf32>
      %376 = vector.shape_cast %375 : vector<1x8x1xf32> to vector<8x1xf32>
      %377 = vector.broadcast %376 : vector<8x1xf32> to vector<8x12xf32>
      %378 = arith.divf %374, %377 : vector<8x12xf32>
      %379 = arith.truncf %378 : vector<8x12xf32> to vector<8x12xbf16>
      %c0_382 = arith.constant 0 : index
      %c96_383 = arith.constant 96 : index
      %380 = vector.load %arg24[%c0_382, %c96_383] : memref<8x384xbf16, #tpu.memory_space<vmem>>, vector<8x12xbf16>
      tpu.vector_store %arg24[%c0_382, %c96_383], %379 {strides = array<i32>} : memref<8x384xbf16, #tpu.memory_space<vmem>>, vector<8x12xbf16>,
      %c9_384 = arith.constant 9 : index
      %c0_385 = arith.constant 0 : index
      %c0_386 = arith.constant 0 : index
      %381 = vector.load %arg23[%c9_384, %c0_385, %c0_386] : memref<32x8x12xf32, #tpu.memory_space<vmem>>, vector<1x8x12xf32>
      %382 = vector.shape_cast %381 : vector<1x8x12xf32> to vector<8x12xf32>
      %c9_387 = arith.constant 9 : index
      %c0_388 = arith.constant 0 : index
      %c0_389 = arith.constant 0 : index
      %383 = vector.load %arg22[%c9_387, %c0_388, %c0_389] : memref<32x8x1xf32, #tpu.memory_space<vmem>>, vector<1x8x1xf32>
      %384 = vector.shape_cast %383 : vector<1x8x1xf32> to vector<8x1xf32>
      %385 = vector.broadcast %384 : vector<8x1xf32> to vector<8x12xf32>
      %386 = arith.divf %382, %385 : vector<8x12xf32>
      %387 = arith.truncf %386 : vector<8x12xf32> to vector<8x12xbf16>
      %c0_390 = arith.constant 0 : index
      %c108_391 = arith.constant 108 : index
      %388 = vector.load %arg24[%c0_390, %c108_391] : memref<8x384xbf16, #tpu.memory_space<vmem>>, vector<8x12xbf16>
      tpu.vector_store %arg24[%c0_390, %c108_391], %387 {strides = array<i32>} : memref<8x384xbf16, #tpu.memory_space<vmem>>, vector<8x12xbf16>,
      %c10_392 = arith.constant 10 : index
      %c0_393 = arith.constant 0 : index
      %c0_394 = arith.constant 0 : index
      %389 = vector.load %arg23[%c10_392, %c0_393, %c0_394] : memref<32x8x12xf32, #tpu.memory_space<vmem>>, vector<1x8x12xf32>
      %390 = vector.shape_cast %389 : vector<1x8x12xf32> to vector<8x12xf32>
      %c10_395 = arith.constant 10 : index
      %c0_396 = arith.constant 0 : index
      %c0_397 = arith.constant 0 : index
      %391 = vector.load %arg22[%c10_395, %c0_396, %c0_397] : memref<32x8x1xf32, #tpu.memory_space<vmem>>, vector<1x8x1xf32>
      %392 = vector.shape_cast %391 : vector<1x8x1xf32> to vector<8x1xf32>
      %393 = vector.broadcast %392 : vector<8x1xf32> to vector<8x12xf32>
      %394 = arith.divf %390, %393 : vector<8x12xf32>
      %395 = arith.truncf %394 : vector<8x12xf32> to vector<8x12xbf16>
      %c0_398 = arith.constant 0 : index
      %c120_399 = arith.constant 120 : index
      %396 = vector.load %arg24[%c0_398, %c120_399] : memref<8x384xbf16, #tpu.memory_space<vmem>>, vector<8x12xbf16>
      tpu.vector_store %arg24[%c0_398, %c120_399], %395 {strides = array<i32>} : memref<8x384xbf16, #tpu.memory_space<vmem>>, vector<8x12xbf16>,
      %c11_400 = arith.constant 11 : index
      %c0_401 = arith.constant 0 : index
      %c0_402 = arith.constant 0 : index
      %397 = vector.load %arg23[%c11_400, %c0_401, %c0_402] : memref<32x8x12xf32, #tpu.memory_space<vmem>>, vector<1x8x12xf32>
      %398 = vector.shape_cast %397 : vector<1x8x12xf32> to vector<8x12xf32>
      %c11_403 = arith.constant 11 : index
      %c0_404 = arith.constant 0 : index
      %c0_405 = arith.constant 0 : index
      %399 = vector.load %arg22[%c11_403, %c0_404, %c0_405] : memref<32x8x1xf32, #tpu.memory_space<vmem>>, vector<1x8x1xf32>
      %400 = vector.shape_cast %399 : vector<1x8x1xf32> to vector<8x1xf32>
      %401 = vector.broadcast %400 : vector<8x1xf32> to vector<8x12xf32>
      %402 = arith.divf %398, %401 : vector<8x12xf32>
      %403 = arith.truncf %402 : vector<8x12xf32> to vector<8x12xbf16>
      %c0_406 = arith.constant 0 : index
      %c132_407 = arith.constant 132 : index
      %404 = vector.load %arg24[%c0_406, %c132_407] : memref<8x384xbf16, #tpu.memory_space<vmem>>, vector<8x12xbf16>
      tpu.vector_store %arg24[%c0_406, %c132_407], %403 {strides = array<i32>} : memref<8x384xbf16, #tpu.memory_space<vmem>>, vector<8x12xbf16>,
      %c12_408 = arith.constant 12 : index
      %c0_409 = arith.constant 0 : index
      %c0_410 = arith.constant 0 : index
      %405 = vector.load %arg23[%c12_408, %c0_409, %c0_410] : memref<32x8x12xf32, #tpu.memory_space<vmem>>, vector<1x8x12xf32>
      %406 = vector.shape_cast %405 : vector<1x8x12xf32> to vector<8x12xf32>
      %c12_411 = arith.constant 12 : index
      %c0_412 = arith.constant 0 : index
      %c0_413 = arith.constant 0 : index
      %407 = vector.load %arg22[%c12_411, %c0_412, %c0_413] : memref<32x8x1xf32, #tpu.memory_space<vmem>>, vector<1x8x1xf32>
      %408 = vector.shape_cast %407 : vector<1x8x1xf32> to vector<8x1xf32>
      %409 = vector.broadcast %408 : vector<8x1xf32> to vector<8x12xf32>
      %410 = arith.divf %406, %409 : vector<8x12xf32>
      %411 = arith.truncf %410 : vector<8x12xf32> to vector<8x12xbf16>
      %c0_414 = arith.constant 0 : index
      %c144_415 = arith.constant 144 : index
      %412 = vector.load %arg24[%c0_414, %c144_415] : memref<8x384xbf16, #tpu.memory_space<vmem>>, vector<8x12xbf16>
      tpu.vector_store %arg24[%c0_414, %c144_415], %411 {strides = array<i32>} : memref<8x384xbf16, #tpu.memory_space<vmem>>, vector<8x12xbf16>,
      %c13_416 = arith.constant 13 : index
      %c0_417 = arith.constant 0 : index
      %c0_418 = arith.constant 0 : index
      %413 = vector.load %arg23[%c13_416, %c0_417, %c0_418] : memref<32x8x12xf32, #tpu.memory_space<vmem>>, vector<1x8x12xf32>
      %414 = vector.shape_cast %413 : vector<1x8x12xf32> to vector<8x12xf32>
      %c13_419 = arith.constant 13 : index
      %c0_420 = arith.constant 0 : index
      %c0_421 = arith.constant 0 : index
      %415 = vector.load %arg22[%c13_419, %c0_420, %c0_421] : memref<32x8x1xf32, #tpu.memory_space<vmem>>, vector<1x8x1xf32>
      %416 = vector.shape_cast %415 : vector<1x8x1xf32> to vector<8x1xf32>
      %417 = vector.broadcast %416 : vector<8x1xf32> to vector<8x12xf32>
      %418 = arith.divf %414, %417 : vector<8x12xf32>
      %419 = arith.truncf %418 : vector<8x12xf32> to vector<8x12xbf16>
      %c0_422 = arith.constant 0 : index
      %c156_423 = arith.constant 156 : index
      %420 = vector.load %arg24[%c0_422, %c156_423] : memref<8x384xbf16, #tpu.memory_space<vmem>>, vector<8x12xbf16>
      tpu.vector_store %arg24[%c0_422, %c156_423], %419 {strides = array<i32>} : memref<8x384xbf16, #tpu.memory_space<vmem>>, vector<8x12xbf16>,
      %c14_424 = arith.constant 14 : index
      %c0_425 = arith.constant 0 : index
      %c0_426 = arith.constant 0 : index
      %421 = vector.load %arg23[%c14_424, %c0_425, %c0_426] : memref<32x8x12xf32, #tpu.memory_space<vmem>>, vector<1x8x12xf32>
      %422 = vector.shape_cast %421 : vector<1x8x12xf32> to vector<8x12xf32>
      %c14_427 = arith.constant 14 : index
      %c0_428 = arith.constant 0 : index
      %c0_429 = arith.constant 0 : index
      %423 = vector.load %arg22[%c14_427, %c0_428, %c0_429] : memref<32x8x1xf32, #tpu.memory_space<vmem>>, vector<1x8x1xf32>
      %424 = vector.shape_cast %423 : vector<1x8x1xf32> to vector<8x1xf32>
      %425 = vector.broadcast %424 : vector<8x1xf32> to vector<8x12xf32>
      %426 = arith.divf %422, %425 : vector<8x12xf32>
      %427 = arith.truncf %426 : vector<8x12xf32> to vector<8x12xbf16>
      %c0_430 = arith.constant 0 : index
      %c168_431 = arith.constant 168 : index
      %428 = vector.load %arg24[%c0_430, %c168_431] : memref<8x384xbf16, #tpu.memory_space<vmem>>, vector<8x12xbf16>
      tpu.vector_store %arg24[%c0_430, %c168_431], %427 {strides = array<i32>} : memref<8x384xbf16, #tpu.memory_space<vmem>>, vector<8x12xbf16>,
      %c15_432 = arith.constant 15 : index
      %c0_433 = arith.constant 0 : index
      %c0_434 = arith.constant 0 : index
      %429 = vector.load %arg23[%c15_432, %c0_433, %c0_434] : memref<32x8x12xf32, #tpu.memory_space<vmem>>, vector<1x8x12xf32>
      %430 = vector.shape_cast %429 : vector<1x8x12xf32> to vector<8x12xf32>
      %c15_435 = arith.constant 15 : index
      %c0_436 = arith.constant 0 : index
      %c0_437 = arith.constant 0 : index
      %431 = vector.load %arg22[%c15_435, %c0_436, %c0_437] : memref<32x8x1xf32, #tpu.memory_space<vmem>>, vector<1x8x1xf32>
      %432 = vector.shape_cast %431 : vector<1x8x1xf32> to vector<8x1xf32>
      %433 = vector.broadcast %432 : vector<8x1xf32> to vector<8x12xf32>
      %434 = arith.divf %430, %433 : vector<8x12xf32>
      %435 = arith.truncf %434 : vector<8x12xf32> to vector<8x12xbf16>
      %c0_438 = arith.constant 0 : index
      %c180_439 = arith.constant 180 : index
      %436 = vector.load %arg24[%c0_438, %c180_439] : memref<8x384xbf16, #tpu.memory_space<vmem>>, vector<8x12xbf16>
      tpu.vector_store %arg24[%c0_438, %c180_439], %435 {strides = array<i32>} : memref<8x384xbf16, #tpu.memory_space<vmem>>, vector<8x12xbf16>,
      %c16_440 = arith.constant 16 : index
      %c0_441 = arith.constant 0 : index
      %c0_442 = arith.constant 0 : index
      %437 = vector.load %arg23[%c16_440, %c0_441, %c0_442] : memref<32x8x12xf32, #tpu.memory_space<vmem>>, vector<1x8x12xf32>
      %438 = vector.shape_cast %437 : vector<1x8x12xf32> to vector<8x12xf32>
      %c16_443 = arith.constant 16 : index
      %c0_444 = arith.constant 0 : index
      %c0_445 = arith.constant 0 : index
      %439 = vector.load %arg22[%c16_443, %c0_444, %c0_445] : memref<32x8x1xf32, #tpu.memory_space<vmem>>, vector<1x8x1xf32>
      %440 = vector.shape_cast %439 : vector<1x8x1xf32> to vector<8x1xf32>
      %441 = vector.broadcast %440 : vector<8x1xf32> to vector<8x12xf32>
      %442 = arith.divf %438, %441 : vector<8x12xf32>
      %443 = arith.truncf %442 : vector<8x12xf32> to vector<8x12xbf16>
      %c0_446 = arith.constant 0 : index
      %c192_447 = arith.constant 192 : index
      %444 = vector.load %arg24[%c0_446, %c192_447] : memref<8x384xbf16, #tpu.memory_space<vmem>>, vector<8x12xbf16>
      tpu.vector_store %arg24[%c0_446, %c192_447], %443 {strides = array<i32>} : memref<8x384xbf16, #tpu.memory_space<vmem>>, vector<8x12xbf16>,
      %c17_448 = arith.constant 17 : index
      %c0_449 = arith.constant 0 : index
      %c0_450 = arith.constant 0 : index
      %445 = vector.load %arg23[%c17_448, %c0_449, %c0_450] : memref<32x8x12xf32, #tpu.memory_space<vmem>>, vector<1x8x12xf32>
      %446 = vector.shape_cast %445 : vector<1x8x12xf32> to vector<8x12xf32>
      %c17_451 = arith.constant 17 : index
      %c0_452 = arith.constant 0 : index
      %c0_453 = arith.constant 0 : index
      %447 = vector.load %arg22[%c17_451, %c0_452, %c0_453] : memref<32x8x1xf32, #tpu.memory_space<vmem>>, vector<1x8x1xf32>
      %448 = vector.shape_cast %447 : vector<1x8x1xf32> to vector<8x1xf32>
      %449 = vector.broadcast %448 : vector<8x1xf32> to vector<8x12xf32>
      %450 = arith.divf %446, %449 : vector<8x12xf32>
      %451 = arith.truncf %450 : vector<8x12xf32> to vector<8x12xbf16>
      %c0_454 = arith.constant 0 : index
      %c204_455 = arith.constant 204 : index
      %452 = vector.load %arg24[%c0_454, %c204_455] : memref<8x384xbf16, #tpu.memory_space<vmem>>, vector<8x12xbf16>
      tpu.vector_store %arg24[%c0_454, %c204_455], %451 {strides = array<i32>} : memref<8x384xbf16, #tpu.memory_space<vmem>>, vector<8x12xbf16>,
      %c18_456 = arith.constant 18 : index
      %c0_457 = arith.constant 0 : index
      %c0_458 = arith.constant 0 : index
      %453 = vector.load %arg23[%c18_456, %c0_457, %c0_458] : memref<32x8x12xf32, #tpu.memory_space<vmem>>, vector<1x8x12xf32>
      %454 = vector.shape_cast %453 : vector<1x8x12xf32> to vector<8x12xf32>
      %c18_459 = arith.constant 18 : index
      %c0_460 = arith.constant 0 : index
      %c0_461 = arith.constant 0 : index
      %455 = vector.load %arg22[%c18_459, %c0_460, %c0_461] : memref<32x8x1xf32, #tpu.memory_space<vmem>>, vector<1x8x1xf32>
      %456 = vector.shape_cast %455 : vector<1x8x1xf32> to vector<8x1xf32>
      %457 = vector.broadcast %456 : vector<8x1xf32> to vector<8x12xf32>
      %458 = arith.divf %454, %457 : vector<8x12xf32>
      %459 = arith.truncf %458 : vector<8x12xf32> to vector<8x12xbf16>
      %c0_462 = arith.constant 0 : index
      %c216_463 = arith.constant 216 : index
      %460 = vector.load %arg24[%c0_462, %c216_463] : memref<8x384xbf16, #tpu.memory_space<vmem>>, vector<8x12xbf16>
      tpu.vector_store %arg24[%c0_462, %c216_463], %459 {strides = array<i32>} : memref<8x384xbf16, #tpu.memory_space<vmem>>, vector<8x12xbf16>,
      %c19_464 = arith.constant 19 : index
      %c0_465 = arith.constant 0 : index
      %c0_466 = arith.constant 0 : index
      %461 = vector.load %arg23[%c19_464, %c0_465, %c0_466] : memref<32x8x12xf32, #tpu.memory_space<vmem>>, vector<1x8x12xf32>
      %462 = vector.shape_cast %461 : vector<1x8x12xf32> to vector<8x12xf32>
      %c19_467 = arith.constant 19 : index
      %c0_468 = arith.constant 0 : index
      %c0_469 = arith.constant 0 : index
      %463 = vector.load %arg22[%c19_467, %c0_468, %c0_469] : memref<32x8x1xf32, #tpu.memory_space<vmem>>, vector<1x8x1xf32>
      %464 = vector.shape_cast %463 : vector<1x8x1xf32> to vector<8x1xf32>
      %465 = vector.broadcast %464 : vector<8x1xf32> to vector<8x12xf32>
      %466 = arith.divf %462, %465 : vector<8x12xf32>
      %467 = arith.truncf %466 : vector<8x12xf32> to vector<8x12xbf16>
      %c0_470 = arith.constant 0 : index
      %c228_471 = arith.constant 228 : index
      %468 = vector.load %arg24[%c0_470, %c228_471] : memref<8x384xbf16, #tpu.memory_space<vmem>>, vector<8x12xbf16>
      tpu.vector_store %arg24[%c0_470, %c228_471], %467 {strides = array<i32>} : memref<8x384xbf16, #tpu.memory_space<vmem>>, vector<8x12xbf16>,
      %c20_472 = arith.constant 20 : index
      %c0_473 = arith.constant 0 : index
      %c0_474 = arith.constant 0 : index
      %469 = vector.load %arg23[%c20_472, %c0_473, %c0_474] : memref<32x8x12xf32, #tpu.memory_space<vmem>>, vector<1x8x12xf32>
      %470 = vector.shape_cast %469 : vector<1x8x12xf32> to vector<8x12xf32>
      %c20_475 = arith.constant 20 : index
      %c0_476 = arith.constant 0 : index
      %c0_477 = arith.constant 0 : index
      %471 = vector.load %arg22[%c20_475, %c0_476, %c0_477] : memref<32x8x1xf32, #tpu.memory_space<vmem>>, vector<1x8x1xf32>
      %472 = vector.shape_cast %471 : vector<1x8x1xf32> to vector<8x1xf32>
      %473 = vector.broadcast %472 : vector<8x1xf32> to vector<8x12xf32>
      %474 = arith.divf %470, %473 : vector<8x12xf32>
      %475 = arith.truncf %474 : vector<8x12xf32> to vector<8x12xbf16>
      %c0_478 = arith.constant 0 : index
      %c240_479 = arith.constant 240 : index
      %476 = vector.load %arg24[%c0_478, %c240_479] : memref<8x384xbf16, #tpu.memory_space<vmem>>, vector<8x12xbf16>
      tpu.vector_store %arg24[%c0_478, %c240_479], %475 {strides = array<i32>} : memref<8x384xbf16, #tpu.memory_space<vmem>>, vector<8x12xbf16>,
      %c21_480 = arith.constant 21 : index
      %c0_481 = arith.constant 0 : index
      %c0_482 = arith.constant 0 : index
      %477 = vector.load %arg23[%c21_480, %c0_481, %c0_482] : memref<32x8x12xf32, #tpu.memory_space<vmem>>, vector<1x8x12xf32>
      %478 = vector.shape_cast %477 : vector<1x8x12xf32> to vector<8x12xf32>
      %c21_483 = arith.constant 21 : index
      %c0_484 = arith.constant 0 : index
      %c0_485 = arith.constant 0 : index
      %479 = vector.load %arg22[%c21_483, %c0_484, %c0_485] : memref<32x8x1xf32, #tpu.memory_space<vmem>>, vector<1x8x1xf32>
      %480 = vector.shape_cast %479 : vector<1x8x1xf32> to vector<8x1xf32>
      %481 = vector.broadcast %480 : vector<8x1xf32> to vector<8x12xf32>
      %482 = arith.divf %478, %481 : vector<8x12xf32>
      %483 = arith.truncf %482 : vector<8x12xf32> to vector<8x12xbf16>
      %c0_486 = arith.constant 0 : index
      %c252_487 = arith.constant 252 : index
      %484 = vector.load %arg24[%c0_486, %c252_487] : memref<8x384xbf16, #tpu.memory_space<vmem>>, vector<8x12xbf16>
      tpu.vector_store %arg24[%c0_486, %c252_487], %483 {strides = array<i32>} : memref<8x384xbf16, #tpu.memory_space<vmem>>, vector<8x12xbf16>,
      %c22_488 = arith.constant 22 : index
      %c0_489 = arith.constant 0 : index
      %c0_490 = arith.constant 0 : index
      %485 = vector.load %arg23[%c22_488, %c0_489, %c0_490] : memref<32x8x12xf32, #tpu.memory_space<vmem>>, vector<1x8x12xf32>
      %486 = vector.shape_cast %485 : vector<1x8x12xf32> to vector<8x12xf32>
      %c22_491 = arith.constant 22 : index
      %c0_492 = arith.constant 0 : index
      %c0_493 = arith.constant 0 : index
      %487 = vector.load %arg22[%c22_491, %c0_492, %c0_493] : memref<32x8x1xf32, #tpu.memory_space<vmem>>, vector<1x8x1xf32>
      %488 = vector.shape_cast %487 : vector<1x8x1xf32> to vector<8x1xf32>
      %489 = vector.broadcast %488 : vector<8x1xf32> to vector<8x12xf32>
      %490 = arith.divf %486, %489 : vector<8x12xf32>
      %491 = arith.truncf %490 : vector<8x12xf32> to vector<8x12xbf16>
      %c0_494 = arith.constant 0 : index
      %c264_495 = arith.constant 264 : index
      %492 = vector.load %arg24[%c0_494, %c264_495] : memref<8x384xbf16, #tpu.memory_space<vmem>>, vector<8x12xbf16>
      tpu.vector_store %arg24[%c0_494, %c264_495], %491 {strides = array<i32>} : memref<8x384xbf16, #tpu.memory_space<vmem>>, vector<8x12xbf16>,
      %c23_496 = arith.constant 23 : index
      %c0_497 = arith.constant 0 : index
      %c0_498 = arith.constant 0 : index
      %493 = vector.load %arg23[%c23_496, %c0_497, %c0_498] : memref<32x8x12xf32, #tpu.memory_space<vmem>>, vector<1x8x12xf32>
      %494 = vector.shape_cast %493 : vector<1x8x12xf32> to vector<8x12xf32>
      %c23_499 = arith.constant 23 : index
      %c0_500 = arith.constant 0 : index
      %c0_501 = arith.constant 0 : index
      %495 = vector.load %arg22[%c23_499, %c0_500, %c0_501] : memref<32x8x1xf32, #tpu.memory_space<vmem>>, vector<1x8x1xf32>
      %496 = vector.shape_cast %495 : vector<1x8x1xf32> to vector<8x1xf32>
      %497 = vector.broadcast %496 : vector<8x1xf32> to vector<8x12xf32>
      %498 = arith.divf %494, %497 : vector<8x12xf32>
      %499 = arith.truncf %498 : vector<8x12xf32> to vector<8x12xbf16>
      %c0_502 = arith.constant 0 : index
      %c276_503 = arith.constant 276 : index
      %500 = vector.load %arg24[%c0_502, %c276_503] : memref<8x384xbf16, #tpu.memory_space<vmem>>, vector<8x12xbf16>
      tpu.vector_store %arg24[%c0_502, %c276_503], %499 {strides = array<i32>} : memref<8x384xbf16, #tpu.memory_space<vmem>>, vector<8x12xbf16>,
      %c24_504 = arith.constant 24 : index
      %c0_505 = arith.constant 0 : index
      %c0_506 = arith.constant 0 : index
      %501 = vector.load %arg23[%c24_504, %c0_505, %c0_506] : memref<32x8x12xf32, #tpu.memory_space<vmem>>, vector<1x8x12xf32>
      %502 = vector.shape_cast %501 : vector<1x8x12xf32> to vector<8x12xf32>
      %c24_507 = arith.constant 24 : index
      %c0_508 = arith.constant 0 : index
      %c0_509 = arith.constant 0 : index
      %503 = vector.load %arg22[%c24_507, %c0_508, %c0_509] : memref<32x8x1xf32, #tpu.memory_space<vmem>>, vector<1x8x1xf32>
      %504 = vector.shape_cast %503 : vector<1x8x1xf32> to vector<8x1xf32>
      %505 = vector.broadcast %504 : vector<8x1xf32> to vector<8x12xf32>
      %506 = arith.divf %502, %505 : vector<8x12xf32>
      %507 = arith.truncf %506 : vector<8x12xf32> to vector<8x12xbf16>
      %c0_510 = arith.constant 0 : index
      %c288_511 = arith.constant 288 : index
      %508 = vector.load %arg24[%c0_510, %c288_511] : memref<8x384xbf16, #tpu.memory_space<vmem>>, vector<8x12xbf16>
      tpu.vector_store %arg24[%c0_510, %c288_511], %507 {strides = array<i32>} : memref<8x384xbf16, #tpu.memory_space<vmem>>, vector<8x12xbf16>,
      %c25_512 = arith.constant 25 : index
      %c0_513 = arith.constant 0 : index
      %c0_514 = arith.constant 0 : index
      %509 = vector.load %arg23[%c25_512, %c0_513, %c0_514] : memref<32x8x12xf32, #tpu.memory_space<vmem>>, vector<1x8x12xf32>
      %510 = vector.shape_cast %509 : vector<1x8x12xf32> to vector<8x12xf32>
      %c25_515 = arith.constant 25 : index
      %c0_516 = arith.constant 0 : index
      %c0_517 = arith.constant 0 : index
      %511 = vector.load %arg22[%c25_515, %c0_516, %c0_517] : memref<32x8x1xf32, #tpu.memory_space<vmem>>, vector<1x8x1xf32>
      %512 = vector.shape_cast %511 : vector<1x8x1xf32> to vector<8x1xf32>
      %513 = vector.broadcast %512 : vector<8x1xf32> to vector<8x12xf32>
      %514 = arith.divf %510, %513 : vector<8x12xf32>
      %515 = arith.truncf %514 : vector<8x12xf32> to vector<8x12xbf16>
      %c0_518 = arith.constant 0 : index
      %c300_519 = arith.constant 300 : index
      %516 = vector.load %arg24[%c0_518, %c300_519] : memref<8x384xbf16, #tpu.memory_space<vmem>>, vector<8x12xbf16>
      tpu.vector_store %arg24[%c0_518, %c300_519], %515 {strides = array<i32>} : memref<8x384xbf16, #tpu.memory_space<vmem>>, vector<8x12xbf16>,
      %c26_520 = arith.constant 26 : index
      %c0_521 = arith.constant 0 : index
      %c0_522 = arith.constant 0 : index
      %517 = vector.load %arg23[%c26_520, %c0_521, %c0_522] : memref<32x8x12xf32, #tpu.memory_space<vmem>>, vector<1x8x12xf32>
      %518 = vector.shape_cast %517 : vector<1x8x12xf32> to vector<8x12xf32>
      %c26_523 = arith.constant 26 : index
      %c0_524 = arith.constant 0 : index
      %c0_525 = arith.constant 0 : index
      %519 = vector.load %arg22[%c26_523, %c0_524, %c0_525] : memref<32x8x1xf32, #tpu.memory_space<vmem>>, vector<1x8x1xf32>
      %520 = vector.shape_cast %519 : vector<1x8x1xf32> to vector<8x1xf32>
      %521 = vector.broadcast %520 : vector<8x1xf32> to vector<8x12xf32>
      %522 = arith.divf %518, %521 : vector<8x12xf32>
      %523 = arith.truncf %522 : vector<8x12xf32> to vector<8x12xbf16>
      %c0_526 = arith.constant 0 : index
      %c312_527 = arith.constant 312 : index
      %524 = vector.load %arg24[%c0_526, %c312_527] : memref<8x384xbf16, #tpu.memory_space<vmem>>, vector<8x12xbf16>
      tpu.vector_store %arg24[%c0_526, %c312_527], %523 {strides = array<i32>} : memref<8x384xbf16, #tpu.memory_space<vmem>>, vector<8x12xbf16>,
      %c27_528 = arith.constant 27 : index
      %c0_529 = arith.constant 0 : index
      %c0_530 = arith.constant 0 : index
      %525 = vector.load %arg23[%c27_528, %c0_529, %c0_530] : memref<32x8x12xf32, #tpu.memory_space<vmem>>, vector<1x8x12xf32>
      %526 = vector.shape_cast %525 : vector<1x8x12xf32> to vector<8x12xf32>
      %c27_531 = arith.constant 27 : index
      %c0_532 = arith.constant 0 : index
      %c0_533 = arith.constant 0 : index
      %527 = vector.load %arg22[%c27_531, %c0_532, %c0_533] : memref<32x8x1xf32, #tpu.memory_space<vmem>>, vector<1x8x1xf32>
      %528 = vector.shape_cast %527 : vector<1x8x1xf32> to vector<8x1xf32>
      %529 = vector.broadcast %528 : vector<8x1xf32> to vector<8x12xf32>
      %530 = arith.divf %526, %529 : vector<8x12xf32>
      %531 = arith.truncf %530 : vector<8x12xf32> to vector<8x12xbf16>
      %c0_534 = arith.constant 0 : index
      %c324_535 = arith.constant 324 : index
      %532 = vector.load %arg24[%c0_534, %c324_535] : memref<8x384xbf16, #tpu.memory_space<vmem>>, vector<8x12xbf16>
      tpu.vector_store %arg24[%c0_534, %c324_535], %531 {strides = array<i32>} : memref<8x384xbf16, #tpu.memory_space<vmem>>, vector<8x12xbf16>,
      %c28_536 = arith.constant 28 : index
      %c0_537 = arith.constant 0 : index
      %c0_538 = arith.constant 0 : index
      %533 = vector.load %arg23[%c28_536, %c0_537, %c0_538] : memref<32x8x12xf32, #tpu.memory_space<vmem>>, vector<1x8x12xf32>
      %534 = vector.shape_cast %533 : vector<1x8x12xf32> to vector<8x12xf32>
      %c28_539 = arith.constant 28 : index
      %c0_540 = arith.constant 0 : index
      %c0_541 = arith.constant 0 : index
      %535 = vector.load %arg22[%c28_539, %c0_540, %c0_541] : memref<32x8x1xf32, #tpu.memory_space<vmem>>, vector<1x8x1xf32>
      %536 = vector.shape_cast %535 : vector<1x8x1xf32> to vector<8x1xf32>
      %537 = vector.broadcast %536 : vector<8x1xf32> to vector<8x12xf32>
      %538 = arith.divf %534, %537 : vector<8x12xf32>
      %539 = arith.truncf %538 : vector<8x12xf32> to vector<8x12xbf16>
      %c0_542 = arith.constant 0 : index
      %c336_543 = arith.constant 336 : index
      %540 = vector.load %arg24[%c0_542, %c336_543] : memref<8x384xbf16, #tpu.memory_space<vmem>>, vector<8x12xbf16>
      tpu.vector_store %arg24[%c0_542, %c336_543], %539 {strides = array<i32>} : memref<8x384xbf16, #tpu.memory_space<vmem>>, vector<8x12xbf16>,
      %c29_544 = arith.constant 29 : index
      %c0_545 = arith.constant 0 : index
      %c0_546 = arith.constant 0 : index
      %541 = vector.load %arg23[%c29_544, %c0_545, %c0_546] : memref<32x8x12xf32, #tpu.memory_space<vmem>>, vector<1x8x12xf32>
      %542 = vector.shape_cast %541 : vector<1x8x12xf32> to vector<8x12xf32>
      %c29_547 = arith.constant 29 : index
      %c0_548 = arith.constant 0 : index
      %c0_549 = arith.constant 0 : index
      %543 = vector.load %arg22[%c29_547, %c0_548, %c0_549] : memref<32x8x1xf32, #tpu.memory_space<vmem>>, vector<1x8x1xf32>
      %544 = vector.shape_cast %543 : vector<1x8x1xf32> to vector<8x1xf32>
      %545 = vector.broadcast %544 : vector<8x1xf32> to vector<8x12xf32>
      %546 = arith.divf %542, %545 : vector<8x12xf32>
      %547 = arith.truncf %546 : vector<8x12xf32> to vector<8x12xbf16>
      %c0_550 = arith.constant 0 : index
      %c348_551 = arith.constant 348 : index
      %548 = vector.load %arg24[%c0_550, %c348_551] : memref<8x384xbf16, #tpu.memory_space<vmem>>, vector<8x12xbf16>
      tpu.vector_store %arg24[%c0_550, %c348_551], %547 {strides = array<i32>} : memref<8x384xbf16, #tpu.memory_space<vmem>>, vector<8x12xbf16>,
      %c30_552 = arith.constant 30 : index
      %c0_553 = arith.constant 0 : index
      %c0_554 = arith.constant 0 : index
      %549 = vector.load %arg23[%c30_552, %c0_553, %c0_554] : memref<32x8x12xf32, #tpu.memory_space<vmem>>, vector<1x8x12xf32>
      %550 = vector.shape_cast %549 : vector<1x8x12xf32> to vector<8x12xf32>
      %c30_555 = arith.constant 30 : index
      %c0_556 = arith.constant 0 : index
      %c0_557 = arith.constant 0 : index
      %551 = vector.load %arg22[%c30_555, %c0_556, %c0_557] : memref<32x8x1xf32, #tpu.memory_space<vmem>>, vector<1x8x1xf32>
      %552 = vector.shape_cast %551 : vector<1x8x1xf32> to vector<8x1xf32>
      %553 = vector.broadcast %552 : vector<8x1xf32> to vector<8x12xf32>
      %554 = arith.divf %550, %553 : vector<8x12xf32>
      %555 = arith.truncf %554 : vector<8x12xf32> to vector<8x12xbf16>
      %c0_558 = arith.constant 0 : index
      %c360_559 = arith.constant 360 : index
      %556 = vector.load %arg24[%c0_558, %c360_559] : memref<8x384xbf16, #tpu.memory_space<vmem>>, vector<8x12xbf16>
      tpu.vector_store %arg24[%c0_558, %c360_559], %555 {strides = array<i32>} : memref<8x384xbf16, #tpu.memory_space<vmem>>, vector<8x12xbf16>,
      %c31_560 = arith.constant 31 : index
      %c0_561 = arith.constant 0 : index
      %c0_562 = arith.constant 0 : index
      %557 = vector.load %arg23[%c31_560, %c0_561, %c0_562] : memref<32x8x12xf32, #tpu.memory_space<vmem>>, vector<1x8x12xf32>
      %558 = vector.shape_cast %557 : vector<1x8x12xf32> to vector<8x12xf32>
      %c31_563 = arith.constant 31 : index
      %c0_564 = arith.constant 0 : index
      %c0_565 = arith.constant 0 : index
      %559 = vector.load %arg22[%c31_563, %c0_564, %c0_565] : memref<32x8x1xf32, #tpu.memory_space<vmem>>, vector<1x8x1xf32>
      %560 = vector.shape_cast %559 : vector<1x8x1xf32> to vector<8x1xf32>
      %561 = vector.broadcast %560 : vector<8x1xf32> to vector<8x12xf32>
      %562 = arith.divf %558, %561 : vector<8x12xf32>
      %563 = arith.truncf %562 : vector<8x12xf32> to vector<8x12xbf16>
      %c0_566 = arith.constant 0 : index
      %c372_567 = arith.constant 372 : index
      %564 = vector.load %arg24[%c0_566, %c372_567] : memref<8x384xbf16, #tpu.memory_space<vmem>>, vector<8x12xbf16>
      tpu.vector_store %arg24[%c0_566, %c372_567], %563 {strides = array<i32>} : memref<8x384xbf16, #tpu.memory_space<vmem>>, vector<8x12xbf16>,
      %c0_568 = arith.constant 0 : index
      %c0_569 = arith.constant 0 : index
      %565 = vector.load %arg24[%c0_568, %c0_569] : memref<8x384xbf16, #tpu.memory_space<vmem>>, vector<8x384xbf16>
      %c0_570 = arith.constant 0 : index
      %c0_571 = arith.constant 0 : index
      %566 = vector.load %arg12[%c0_570, %c0_571] : memref<384x384xbf16, #tpu.memory_space<vmem>>, vector<384x384xbf16>
      %cst_572 = arith.constant dense<0.000000e+00> : vector<8x384xf32>
      %567 = tpu.matmul %565, %566, %cst_572 {dimension_numbers = #tpu.dot_dimension_numbers<[1], [0], [0], [1], [0, 0, 1, 1], [], []>} : vector<8x384xbf16>, vector<384x384xbf16>, vector<8x384xf32> -> vector<8x384xf32>
      %c0_573 = arith.constant 0 : index
      %c0_574 = arith.constant 0 : index
      %568 = vector.load %arg13[%c0_573, %c0_574] : memref<1x384xf32, #tpu.memory_space<vmem>>, vector<1x384xf32>
      %569 = vector.broadcast %568 : vector<1x384xf32> to vector<8x384xf32>
      %570 = arith.addf %567, %569 : vector<8x384xf32>
      %c0_575 = arith.constant 0 : index
      %c0_576 = arith.constant 0 : index
      %c0_577 = arith.constant 0 : index
      %571 = vector.load %arg14[%c0_575, %c0_576, %c0_577] : memref<1x8x384xf32, #tpu.memory_space<vmem>>, vector<1x8x384xf32>
      %572 = vector.shape_cast %571 : vector<1x8x384xf32> to vector<8x384xf32>
      %573 = vector.shape_cast %570 : vector<8x384xf32> to vector<1x8x384xf32>
      tpu.vector_store %arg14[%c0_575, %c0_576, %c0_577], %573 {strides = array<i32>} : memref<1x8x384xf32, #tpu.memory_space<vmem>>, vector<1x8x384xf32>,
    } else {
    }
    return
  }
  func.func @transform_0(%arg0: i32, %arg1: i32, %arg2: i32) -> (i32, i32, i32) {
    %c0_i32 = arith.constant 0 : i32
    %c0_i32_0 = arith.constant 0 : i32
    return %arg0, %arg1, %c0_i32 : i32, i32, i32
  }
  func.func @transform_1(%arg0: i32, %arg1: i32, %arg2: i32) -> (i32, i32, i32) {
    %c0_i32 = arith.constant 0 : i32
    %c0_i32_0 = arith.constant 0 : i32
    return %arg0, %arg2, %c0_i32 : i32, i32, i32
  }
  func.func @transform_2(%arg0: i32, %arg1: i32, %arg2: i32) -> (i32, i32, i32) {
    %c0_i32 = arith.constant 0 : i32
    %c0_i32_0 = arith.constant 0 : i32
    return %arg0, %arg2, %c0_i32 : i32, i32, i32
  }
  func.func @transform_3(%arg0: i32, %arg1: i32, %arg2: i32) -> (i32, i32) {
    %c0_i32 = arith.constant 0 : i32
    %c0_i32_0 = arith.constant 0 : i32
    %c0_i32_1 = arith.constant 0 : i32
    return %c0_i32, %c0_i32_0 : i32, i32
  }
  func.func @transform_4(%arg0: i32, %arg1: i32, %arg2: i32) -> (i32, i32) {
    %c0_i32 = arith.constant 0 : i32
    %c0_i32_0 = arith.constant 0 : i32
    %c0_i32_1 = arith.constant 0 : i32
    return %c0_i32, %c0_i32_0 : i32, i32
  }
  func.func @transform_5(%arg0: i32, %arg1: i32, %arg2: i32) -> (i32, i32) {
    %c0_i32 = arith.constant 0 : i32
    %c0_i32_0 = arith.constant 0 : i32
    %c0_i32_1 = arith.constant 0 : i32
    return %c0_i32, %c0_i32_0 : i32, i32
  }
  func.func @transform_6(%arg0: i32, %arg1: i32, %arg2: i32) -> (i32, i32) {
    %c0_i32 = arith.constant 0 : i32
    %c0_i32_0 = arith.constant 0 : i32
    %c0_i32_1 = arith.constant 0 : i32
    return %c0_i32, %c0_i32_0 : i32, i32
  }
  func.func @transform_7(%arg0: i32, %arg1: i32, %arg2: i32) -> (i32, i32) {
    %c0_i32 = arith.constant 0 : i32
    %c0_i32_0 = arith.constant 0 : i32
    %c0_i32_1 = arith.constant 0 : i32
    return %c0_i32, %c0_i32_0 : i32, i32
  }
  func.func @transform_8(%arg0: i32, %arg1: i32, %arg2: i32) -> (i32, i32) {
    %c0_i32 = arith.constant 0 : i32
    %c0_i32_0 = arith.constant 0 : i32
    %c0_i32_1 = arith.constant 0 : i32
    return %c0_i32, %c0_i32_0 : i32, i32
  }
  func.func @transform_9(%arg0: i32, %arg1: i32, %arg2: i32) -> (i32, i32) {
    %c0_i32 = arith.constant 0 : i32
    %c0_i32_0 = arith.constant 0 : i32
    %c0_i32_1 = arith.constant 0 : i32
    return %c0_i32, %c0_i32_0 : i32, i32
  }
  func.func @transform_10(%arg0: i32, %arg1: i32, %arg2: i32) -> (i32, i32) {
    %c0_i32 = arith.constant 0 : i32
    %c0_i32_0 = arith.constant 0 : i32
    %c0_i32_1 = arith.constant 0 : i32
    return %c0_i32, %c0_i32_0 : i32, i32
  }
  func.func @transform_11(%arg0: i32, %arg1: i32, %arg2: i32) -> (i32, i32, i32) {
    %c0_i32 = arith.constant 0 : i32
    %c0_i32_0 = arith.constant 0 : i32
    return %arg0, %arg1, %c0_i32 : i32, i32, i32
  }
}

</mosaic_0001>

<llo_original>
// kernel: tpu_custom_call.1
$region0: #{tpu_custom_call.1}
  #allocation0 [shape = 'u32[]', space=smem, size = 0x4, offset = 0x4, fixed_abs, tag = 'smem constant byte address 0x4 - core index']
  #allocation1 [shape = 'u32[144,128]{1,0:T(1,128)}', space=vmem, size = 0x12000, scoped, tag = 'internal scratch']
  #allocation2 [shape = 'bf16[8,384]{1,0:T(8,128)(2,1)}', space=vmem, size = 0x1800, scoped, tag = 'scratch operand']
  #allocation3 [shape = 'bf16[32,8,12]{2,1,0:T(8,128)(2,1)}', space=vmem, size = 0x10000, scoped, tag = 'scratch operand']
  #allocation4 [shape = 'bf16[8,384]{1,0:T(8,128)(2,1)}', space=vmem, size = 0x1800, scoped, tag = 'scratch operand']
  #allocation5 [shape = 'bf16[8,384]{1,0:T(8,128)(2,1)}', space=vmem, size = 0x1800, scoped, tag = 'scratch operand']
  #allocation6 [shape = 'bf16[32,8,12]{2,1,0:T(8,128)(2,1)}', space=vmem, size = 0x10000, scoped, tag = 'scratch operand']
  #allocation7 [shape = 'bf16[32,8,12]{2,1,0:T(8,128)(2,1)}', space=vmem, size = 0x10000, scoped, tag = 'scratch operand']
  #allocation8 [shape = 'f32[32,8,1]{2,1,0:T(8,128)}', space=vmem, size = 0x20000, scoped, tag = 'scratch operand']
  #allocation9 [shape = 'f32[32,8,1]{2,1,0:T(8,128)}', space=vmem, size = 0x20000, scoped, tag = 'scratch operand']
  #allocation10 [shape = 'f32[32,8,12]{2,1,0:T(8,128)}', space=vmem, size = 0x20000, scoped, tag = 'scratch operand']
  #allocation11 [shape = 'bf16[8,384]{1,0:T(8,128)(2,1)}', space=vmem, size = 0x1800, scoped, tag = 'scratch operand']
  %s0 = inlined_call_operand.hbm [shape: f32[2,8,384], index: 0, kind: input, shape index: {}]
  %s1 = inlined_call_operand.hbm [shape: f32[2,8,384], index: 1, kind: input, shape index: {}]
  %s2 = inlined_call_operand.hbm [shape: f32[2,8,384], index: 2, kind: input, shape index: {}]
  %s3 = inlined_call_operand.hbm [shape: bf16[384,384], index: 3, kind: input, shape index: {}]
  %s4 = inlined_call_operand.hbm [shape: bf16[384,384], index: 4, kind: input, shape index: {}]
  %s5 = inlined_call_operand.hbm [shape: bf16[384,384], index: 5, kind: input, shape index: {}]
  %s6 = inlined_call_operand.vmem [shape: f32[1,384], index: 6, kind: input, shape index: {}]
  %s7 = inlined_call_operand.vmem [shape: f32[1,384], index: 7, kind: input, shape index: {}]
  %s8 = inlined_call_operand.vmem [shape: f32[1,384], index: 8, kind: input, shape index: {}]
  %s9 = inlined_call_operand.hbm [shape: bf16[384,384], index: 9, kind: input, shape index: {}]
  %s10 = inlined_call_operand.vmem [shape: f32[1,384], index: 10, kind: input, shape index: {}]
  %s11 = inlined_call_operand.hbm [shape: f32[2,8,384], index: 11, kind: output, shape index: {}]
  %s12 = sld [smem:[#allocation0]]
  $region113: #{tpu_custom_call.1} parent=0
    _
  %s14 = ssub.s32 1, %s12
  %s15 = scalar_select 0, %s14, %s12
  $region1: #{tpu_custom_call.1} parent=0
    #allocation12 [shape = 'u8[24576]{0}', space=vmem, size = 0x6000, scoped, tag = 'input window, operand 0']
    #allocation13 [shape = 's32[2]{0}', space=sflag, size = 0x8, scoped, tag = 'scoped memory for tpu_custom_call.1']
    #allocation14 [shape = 's32[2]{0}', space=sflag, size = 0x8, scoped, tag = 'scoped memory for tpu_custom_call.1']
    #allocation15 [shape = 'u8[24576]{0}', space=vmem, size = 0x6000, scoped, tag = 'input window, operand 1']
    #allocation16 [shape = 's32[2]{0}', space=sflag, size = 0x8, scoped, tag = 'scoped memory for tpu_custom_call.1']
    #allocation17 [shape = 'u8[24576]{0}', space=vmem, size = 0x6000, scoped, tag = 'input window, operand 2']
    #allocation18 [shape = 'u8[294912]{0}', space=vmem, size = 0x48000, scoped, tag = 'input window, operand 3, single buffered']
    #allocation19 [shape = 's32[1]{0}', space=sflag, size = 0x4, scoped, tag = 'scoped memory for tpu_custom_call.1']
    #allocation20 [shape = 'u8[294912]{0}', space=vmem, size = 0x48000, scoped, tag = 'input window, operand 4, single buffered']
    #allocation21 [shape = 'u8[294912]{0}', space=vmem, size = 0x48000, scoped, tag = 'input window, operand 5, single buffered']
    #allocation22 [shape = 's32[1]{0}', space=sflag, size = 0x4, scoped, tag = 'scoped memory for tpu_custom_call.1']
    #allocation23 [shape = 'u8[294912]{0}', space=vmem, size = 0x48000, scoped, tag = 'input window, operand 9, single buffered']
    #allocation24 [shape = 'u8[24576]{0}', space=vmem, size = 0x6000, scoped, tag = 'output window, operand 0']
    %16 = vsyncpa [#allocation13], 0
    %s17 = scalar_lea.sflag [#allocation13], 1
    %18 = vsyncpa %s17, 0
    %19 = vsyncpa [#allocation16], 0
    %s20 = scalar_lea.sflag [#allocation16], 1
    %21 = vsyncpa %s20, 0
    %22 = vsyncpa [#allocation19], 0
    %23 = vsyncpa [#allocation22], 0
    %24 = vsyncpa [#allocation14], 0
    %s25 = scalar_lea.sflag [#allocation14], 1
    %26 = vsyncpa %s25, 0
    loop: start=0, step=1, limit=4
    $region2: #{tpu_custom_call.1} parent=1 // loop_pre_header
      _
    $region3: #{tpu_custom_call.1} parent=1 // loop_header
      %s28 = sphi 0, %s32
      %p29 = scmp.ge.s32.totalorder %s28, 4
      %s35 = sphi 0, %s54
      %s36 = sphi 0, %s50
      %s37 = sphi 0, %s46
      %s38 = sphi 0, %s35
      %s39 = sphi 0, %s36
      %s40 = sphi 0, %s37
      %s41 = sphi 0, %s38
      %s42 = sphi 0, %s39
      %s43 = sphi 0, %s40
      %s59 = sphi 0, %s61
      %s62 = sphi 0, %s59
      %s63 = sphi 0, %s62
      %s79 = sphi 0, %s63
      %s87 = sphi 0, %s89
      %s90 = sphi 0, %s87
      %s91 = sphi 0, %s90
      %s107 = sphi 0, %s91
      %s115 = sphi 0, %s117
      %s118 = sphi 0, %s115
      %s119 = sphi 0, %s118
      %s135 = sphi 0, %s119
      %s139 = sphi 0, %s139
      %s141 = sphi 0, %s139
      %s142 = sphi 0, %s141
      %s156 = sphi 0, %s142
      %s160 = sphi 0, %s160
      %s162 = sphi 0, %s160
      %s163 = sphi 0, %s162
      %s177 = sphi 0, %s163
      %s181 = sphi 0, %s181
      %s183 = sphi 0, %s181
      %s184 = sphi 0, %s183
      %s198 = sphi 0, %s184
      %s202 = sphi 0, %s202
      %s204 = sphi 0, %s202
      %s205 = sphi 0, %s204
      %s219 = sphi 0, %s205
      %s223 = sphi 0, %s223
      %s225 = sphi 0, %s223
      %s226 = sphi 0, %s225
      %s240 = sphi 0, %s226
      %s244 = sphi 0, %s244
      %s246 = sphi 0, %s244
      %s247 = sphi 0, %s246
      %s261 = sphi 0, %s247
      %s265 = sphi 0, %s265
      %s267 = sphi 0, %s265
      %s268 = sphi 0, %s267
      %s282 = sphi 0, %s268
      %s286 = sphi 0, %s286
      %s288 = sphi 0, %s286
      %s289 = sphi 0, %s288
      %s303 = sphi 0, %s289
      %s311 = sphi 0, %s313
      %s314 = sphi 0, %s311
      %s315 = sphi 0, %s314
      %s331 = sphi 0, %s315
    $region4: #{tpu_custom_call.1} parent=1 // loop_header_branch
      %31 = sbr.rel (%p29) target = $region8
    $region5: #{tpu_custom_call.1} parent=1 // loop_body
      %s33 = ssub.s32 %s28, 1
      %s34 = ssub.s32 %s28, 2
      %s44 = sadd.s32 1, %s37
      %p45 = scmp.ge.s32.totalorder %s44, 1
      %s46 = scalar_select %p45, 0, %s44
      %s47 = sadd.s32 1, %s36
      %s48 = scalar_select %p45, %s47, %s36
      %p49 = scmp.ge.s32.totalorder %s48, 1
      %s50 = scalar_select %p49, 0, %s48
      %s51 = sadd.s32 1, %s35
      %s52 = scalar_select %p49, %s51, %s35
      %p53 = scmp.ge.s32.totalorder %s52, 2
      %s54 = scalar_select %p53, 0, %s52
      %s55 = ssub.s32 %s35, %s54
      %s56 = ssub.s32 %s36, %s50
      %s57 = sor.u32 %s55, %s56
      %p58 = scmp.eq.s32.totalorder %s57, 0
      %s60 = sadd.s32 %s59, 1
      %s61 = scalar_select %p58, %s59, %s60
      %p64 = pneg %p58
      %p65 = scmp.eq.s32.totalorder %s28, 1
      %p66 = por %p64, %p65
      %p67 = scmp.ne.s32.totalorder %s59, %s62
      %p68 = scmp.eq.s32.totalorder %s28, 0
      %p69 = por %p67, %p68
      %p70 = scmp.ne.s32.totalorder %s59, %s62
      %p71 = scmp.eq.s32.totalorder %s33, 1
      %p72 = por %p70, %p71
      %p73 = scmp.ne.s32.totalorder %s62, %s63
      %p74 = scmp.eq.s32.totalorder %s33, 0
      %p75 = por %p73, %p74
      %p76 = scmp.ne.s32.totalorder %s62, %s63
      %p77 = scmp.eq.s32.totalorder %s34, 1
      %p78 = por %p76, %p77
      %p80 = scmp.ne.s32.totalorder %s63, %s79
      %p81 = scmp.eq.s32.totalorder %s34, 0
      %p82 = por %p80, %p81
      %s83 = ssub.s32 %s35, %s54
      %s84 = ssub.s32 %s37, %s46
      %s85 = sor.u32 %s83, %s84
      %p86 = scmp.eq.s32.totalorder %s85, 0
      %s88 = sadd.s32 %s87, 1
      %s89 = scalar_select %p86, %s87, %s88
      %p92 = pneg %p86
      %p93 = scmp.eq.s32.totalorder %s28, 1
      %p94 = por %p92, %p93
      %p95 = scmp.ne.s32.totalorder %s87, %s90
      %p96 = scmp.eq.s32.totalorder %s28, 0
      %p97 = por %p95, %p96
      %p98 = scmp.ne.s32.totalorder %s87, %s90
      %p99 = scmp.eq.s32.totalorder %s33, 1
      %p100 = por %p98, %p99
      %p101 = scmp.ne.s32.totalorder %s90, %s91
      %p102 = scmp.eq.s32.totalorder %s33, 0
      %p103 = por %p101, %p102
      %p104 = scmp.ne.s32.totalorder %s90, %s91
      %p105 = scmp.eq.s32.totalorder %s34, 1
      %p106 = por %p104, %p105
      %p108 = scmp.ne.s32.totalorder %s91, %s107
      %p109 = scmp.eq.s32.totalorder %s34, 0
      %p110 = por %p108, %p109
      %s111 = ssub.s32 %s35, %s54
      %s112 = ssub.s32 %s37, %s46
      %s113 = sor.u32 %s111, %s112
      %p114 = scmp.eq.s32.totalorder %s113, 0
      %s116 = sadd.s32 %s115, 1
      %s117 = scalar_select %p114, %s115, %s116
      %p120 = pneg %p114
      %p121 = scmp.eq.s32.totalorder %s28, 1
      %p122 = por %p120, %p121
      %p123 = scmp.ne.s32.totalorder %s115, %s118
      %p124 = scmp.eq.s32.totalorder %s28, 0
      %p125 = por %p123, %p124
      %p126 = scmp.ne.s32.totalorder %s115, %s118
      %p127 = scmp.eq.s32.totalorder %s33, 1
      %p128 = por %p126, %p127
      %p129 = scmp.ne.s32.totalorder %s118, %s119
      %p130 = scmp.eq.s32.totalorder %s33, 0
      %p131 = por %p129, %p130
      %p132 = scmp.ne.s32.totalorder %s118, %s119
      %p133 = scmp.eq.s32.totalorder %s34, 1
      %p134 = por %p132, %p133
      %p136 = scmp.ne.s32.totalorder %s119, %s135
      %p137 = scmp.eq.s32.totalorder %s34, 0
      %p138 = por %p136, %p137
      %s140 = sadd.s32 %s139, 1
      %p143 = scmp.eq.s32.totalorder %s28, 1
      %p144 = scmp.ne.s32.totalorder %s139, %s141
      %p145 = scmp.eq.s32.totalorder %s28, 0
      %p146 = por %p144, %p145
      %p147 = scmp.ne.s32.totalorder %s139, %s141
      %p148 = scmp.eq.s32.totalorder %s33, 1
      %p149 = por %p147, %p148
      %p150 = scmp.ne.s32.totalorder %s141, %s142
      %p151 = scmp.eq.s32.totalorder %s33, 0
      %p152 = por %p150, %p151
      %p153 = scmp.ne.s32.totalorder %s141, %s142
      %p154 = scmp.eq.s32.totalorder %s34, 1
      %p155 = por %p153, %p154
      %p157 = scmp.ne.s32.totalorder %s142, %s156
      %p158 = scmp.eq.s32.totalorder %s34, 0
      %p159 = por %p157, %p158
      %s161 = sadd.s32 %s160, 1
      %p164 = scmp.eq.s32.totalorder %s28, 1
      %p165 = scmp.ne.s32.totalorder %s160, %s162
      %p166 = scmp.eq.s32.totalorder %s28, 0
      %p167 = por %p165, %p166
      %p168 = scmp.ne.s32.totalorder %s160, %s162
      %p169 = scmp.eq.s32.totalorder %s33, 1
      %p170 = por %p168, %p169
      %p171 = scmp.ne.s32.totalorder %s162, %s163
      %p172 = scmp.eq.s32.totalorder %s33, 0
      %p173 = por %p171, %p172
      %p174 = scmp.ne.s32.totalorder %s162, %s163
      %p175 = scmp.eq.s32.totalorder %s34, 1
      %p176 = por %p174, %p175
      %p178 = scmp.ne.s32.totalorder %s163, %s177
      %p179 = scmp.eq.s32.totalorder %s34, 0
      %p180 = por %p178, %p179
      %s182 = sadd.s32 %s181, 1
      %p185 = scmp.eq.s32.totalorder %s28, 1
      %p186 = scmp.ne.s32.totalorder %s181, %s183
      %p187 = scmp.eq.s32.totalorder %s28, 0
      %p188 = por %p186, %p187
      %p189 = scmp.ne.s32.totalorder %s181, %s183
      %p190 = scmp.eq.s32.totalorder %s33, 1
      %p191 = por %p189, %p190
      %p192 = scmp.ne.s32.totalorder %s183, %s184
      %p193 = scmp.eq.s32.totalorder %s33, 0
      %p194 = por %p192, %p193
      %p195 = scmp.ne.s32.totalorder %s183, %s184
      %p196 = scmp.eq.s32.totalorder %s34, 1
      %p197 = por %p195, %p196
      %p199 = scmp.ne.s32.totalorder %s184, %s198
      %p200 = scmp.eq.s32.totalorder %s34, 0
      %p201 = por %p199, %p200
      %s203 = sadd.s32 %s202, 1
      %p206 = scmp.eq.s32.totalorder %s28, 1
      %p207 = scmp.ne.s32.totalorder %s202, %s204
      %p208 = scmp.eq.s32.totalorder %s28, 0
      %p209 = por %p207, %p208
      %p210 = scmp.ne.s32.totalorder %s202, %s204
      %p211 = scmp.eq.s32.totalorder %s33, 1
      %p212 = por %p210, %p211
      %p213 = scmp.ne.s32.totalorder %s204, %s205
      %p214 = scmp.eq.s32.totalorder %s33, 0
      %p215 = por %p213, %p214
      %p216 = scmp.ne.s32.totalorder %s204, %s205
      %p217 = scmp.eq.s32.totalorder %s34, 1
      %p218 = por %p216, %p217
      %p220 = scmp.ne.s32.totalorder %s205, %s219
      %p221 = scmp.eq.s32.totalorder %s34, 0
      %p222 = por %p220, %p221
      %s224 = sadd.s32 %s223, 1
      %p227 = scmp.eq.s32.totalorder %s28, 1
      %p228 = scmp.ne.s32.totalorder %s223, %s225
      %p229 = scmp.eq.s32.totalorder %s28, 0
      %p230 = por %p228, %p229
      %p231 = scmp.ne.s32.totalorder %s223, %s225
      %p232 = scmp.eq.s32.totalorder %s33, 1
      %p233 = por %p231, %p232
      %p234 = scmp.ne.s32.totalorder %s225, %s226
      %p235 = scmp.eq.s32.totalorder %s33, 0
      %p236 = por %p234, %p235
      %p237 = scmp.ne.s32.totalorder %s225, %s226
      %p238 = scmp.eq.s32.totalorder %s34, 1
      %p239 = por %p237, %p238
      %p241 = scmp.ne.s32.totalorder %s226, %s240
      %p242 = scmp.eq.s32.totalorder %s34, 0
      %p243 = por %p241, %p242
      %s245 = sadd.s32 %s244, 1
      %p248 = scmp.eq.s32.totalorder %s28, 1
      %p249 = scmp.ne.s32.totalorder %s244, %s246
      %p250 = scmp.eq.s32.totalorder %s28, 0
      %p251 = por %p249, %p250
      %p252 = scmp.ne.s32.totalorder %s244, %s246
      %p253 = scmp.eq.s32.totalorder %s33, 1
      %p254 = por %p252, %p253
      %p255 = scmp.ne.s32.totalorder %s246, %s247
      %p256 = scmp.eq.s32.totalorder %s33, 0
      %p257 = por %p255, %p256
      %p258 = scmp.ne.s32.totalorder %s246, %s247
      %p259 = scmp.eq.s32.totalorder %s34, 1
      %p260 = por %p258, %p259
      %p262 = scmp.ne.s32.totalorder %s247, %s261
      %p263 = scmp.eq.s32.totalorder %s34, 0
      %p264 = por %p262, %p263
      %s266 = sadd.s32 %s265, 1
      %p269 = scmp.eq.s32.totalorder %s28, 1
      %p270 = scmp.ne.s32.totalorder %s265, %s267
      %p271 = scmp.eq.s32.totalorder %s28, 0
      %p272 = por %p270, %p271
      %p273 = scmp.ne.s32.totalorder %s265, %s267
      %p274 = scmp.eq.s32.totalorder %s33, 1
      %p275 = por %p273, %p274
      %p276 = scmp.ne.s32.totalorder %s267, %s268
      %p277 = scmp.eq.s32.totalorder %s33, 0
      %p278 = por %p276, %p277
      %p279 = scmp.ne.s32.totalorder %s267, %s268
      %p280 = scmp.eq.s32.totalorder %s34, 1
      %p281 = por %p279, %p280
      %p283 = scmp.ne.s32.totalorder %s268, %s282
      %p284 = scmp.eq.s32.totalorder %s34, 0
      %p285 = por %p283, %p284
      %s287 = sadd.s32 %s286, 1
      %p290 = scmp.eq.s32.totalorder %s28, 1
      %p291 = scmp.ne.s32.totalorder %s286, %s288
      %p292 = scmp.eq.s32.totalorder %s28, 0
      %p293 = por %p291, %p292
      %p294 = scmp.ne.s32.totalorder %s286, %s288
      %p295 = scmp.eq.s32.totalorder %s33, 1
      %p296 = por %p294, %p295
      %p297 = scmp.ne.s32.totalorder %s288, %s289
      %p298 = scmp.eq.s32.totalorder %s33, 0
      %p299 = por %p297, %p298
      %p300 = scmp.ne.s32.totalorder %s288, %s289
      %p301 = scmp.eq.s32.totalorder %s34, 1
      %p302 = por %p300, %p301
      %p304 = scmp.ne.s32.totalorder %s289, %s303
      %p305 = scmp.eq.s32.totalorder %s34, 0
      %p306 = por %p304, %p305
      %s307 = ssub.s32 %s35, %s54
      %s308 = ssub.s32 %s36, %s50
      %s309 = sor.u32 %s307, %s308
      %p310 = scmp.eq.s32.totalorder %s309, 0
      %s312 = sadd.s32 %s311, 1
      %s313 = scalar_select %p310, %s311, %s312
      %p316 = pneg %p310
      %p317 = scmp.eq.s32.totalorder %s28, 1
      %p318 = por %p316, %p317
      %p319 = scmp.ne.s32.totalorder %s311, %s314
      %p320 = scmp.eq.s32.totalorder %s28, 0
      %p321 = por %p319, %p320
      %p322 = scmp.ne.s32.totalorder %s311, %s314
      %p323 = scmp.eq.s32.totalorder %s33, 1
      %p324 = por %p322, %p323
      %p325 = scmp.ne.s32.totalorder %s314, %s315
      %p326 = scmp.eq.s32.totalorder %s33, 0
      %p327 = por %p325, %p326
      %p328 = scmp.ne.s32.totalorder %s314, %s315
      %p329 = scmp.eq.s32.totalorder %s34, 1
      %p330 = por %p328, %p329
      %p332 = scmp.ne.s32.totalorder %s315, %s331
      %p333 = scmp.eq.s32.totalorder %s34, 0
      %p334 = por %p332, %p333
      %p335 = scmp.le.s32.totalorder 1, %s28
      %p336 = scmp.lt.s32.totalorder %s28, 3
      %p337 = pnand %p335, %p336
      %p338 = pneg %p337
      // Predicated region
      $region9: #{tpu_custom_call.1} parent=5 // pred_check
        _
      $region10: #{tpu_custom_call.1} parent=5 // pred_check_branch
        %340 = sbr.rel (%p337) target = $region12
      $region11: #{tpu_custom_call.1} parent=5 // pred_region
        %s341 = ssub.s32 %s28, 1
        // Predicated region
        $region13: #{tpu_custom_call.1} parent=11 // pred_check
          %p342 = pneg %p152
        $region14: #{tpu_custom_call.1} parent=11 // pred_check_branch
          %344 = sbr.rel (%p342) target = $region16
        $region15: #{tpu_custom_call.1} parent=11 // pred_region
          %s346 = ssub.s32 9216, 9216
          %347 = vsyncadd [#allocation19], %s346
          %s348 = sshll.u32 [#allocation18], 4
          %s349 = int_to_ptr.vmem [resolvable:$true] %s348
          %354 = dma.hbm_to_vmem [thread:$0]  %s3, 9216, %s349, [#allocation19], 192, 192, 12
        $region16: #{tpu_custom_call.1} parent=11 // pred_fallthru
          _
        // Predicated region
        $region17: #{tpu_custom_call.1} parent=11 // pred_check
          %p355 = pneg %p173
        $region18: #{tpu_custom_call.1} parent=11 // pred_check_branch
          %357 = sbr.rel (%p355) target = $region20
        $region19: #{tpu_custom_call.1} parent=11 // pred_region
          %s359 = ssub.s32 9216, 9216
          %360 = vsyncadd [#allocation19], %s359
          %s361 = sshll.u32 [#allocation20], 4
          %s362 = int_to_ptr.vmem [resolvable:$true] %s361
          %367 = dma.hbm_to_vmem [thread:$0]  %s4, 9216, %s362, [#allocation19], 192, 192, 12
        $region20: #{tpu_custom_call.1} parent=11 // pred_fallthru
          _
        // Predicated region
        $region21: #{tpu_custom_call.1} parent=11 // pred_check
          %p368 = pneg %p194
        $region22: #{tpu_custom_call.1} parent=11 // pred_check_branch
          %370 = sbr.rel (%p368) target = $region24
        $region23: #{tpu_custom_call.1} parent=11 // pred_region
          %s372 = ssub.s32 9216, 9216
          %373 = vsyncadd [#allocation22], %s372
          %s374 = sshll.u32 [#allocation21], 4
          %s375 = int_to_ptr.vmem [resolvable:$true] %s374
          %380 = dma.hbm_to_vmem [thread:$0]  %s5, 9216, %s375, [#allocation22], 192, 192, 12
        $region24: #{tpu_custom_call.1} parent=11 // pred_fallthru
          _
        // Predicated region
        $region25: #{tpu_custom_call.1} parent=11 // pred_check
          %p381 = pneg %p215
        $region26: #{tpu_custom_call.1} parent=11 // pred_check_branch
          %383 = sbr.rel (%p381) target = $region28
        $region27: #{tpu_custom_call.1} parent=11 // pred_region
          _
        $region28: #{tpu_custom_call.1} parent=11 // pred_fallthru
          _
        // Predicated region
        $region29: #{tpu_custom_call.1} parent=11 // pred_check
          %p384 = pneg %p236
        $region30: #{tpu_custom_call.1} parent=11 // pred_check_branch
          %386 = sbr.rel (%p384) target = $region32
        $region31: #{tpu_custom_call.1} parent=11 // pred_region
          _
        $region32: #{tpu_custom_call.1} parent=11 // pred_fallthru
          _
        // Predicated region
        $region33: #{tpu_custom_call.1} parent=11 // pred_check
          %p387 = pneg %p257
        $region34: #{tpu_custom_call.1} parent=11 // pred_check_branch
          %389 = sbr.rel (%p387) target = $region36
        $region35: #{tpu_custom_call.1} parent=11 // pred_region
          _
        $region36: #{tpu_custom_call.1} parent=11 // pred_fallthru
          _
        // Predicated region
        $region37: #{tpu_custom_call.1} parent=11 // pred_check
          %p390 = pneg %p278
        $region38: #{tpu_custom_call.1} parent=11 // pred_check_branch
          %392 = sbr.rel (%p390) target = $region40
        $region39: #{tpu_custom_call.1} parent=11 // pred_region
          %s394 = ssub.s32 9216, 9216
          %395 = vsyncadd [#allocation22], %s394
          %s396 = sshll.u32 [#allocation23], 4
          %s397 = int_to_ptr.vmem [resolvable:$true] %s396
          %402 = dma.hbm_to_vmem [thread:$0]  %s9, 9216, %s397, [#allocation22], 192, 192, 12
        $region40: #{tpu_custom_call.1} parent=11 // pred_fallthru
          _
        // Predicated region
        $region41: #{tpu_custom_call.1} parent=11 // pred_check
          %p403 = pneg %p299
        $region42: #{tpu_custom_call.1} parent=11 // pred_check_branch
          %405 = sbr.rel (%p403) target = $region44
        $region43: #{tpu_custom_call.1} parent=11 // pred_region
          _
        $region44: #{tpu_custom_call.1} parent=11 // pred_fallthru
          _
      $region12: #{tpu_custom_call.1} parent=5 // pred_fallthru
        _
      %p406 = scmp.lt.s32.totalorder %s28, 2
      // Predicated region
      $region45: #{tpu_custom_call.1} parent=5 // pred_check
        %p407 = pneg %p406
      $region46: #{tpu_custom_call.1} parent=5 // pred_check_branch
        %409 = sbr.rel (%p407) target = $region48
      $region47: #{tpu_custom_call.1} parent=5 // pred_region
        // Predicated region
        $region49: #{tpu_custom_call.1} parent=47 // pred_check
          %p410 = pneg %p69
        $region50: #{tpu_custom_call.1} parent=47 // pred_check_branch
          %412 = sbr.rel (%p410) target = $region52
        $region51: #{tpu_custom_call.1} parent=47 // pred_region
          %s413 = sand.u32 %s59, 1
          %s414 = scalar_lea.sflag [#allocation13], %s413
          %s415 = sand.u32 %s59, 1
          %s416 = smul.addr %s415, 24
          %s417 = scalar_lea.vmem [#allocation12], %s416
          %s419 = ssub.s32 384, 384
          %420 = vsyncadd %s414, %s419
          %s421 = smul.addr %s36, 3
          %s422 = smul.addr %s35, 3
          %s423 = sadd.s32 %s421, %s422
          %s424 = smul.addr %s423, 128
          %s425 = scalar_lea.hbm %s0, %s424
          %s427 = sshll.u32 %s417, 4
          %s428 = int_to_ptr.vmem [resolvable:$true] %s427
          %430 = dma.hbm_to_vmem [thread:$0]  %s425, 384, %s428, %s414
        $region52: #{tpu_custom_call.1} parent=47 // pred_fallthru
          _
        // Predicated region
        $region53: #{tpu_custom_call.1} parent=47 // pred_check
          %p431 = pneg %p97
        $region54: #{tpu_custom_call.1} parent=47 // pred_check_branch
          %433 = sbr.rel (%p431) target = $region56
        $region55: #{tpu_custom_call.1} parent=47 // pred_region
          %s434 = sand.u32 %s28, 1
          %s435 = scalar_lea.sflag [#allocation16], %s434
          %s436 = sand.u32 %s87, 1
          %s437 = smul.addr %s436, 24
          %s438 = scalar_lea.vmem [#allocation15], %s437
          %s440 = ssub.s32 384, 384
          %441 = vsyncadd %s435, %s440
          %s442 = smul.addr %s37, 3
          %s443 = smul.addr %s35, 3
          %s444 = sadd.s32 %s442, %s443
          %s445 = smul.addr %s444, 128
          %s446 = scalar_lea.hbm %s1, %s445
          %s448 = sshll.u32 %s438, 4
          %s449 = int_to_ptr.vmem [resolvable:$true] %s448
          %451 = dma.hbm_to_vmem [thread:$0]  %s446, 384, %s449, %s435
        $region56: #{tpu_custom_call.1} parent=47 // pred_fallthru
          _
        // Predicated region
        $region57: #{tpu_custom_call.1} parent=47 // pred_check
          %p452 = pneg %p125
        $region58: #{tpu_custom_call.1} parent=47 // pred_check_branch
          %454 = sbr.rel (%p452) target = $region60
        $region59: #{tpu_custom_call.1} parent=47 // pred_region
          %s455 = sand.u32 %s28, 1
          %s456 = scalar_lea.sflag [#allocation16], %s455
          %s457 = sand.u32 %s115, 1
          %s458 = smul.addr %s457, 24
          %s459 = scalar_lea.vmem [#allocation17], %s458
          %s461 = ssub.s32 384, 384
          %462 = vsyncadd %s456, %s461
          %s463 = smul.addr %s37, 3
          %s464 = smul.addr %s35, 3
          %s465 = sadd.s32 %s463, %s464
          %s466 = smul.addr %s465, 128
          %s467 = scalar_lea.hbm %s2, %s466
          %s469 = sshll.u32 %s459, 4
          %s470 = int_to_ptr.vmem [resolvable:$true] %s469
          %472 = dma.hbm_to_vmem [thread:$0]  %s467, 384, %s470, %s456
        $region60: #{tpu_custom_call.1} parent=47 // pred_fallthru
          _
      $region48: #{tpu_custom_call.1} parent=5 // pred_fallthru
        _
      %p473 = scmp.le.s32.totalorder 1, %s28
      %p474 = scmp.lt.s32.totalorder %s28, 3
      %p475 = pnand %p473, %p474
      %p476 = pneg %p475
      // Predicated region
      $region61: #{tpu_custom_call.1} parent=5 // pred_check
        _
      $region62: #{tpu_custom_call.1} parent=5 // pred_check_branch
        %478 = sbr.rel (%p475) target = $region64
      $region63: #{tpu_custom_call.1} parent=5 // pred_region
        %s479 = ssub.s32 %s28, 1
        %s480 = sand.u32 %s62, 1
        %s481 = scalar_lea.sflag [#allocation13], %s480
        %s482 = sand.u32 %s62, 1
        %s483 = smul.addr %s482, 24
        %s484 = scalar_lea.vmem [#allocation12], %s483
        // Predicated region
        $region65: #{tpu_custom_call.1} parent=63 // pred_check
          %p485 = pneg %p75
        $region66: #{tpu_custom_call.1} parent=63 // pred_check_branch
          %487 = sbr.rel (%p485) target = $region68
        $region67: #{tpu_custom_call.1} parent=63 // pred_region
          %488 = dma.done %s481, 384
        $region68: #{tpu_custom_call.1} parent=63 // pred_fallthru
          _
        %s489 = sand.u32 %s33, 1
        %s490 = scalar_lea.sflag [#allocation16], %s489
        %s491 = sand.u32 %s90, 1
        %s492 = smul.addr %s491, 24
        %s493 = scalar_lea.vmem [#allocation15], %s492
        // Predicated region
        $region69: #{tpu_custom_call.1} parent=63 // pred_check
          %p494 = pneg %p103
        $region70: #{tpu_custom_call.1} parent=63 // pred_check_branch
          %496 = sbr.rel (%p494) target = $region72
        $region71: #{tpu_custom_call.1} parent=63 // pred_region
          %497 = dma.done %s490, 384
        $region72: #{tpu_custom_call.1} parent=63 // pred_fallthru
          _
        %s498 = sand.u32 %s33, 1
        %s499 = scalar_lea.sflag [#allocation16], %s498
        %s500 = sand.u32 %s118, 1
        %s501 = smul.addr %s500, 24
        %s502 = scalar_lea.vmem [#allocation17], %s501
        // Predicated region
        $region73: #{tpu_custom_call.1} parent=63 // pred_check
          %p503 = pneg %p131
        $region74: #{tpu_custom_call.1} parent=63 // pred_check_branch
          %505 = sbr.rel (%p503) target = $region76
        $region75: #{tpu_custom_call.1} parent=63 // pred_region
          %506 = dma.done %s499, 384
        $region76: #{tpu_custom_call.1} parent=63 // pred_fallthru
          _
        // Predicated region
        $region77: #{tpu_custom_call.1} parent=63 // pred_check
          %p507 = pneg %p152
        $region78: #{tpu_custom_call.1} parent=63 // pred_check_branch
          %509 = sbr.rel (%p507) target = $region80
        $region79: #{tpu_custom_call.1} parent=63 // pred_region
          %510 = dma.done [#allocation19], 9216
        $region80: #{tpu_custom_call.1} parent=63 // pred_fallthru
          _
        // Predicated region
        $region81: #{tpu_custom_call.1} parent=63 // pred_check
          %p511 = pneg %p173
        $region82: #{tpu_custom_call.1} parent=63 // pred_check_branch
          %513 = sbr.rel (%p511) target = $region84
        $region83: #{tpu_custom_call.1} parent=63 // pred_region
          %514 = dma.done [#allocation19], 9216
        $region84: #{tpu_custom_call.1} parent=63 // pred_fallthru
          _
        // Predicated region
        $region85: #{tpu_custom_call.1} parent=63 // pred_check
          %p515 = pneg %p194
        $region86: #{tpu_custom_call.1} parent=63 // pred_check_branch
          %517 = sbr.rel (%p515) target = $region88
        $region87: #{tpu_custom_call.1} parent=63 // pred_region
          %518 = dma.done [#allocation22], 9216
        $region88: #{tpu_custom_call.1} parent=63 // pred_fallthru
          _
        // Predicated region
        $region89: #{tpu_custom_call.1} parent=63 // pred_check
          %p519 = pneg %p278
        $region90: #{tpu_custom_call.1} parent=63 // pred_check_branch
          %521 = sbr.rel (%p519) target = $region92
        $region91: #{tpu_custom_call.1} parent=63 // pred_region
          %522 = dma.done [#allocation22], 9216
        $region92: #{tpu_custom_call.1} parent=63 // pred_fallthru
          _
        %s523 = sand.u32 %s62, 1
        %s524 = scalar_lea.sflag [#allocation13], %s523
        %s525 = sand.u32 %s62, 1
        %s526 = smul.addr %s525, 24
        %s527 = scalar_lea.vmem [#allocation12], %s526
        %p528 = pneg %p75
        %p529 = pneg %p72
        %s530 = sand.u32 %s33, 1
        %s531 = scalar_lea.sflag [#allocation16], %s530
        %s532 = sand.u32 %s90, 1
        %s533 = smul.addr %s532, 24
        %s534 = scalar_lea.vmem [#allocation15], %s533
        %p535 = pneg %p103
        %p536 = pneg %p100
        %s537 = sand.u32 %s33, 1
        %s538 = scalar_lea.sflag [#allocation16], %s537
        %s539 = sand.u32 %s118, 1
        %s540 = smul.addr %s539, 24
        %s541 = scalar_lea.vmem [#allocation17], %s540
        %p542 = pneg %p131
        %p543 = pneg %p128
        %p544 = pneg %p152
        %p545 = pneg %p149
        %p546 = pneg %p173
        %p547 = pneg %p170
        %p548 = pneg %p194
        %p549 = pneg %p191
        %p550 = pneg %p215
        %p551 = pneg %p212
        %p552 = pneg %p236
        %p553 = pneg %p233
        %p554 = pneg %p257
        %p555 = pneg %p254
        %p556 = pneg %p278
        %p557 = pneg %p275
        %p558 = pneg %p299
        %p559 = pneg %p296
        %p560 = pneg %p327
        %p561 = pneg %p324
        %s562 = sand.u32 %s314, 1
        %s563 = scalar_lea.sflag [#allocation14], %s562
        %s564 = sand.u32 %s314, 1
        %s565 = smul.addr %s564, 24
        %s566 = scalar_lea.vmem [#allocation24], %s565
        %p568 = scmp.eq.s32.totalorder %s40, 0
        // Predicated region
        $region93: #{tpu_custom_call.1} parent=63 // pred_check
          %p569 = pneg %p568
        $region94: #{tpu_custom_call.1} parent=63 // pred_check_branch
          %571 = sbr.rel (%p569) target = $region96
        $region95: #{tpu_custom_call.1} parent=63 // pred_region
          %v572 = vld [vmem:[%s484] sm:$0xff]
          %v573 = vld [vmem:[%s484 + $0x8] sm:$0xff]
          %v574 = vld [vmem:[%s484 + $0x10] sm:$0xff]
          %v575 = vpack.c.bf16 %v572, %v572
          %v576 = vpack.c.bf16 %v573, %v573
          %v577 = vpack.c.bf16 %v574, %v574
          %v578 = vld [vmem:[#allocation18] sm:$0xff]
          %v579 = vld [vmem:[#allocation18 + $0x8] sm:$0xf]
          %v580 = vld [vmem:[#allocation18 + $0xc] sm:$0xff]
          %v581 = vld [vmem:[#allocation18 + $0x14] sm:$0xf]
          %v582 = vld [vmem:[#allocation18 + $0x18] sm:$0xff]
          %v583 = vld [vmem:[#allocation18 + $0x20] sm:$0xf]
          %v584 = vld [vmem:[#allocation18 + $0x24] sm:$0xff]
          %v585 = vld [vmem:[#allocation18 + $0x2c] sm:$0xf]
          %v586 = vld [vmem:[#allocation18 + $0x30] sm:$0xff]
          %v587 = vld [vmem:[#allocation18 + $0x38] sm:$0xf]
          %v588 = vld [vmem:[#allocation18 + $0x3c] sm:$0xff]
          %v589 = vld [vmem:[#allocation18 + $0x44] sm:$0xf]
          %v590 = vld [vmem:[#allocation18 + $0x48] sm:$0xff]
          %v591 = vld [vmem:[#allocation18 + $0x50] sm:$0xf]
          %v592 = vld [vmem:[#allocation18 + $0x54] sm:$0xff]
          %v593 = vld [vmem:[#allocation18 + $0x5c] sm:$0xf]
          %v594 = vld [vmem:[#allocation18 + $0x60] sm:$0xff]
          %v595 = vld [vmem:[#allocation18 + $0x68] sm:$0xf]
          %v596 = vld [vmem:[#allocation18 + $0x6c] sm:$0xff]
          %v597 = vld [vmem:[#allocation18 + $0x74] sm:$0xf]
          %v598 = vld [vmem:[#allocation18 + $0x78] sm:$0xff]
          %v599 = vld [vmem:[#allocation18 + $0x80] sm:$0xf]
          %v600 = vld [vmem:[#allocation18 + $0x84] sm:$0xff]
          %v601 = vld [vmem:[#allocation18 + $0x8c] sm:$0xf]
          %v602 = vld [vmem:[#allocation18 + $0x90] sm:$0xff]
          %v603 = vld [vmem:[#allocation18 + $0x98] sm:$0xf]
          %v604 = vld [vmem:[#allocation18 + $0x9c] sm:$0xff]
          %v605 = vld [vmem:[#allocation18 + $0xa4] sm:$0xf]
          %v606 = vld [vmem:[#allocation18 + $0xa8] sm:$0xff]
          %v607 = vld [vmem:[#allocation18 + $0xb0] sm:$0xf]
          %v608 = vld [vmem:[#allocation18 + $0xb4] sm:$0xff]
          %v609 = vld [vmem:[#allocation18 + $0xbc] sm:$0xf]
          %v610 = vld [vmem:[#allocation18 + $0xc0] sm:$0xff]
          %v611 = vld [vmem:[#allocation18 + $0xc8] sm:$0xf]
          %v612 = vld [vmem:[#allocation18 + $0xcc] sm:$0xff]
          %v613 = vld [vmem:[#allocation18 + $0xd4] sm:$0xf]
          %v614 = vld [vmem:[#allocation18 + $0xd8] sm:$0xff]
          %v615 = vld [vmem:[#allocation18 + $0xe0] sm:$0xf]
          %v616 = vld [vmem:[#allocation18 + $0xe4] sm:$0xff]
          %v617 = vld [vmem:[#allocation18 + $0xec] sm:$0xf]
          %v618 = vld [vmem:[#allocation18 + $0xf0] sm:$0xff]
          %v619 = vld [vmem:[#allocation18 + $0xf8] sm:$0xf]
          %v620 = vld [vmem:[#allocation18 + $0xfc] sm:$0xff]
          %v621 = vld [vmem:[#allocation18 + $0x104] sm:$0xf]
          %v622 = vld [vmem:[#allocation18 + $0x108] sm:$0xff]
          %v623 = vld [vmem:[#allocation18 + $0x110] sm:$0xf]
          %v624 = vld [vmem:[#allocation18 + $0x114] sm:$0xff]
          %v625 = vld [vmem:[#allocation18 + $0x11c] sm:$0xf]
          %v626 = vld [vmem:[#allocation18 + $0x120] sm:$0xff]
          %v627 = vld [vmem:[#allocation18 + $0x128] sm:$0xf]
          %v628 = vld [vmem:[#allocation18 + $0x12c] sm:$0xff]
          %v629 = vld [vmem:[#allocation18 + $0x134] sm:$0xf]
          %v630 = vld [vmem:[#allocation18 + $0x138] sm:$0xff]
          %v631 = vld [vmem:[#allocation18 + $0x140] sm:$0xf]
          %v632 = vld [vmem:[#allocation18 + $0x144] sm:$0xff]
          %v633 = vld [vmem:[#allocation18 + $0x14c] sm:$0xf]
          %v634 = vld [vmem:[#allocation18 + $0x150] sm:$0xff]
          %v635 = vld [vmem:[#allocation18 + $0x158] sm:$0xf]
          %v636 = vld [vmem:[#allocation18 + $0x15c] sm:$0xff]
          %v637 = vld [vmem:[#allocation18 + $0x164] sm:$0xf]
          %v638 = vld [vmem:[#allocation18 + $0x168] sm:$0xff]
          %v639 = vld [vmem:[#allocation18 + $0x170] sm:$0xf]
          %v640 = vld [vmem:[#allocation18 + $0x174] sm:$0xff]
          %v641 = vld [vmem:[#allocation18 + $0x17c] sm:$0xf]
          %v642 = vld [vmem:[#allocation18 + $0x180] sm:$0xff]
          %v643 = vld [vmem:[#allocation18 + $0x188] sm:$0xf]
          %v644 = vld [vmem:[#allocation18 + $0x18c] sm:$0xff]
          %v645 = vld [vmem:[#allocation18 + $0x194] sm:$0xf]
          %v646 = vld [vmem:[#allocation18 + $0x198] sm:$0xff]
          %v647 = vld [vmem:[#allocation18 + $0x1a0] sm:$0xf]
          %v648 = vld [vmem:[#allocation18 + $0x1a4] sm:$0xff]
          %v649 = vld [vmem:[#allocation18 + $0x1ac] sm:$0xf]
          %v650 = vld [vmem:[#allocation18 + $0x1b0] sm:$0xff]
          %v651 = vld [vmem:[#allocation18 + $0x1b8] sm:$0xf]
          %v652 = vld [vmem:[#allocation18 + $0x1bc] sm:$0xff]
          %v653 = vld [vmem:[#allocation18 + $0x1c4] sm:$0xf]
          %v654 = vld [vmem:[#allocation18 + $0x1c8] sm:$0xff]
          %v655 = vld [vmem:[#allocation18 + $0x1d0] sm:$0xf]
          %v656 = vld [vmem:[#allocation18 + $0x1d4] sm:$0xff]
          %v657 = vld [vmem:[#allocation18 + $0x1dc] sm:$0xf]
          %v658 = vld [vmem:[#allocation18 + $0x1e0] sm:$0xff]
          %v659 = vld [vmem:[#allocation18 + $0x1e8] sm:$0xf]
          %v660 = vld [vmem:[#allocation18 + $0x1ec] sm:$0xff]
          %v661 = vld [vmem:[#allocation18 + $0x1f4] sm:$0xf]
          %v662 = vld [vmem:[#allocation18 + $0x1f8] sm:$0xff]
          %v663 = vld [vmem:[#allocation18 + $0x200] sm:$0xf]
          %v664 = vld [vmem:[#allocation18 + $0x204] sm:$0xff]
          %v665 = vld [vmem:[#allocation18 + $0x20c] sm:$0xf]
          %v666 = vld [vmem:[#allocation18 + $0x210] sm:$0xff]
          %v667 = vld [vmem:[#allocation18 + $0x218] sm:$0xf]
          %v668 = vld [vmem:[#allocation18 + $0x21c] sm:$0xff]
          %v669 = vld [vmem:[#allocation18 + $0x224] sm:$0xf]
          %v670 = vld [vmem:[#allocation18 + $0x228] sm:$0xff]
          %v671 = vld [vmem:[#allocation18 + $0x230] sm:$0xf]
          %v672 = vld [vmem:[#allocation18 + $0x234] sm:$0xff]
          %v673 = vld [vmem:[#allocation18 + $0x23c] sm:$0xf]
          %v674 = vld [vmem:[%s6] sm:$0x7]
          %v676 = vlaneseq
          %v677 = vshrl.u32 %v676, 7
          %v678 = vsub.s32 0, %v677
          %v679 = vrot.slane %v674, %v678
          %v680 = vlaneseq
          %v681 = vshrl.u32 %v680, 7
          %v682 = vsub.s32 1, %v681
          %v683 = vrot.slane %v674, %v682
          %v684 = vlaneseq
          %v685 = vshrl.u32 %v684, 7
          %v686 = vsub.s32 2, %v685
          %v687 = vrot.slane %v674, %v686
          %v787 = vunpack.c.l.b16 %v578
          %v788 = vunpack.c.h.b16 %v578
          %v789 = vunpack.c.l.b16 %v579
          %v790 = vunpack.c.l.b16 %v580
          %v791 = vunpack.c.h.b16 %v580
          %v792 = vunpack.c.l.b16 %v581
          %v793 = vunpack.c.l.b16 %v582
          %v794 = vunpack.c.h.b16 %v582
          %v795 = vunpack.c.l.b16 %v583
          %v796 = vunpack.c.l.b16 %v584
          %v797 = vunpack.c.h.b16 %v584
          %v798 = vunpack.c.l.b16 %v585
          %v799 = vunpack.c.l.b16 %v586
          %v800 = vunpack.c.h.b16 %v586
          %v801 = vunpack.c.l.b16 %v587
          %v802 = vunpack.c.l.b16 %v588
          %v803 = vunpack.c.h.b16 %v588
          %v804 = vunpack.c.l.b16 %v589
          %v805 = vunpack.c.l.b16 %v590
          %v806 = vunpack.c.h.b16 %v590
          %v807 = vunpack.c.l.b16 %v591
          %v808 = vunpack.c.l.b16 %v592
          %v809 = vunpack.c.h.b16 %v592
          %v810 = vunpack.c.l.b16 %v593
          %v811 = vunpack.c.l.b16 %v594
          %v812 = vunpack.c.h.b16 %v594
          %v813 = vunpack.c.l.b16 %v595
          %v814 = vunpack.c.l.b16 %v596
          %v815 = vunpack.c.h.b16 %v596
          %v816 = vunpack.c.l.b16 %v597
          %v817 = vunpack.c.l.b16 %v598
          %v818 = vunpack.c.h.b16 %v598
          %v819 = vunpack.c.l.b16 %v599
          %v820 = vunpack.c.l.b16 %v600
          %v821 = vunpack.c.h.b16 %v600
          %v822 = vunpack.c.l.b16 %v601
          %v823 = vunpack.c.l.b16 %v602
          %v824 = vunpack.c.h.b16 %v602
          %v825 = vunpack.c.l.b16 %v603
          %v826 = vunpack.c.l.b16 %v604
          %v827 = vunpack.c.h.b16 %v604
          %v828 = vunpack.c.l.b16 %v605
          %v829 = vunpack.c.l.b16 %v606
          %v830 = vunpack.c.h.b16 %v606
          %v831 = vunpack.c.l.b16 %v607
          %v832 = vunpack.c.l.b16 %v608
          %v833 = vunpack.c.h.b16 %v608
          %v834 = vunpack.c.l.b16 %v609
          %v835 = vunpack.c.l.b16 %v610
          %v836 = vunpack.c.h.b16 %v610
          %v837 = vunpack.c.l.b16 %v611
          %v838 = vunpack.c.l.b16 %v612
          %v839 = vunpack.c.h.b16 %v612
          %v840 = vunpack.c.l.b16 %v613
          %v841 = vunpack.c.l.b16 %v614
          %v842 = vunpack.c.h.b16 %v614
          %v843 = vunpack.c.l.b16 %v615
          %v844 = vunpack.c.l.b16 %v616
          %v845 = vunpack.c.h.b16 %v616
          %v846 = vunpack.c.l.b16 %v617
          %v847 = vunpack.c.l.b16 %v618
          %v848 = vunpack.c.h.b16 %v618
          %v849 = vunpack.c.l.b16 %v619
          %v850 = vunpack.c.l.b16 %v620
          %v851 = vunpack.c.h.b16 %v620
          %v852 = vunpack.c.l.b16 %v621
          %v853 = vunpack.c.l.b16 %v622
          %v854 = vunpack.c.h.b16 %v622
          %v855 = vunpack.c.l.b16 %v623
          %v856 = vunpack.c.l.b16 %v624
          %v857 = vunpack.c.h.b16 %v624
          %v858 = vunpack.c.l.b16 %v625
          %v859 = vunpack.c.l.b16 %v626
          %v860 = vunpack.c.h.b16 %v626
          %v861 = vunpack.c.l.b16 %v627
          %v862 = vunpack.c.l.b16 %v628
          %v863 = vunpack.c.h.b16 %v628
          %v864 = vunpack.c.l.b16 %v629
          %v865 = vunpack.c.l.b16 %v630
          %v866 = vunpack.c.h.b16 %v630
          %v867 = vunpack.c.l.b16 %v631
          %v868 = vunpack.c.l.b16 %v632
          %v869 = vunpack.c.h.b16 %v632
          %v870 = vunpack.c.l.b16 %v633
          %v871 = vunpack.c.l.b16 %v634
          %v872 = vunpack.c.h.b16 %v634
          %v873 = vunpack.c.l.b16 %v635
          %v874 = vunpack.c.l.b16 %v636
          %v875 = vunpack.c.h.b16 %v636
          %v876 = vunpack.c.l.b16 %v637
          %v877 = vunpack.c.l.b16 %v638
          %v878 = vunpack.c.h.b16 %v638
          %v879 = vunpack.c.l.b16 %v639
          %v880 = vunpack.c.l.b16 %v640
          %v881 = vunpack.c.h.b16 %v640
          %v882 = vunpack.c.l.b16 %v641
          %v883 = vunpack.c.l.b16 %v642
          %v884 = vunpack.c.h.b16 %v642
          %v885 = vunpack.c.l.b16 %v643
          %v886 = vunpack.c.l.b16 %v644
          %v887 = vunpack.c.h.b16 %v644
          %v888 = vunpack.c.l.b16 %v645
          %v889 = vunpack.c.l.b16 %v646
          %v890 = vunpack.c.h.b16 %v646
          %v891 = vunpack.c.l.b16 %v647
          %v892 = vunpack.c.l.b16 %v648
          %v893 = vunpack.c.h.b16 %v648
          %v894 = vunpack.c.l.b16 %v649
          %v895 = vunpack.c.l.b16 %v650
          %v896 = vunpack.c.h.b16 %v650
          %v897 = vunpack.c.l.b16 %v651
          %v898 = vunpack.c.l.b16 %v652
          %v899 = vunpack.c.h.b16 %v652
          %v900 = vunpack.c.l.b16 %v653
          %v901 = vunpack.c.l.b16 %v654
          %v902 = vunpack.c.h.b16 %v654
          %v903 = vunpack.c.l.b16 %v655
          %v904 = vunpack.c.l.b16 %v656
          %v905 = vunpack.c.h.b16 %v656
          %v906 = vunpack.c.l.b16 %v657
          %v907 = vunpack.c.l.b16 %v658
          %v908 = vunpack.c.h.b16 %v658
          %v909 = vunpack.c.l.b16 %v659
          %v910 = vunpack.c.l.b16 %v660
          %v911 = vunpack.c.h.b16 %v660
          %v912 = vunpack.c.l.b16 %v661
          %v913 = vunpack.c.l.b16 %v662
          %v914 = vunpack.c.h.b16 %v662
          %v915 = vunpack.c.l.b16 %v663
          %v916 = vunpack.c.l.b16 %v664
          %v917 = vunpack.c.h.b16 %v664
          %v918 = vunpack.c.l.b16 %v665
          %v919 = vunpack.c.l.b16 %v666
          %v920 = vunpack.c.h.b16 %v666
          %v921 = vunpack.c.l.b16 %v667
          %v922 = vunpack.c.l.b16 %v668
          %v923 = vunpack.c.h.b16 %v668
          %v924 = vunpack.c.l.b16 %v669
          %v925 = vunpack.c.l.b16 %v670
          %v926 = vunpack.c.h.b16 %v670
          %v927 = vunpack.c.l.b16 %v671
          %v928 = vunpack.c.l.b16 %v672
          %v929 = vunpack.c.h.b16 %v672
          %v930 = vunpack.c.l.b16 %v673
          %v931 = vpack.c.b16 %v790, %v787
          %v932 = vpack.c.b16 %v791, %v788
          %v933 = vpack.c.b16 %v792, %v789
          %v934 = vpack.c.b16 %v796, %v793
          %v935 = vpack.c.b16 %v797, %v794
          %v936 = vpack.c.b16 %v798, %v795
          %v937 = vpack.c.b16 %v802, %v799
          %v938 = vpack.c.b16 %v803, %v800
          %v939 = vpack.c.b16 %v804, %v801
          %v940 = vpack.c.b16 %v808, %v805
          %v941 = vpack.c.b16 %v809, %v806
          %v942 = vpack.c.b16 %v810, %v807
          %v943 = vpack.c.b16 %v814, %v811
          %v944 = vpack.c.b16 %v815, %v812
          %v945 = vpack.c.b16 %v816, %v813
          %v946 = vpack.c.b16 %v820, %v817
          %v947 = vpack.c.b16 %v821, %v818
          %v948 = vpack.c.b16 %v822, %v819
          %v949 = vpack.c.b16 %v826, %v823
          %v950 = vpack.c.b16 %v827, %v824
          %v951 = vpack.c.b16 %v828, %v825
          %v952 = vpack.c.b16 %v832, %v829
          %v953 = vpack.c.b16 %v833, %v830
          %v954 = vpack.c.b16 %v834, %v831
          %v955 = vpack.c.b16 %v838, %v835
          %v956 = vpack.c.b16 %v839, %v836
          %v957 = vpack.c.b16 %v840, %v837
          %v958 = vpack.c.b16 %v844, %v841
          %v959 = vpack.c.b16 %v845, %v842
          %v960 = vpack.c.b16 %v846, %v843
          %v961 = vpack.c.b16 %v850, %v847
          %v962 = vpack.c.b16 %v851, %v848
          %v963 = vpack.c.b16 %v852, %v849
          %v964 = vpack.c.b16 %v856, %v853
          %v965 = vpack.c.b16 %v857, %v854
          %v966 = vpack.c.b16 %v858, %v855
          %v967 = vpack.c.b16 %v862, %v859
          %v968 = vpack.c.b16 %v863, %v860
          %v969 = vpack.c.b16 %v864, %v861
          %v970 = vpack.c.b16 %v868, %v865
          %v971 = vpack.c.b16 %v869, %v866
          %v972 = vpack.c.b16 %v870, %v867
          %v973 = vpack.c.b16 %v874, %v871
          %v974 = vpack.c.b16 %v875, %v872
          %v975 = vpack.c.b16 %v876, %v873
          %v976 = vpack.c.b16 %v880, %v877
          %v977 = vpack.c.b16 %v881, %v878
          %v978 = vpack.c.b16 %v882, %v879
          %v979 = vpack.c.b16 %v886, %v883
          %v980 = vpack.c.b16 %v887, %v884
          %v981 = vpack.c.b16 %v888, %v885
          %v982 = vpack.c.b16 %v892, %v889
          %v983 = vpack.c.b16 %v893, %v890
          %v984 = vpack.c.b16 %v894, %v891
          %v985 = vpack.c.b16 %v898, %v895
          %v986 = vpack.c.b16 %v899, %v896
          %v987 = vpack.c.b16 %v900, %v897
          %v988 = vpack.c.b16 %v904, %v901
          %v989 = vpack.c.b16 %v905, %v902
          %v990 = vpack.c.b16 %v906, %v903
          %v991 = vpack.c.b16 %v910, %v907
          %v992 = vpack.c.b16 %v911, %v908
          %v993 = vpack.c.b16 %v912, %v909
          %v994 = vpack.c.b16 %v916, %v913
          %v995 = vpack.c.b16 %v917, %v914
          %v996 = vpack.c.b16 %v918, %v915
          %v997 = vpack.c.b16 %v922, %v919
          %v998 = vpack.c.b16 %v923, %v920
          %v999 = vpack.c.b16 %v924, %v921
          %v1000 = vpack.c.b16 %v928, %v925
          %v1001 = vpack.c.b16 %v929, %v926
          %v1002 = vpack.c.b16 %v930, %v927
          %1075 = vmatprep.subr.bf16.mxu0 %v932
          %1076 = vmatpush1.bf16.msra.mxu0 %v931
          %1077 = vmatprep.subr.bf16.mxu0 %v935
          %1078 = vmatpush1.bf16.msra.mxu0 %v934
          %1079 = vmatprep.subr.bf16.mxu0 %v938
          %1080 = vmatpush1.bf16.msra.mxu0 %v937
          %1081 = vmatprep.subr.bf16.mxu0 %v941
          %1082 = vmatpush1.bf16.msra.mxu0 %v940
          %1083 = vmatprep.subr.bf16.mxu0 %v944
          %1084 = vmatpush1.bf16.msra.mxu0 %v943
          %1085 = vmatprep.subr.bf16.mxu0 %v947
          %1086 = vmatpush1.bf16.msra.mxu0 %v946
          %1087 = vmatprep.subr.bf16.mxu0 %v950
          %1088 = vmatpush1.bf16.msra.mxu0 %v949
          %1089 = vmatprep.subr.bf16.mxu0 %v953
          %1090 = vmatpush1.bf16.msra.mxu0 %v952
          %1091 = vmatprep.subr.bf16.mxu0 %v956
          %1092 = vmatpush1.bf16.msra.mxu0 %v955
          %1093 = vmatprep.subr.bf16.mxu0 %v959
          %1094 = vmatpush1.bf16.msra.mxu0 %v958
          %1095 = vmatprep.subr.bf16.mxu0 %v962
          %1096 = vmatpush1.bf16.msra.mxu0 %v961
          %1097 = vmatprep.subr.bf16.mxu0 %v965
          %1098 = vmatpush1.bf16.msra.mxu0 %v964
          %1099 = vmatprep.subr.bf16.mxu0 %v968
          %1100 = vmatpush1.bf16.msra.mxu0 %v967
          %1101 = vmatprep.subr.bf16.mxu0 %v971
          %1102 = vmatpush1.bf16.msra.mxu0 %v970
          %1103 = vmatprep.subr.bf16.mxu0 %v974
          %1104 = vmatpush1.bf16.msra.mxu0 %v973
          %1105 = vmatprep.subr.bf16.mxu0 %v977
          %1106 = vmatpush1.bf16.msra.mxu0 %v976
          %1107 = vmatprep.mubr.bf16.mxu0 %v576
          %1108 = vmatmul.mubr.bf16.gmra.mrb[0].mxu0 %v575
          %v1109 = vpop.f32.mrb[0].mxu0
          %v1110 = vadd.f32 %v679, %v1109
          %v1111 = vpop.f32.mrb[0].mxu0
          %v1112 = vadd.f32 %v683, %v1111
          %v1113 = vpop.f32.mrb[0].mxu0
          %v1114 = vpop.f32.mrb[0].mxu0
          %1115 = vdwg.mxu0
          %1116 = vmatprep.subr.bf16.mxu0 %v980
          %1117 = vmatpush1.bf16.msra.mxu0 %v979
          %1118 = vmatprep.subr.bf16.mxu0 %v983
          %1119 = vmatpush1.bf16.msra.mxu0 %v982
          %1120 = vmatprep.subr.bf16.mxu0 %v986
          %1121 = vmatpush1.bf16.msra.mxu0 %v985
          %1122 = vmatprep.subr.bf16.mxu0 %v989
          %1123 = vmatpush1.bf16.msra.mxu0 %v988
          %1124 = vmatprep.subr.bf16.mxu0 %v992
          %1125 = vmatpush1.bf16.msra.mxu0 %v991
          %1126 = vmatprep.subr.bf16.mxu0 %v995
          %1127 = vmatpush1.bf16.msra.mxu0 %v994
          %1128 = vmatprep.subr.bf16.mxu0 %v998
          %1129 = vmatpush1.bf16.msra.mxu0 %v997
          %1130 = vmatprep.subr.bf16.mxu0 %v1001
          %1131 = vmatpush1.bf16.msra.mxu0 %v1000
          %1132 = vmatprep.subr.bf16.mxu0 0
          %1133 = vmatpush1.bf16.msra.mxu0 0
          %1134 = vmatprep.subr.bf16.mxu0 0
          %1135 = vmatpush1.bf16.msra.mxu0 0
          %1136 = vmatprep.subr.bf16.mxu0 0
          %1137 = vmatpush1.bf16.msra.mxu0 0
          %1138 = vmatprep.subr.bf16.mxu0 0
          %1139 = vmatpush1.bf16.msra.mxu0 0
          %1140 = vmatprep.subr.bf16.mxu0 0
          %1141 = vmatpush1.bf16.msra.mxu0 0
          %1142 = vmatprep.subr.bf16.mxu0 0
          %1143 = vmatpush1.bf16.msra.mxu0 0
          %1144 = vmatprep.subr.bf16.mxu0 0
          %1145 = vmatpush1.bf16.msra.mxu0 0
          %1146 = vmatprep.subr.bf16.mxu0 0
          %1147 = vmatpush1.bf16.msra.mxu0 0
          %1148 = vmatprep.mubr.bf16.mxu0 0
          %1149 = vmatmul.mubr.bf16.gmra.mrb[0].mxu0 %v577
          %v1150 = vpop.f32.mrb[0].mxu0
          %v1151 = vadd.f32 %v1110, %v1150
          %v1152 = vpop.f32.mrb[0].mxu0
          %v1153 = vadd.f32 %v1112, %v1152
          %v1154 = vpop.f32.mrb[0].mxu0
          %v1155 = vpop.f32.mrb[0].mxu0
          %1156 = vdwg.mxu0
          %1157 = vmatprep.subr.bf16.mxu0 0
          %1158 = vmatpush1.bf16.msra.mxu0 %v933
          %1159 = vmatprep.subr.bf16.mxu0 0
          %1160 = vmatpush1.bf16.msra.mxu0 %v936
          %1161 = vmatprep.subr.bf16.mxu0 0
          %1162 = vmatpush1.bf16.msra.mxu0 %v939
          %1163 = vmatprep.subr.bf16.mxu0 0
          %1164 = vmatpush1.bf16.msra.mxu0 %v942
          %1165 = vmatprep.subr.bf16.mxu0 0
          %1166 = vmatpush1.bf16.msra.mxu0 %v945
          %1167 = vmatprep.subr.bf16.mxu0 0
          %1168 = vmatpush1.bf16.msra.mxu0 %v948
          %1169 = vmatprep.subr.bf16.mxu0 0
          %1170 = vmatpush1.bf16.msra.mxu0 %v951
          %1171 = vmatprep.subr.bf16.mxu0 0
          %1172 = vmatpush1.bf16.msra.mxu0 %v954
          %1173 = vmatprep.subr.bf16.mxu0 0
          %1174 = vmatpush1.bf16.msra.mxu0 %v957
          %1175 = vmatprep.subr.bf16.mxu0 0
          %1176 = vmatpush1.bf16.msra.mxu0 %v960
          %1177 = vmatprep.subr.bf16.mxu0 0
          %1178 = vmatpush1.bf16.msra.mxu0 %v963
          %1179 = vmatprep.subr.bf16.mxu0 0
          %1180 = vmatpush1.bf16.msra.mxu0 %v966
          %1181 = vmatprep.subr.bf16.mxu0 0
          %1182 = vmatpush1.bf16.msra.mxu0 %v969
          %1183 = vmatprep.subr.bf16.mxu0 0
          %1184 = vmatpush1.bf16.msra.mxu0 %v972
          %1185 = vmatprep.subr.bf16.mxu0 0
          %1186 = vmatpush1.bf16.msra.mxu0 %v975
          %1187 = vmatprep.subr.bf16.mxu0 0
          %1188 = vmatpush1.bf16.msra.mxu0 %v978
          %1189 = vmatprep.mubr.bf16.mxu0 %v576
          %1190 = vmatmul.mubr.bf16.gmra.mrb[0].mxu0 %v575
          %v1191 = vpop.f32.mrb[0].mxu0
          %v1192 = vadd.f32 %v687, %v1191
          %v1193 = vpop.f32.mrb[0].mxu0
          %v1194 = vpop.f32.mrb[0].mxu0
          %v1195 = vpop.f32.mrb[0].mxu0
          %1196 = vdwg.mxu0
          %1197 = vmatprep.subr.bf16.mxu0 0
          %1198 = vmatpush1.bf16.msra.mxu0 %v981
          %1199 = vmatprep.subr.bf16.mxu0 0
          %1200 = vmatpush1.bf16.msra.mxu0 %v984
          %1201 = vmatprep.subr.bf16.mxu0 0
          %1202 = vmatpush1.bf16.msra.mxu0 %v987
          %1203 = vmatprep.subr.bf16.mxu0 0
          %1204 = vmatpush1.bf16.msra.mxu0 %v990
          %1205 = vmatprep.subr.bf16.mxu0 0
          %1206 = vmatpush1.bf16.msra.mxu0 %v993
          %1207 = vmatprep.subr.bf16.mxu0 0
          %1208 = vmatpush1.bf16.msra.mxu0 %v996
          %1209 = vmatprep.subr.bf16.mxu0 0
          %1210 = vmatpush1.bf16.msra.mxu0 %v999
          %1211 = vmatprep.subr.bf16.mxu0 0
          %1212 = vmatpush1.bf16.msra.mxu0 %v1002
          %1213 = vmatprep.subr.bf16.mxu0 0
          %1214 = vmatpush1.bf16.msra.mxu0 0
          %1215 = vmatprep.subr.bf16.mxu0 0
          %1216 = vmatpush1.bf16.msra.mxu0 0
          %1217 = vmatprep.subr.bf16.mxu0 0
          %1218 = vmatpush1.bf16.msra.mxu0 0
          %1219 = vmatprep.subr.bf16.mxu0 0
          %1220 = vmatpush1.bf16.msra.mxu0 0
          %1221 = vmatprep.subr.bf16.mxu0 0
          %1222 = vmatpush1.bf16.msra.mxu0 0
          %1223 = vmatprep.subr.bf16.mxu0 0
          %1224 = vmatpush1.bf16.msra.mxu0 0
          %1225 = vmatprep.subr.bf16.mxu0 0
          %1226 = vmatpush1.bf16.msra.mxu0 0
          %1227 = vmatprep.subr.bf16.mxu0 0
          %1228 = vmatpush1.bf16.msra.mxu0 0
          %1229 = vmatprep.mubr.bf16.mxu0 0
          %1230 = vmatmul.mubr.bf16.gmra.mrb[0].mxu0 %v577
          %v1231 = vpop.f32.mrb[0].mxu0
          %v1232 = vadd.f32 %v1192, %v1231
          %v1233 = vpop.f32.mrb[0].mxu0
          %v1234 = vpop.f32.mrb[0].mxu0
          %v1235 = vpop.f32.mrb[0].mxu0
          %1236 = vdwg.mxu0
          %v1237 = vpack.c.bf16 %v1151, %v1151
          %v1238 = vpack.c.bf16 %v1153, %v1153
          %v1239 = vpack.c.bf16 %v1232, %v1232
          %v1243 = vunpack.c.l.b16 %v1237
          %v1244 = vunpack.c.l.b16 %v1238
          %v1245 = vunpack.c.l.b16 %v1239
          %v1246 = vpack.c.b16 %v1244, %v1243
          %v1247 = vpack.c.b16 %v1245, %v1245
          %1250 = vst [vmem:[#allocation2] sm:$0xff] %v1246
          %1251 = vst [vmem:[#allocation2 + $0x8] sm:$0xf] %v1247
          %v1252 = vld [vmem:[#allocation2] sm:$0xf]
          %vm1253 = vcmask 93184
          %1254 = vst.msk [vmem:[#allocation3] sm:$0xf] %vm1253, %v1252
          %v1255 = vld [vmem:[#allocation2] sm:$0xf]
          %1257 = vrot.lane.b32.xlu0 %v1255, 116
          %v1258 = vpop.permute.xlu0 %1257
          %s1260 = scalar_lea.vmem [#allocation3], 4
          %1261 = vst.msk [vmem:[%s1260] sm:$0xf] %vm1253, %v1258
          %v1262 = vld [vmem:[#allocation2] sm:$0xf]
          %1264 = vrot.lane.b32.xlu0 %v1262, 104
          %v1265 = vpop.permute.xlu0 %1264
          %s1267 = scalar_lea.vmem [#allocation3], 8
          %1268 = vst.msk [vmem:[%s1267] sm:$0xf] %vm1253, %v1265
          %v1269 = vld [vmem:[#allocation2] sm:$0xf]
          %1271 = vrot.lane.b32.xlu0 %v1269, 92
          %v1272 = vpop.permute.xlu0 %1271
          %s1274 = scalar_lea.vmem [#allocation3], 12
          %1275 = vst.msk [vmem:[%s1274] sm:$0xf] %vm1253, %v1272
          %v1276 = vld [vmem:[#allocation2] sm:$0xf]
          %1278 = vrot.lane.b32.xlu0 %v1276, 80
          %v1279 = vpop.permute.xlu0 %1278
          %s1281 = scalar_lea.vmem [#allocation3], 16
          %1282 = vst.msk [vmem:[%s1281] sm:$0xf] %vm1253, %v1279
          %v1283 = vld [vmem:[#allocation2] sm:$0xf]
          %1285 = vrot.lane.b32.xlu0 %v1283, 68
          %v1286 = vpop.permute.xlu0 %1285
          %s1288 = scalar_lea.vmem [#allocation3], 20
          %1289 = vst.msk [vmem:[%s1288] sm:$0xf] %vm1253, %v1286
          %v1290 = vld [vmem:[#allocation2] sm:$0xf]
          %1292 = vrot.lane.b32.xlu0 %v1290, 56
          %v1293 = vpop.permute.xlu0 %1292
          %s1295 = scalar_lea.vmem [#allocation3], 24
          %1296 = vst.msk [vmem:[%s1295] sm:$0xf] %vm1253, %v1293
          %v1297 = vld [vmem:[#allocation2] sm:$0xf]
          %1299 = vrot.lane.b32.xlu0 %v1297, 44
          %v1300 = vpop.permute.xlu0 %1299
          %s1302 = scalar_lea.vmem [#allocation3], 28
          %1303 = vst.msk [vmem:[%s1302] sm:$0xf] %vm1253, %v1300
          %v1304 = vld [vmem:[#allocation2] sm:$0xf]
          %1306 = vrot.lane.b32.xlu0 %v1304, 32
          %v1307 = vpop.permute.xlu0 %1306
          %s1309 = scalar_lea.vmem [#allocation3], 32
          %1310 = vst.msk [vmem:[%s1309] sm:$0xf] %vm1253, %v1307
          %v1311 = vld [vmem:[#allocation2] sm:$0xf]
          %1313 = vrot.lane.b32.xlu0 %v1311, 20
          %v1314 = vpop.permute.xlu0 %1313
          %s1316 = scalar_lea.vmem [#allocation3], 36
          %1317 = vst.msk [vmem:[%s1316] sm:$0xf] %vm1253, %v1314
          %v1318 = vld [vmem:[#allocation2] sm:$0xff]
          %1320 = vrot.lane.b32.xlu0 %v1318, 8
          %v1321 = vpop.permute.xlu0 %1320
          %v1322 = vrot.slane %v1321, 4
          %vm1323 = vcmask 64512
          %v1324 = vsel %vm1323, %v1321, %v1322
          %s1326 = scalar_lea.vmem [#allocation3], 40
          %1327 = vst.msk [vmem:[%s1326] sm:$0xf] %vm1253, %v1324
          %v1328 = vld [vmem:[#allocation2 + $0x4] sm:$0xf]
          %1330 = vrot.lane.b32.xlu0 %v1328, 124
          %v1331 = vpop.permute.xlu0 %1330
          %s1333 = scalar_lea.vmem [#allocation3], 44
          %1334 = vst.msk [vmem:[%s1333] sm:$0xf] %vm1253, %v1331
          %v1335 = vld [vmem:[#allocation2 + $0x4] sm:$0xf]
          %1337 = vrot.lane.b32.xlu0 %v1335, 112
          %v1338 = vpop.permute.xlu0 %1337
          %s1340 = scalar_lea.vmem [#allocation3], 48
          %1341 = vst.msk [vmem:[%s1340] sm:$0xf] %vm1253, %v1338
          %v1342 = vld [vmem:[#allocation2 + $0x4] sm:$0xf]
          %1344 = vrot.lane.b32.xlu0 %v1342, 100
          %v1345 = vpop.permute.xlu0 %1344
          %s1347 = scalar_lea.vmem [#allocation3], 52
          %1348 = vst.msk [vmem:[%s1347] sm:$0xf] %vm1253, %v1345
          %v1349 = vld [vmem:[#allocation2 + $0x4] sm:$0xf]
          %1351 = vrot.lane.b32.xlu0 %v1349, 88
          %v1352 = vpop.permute.xlu0 %1351
          %s1354 = scalar_lea.vmem [#allocation3], 56
          %1355 = vst.msk [vmem:[%s1354] sm:$0xf] %vm1253, %v1352
          %v1356 = vld [vmem:[#allocation2 + $0x4] sm:$0xf]
          %1358 = vrot.lane.b32.xlu0 %v1356, 76
          %v1359 = vpop.permute.xlu0 %1358
          %s1361 = scalar_lea.vmem [#allocation3], 60
          %1362 = vst.msk [vmem:[%s1361] sm:$0xf] %vm1253, %v1359
          %v1363 = vld [vmem:[#allocation2 + $0x4] sm:$0xf]
          %1365 = vrot.lane.b32.xlu0 %v1363, 64
          %v1366 = vpop.permute.xlu0 %1365
          %s1368 = scalar_lea.vmem [#allocation3], 64
          %1369 = vst.msk [vmem:[%s1368] sm:$0xf] %vm1253, %v1366
          %v1370 = vld [vmem:[#allocation2 + $0x4] sm:$0xf]
          %1372 = vrot.lane.b32.xlu0 %v1370, 52
          %v1373 = vpop.permute.xlu0 %1372
          %s1375 = scalar_lea.vmem [#allocation3], 68
          %1376 = vst.msk [vmem:[%s1375] sm:$0xf] %vm1253, %v1373
          %v1377 = vld [vmem:[#allocation2 + $0x4] sm:$0xf]
          %1379 = vrot.lane.b32.xlu0 %v1377, 40
          %v1380 = vpop.permute.xlu0 %1379
          %s1382 = scalar_lea.vmem [#allocation3], 72
          %1383 = vst.msk [vmem:[%s1382] sm:$0xf] %vm1253, %v1380
          %v1384 = vld [vmem:[#allocation2 + $0x4] sm:$0xf]
          %1386 = vrot.lane.b32.xlu0 %v1384, 28
          %v1387 = vpop.permute.xlu0 %1386
          %s1389 = scalar_lea.vmem [#allocation3], 76
          %1390 = vst.msk [vmem:[%s1389] sm:$0xf] %vm1253, %v1387
          %v1391 = vld [vmem:[#allocation2 + $0x4] sm:$0xf]
          %1393 = vrot.lane.b32.xlu0 %v1391, 16
          %v1394 = vpop.permute.xlu0 %1393
          %s1396 = scalar_lea.vmem [#allocation3], 80
          %1397 = vst.msk [vmem:[%s1396] sm:$0xf] %vm1253, %v1394
          %v1398 = vld [vmem:[#allocation2 + $0x4] sm:$0xff]
          %1400 = vrot.lane.b32.xlu0 %v1398, 4
          %v1401 = vpop.permute.xlu0 %1400
          %v1402 = vrot.slane %v1401, 4
          %vm1403 = vcmask 31744
          %v1404 = vsel %vm1403, %v1401, %v1402
          %s1406 = scalar_lea.vmem [#allocation3], 84
          %1407 = vst.msk [vmem:[%s1406] sm:$0xf] %vm1253, %v1404
          %v1408 = vld [vmem:[#allocation2 + $0x8] sm:$0xf]
          %1410 = vrot.lane.b32.xlu0 %v1408, 120
          %v1411 = vpop.permute.xlu0 %1410
          %s1413 = scalar_lea.vmem [#allocation3], 88
          %1414 = vst.msk [vmem:[%s1413] sm:$0xf] %vm1253, %v1411
          %v1415 = vld [vmem:[#allocation2 + $0x8] sm:$0xf]
          %1417 = vrot.lane.b32.xlu0 %v1415, 108
          %v1418 = vpop.permute.xlu0 %1417
          %s1420 = scalar_lea.vmem [#allocation3], 92
          %1421 = vst.msk [vmem:[%s1420] sm:$0xf] %vm1253, %v1418
          %v1422 = vld [vmem:[#allocation2 + $0x8] sm:$0xf]
          %1424 = vrot.lane.b32.xlu0 %v1422, 96
          %v1425 = vpop.permute.xlu0 %1424
          %s1427 = scalar_lea.vmem [#allocation3], 96
          %1428 = vst.msk [vmem:[%s1427] sm:$0xf] %vm1253, %v1425
          %v1429 = vld [vmem:[#allocation2 + $0x8] sm:$0xf]
          %1431 = vrot.lane.b32.xlu0 %v1429, 84
          %v1432 = vpop.permute.xlu0 %1431
          %s1434 = scalar_lea.vmem [#allocation3], 100
          %1435 = vst.msk [vmem:[%s1434] sm:$0xf] %vm1253, %v1432
          %v1436 = vld [vmem:[#allocation2 + $0x8] sm:$0xf]
          %1438 = vrot.lane.b32.xlu0 %v1436, 72
          %v1439 = vpop.permute.xlu0 %1438
          %s1441 = scalar_lea.vmem [#allocation3], 104
          %1442 = vst.msk [vmem:[%s1441] sm:$0xf] %vm1253, %v1439
          %v1443 = vld [vmem:[#allocation2 + $0x8] sm:$0xf]
          %1445 = vrot.lane.b32.xlu0 %v1443, 60
          %v1446 = vpop.permute.xlu0 %1445
          %s1448 = scalar_lea.vmem [#allocation3], 108
          %1449 = vst.msk [vmem:[%s1448] sm:$0xf] %vm1253, %v1446
          %v1450 = vld [vmem:[#allocation2 + $0x8] sm:$0xf]
          %1452 = vrot.lane.b32.xlu0 %v1450, 48
          %v1453 = vpop.permute.xlu0 %1452
          %s1455 = scalar_lea.vmem [#allocation3], 112
          %1456 = vst.msk [vmem:[%s1455] sm:$0xf] %vm1253, %v1453
          %v1457 = vld [vmem:[#allocation2 + $0x8] sm:$0xf]
          %1459 = vrot.lane.b32.xlu0 %v1457, 36
          %v1460 = vpop.permute.xlu0 %1459
          %s1462 = scalar_lea.vmem [#allocation3], 116
          %1463 = vst.msk [vmem:[%s1462] sm:$0xf] %vm1253, %v1460
          %v1464 = vld [vmem:[#allocation2 + $0x8] sm:$0xf]
          %1466 = vrot.lane.b32.xlu0 %v1464, 24
          %v1467 = vpop.permute.xlu0 %1466
          %s1469 = scalar_lea.vmem [#allocation3], 120
          %1470 = vst.msk [vmem:[%s1469] sm:$0xf] %vm1253, %v1467
          %v1471 = vld [vmem:[#allocation2 + $0x8] sm:$0xf]
          %1473 = vrot.lane.b32.xlu0 %v1471, 12
          %v1474 = vpop.permute.xlu0 %1473
          %s1476 = scalar_lea.vmem [#allocation3], 124
          %1477 = vst.msk [vmem:[%s1476] sm:$0xf] %vm1253, %v1474
          %vm1478 = vcmask 7168
          %1479 = vst.msk [vmem:[#allocation8] sm:$0xff] %vm1478, -inf
          %1480 = vst.msk [vmem:[#allocation8 + $0x8] sm:$0xff] %vm1478, -inf
          %1481 = vst.msk [vmem:[#allocation8 + $0x10] sm:$0xff] %vm1478, -inf
          %1482 = vst.msk [vmem:[#allocation8 + $0x18] sm:$0xff] %vm1478, -inf
          %1483 = vst.msk [vmem:[#allocation8 + $0x20] sm:$0xff] %vm1478, -inf
          %1484 = vst.msk [vmem:[#allocation8 + $0x28] sm:$0xff] %vm1478, -inf
          %1485 = vst.msk [vmem:[#allocation8 + $0x30] sm:$0xff] %vm1478, -inf
          %1486 = vst.msk [vmem:[#allocation8 + $0x38] sm:$0xff] %vm1478, -inf
          %1487 = vst.msk [vmem:[#allocation8 + $0x40] sm:$0xff] %vm1478, -inf
          %1488 = vst.msk [vmem:[#allocation8 + $0x48] sm:$0xff] %vm1478, -inf
          %1489 = vst.msk [vmem:[#allocation8 + $0x50] sm:$0xff] %vm1478, -inf
          %1490 = vst.msk [vmem:[#allocation8 + $0x58] sm:$0xff] %vm1478, -inf
          %1491 = vst.msk [vmem:[#allocation8 + $0x60] sm:$0xff] %vm1478, -inf
          %1492 = vst.msk [vmem:[#allocation8 + $0x68] sm:$0xff] %vm1478, -inf
          %1493 = vst.msk [vmem:[#allocation8 + $0x70] sm:$0xff] %vm1478, -inf
          %1494 = vst.msk [vmem:[#allocation8 + $0x78] sm:$0xff] %vm1478, -inf
          %1495 = vst.msk [vmem:[#allocation8 + $0x80] sm:$0xff] %vm1478, -inf
          %1496 = vst.msk [vmem:[#allocation8 + $0x88] sm:$0xff] %vm1478, -inf
          %1497 = vst.msk [vmem:[#allocation8 + $0x90] sm:$0xff] %vm1478, -inf
          %1498 = vst.msk [vmem:[#allocation8 + $0x98] sm:$0xff] %vm1478, -inf
          %1499 = vst.msk [vmem:[#allocation8 + $0xa0] sm:$0xff] %vm1478, -inf
          %1500 = vst.msk [vmem:[#allocation8 + $0xa8] sm:$0xff] %vm1478, -inf
          %1501 = vst.msk [vmem:[#allocation8 + $0xb0] sm:$0xff] %vm1478, -inf
          %1502 = vst.msk [vmem:[#allocation8 + $0xb8] sm:$0xff] %vm1478, -inf
          %1503 = vst.msk [vmem:[#allocation8 + $0xc0] sm:$0xff] %vm1478, -inf
          %1504 = vst.msk [vmem:[#allocation8 + $0xc8] sm:$0xff] %vm1478, -inf
          %1505 = vst.msk [vmem:[#allocation8 + $0xd0] sm:$0xff] %vm1478, -inf
          %1506 = vst.msk [vmem:[#allocation8 + $0xd8] sm:$0xff] %vm1478, -inf
          %1507 = vst.msk [vmem:[#allocation8 + $0xe0] sm:$0xff] %vm1478, -inf
          %1508 = vst.msk [vmem:[#allocation8 + $0xe8] sm:$0xff] %vm1478, -inf
          %1509 = vst.msk [vmem:[#allocation8 + $0xf0] sm:$0xff] %vm1478, -inf
          %1510 = vst.msk [vmem:[#allocation8 + $0xf8] sm:$0xff] %vm1478, -inf
          %1511 = vst.msk [vmem:[#allocation9] sm:$0xff] %vm1478, 0.0
          %1512 = vst.msk [vmem:[#allocation9 + $0x8] sm:$0xff] %vm1478, 0.0
          %1513 = vst.msk [vmem:[#allocation9 + $0x10] sm:$0xff] %vm1478, 0.0
          %1514 = vst.msk [vmem:[#allocation9 + $0x18] sm:$0xff] %vm1478, 0.0
          %1515 = vst.msk [vmem:[#allocation9 + $0x20] sm:$0xff] %vm1478, 0.0
          %1516 = vst.msk [vmem:[#allocation9 + $0x28] sm:$0xff] %vm1478, 0.0
          %1517 = vst.msk [vmem:[#allocation9 + $0x30] sm:$0xff] %vm1478, 0.0
          %1518 = vst.msk [vmem:[#allocation9 + $0x38] sm:$0xff] %vm1478, 0.0
          %1519 = vst.msk [vmem:[#allocation9 + $0x40] sm:$0xff] %vm1478, 0.0
          %1520 = vst.msk [vmem:[#allocation9 + $0x48] sm:$0xff] %vm1478, 0.0
          %1521 = vst.msk [vmem:[#allocation9 + $0x50] sm:$0xff] %vm1478, 0.0
          %1522 = vst.msk [vmem:[#allocation9 + $0x58] sm:$0xff] %vm1478, 0.0
          %1523 = vst.msk [vmem:[#allocation9 + $0x60] sm:$0xff] %vm1478, 0.0
          %1524 = vst.msk [vmem:[#allocation9 + $0x68] sm:$0xff] %vm1478, 0.0
          %1525 = vst.msk [vmem:[#allocation9 + $0x70] sm:$0xff] %vm1478, 0.0
          %1526 = vst.msk [vmem:[#allocation9 + $0x78] sm:$0xff] %vm1478, 0.0
          %1527 = vst.msk [vmem:[#allocation9 + $0x80] sm:$0xff] %vm1478, 0.0
          %1528 = vst.msk [vmem:[#allocation9 + $0x88] sm:$0xff] %vm1478, 0.0
          %1529 = vst.msk [vmem:[#allocation9 + $0x90] sm:$0xff] %vm1478, 0.0
          %1530 = vst.msk [vmem:[#allocation9 + $0x98] sm:$0xff] %vm1478, 0.0
          %1531 = vst.msk [vmem:[#allocation9 + $0xa0] sm:$0xff] %vm1478, 0.0
          %1532 = vst.msk [vmem:[#allocation9 + $0xa8] sm:$0xff] %vm1478, 0.0
          %1533 = vst.msk [vmem:[#allocation9 + $0xb0] sm:$0xff] %vm1478, 0.0
          %1534 = vst.msk [vmem:[#allocation9 + $0xb8] sm:$0xff] %vm1478, 0.0
          %1535 = vst.msk [vmem:[#allocation9 + $0xc0] sm:$0xff] %vm1478, 0.0
          %1536 = vst.msk [vmem:[#allocation9 + $0xc8] sm:$0xff] %vm1478, 0.0
          %1537 = vst.msk [vmem:[#allocation9 + $0xd0] sm:$0xff] %vm1478, 0.0
          %1538 = vst.msk [vmem:[#allocation9 + $0xd8] sm:$0xff] %vm1478, 0.0
          %1539 = vst.msk [vmem:[#allocation9 + $0xe0] sm:$0xff] %vm1478, 0.0
          %1540 = vst.msk [vmem:[#allocation9 + $0xe8] sm:$0xff] %vm1478, 0.0
          %1541 = vst.msk [vmem:[#allocation9 + $0xf0] sm:$0xff] %vm1478, 0.0
          %1542 = vst.msk [vmem:[#allocation9 + $0xf8] sm:$0xff] %vm1478, 0.0
          %vm1543 = vcmask 97280
          %1544 = vst.msk [vmem:[#allocation10] sm:$0xff] %vm1543, 0.0
          %1545 = vst.msk [vmem:[#allocation10 + $0x8] sm:$0xff] %vm1543, 0.0
          %1546 = vst.msk [vmem:[#allocation10 + $0x10] sm:$0xff] %vm1543, 0.0
          %1547 = vst.msk [vmem:[#allocation10 + $0x18] sm:$0xff] %vm1543, 0.0
          %1548 = vst.msk [vmem:[#allocation10 + $0x20] sm:$0xff] %vm1543, 0.0
          %1549 = vst.msk [vmem:[#allocation10 + $0x28] sm:$0xff] %vm1543, 0.0
          %1550 = vst.msk [vmem:[#allocation10 + $0x30] sm:$0xff] %vm1543, 0.0
          %1551 = vst.msk [vmem:[#allocation10 + $0x38] sm:$0xff] %vm1543, 0.0
          %1552 = vst.msk [vmem:[#allocation10 + $0x40] sm:$0xff] %vm1543, 0.0
          %1553 = vst.msk [vmem:[#allocation10 + $0x48] sm:$0xff] %vm1543, 0.0
          %1554 = vst.msk [vmem:[#allocation10 + $0x50] sm:$0xff] %vm1543, 0.0
          %1555 = vst.msk [vmem:[#allocation10 + $0x58] sm:$0xff] %vm1543, 0.0
          %1556 = vst.msk [vmem:[#allocation10 + $0x60] sm:$0xff] %vm1543, 0.0
          %1557 = vst.msk [vmem:[#allocation10 + $0x68] sm:$0xff] %vm1543, 0.0
          %1558 = vst.msk [vmem:[#allocation10 + $0x70] sm:$0xff] %vm1543, 0.0
          %1559 = vst.msk [vmem:[#allocation10 + $0x78] sm:$0xff] %vm1543, 0.0
          %1560 = vst.msk [vmem:[#allocation10 + $0x80] sm:$0xff] %vm1543, 0.0
          %1561 = vst.msk [vmem:[#allocation10 + $0x88] sm:$0xff] %vm1543, 0.0
          %1562 = vst.msk [vmem:[#allocation10 + $0x90] sm:$0xff] %vm1543, 0.0
          %1563 = vst.msk [vmem:[#allocation10 + $0x98] sm:$0xff] %vm1543, 0.0
          %1564 = vst.msk [vmem:[#allocation10 + $0xa0] sm:$0xff] %vm1543, 0.0
          %1565 = vst.msk [vmem:[#allocation10 + $0xa8] sm:$0xff] %vm1543, 0.0
          %1566 = vst.msk [vmem:[#allocation10 + $0xb0] sm:$0xff] %vm1543, 0.0
          %1567 = vst.msk [vmem:[#allocation10 + $0xb8] sm:$0xff] %vm1543, 0.0
          %1568 = vst.msk [vmem:[#allocation10 + $0xc0] sm:$0xff] %vm1543, 0.0
          %1569 = vst.msk [vmem:[#allocation10 + $0xc8] sm:$0xff] %vm1543, 0.0
          %1570 = vst.msk [vmem:[#allocation10 + $0xd0] sm:$0xff] %vm1543, 0.0
          %1571 = vst.msk [vmem:[#allocation10 + $0xd8] sm:$0xff] %vm1543, 0.0
          %1572 = vst.msk [vmem:[#allocation10 + $0xe0] sm:$0xff] %vm1543, 0.0
          %1573 = vst.msk [vmem:[#allocation10 + $0xe8] sm:$0xff] %vm1543, 0.0
          %1574 = vst.msk [vmem:[#allocation10 + $0xf0] sm:$0xff] %vm1543, 0.0
          %1575 = vst.msk [vmem:[#allocation10 + $0xf8] sm:$0xff] %vm1543, 0.0
        $region96: #{tpu_custom_call.1} parent=63 // pred_fallthru
          _
        %v1576 = vld [vmem:[%s493] sm:$0xff]
        %v1577 = vld [vmem:[%s493 + $0x8] sm:$0xff]
        %v1578 = vld [vmem:[%s493 + $0x10] sm:$0xff]
        %v1579 = vpack.c.bf16 %v1576, %v1576
        %v1580 = vpack.c.bf16 %v1577, %v1577
        %v1581 = vpack.c.bf16 %v1578, %v1578
        %v1582 = vld [vmem:[%s502] sm:$0xff]
        %v1583 = vld [vmem:[%s502 + $0x8] sm:$0xff]
        %v1584 = vld [vmem:[%s502 + $0x10] sm:$0xff]
        %v1585 = vpack.c.bf16 %v1582, %v1582
        %v1586 = vpack.c.bf16 %v1583, %v1583
        %v1587 = vpack.c.bf16 %v1584, %v1584
        %v1588 = vld [vmem:[#allocation20] sm:$0xff]
        %v1589 = vld [vmem:[#allocation20 + $0x8] sm:$0xf]
        %v1590 = vld [vmem:[#allocation20 + $0xc] sm:$0xff]
        %v1591 = vld [vmem:[#allocation20 + $0x14] sm:$0xf]
        %v1592 = vld [vmem:[#allocation20 + $0x18] sm:$0xff]
        %v1593 = vld [vmem:[#allocation20 + $0x20] sm:$0xf]
        %v1594 = vld [vmem:[#allocation20 + $0x24] sm:$0xff]
        %v1595 = vld [vmem:[#allocation20 + $0x2c] sm:$0xf]
        %v1596 = vld [vmem:[#allocation20 + $0x30] sm:$0xff]
        %v1597 = vld [vmem:[#allocation20 + $0x38] sm:$0xf]
        %v1598 = vld [vmem:[#allocation20 + $0x3c] sm:$0xff]
        %v1599 = vld [vmem:[#allocation20 + $0x44] sm:$0xf]
        %v1600 = vld [vmem:[#allocation20 + $0x48] sm:$0xff]
        %v1601 = vld [vmem:[#allocation20 + $0x50] sm:$0xf]
        %v1602 = vld [vmem:[#allocation20 + $0x54] sm:$0xff]
        %v1603 = vld [vmem:[#allocation20 + $0x5c] sm:$0xf]
        %v1604 = vld [vmem:[#allocation20 + $0x60] sm:$0xff]
        %v1605 = vld [vmem:[#allocation20 + $0x68] sm:$0xf]
        %v1606 = vld [vmem:[#allocation20 + $0x6c] sm:$0xff]
        %v1607 = vld [vmem:[#allocation20 + $0x74] sm:$0xf]
        %v1608 = vld [vmem:[#allocation20 + $0x78] sm:$0xff]
        %v1609 = vld [vmem:[#allocation20 + $0x80] sm:$0xf]
        %v1610 = vld [vmem:[#allocation20 + $0x84] sm:$0xff]
        %v1611 = vld [vmem:[#allocation20 + $0x8c] sm:$0xf]
        %v1612 = vld [vmem:[#allocation20 + $0x90] sm:$0xff]
        %v1613 = vld [vmem:[#allocation20 + $0x98] sm:$0xf]
        %v1614 = vld [vmem:[#allocation20 + $0x9c] sm:$0xff]
        %v1615 = vld [vmem:[#allocation20 + $0xa4] sm:$0xf]
        %v1616 = vld [vmem:[#allocation20 + $0xa8] sm:$0xff]
        %v1617 = vld [vmem:[#allocation20 + $0xb0] sm:$0xf]
        %v1618 = vld [vmem:[#allocation20 + $0xb4] sm:$0xff]
        %v1619 = vld [vmem:[#allocation20 + $0xbc] sm:$0xf]
        %v1620 = vld [vmem:[#allocation20 + $0xc0] sm:$0xff]
        %v1621 = vld [vmem:[#allocation20 + $0xc8] sm:$0xf]
        %v1622 = vld [vmem:[#allocation20 + $0xcc] sm:$0xff]
        %v1623 = vld [vmem:[#allocation20 + $0xd4] sm:$0xf]
        %v1624 = vld [vmem:[#allocation20 + $0xd8] sm:$0xff]
        %v1625 = vld [vmem:[#allocation20 + $0xe0] sm:$0xf]
        %v1626 = vld [vmem:[#allocation20 + $0xe4] sm:$0xff]
        %v1627 = vld [vmem:[#allocation20 + $0xec] sm:$0xf]
        %v1628 = vld [vmem:[#allocation20 + $0xf0] sm:$0xff]
        %v1629 = vld [vmem:[#allocation20 + $0xf8] sm:$0xf]
        %v1630 = vld [vmem:[#allocation20 + $0xfc] sm:$0xff]
        %v1631 = vld [vmem:[#allocation20 + $0x104] sm:$0xf]
        %v1632 = vld [vmem:[#allocation20 + $0x108] sm:$0xff]
        %v1633 = vld [vmem:[#allocation20 + $0x110] sm:$0xf]
        %v1634 = vld [vmem:[#allocation20 + $0x114] sm:$0xff]
        %v1635 = vld [vmem:[#allocation20 + $0x11c] sm:$0xf]
        %v1636 = vld [vmem:[#allocation20 + $0x120] sm:$0xff]
        %v1637 = vld [vmem:[#allocation20 + $0x128] sm:$0xf]
        %v1638 = vld [vmem:[#allocation20 + $0x12c] sm:$0xff]
        %v1639 = vld [vmem:[#allocation20 + $0x134] sm:$0xf]
        %v1640 = vld [vmem:[#allocation20 + $0x138] sm:$0xff]
        %v1641 = vld [vmem:[#allocation20 + $0x140] sm:$0xf]
        %v1642 = vld [vmem:[#allocation20 + $0x144] sm:$0xff]
        %v1643 = vld [vmem:[#allocation20 + $0x14c] sm:$0xf]
        %v1644 = vld [vmem:[#allocation20 + $0x150] sm:$0xff]
        %v1645 = vld [vmem:[#allocation20 + $0x158] sm:$0xf]
        %v1646 = vld [vmem:[#allocation20 + $0x15c] sm:$0xff]
        %v1647 = vld [vmem:[#allocation20 + $0x164] sm:$0xf]
        %v1648 = vld [vmem:[#allocation20 + $0x168] sm:$0xff]
        %v1649 = vld [vmem:[#allocation20 + $0x170] sm:$0xf]
        %v1650 = vld [vmem:[#allocation20 + $0x174] sm:$0xff]
        %v1651 = vld [vmem:[#allocation20 + $0x17c] sm:$0xf]
        %v1652 = vld [vmem:[#allocation20 + $0x180] sm:$0xff]
        %v1653 = vld [vmem:[#allocation20 + $0x188] sm:$0xf]
        %v1654 = vld [vmem:[#allocation20 + $0x18c] sm:$0xff]
        %v1655 = vld [vmem:[#allocation20 + $0x194] sm:$0xf]
        %v1656 = vld [vmem:[#allocation20 + $0x198] sm:$0xff]
        %v1657 = vld [vmem:[#allocation20 + $0x1a0] sm:$0xf]
        %v1658 = vld [vmem:[#allocation20 + $0x1a4] sm:$0xff]
        %v1659 = vld [vmem:[#allocation20 + $0x1ac] sm:$0xf]
        %v1660 = vld [vmem:[#allocation20 + $0x1b0] sm:$0xff]
        %v1661 = vld [vmem:[#allocation20 + $0x1b8] sm:$0xf]
        %v1662 = vld [vmem:[#allocation20 + $0x1bc] sm:$0xff]
        %v1663 = vld [vmem:[#allocation20 + $0x1c4] sm:$0xf]
        %v1664 = vld [vmem:[#allocation20 + $0x1c8] sm:$0xff]
        %v1665 = vld [vmem:[#allocation20 + $0x1d0] sm:$0xf]
        %v1666 = vld [vmem:[#allocation20 + $0x1d4] sm:$0xff]
        %v1667 = vld [vmem:[#allocation20 + $0x1dc] sm:$0xf]
        %v1668 = vld [vmem:[#allocation20 + $0x1e0] sm:$0xff]
        %v1669 = vld [vmem:[#allocation20 + $0x1e8] sm:$0xf]
        %v1670 = vld [vmem:[#allocation20 + $0x1ec] sm:$0xff]
        %v1671 = vld [vmem:[#allocation20 + $0x1f4] sm:$0xf]
        %v1672 = vld [vmem:[#allocation20 + $0x1f8] sm:$0xff]
        %v1673 = vld [vmem:[#allocation20 + $0x200] sm:$0xf]
        %v1674 = vld [vmem:[#allocation20 + $0x204] sm:$0xff]
        %v1675 = vld [vmem:[#allocation20 + $0x20c] sm:$0xf]
        %v1676 = vld [vmem:[#allocation20 + $0x210] sm:$0xff]
        %v1677 = vld [vmem:[#allocation20 + $0x218] sm:$0xf]
        %v1678 = vld [vmem:[#allocation20 + $0x21c] sm:$0xff]
        %v1679 = vld [vmem:[#allocation20 + $0x224] sm:$0xf]
        %v1680 = vld [vmem:[#allocation20 + $0x228] sm:$0xff]
        %v1681 = vld [vmem:[#allocation20 + $0x230] sm:$0xf]
        %v1682 = vld [vmem:[#allocation20 + $0x234] sm:$0xff]
        %v1683 = vld [vmem:[#allocation20 + $0x23c] sm:$0xf]
        %v1684 = vld [vmem:[%s7] sm:$0x7]
        %v1686 = vlaneseq
        %v1687 = vshrl.u32 %v1686, 7
        %v1688 = vsub.s32 0, %v1687
        %v1689 = vrot.slane %v1684, %v1688
        %v1690 = vlaneseq
        %v1691 = vshrl.u32 %v1690, 7
        %v1692 = vsub.s32 1, %v1691
        %v1693 = vrot.slane %v1684, %v1692
        %v1694 = vlaneseq
        %v1695 = vshrl.u32 %v1694, 7
        %v1696 = vsub.s32 2, %v1695
        %v1697 = vrot.slane %v1684, %v1696
        %v1797 = vunpack.c.l.b16 %v1588
        %v1798 = vunpack.c.h.b16 %v1588
        %v1799 = vunpack.c.l.b16 %v1589
        %v1800 = vunpack.c.l.b16 %v1590
        %v1801 = vunpack.c.h.b16 %v1590
        %v1802 = vunpack.c.l.b16 %v1591
        %v1803 = vunpack.c.l.b16 %v1592
        %v1804 = vunpack.c.h.b16 %v1592
        %v1805 = vunpack.c.l.b16 %v1593
        %v1806 = vunpack.c.l.b16 %v1594
        %v1807 = vunpack.c.h.b16 %v1594
        %v1808 = vunpack.c.l.b16 %v1595
        %v1809 = vunpack.c.l.b16 %v1596
        %v1810 = vunpack.c.h.b16 %v1596
        %v1811 = vunpack.c.l.b16 %v1597
        %v1812 = vunpack.c.l.b16 %v1598
        %v1813 = vunpack.c.h.b16 %v1598
        %v1814 = vunpack.c.l.b16 %v1599
        %v1815 = vunpack.c.l.b16 %v1600
        %v1816 = vunpack.c.h.b16 %v1600
        %v1817 = vunpack.c.l.b16 %v1601
        %v1818 = vunpack.c.l.b16 %v1602
        %v1819 = vunpack.c.h.b16 %v1602
        %v1820 = vunpack.c.l.b16 %v1603
        %v1821 = vunpack.c.l.b16 %v1604
        %v1822 = vunpack.c.h.b16 %v1604
        %v1823 = vunpack.c.l.b16 %v1605
        %v1824 = vunpack.c.l.b16 %v1606
        %v1825 = vunpack.c.h.b16 %v1606
        %v1826 = vunpack.c.l.b16 %v1607
        %v1827 = vunpack.c.l.b16 %v1608
        %v1828 = vunpack.c.h.b16 %v1608
        %v1829 = vunpack.c.l.b16 %v1609
        %v1830 = vunpack.c.l.b16 %v1610
        %v1831 = vunpack.c.h.b16 %v1610
        %v1832 = vunpack.c.l.b16 %v1611
        %v1833 = vunpack.c.l.b16 %v1612
        %v1834 = vunpack.c.h.b16 %v1612
        %v1835 = vunpack.c.l.b16 %v1613
        %v1836 = vunpack.c.l.b16 %v1614
        %v1837 = vunpack.c.h.b16 %v1614
        %v1838 = vunpack.c.l.b16 %v1615
        %v1839 = vunpack.c.l.b16 %v1616
        %v1840 = vunpack.c.h.b16 %v1616
        %v1841 = vunpack.c.l.b16 %v1617
        %v1842 = vunpack.c.l.b16 %v1618
        %v1843 = vunpack.c.h.b16 %v1618
        %v1844 = vunpack.c.l.b16 %v1619
        %v1845 = vunpack.c.l.b16 %v1620
        %v1846 = vunpack.c.h.b16 %v1620
        %v1847 = vunpack.c.l.b16 %v1621
        %v1848 = vunpack.c.l.b16 %v1622
        %v1849 = vunpack.c.h.b16 %v1622
        %v1850 = vunpack.c.l.b16 %v1623
        %v1851 = vunpack.c.l.b16 %v1624
        %v1852 = vunpack.c.h.b16 %v1624
        %v1853 = vunpack.c.l.b16 %v1625
        %v1854 = vunpack.c.l.b16 %v1626
        %v1855 = vunpack.c.h.b16 %v1626
        %v1856 = vunpack.c.l.b16 %v1627
        %v1857 = vunpack.c.l.b16 %v1628
        %v1858 = vunpack.c.h.b16 %v1628
        %v1859 = vunpack.c.l.b16 %v1629
        %v1860 = vunpack.c.l.b16 %v1630
        %v1861 = vunpack.c.h.b16 %v1630
        %v1862 = vunpack.c.l.b16 %v1631
        %v1863 = vunpack.c.l.b16 %v1632
        %v1864 = vunpack.c.h.b16 %v1632
        %v1865 = vunpack.c.l.b16 %v1633
        %v1866 = vunpack.c.l.b16 %v1634
        %v1867 = vunpack.c.h.b16 %v1634
        %v1868 = vunpack.c.l.b16 %v1635
        %v1869 = vunpack.c.l.b16 %v1636
        %v1870 = vunpack.c.h.b16 %v1636
        %v1871 = vunpack.c.l.b16 %v1637
        %v1872 = vunpack.c.l.b16 %v1638
        %v1873 = vunpack.c.h.b16 %v1638
        %v1874 = vunpack.c.l.b16 %v1639
        %v1875 = vunpack.c.l.b16 %v1640
        %v1876 = vunpack.c.h.b16 %v1640
        %v1877 = vunpack.c.l.b16 %v1641
        %v1878 = vunpack.c.l.b16 %v1642
        %v1879 = vunpack.c.h.b16 %v1642
        %v1880 = vunpack.c.l.b16 %v1643
        %v1881 = vunpack.c.l.b16 %v1644
        %v1882 = vunpack.c.h.b16 %v1644
        %v1883 = vunpack.c.l.b16 %v1645
        %v1884 = vunpack.c.l.b16 %v1646
        %v1885 = vunpack.c.h.b16 %v1646
        %v1886 = vunpack.c.l.b16 %v1647
        %v1887 = vunpack.c.l.b16 %v1648
        %v1888 = vunpack.c.h.b16 %v1648
        %v1889 = vunpack.c.l.b16 %v1649
        %v1890 = vunpack.c.l.b16 %v1650
        %v1891 = vunpack.c.h.b16 %v1650
        %v1892 = vunpack.c.l.b16 %v1651
        %v1893 = vunpack.c.l.b16 %v1652
        %v1894 = vunpack.c.h.b16 %v1652
        %v1895 = vunpack.c.l.b16 %v1653
        %v1896 = vunpack.c.l.b16 %v1654
        %v1897 = vunpack.c.h.b16 %v1654
        %v1898 = vunpack.c.l.b16 %v1655
        %v1899 = vunpack.c.l.b16 %v1656
        %v1900 = vunpack.c.h.b16 %v1656
        %v1901 = vunpack.c.l.b16 %v1657
        %v1902 = vunpack.c.l.b16 %v1658
        %v1903 = vunpack.c.h.b16 %v1658
        %v1904 = vunpack.c.l.b16 %v1659
        %v1905 = vunpack.c.l.b16 %v1660
        %v1906 = vunpack.c.h.b16 %v1660
        %v1907 = vunpack.c.l.b16 %v1661
        %v1908 = vunpack.c.l.b16 %v1662
        %v1909 = vunpack.c.h.b16 %v1662
        %v1910 = vunpack.c.l.b16 %v1663
        %v1911 = vunpack.c.l.b16 %v1664
        %v1912 = vunpack.c.h.b16 %v1664
        %v1913 = vunpack.c.l.b16 %v1665
        %v1914 = vunpack.c.l.b16 %v1666
        %v1915 = vunpack.c.h.b16 %v1666
        %v1916 = vunpack.c.l.b16 %v1667
        %v1917 = vunpack.c.l.b16 %v1668
        %v1918 = vunpack.c.h.b16 %v1668
        %v1919 = vunpack.c.l.b16 %v1669
        %v1920 = vunpack.c.l.b16 %v1670
        %v1921 = vunpack.c.h.b16 %v1670
        %v1922 = vunpack.c.l.b16 %v1671
        %v1923 = vunpack.c.l.b16 %v1672
        %v1924 = vunpack.c.h.b16 %v1672
        %v1925 = vunpack.c.l.b16 %v1673
        %v1926 = vunpack.c.l.b16 %v1674
        %v1927 = vunpack.c.h.b16 %v1674
        %v1928 = vunpack.c.l.b16 %v1675
        %v1929 = vunpack.c.l.b16 %v1676
        %v1930 = vunpack.c.h.b16 %v1676
        %v1931 = vunpack.c.l.b16 %v1677
        %v1932 = vunpack.c.l.b16 %v1678
        %v1933 = vunpack.c.h.b16 %v1678
        %v1934 = vunpack.c.l.b16 %v1679
        %v1935 = vunpack.c.l.b16 %v1680
        %v1936 = vunpack.c.h.b16 %v1680
        %v1937 = vunpack.c.l.b16 %v1681
        %v1938 = vunpack.c.l.b16 %v1682
        %v1939 = vunpack.c.h.b16 %v1682
        %v1940 = vunpack.c.l.b16 %v1683
        %v1941 = vpack.c.b16 %v1800, %v1797
        %v1942 = vpack.c.b16 %v1801, %v1798
        %v1943 = vpack.c.b16 %v1802, %v1799
        %v1944 = vpack.c.b16 %v1806, %v1803
        %v1945 = vpack.c.b16 %v1807, %v1804
        %v1946 = vpack.c.b16 %v1808, %v1805
        %v1947 = vpack.c.b16 %v1812, %v1809
        %v1948 = vpack.c.b16 %v1813, %v1810
        %v1949 = vpack.c.b16 %v1814, %v1811
        %v1950 = vpack.c.b16 %v1818, %v1815
        %v1951 = vpack.c.b16 %v1819, %v1816
        %v1952 = vpack.c.b16 %v1820, %v1817
        %v1953 = vpack.c.b16 %v1824, %v1821
        %v1954 = vpack.c.b16 %v1825, %v1822
        %v1955 = vpack.c.b16 %v1826, %v1823
        %v1956 = vpack.c.b16 %v1830, %v1827
        %v1957 = vpack.c.b16 %v1831, %v1828
        %v1958 = vpack.c.b16 %v1832, %v1829
        %v1959 = vpack.c.b16 %v1836, %v1833
        %v1960 = vpack.c.b16 %v1837, %v1834
        %v1961 = vpack.c.b16 %v1838, %v1835
        %v1962 = vpack.c.b16 %v1842, %v1839
        %v1963 = vpack.c.b16 %v1843, %v1840
        %v1964 = vpack.c.b16 %v1844, %v1841
        %v1965 = vpack.c.b16 %v1848, %v1845
        %v1966 = vpack.c.b16 %v1849, %v1846
        %v1967 = vpack.c.b16 %v1850, %v1847
        %v1968 = vpack.c.b16 %v1854, %v1851
        %v1969 = vpack.c.b16 %v1855, %v1852
        %v1970 = vpack.c.b16 %v1856, %v1853
        %v1971 = vpack.c.b16 %v1860, %v1857
        %v1972 = vpack.c.b16 %v1861, %v1858
        %v1973 = vpack.c.b16 %v1862, %v1859
        %v1974 = vpack.c.b16 %v1866, %v1863
        %v1975 = vpack.c.b16 %v1867, %v1864
        %v1976 = vpack.c.b16 %v1868, %v1865
        %v1977 = vpack.c.b16 %v1872, %v1869
        %v1978 = vpack.c.b16 %v1873, %v1870
        %v1979 = vpack.c.b16 %v1874, %v1871
        %v1980 = vpack.c.b16 %v1878, %v1875
        %v1981 = vpack.c.b16 %v1879, %v1876
        %v1982 = vpack.c.b16 %v1880, %v1877
        %v1983 = vpack.c.b16 %v1884, %v1881
        %v1984 = vpack.c.b16 %v1885, %v1882
        %v1985 = vpack.c.b16 %v1886, %v1883
        %v1986 = vpack.c.b16 %v1890, %v1887
        %v1987 = vpack.c.b16 %v1891, %v1888
        %v1988 = vpack.c.b16 %v1892, %v1889
        %v1989 = vpack.c.b16 %v1896, %v1893
        %v1990 = vpack.c.b16 %v1897, %v1894
        %v1991 = vpack.c.b16 %v1898, %v1895
        %v1992 = vpack.c.b16 %v1902, %v1899
        %v1993 = vpack.c.b16 %v1903, %v1900
        %v1994 = vpack.c.b16 %v1904, %v1901
        %v1995 = vpack.c.b16 %v1908, %v1905
        %v1996 = vpack.c.b16 %v1909, %v1906
        %v1997 = vpack.c.b16 %v1910, %v1907
        %v1998 = vpack.c.b16 %v1914, %v1911
        %v1999 = vpack.c.b16 %v1915, %v1912
        %v2000 = vpack.c.b16 %v1916, %v1913
        %v2001 = vpack.c.b16 %v1920, %v1917
        %v2002 = vpack.c.b16 %v1921, %v1918
        %v2003 = vpack.c.b16 %v1922, %v1919
        %v2004 = vpack.c.b16 %v1926, %v1923
        %v2005 = vpack.c.b16 %v1927, %v1924
        %v2006 = vpack.c.b16 %v1928, %v1925
        %v2007 = vpack.c.b16 %v1932, %v1929
        %v2008 = vpack.c.b16 %v1933, %v1930
        %v2009 = vpack.c.b16 %v1934, %v1931
        %v2010 = vpack.c.b16 %v1938, %v1935
        %v2011 = vpack.c.b16 %v1939, %v1936
        %v2012 = vpack.c.b16 %v1940, %v1937
        %2085 = vmatprep.subr.bf16.mxu0 %v1942
        %2086 = vmatpush1.bf16.msra.mxu0 %v1941
        %2087 = vmatprep.subr.bf16.mxu0 %v1945
        %2088 = vmatpush1.bf16.msra.mxu0 %v1944
        %2089 = vmatprep.subr.bf16.mxu0 %v1948
        %2090 = vmatpush1.bf16.msra.mxu0 %v1947
        %2091 = vmatprep.subr.bf16.mxu0 %v1951
        %2092 = vmatpush1.bf16.msra.mxu0 %v1950
        %2093 = vmatprep.subr.bf16.mxu0 %v1954
        %2094 = vmatpush1.bf16.msra.mxu0 %v1953
        %2095 = vmatprep.subr.bf16.mxu0 %v1957
        %2096 = vmatpush1.bf16.msra.mxu0 %v1956
        %2097 = vmatprep.subr.bf16.mxu0 %v1960
        %2098 = vmatpush1.bf16.msra.mxu0 %v1959
        %2099 = vmatprep.subr.bf16.mxu0 %v1963
        %2100 = vmatpush1.bf16.msra.mxu0 %v1962
        %2101 = vmatprep.subr.bf16.mxu0 %v1966
        %2102 = vmatpush1.bf16.msra.mxu0 %v1965
        %2103 = vmatprep.subr.bf16.mxu0 %v1969
        %2104 = vmatpush1.bf16.msra.mxu0 %v1968
        %2105 = vmatprep.subr.bf16.mxu0 %v1972
        %2106 = vmatpush1.bf16.msra.mxu0 %v1971
        %2107 = vmatprep.subr.bf16.mxu0 %v1975
        %2108 = vmatpush1.bf16.msra.mxu0 %v1974
        %2109 = vmatprep.subr.bf16.mxu0 %v1978
        %2110 = vmatpush1.bf16.msra.mxu0 %v1977
        %2111 = vmatprep.subr.bf16.mxu0 %v1981
        %2112 = vmatpush1.bf16.msra.mxu0 %v1980
        %2113 = vmatprep.subr.bf16.mxu0 %v1984
        %2114 = vmatpush1.bf16.msra.mxu0 %v1983
        %2115 = vmatprep.subr.bf16.mxu0 %v1987
        %2116 = vmatpush1.bf16.msra.mxu0 %v1986
        %2117 = vmatprep.mubr.bf16.mxu0 %v1580
        %2118 = vmatmul.mubr.bf16.gmra.mrb[0].mxu0 %v1579
        %v2119 = vpop.f32.mrb[0].mxu0
        %v2120 = vadd.f32 %v1689, %v2119
        %v2121 = vpop.f32.mrb[0].mxu0
        %v2122 = vadd.f32 %v1693, %v2121
        %v2123 = vpop.f32.mrb[0].mxu0
        %v2124 = vpop.f32.mrb[0].mxu0
        %2125 = vdwg.mxu0
        %2126 = vmatprep.subr.bf16.mxu0 %v1990
        %2127 = vmatpush1.bf16.msra.mxu0 %v1989
        %2128 = vmatprep.subr.bf16.mxu0 %v1993
        %2129 = vmatpush1.bf16.msra.mxu0 %v1992
        %2130 = vmatprep.subr.bf16.mxu0 %v1996
        %2131 = vmatpush1.bf16.msra.mxu0 %v1995
        %2132 = vmatprep.subr.bf16.mxu0 %v1999
        %2133 = vmatpush1.bf16.msra.mxu0 %v1998
        %2134 = vmatprep.subr.bf16.mxu0 %v2002
        %2135 = vmatpush1.bf16.msra.mxu0 %v2001
        %2136 = vmatprep.subr.bf16.mxu0 %v2005
        %2137 = vmatpush1.bf16.msra.mxu0 %v2004
        %2138 = vmatprep.subr.bf16.mxu0 %v2008
        %2139 = vmatpush1.bf16.msra.mxu0 %v2007
        %2140 = vmatprep.subr.bf16.mxu0 %v2011
        %2141 = vmatpush1.bf16.msra.mxu0 %v2010
        %2142 = vmatprep.subr.bf16.mxu0 0
        %2143 = vmatpush1.bf16.msra.mxu0 0
        %2144 = vmatprep.subr.bf16.mxu0 0
        %2145 = vmatpush1.bf16.msra.mxu0 0
        %2146 = vmatprep.subr.bf16.mxu0 0
        %2147 = vmatpush1.bf16.msra.mxu0 0
        %2148 = vmatprep.subr.bf16.mxu0 0
        %2149 = vmatpush1.bf16.msra.mxu0 0
        %2150 = vmatprep.subr.bf16.mxu0 0
        %2151 = vmatpush1.bf16.msra.mxu0 0
        %2152 = vmatprep.subr.bf16.mxu0 0
        %2153 = vmatpush1.bf16.msra.mxu0 0
        %2154 = vmatprep.subr.bf16.mxu0 0
        %2155 = vmatpush1.bf16.msra.mxu0 0
        %2156 = vmatprep.subr.bf16.mxu0 0
        %2157 = vmatpush1.bf16.msra.mxu0 0
        %2158 = vmatprep.mubr.bf16.mxu0 0
        %2159 = vmatmul.mubr.bf16.gmra.mrb[0].mxu0 %v1581
        %v2160 = vpop.f32.mrb[0].mxu0
        %v2161 = vadd.f32 %v2120, %v2160
        %v2162 = vpop.f32.mrb[0].mxu0
        %v2163 = vadd.f32 %v2122, %v2162
        %v2164 = vpop.f32.mrb[0].mxu0
        %v2165 = vpop.f32.mrb[0].mxu0
        %2166 = vdwg.mxu0
        %2167 = vmatprep.subr.bf16.mxu0 0
        %2168 = vmatpush1.bf16.msra.mxu0 %v1943
        %2169 = vmatprep.subr.bf16.mxu0 0
        %2170 = vmatpush1.bf16.msra.mxu0 %v1946
        %2171 = vmatprep.subr.bf16.mxu0 0
        %2172 = vmatpush1.bf16.msra.mxu0 %v1949
        %2173 = vmatprep.subr.bf16.mxu0 0
        %2174 = vmatpush1.bf16.msra.mxu0 %v1952
        %2175 = vmatprep.subr.bf16.mxu0 0
        %2176 = vmatpush1.bf16.msra.mxu0 %v1955
        %2177 = vmatprep.subr.bf16.mxu0 0
        %2178 = vmatpush1.bf16.msra.mxu0 %v1958
        %2179 = vmatprep.subr.bf16.mxu0 0
        %2180 = vmatpush1.bf16.msra.mxu0 %v1961
        %2181 = vmatprep.subr.bf16.mxu0 0
        %2182 = vmatpush1.bf16.msra.mxu0 %v1964
        %2183 = vmatprep.subr.bf16.mxu0 0
        %2184 = vmatpush1.bf16.msra.mxu0 %v1967
        %2185 = vmatprep.subr.bf16.mxu0 0
        %2186 = vmatpush1.bf16.msra.mxu0 %v1970
        %2187 = vmatprep.subr.bf16.mxu0 0
        %2188 = vmatpush1.bf16.msra.mxu0 %v1973
        %2189 = vmatprep.subr.bf16.mxu0 0
        %2190 = vmatpush1.bf16.msra.mxu0 %v1976
        %2191 = vmatprep.subr.bf16.mxu0 0
        %2192 = vmatpush1.bf16.msra.mxu0 %v1979
        %2193 = vmatprep.subr.bf16.mxu0 0
        %2194 = vmatpush1.bf16.msra.mxu0 %v1982
        %2195 = vmatprep.subr.bf16.mxu0 0
        %2196 = vmatpush1.bf16.msra.mxu0 %v1985
        %2197 = vmatprep.subr.bf16.mxu0 0
        %2198 = vmatpush1.bf16.msra.mxu0 %v1988
        %2199 = vmatprep.mubr.bf16.mxu0 %v1580
        %2200 = vmatmul.mubr.bf16.gmra.mrb[0].mxu0 %v1579
        %v2201 = vpop.f32.mrb[0].mxu0
        %v2202 = vadd.f32 %v1697, %v2201
        %v2203 = vpop.f32.mrb[0].mxu0
        %v2204 = vpop.f32.mrb[0].mxu0
        %v2205 = vpop.f32.mrb[0].mxu0
        %2206 = vdwg.mxu0
        %2207 = vmatprep.subr.bf16.mxu0 0
        %2208 = vmatpush1.bf16.msra.mxu0 %v1991
        %2209 = vmatprep.subr.bf16.mxu0 0
        %2210 = vmatpush1.bf16.msra.mxu0 %v1994
        %2211 = vmatprep.subr.bf16.mxu0 0
        %2212 = vmatpush1.bf16.msra.mxu0 %v1997
        %2213 = vmatprep.subr.bf16.mxu0 0
        %2214 = vmatpush1.bf16.msra.mxu0 %v2000
        %2215 = vmatprep.subr.bf16.mxu0 0
        %2216 = vmatpush1.bf16.msra.mxu0 %v2003
        %2217 = vmatprep.subr.bf16.mxu0 0
        %2218 = vmatpush1.bf16.msra.mxu0 %v2006
        %2219 = vmatprep.subr.bf16.mxu0 0
        %2220 = vmatpush1.bf16.msra.mxu0 %v2009
        %2221 = vmatprep.subr.bf16.mxu0 0
        %2222 = vmatpush1.bf16.msra.mxu0 %v2012
        %2223 = vmatprep.subr.bf16.mxu0 0
        %2224 = vmatpush1.bf16.msra.mxu0 0
        %2225 = vmatprep.subr.bf16.mxu0 0
        %2226 = vmatpush1.bf16.msra.mxu0 0
        %2227 = vmatprep.subr.bf16.mxu0 0
        %2228 = vmatpush1.bf16.msra.mxu0 0
        %2229 = vmatprep.subr.bf16.mxu0 0
        %2230 = vmatpush1.bf16.msra.mxu0 0
        %2231 = vmatprep.subr.bf16.mxu0 0
        %2232 = vmatpush1.bf16.msra.mxu0 0
        %2233 = vmatprep.subr.bf16.mxu0 0
        %2234 = vmatpush1.bf16.msra.mxu0 0
        %2235 = vmatprep.subr.bf16.mxu0 0
        %2236 = vmatpush1.bf16.msra.mxu0 0
        %2237 = vmatprep.subr.bf16.mxu0 0
        %2238 = vmatpush1.bf16.msra.mxu0 0
        %2239 = vmatprep.mubr.bf16.mxu0 0
        %2240 = vmatmul.mubr.bf16.gmra.mrb[0].mxu0 %v1581
        %v2241 = vpop.f32.mrb[0].mxu0
        %v2242 = vadd.f32 %v2202, %v2241
        %v2243 = vpop.f32.mrb[0].mxu0
        %v2244 = vpop.f32.mrb[0].mxu0
        %v2245 = vpop.f32.mrb[0].mxu0
        %2246 = vdwg.mxu0
        %v2247 = vpack.c.bf16 %v2161, %v2161
        %v2248 = vpack.c.bf16 %v2163, %v2163
        %v2249 = vpack.c.bf16 %v2242, %v2242
        %v2253 = vunpack.c.l.b16 %v2247
        %v2254 = vunpack.c.l.b16 %v2248
        %v2255 = vunpack.c.l.b16 %v2249
        %v2256 = vpack.c.b16 %v2254, %v2253
        %v2257 = vpack.c.b16 %v2255, %v2255
        %2260 = vst [vmem:[#allocation4] sm:$0xff] %v2256
        %2261 = vst [vmem:[#allocation4 + $0x8] sm:$0xf] %v2257
        %v2262 = vld [vmem:[#allocation21] sm:$0xff]
        %v2263 = vld [vmem:[#allocation21 + $0x8] sm:$0xf]
        %v2264 = vld [vmem:[#allocation21 + $0xc] sm:$0xff]
        %v2265 = vld [vmem:[#allocation21 + $0x14] sm:$0xf]
        %v2266 = vld [vmem:[#allocation21 + $0x18] sm:$0xff]
        %v2267 = vld [vmem:[#allocation21 + $0x20] sm:$0xf]
        %v2268 = vld [vmem:[#allocation21 + $0x24] sm:$0xff]
        %v2269 = vld [vmem:[#allocation21 + $0x2c] sm:$0xf]
        %v2270 = vld [vmem:[#allocation21 + $0x30] sm:$0xff]
        %v2271 = vld [vmem:[#allocation21 + $0x38] sm:$0xf]
        %v2272 = vld [vmem:[#allocation21 + $0x3c] sm:$0xff]
        %v2273 = vld [vmem:[#allocation21 + $0x44] sm:$0xf]
        %v2274 = vld [vmem:[#allocation21 + $0x48] sm:$0xff]
        %v2275 = vld [vmem:[#allocation21 + $0x50] sm:$0xf]
        %v2276 = vld [vmem:[#allocation21 + $0x54] sm:$0xff]
        %v2277 = vld [vmem:[#allocation21 + $0x5c] sm:$0xf]
        %v2278 = vld [vmem:[#allocation21 + $0x60] sm:$0xff]
        %v2279 = vld [vmem:[#allocation21 + $0x68] sm:$0xf]
        %v2280 = vld [vmem:[#allocation21 + $0x6c] sm:$0xff]
        %v2281 = vld [vmem:[#allocation21 + $0x74] sm:$0xf]
        %v2282 = vld [vmem:[#allocation21 + $0x78] sm:$0xff]
        %v2283 = vld [vmem:[#allocation21 + $0x80] sm:$0xf]
        %v2284 = vld [vmem:[#allocation21 + $0x84] sm:$0xff]
        %v2285 = vld [vmem:[#allocation21 + $0x8c] sm:$0xf]
        %v2286 = vld [vmem:[#allocation21 + $0x90] sm:$0xff]
        %v2287 = vld [vmem:[#allocation21 + $0x98] sm:$0xf]
        %v2288 = vld [vmem:[#allocation21 + $0x9c] sm:$0xff]
        %v2289 = vld [vmem:[#allocation21 + $0xa4] sm:$0xf]
        %v2290 = vld [vmem:[#allocation21 + $0xa8] sm:$0xff]
        %v2291 = vld [vmem:[#allocation21 + $0xb0] sm:$0xf]
        %v2292 = vld [vmem:[#allocation21 + $0xb4] sm:$0xff]
        %v2293 = vld [vmem:[#allocation21 + $0xbc] sm:$0xf]
        %v2294 = vld [vmem:[#allocation21 + $0xc0] sm:$0xff]
        %v2295 = vld [vmem:[#allocation21 + $0xc8] sm:$0xf]
        %v2296 = vld [vmem:[#allocation21 + $0xcc] sm:$0xff]
        %v2297 = vld [vmem:[#allocation21 + $0xd4] sm:$0xf]
        %v2298 = vld [vmem:[#allocation21 + $0xd8] sm:$0xff]
        %v2299 = vld [vmem:[#allocation21 + $0xe0] sm:$0xf]
        %v2300 = vld [vmem:[#allocation21 + $0xe4] sm:$0xff]
        %v2301 = vld [vmem:[#allocation21 + $0xec] sm:$0xf]
        %v2302 = vld [vmem:[#allocation21 + $0xf0] sm:$0xff]
        %v2303 = vld [vmem:[#allocation21 + $0xf8] sm:$0xf]
        %v2304 = vld [vmem:[#allocation21 + $0xfc] sm:$0xff]
        %v2305 = vld [vmem:[#allocation21 + $0x104] sm:$0xf]
        %v2306 = vld [vmem:[#allocation21 + $0x108] sm:$0xff]
        %v2307 = vld [vmem:[#allocation21 + $0x110] sm:$0xf]
        %v2308 = vld [vmem:[#allocation21 + $0x114] sm:$0xff]
        %v2309 = vld [vmem:[#allocation21 + $0x11c] sm:$0xf]
        %v2310 = vld [vmem:[#allocation21 + $0x120] sm:$0xff]
        %v2311 = vld [vmem:[#allocation21 + $0x128] sm:$0xf]
        %v2312 = vld [vmem:[#allocation21 + $0x12c] sm:$0xff]
        %v2313 = vld [vmem:[#allocation21 + $0x134] sm:$0xf]
        %v2314 = vld [vmem:[#allocation21 + $0x138] sm:$0xff]
        %v2315 = vld [vmem:[#allocation21 + $0x140] sm:$0xf]
        %v2316 = vld [vmem:[#allocation21 + $0x144] sm:$0xff]
        %v2317 = vld [vmem:[#allocation21 + $0x14c] sm:$0xf]
        %v2318 = vld [vmem:[#allocation21 + $0x150] sm:$0xff]
        %v2319 = vld [vmem:[#allocation21 + $0x158] sm:$0xf]
        %v2320 = vld [vmem:[#allocation21 + $0x15c] sm:$0xff]
        %v2321 = vld [vmem:[#allocation21 + $0x164] sm:$0xf]
        %v2322 = vld [vmem:[#allocation21 + $0x168] sm:$0xff]
        %v2323 = vld [vmem:[#allocation21 + $0x170] sm:$0xf]
        %v2324 = vld [vmem:[#allocation21 + $0x174] sm:$0xff]
        %v2325 = vld [vmem:[#allocation21 + $0x17c] sm:$0xf]
        %v2326 = vld [vmem:[#allocation21 + $0x180] sm:$0xff]
        %v2327 = vld [vmem:[#allocation21 + $0x188] sm:$0xf]
        %v2328 = vld [vmem:[#allocation21 + $0x18c] sm:$0xff]
        %v2329 = vld [vmem:[#allocation21 + $0x194] sm:$0xf]
        %v2330 = vld [vmem:[#allocation21 + $0x198] sm:$0xff]
        %v2331 = vld [vmem:[#allocation21 + $0x1a0] sm:$0xf]
        %v2332 = vld [vmem:[#allocation21 + $0x1a4] sm:$0xff]
        %v2333 = vld [vmem:[#allocation21 + $0x1ac] sm:$0xf]
        %v2334 = vld [vmem:[#allocation21 + $0x1b0] sm:$0xff]
        %v2335 = vld [vmem:[#allocation21 + $0x1b8] sm:$0xf]
        %v2336 = vld [vmem:[#allocation21 + $0x1bc] sm:$0xff]
        %v2337 = vld [vmem:[#allocation21 + $0x1c4] sm:$0xf]
        %v2338 = vld [vmem:[#allocation21 + $0x1c8] sm:$0xff]
        %v2339 = vld [vmem:[#allocation21 + $0x1d0] sm:$0xf]
        %v2340 = vld [vmem:[#allocation21 + $0x1d4] sm:$0xff]
        %v2341 = vld [vmem:[#allocation21 + $0x1dc] sm:$0xf]
        %v2342 = vld [vmem:[#allocation21 + $0x1e0] sm:$0xff]
        %v2343 = vld [vmem:[#allocation21 + $0x1e8] sm:$0xf]
        %v2344 = vld [vmem:[#allocation21 + $0x1ec] sm:$0xff]
        %v2345 = vld [vmem:[#allocation21 + $0x1f4] sm:$0xf]
        %v2346 = vld [vmem:[#allocation21 + $0x1f8] sm:$0xff]
        %v2347 = vld [vmem:[#allocation21 + $0x200] sm:$0xf]
        %v2348 = vld [vmem:[#allocation21 + $0x204] sm:$0xff]
        %v2349 = vld [vmem:[#allocation21 + $0x20c] sm:$0xf]
        %v2350 = vld [vmem:[#allocation21 + $0x210] sm:$0xff]
        %v2351 = vld [vmem:[#allocation21 + $0x218] sm:$0xf]
        %v2352 = vld [vmem:[#allocation21 + $0x21c] sm:$0xff]
        %v2353 = vld [vmem:[#allocation21 + $0x224] sm:$0xf]
        %v2354 = vld [vmem:[#allocation21 + $0x228] sm:$0xff]
        %v2355 = vld [vmem:[#allocation21 + $0x230] sm:$0xf]
        %v2356 = vld [vmem:[#allocation21 + $0x234] sm:$0xff]
        %v2357 = vld [vmem:[#allocation21 + $0x23c] sm:$0xf]
        %v2358 = vld [vmem:[%s8] sm:$0x7]
        %v2360 = vlaneseq
        %v2361 = vshrl.u32 %v2360, 7
        %v2362 = vsub.s32 0, %v2361
        %v2363 = vrot.slane %v2358, %v2362
        %v2364 = vlaneseq
        %v2365 = vshrl.u32 %v2364, 7
        %v2366 = vsub.s32 1, %v2365
        %v2367 = vrot.slane %v2358, %v2366
        %v2368 = vlaneseq
        %v2369 = vshrl.u32 %v2368, 7
        %v2370 = vsub.s32 2, %v2369
        %v2371 = vrot.slane %v2358, %v2370
        %v2471 = vunpack.c.l.b16 %v2262
        %v2472 = vunpack.c.h.b16 %v2262
        %v2473 = vunpack.c.l.b16 %v2263
        %v2474 = vunpack.c.l.b16 %v2264
        %v2475 = vunpack.c.h.b16 %v2264
        %v2476 = vunpack.c.l.b16 %v2265
        %v2477 = vunpack.c.l.b16 %v2266
        %v2478 = vunpack.c.h.b16 %v2266
        %v2479 = vunpack.c.l.b16 %v2267
        %v2480 = vunpack.c.l.b16 %v2268
        %v2481 = vunpack.c.h.b16 %v2268
        %v2482 = vunpack.c.l.b16 %v2269
        %v2483 = vunpack.c.l.b16 %v2270
        %v2484 = vunpack.c.h.b16 %v2270
        %v2485 = vunpack.c.l.b16 %v2271
        %v2486 = vunpack.c.l.b16 %v2272
        %v2487 = vunpack.c.h.b16 %v2272
        %v2488 = vunpack.c.l.b16 %v2273
        %v2489 = vunpack.c.l.b16 %v2274
        %v2490 = vunpack.c.h.b16 %v2274
        %v2491 = vunpack.c.l.b16 %v2275
        %v2492 = vunpack.c.l.b16 %v2276
        %v2493 = vunpack.c.h.b16 %v2276
        %v2494 = vunpack.c.l.b16 %v2277
        %v2495 = vunpack.c.l.b16 %v2278
        %v2496 = vunpack.c.h.b16 %v2278
        %v2497 = vunpack.c.l.b16 %v2279
        %v2498 = vunpack.c.l.b16 %v2280
        %v2499 = vunpack.c.h.b16 %v2280
        %v2500 = vunpack.c.l.b16 %v2281
        %v2501 = vunpack.c.l.b16 %v2282
        %v2502 = vunpack.c.h.b16 %v2282
        %v2503 = vunpack.c.l.b16 %v2283
        %v2504 = vunpack.c.l.b16 %v2284
        %v2505 = vunpack.c.h.b16 %v2284
        %v2506 = vunpack.c.l.b16 %v2285
        %v2507 = vunpack.c.l.b16 %v2286
        %v2508 = vunpack.c.h.b16 %v2286
        %v2509 = vunpack.c.l.b16 %v2287
        %v2510 = vunpack.c.l.b16 %v2288
        %v2511 = vunpack.c.h.b16 %v2288
        %v2512 = vunpack.c.l.b16 %v2289
        %v2513 = vunpack.c.l.b16 %v2290
        %v2514 = vunpack.c.h.b16 %v2290
        %v2515 = vunpack.c.l.b16 %v2291
        %v2516 = vunpack.c.l.b16 %v2292
        %v2517 = vunpack.c.h.b16 %v2292
        %v2518 = vunpack.c.l.b16 %v2293
        %v2519 = vunpack.c.l.b16 %v2294
        %v2520 = vunpack.c.h.b16 %v2294
        %v2521 = vunpack.c.l.b16 %v2295
        %v2522 = vunpack.c.l.b16 %v2296
        %v2523 = vunpack.c.h.b16 %v2296
        %v2524 = vunpack.c.l.b16 %v2297
        %v2525 = vunpack.c.l.b16 %v2298
        %v2526 = vunpack.c.h.b16 %v2298
        %v2527 = vunpack.c.l.b16 %v2299
        %v2528 = vunpack.c.l.b16 %v2300
        %v2529 = vunpack.c.h.b16 %v2300
        %v2530 = vunpack.c.l.b16 %v2301
        %v2531 = vunpack.c.l.b16 %v2302
        %v2532 = vunpack.c.h.b16 %v2302
        %v2533 = vunpack.c.l.b16 %v2303
        %v2534 = vunpack.c.l.b16 %v2304
        %v2535 = vunpack.c.h.b16 %v2304
        %v2536 = vunpack.c.l.b16 %v2305
        %v2537 = vunpack.c.l.b16 %v2306
        %v2538 = vunpack.c.h.b16 %v2306
        %v2539 = vunpack.c.l.b16 %v2307
        %v2540 = vunpack.c.l.b16 %v2308
        %v2541 = vunpack.c.h.b16 %v2308
        %v2542 = vunpack.c.l.b16 %v2309
        %v2543 = vunpack.c.l.b16 %v2310
        %v2544 = vunpack.c.h.b16 %v2310
        %v2545 = vunpack.c.l.b16 %v2311
        %v2546 = vunpack.c.l.b16 %v2312
        %v2547 = vunpack.c.h.b16 %v2312
        %v2548 = vunpack.c.l.b16 %v2313
        %v2549 = vunpack.c.l.b16 %v2314
        %v2550 = vunpack.c.h.b16 %v2314
        %v2551 = vunpack.c.l.b16 %v2315
        %v2552 = vunpack.c.l.b16 %v2316
        %v2553 = vunpack.c.h.b16 %v2316
        %v2554 = vunpack.c.l.b16 %v2317
        %v2555 = vunpack.c.l.b16 %v2318
        %v2556 = vunpack.c.h.b16 %v2318
        %v2557 = vunpack.c.l.b16 %v2319
        %v2558 = vunpack.c.l.b16 %v2320
        %v2559 = vunpack.c.h.b16 %v2320
        %v2560 = vunpack.c.l.b16 %v2321
        %v2561 = vunpack.c.l.b16 %v2322
        %v2562 = vunpack.c.h.b16 %v2322
        %v2563 = vunpack.c.l.b16 %v2323
        %v2564 = vunpack.c.l.b16 %v2324
        %v2565 = vunpack.c.h.b16 %v2324
        %v2566 = vunpack.c.l.b16 %v2325
        %v2567 = vunpack.c.l.b16 %v2326
        %v2568 = vunpack.c.h.b16 %v2326
        %v2569 = vunpack.c.l.b16 %v2327
        %v2570 = vunpack.c.l.b16 %v2328
        %v2571 = vunpack.c.h.b16 %v2328
        %v2572 = vunpack.c.l.b16 %v2329
        %v2573 = vunpack.c.l.b16 %v2330
        %v2574 = vunpack.c.h.b16 %v2330
        %v2575 = vunpack.c.l.b16 %v2331
        %v2576 = vunpack.c.l.b16 %v2332
        %v2577 = vunpack.c.h.b16 %v2332
        %v2578 = vunpack.c.l.b16 %v2333
        %v2579 = vunpack.c.l.b16 %v2334
        %v2580 = vunpack.c.h.b16 %v2334
        %v2581 = vunpack.c.l.b16 %v2335
        %v2582 = vunpack.c.l.b16 %v2336
        %v2583 = vunpack.c.h.b16 %v2336
        %v2584 = vunpack.c.l.b16 %v2337
        %v2585 = vunpack.c.l.b16 %v2338
        %v2586 = vunpack.c.h.b16 %v2338
        %v2587 = vunpack.c.l.b16 %v2339
        %v2588 = vunpack.c.l.b16 %v2340
        %v2589 = vunpack.c.h.b16 %v2340
        %v2590 = vunpack.c.l.b16 %v2341
        %v2591 = vunpack.c.l.b16 %v2342
        %v2592 = vunpack.c.h.b16 %v2342
        %v2593 = vunpack.c.l.b16 %v2343
        %v2594 = vunpack.c.l.b16 %v2344
        %v2595 = vunpack.c.h.b16 %v2344
        %v2596 = vunpack.c.l.b16 %v2345
        %v2597 = vunpack.c.l.b16 %v2346
        %v2598 = vunpack.c.h.b16 %v2346
        %v2599 = vunpack.c.l.b16 %v2347
        %v2600 = vunpack.c.l.b16 %v2348
        %v2601 = vunpack.c.h.b16 %v2348
        %v2602 = vunpack.c.l.b16 %v2349
        %v2603 = vunpack.c.l.b16 %v2350
        %v2604 = vunpack.c.h.b16 %v2350
        %v2605 = vunpack.c.l.b16 %v2351
        %v2606 = vunpack.c.l.b16 %v2352
        %v2607 = vunpack.c.h.b16 %v2352
        %v2608 = vunpack.c.l.b16 %v2353
        %v2609 = vunpack.c.l.b16 %v2354
        %v2610 = vunpack.c.h.b16 %v2354
        %v2611 = vunpack.c.l.b16 %v2355
        %v2612 = vunpack.c.l.b16 %v2356
        %v2613 = vunpack.c.h.b16 %v2356
        %v2614 = vunpack.c.l.b16 %v2357
        %v2615 = vpack.c.b16 %v2474, %v2471
        %v2616 = vpack.c.b16 %v2475, %v2472
        %v2617 = vpack.c.b16 %v2476, %v2473
        %v2618 = vpack.c.b16 %v2480, %v2477
        %v2619 = vpack.c.b16 %v2481, %v2478
        %v2620 = vpack.c.b16 %v2482, %v2479
        %v2621 = vpack.c.b16 %v2486, %v2483
        %v2622 = vpack.c.b16 %v2487, %v2484
        %v2623 = vpack.c.b16 %v2488, %v2485
        %v2624 = vpack.c.b16 %v2492, %v2489
        %v2625 = vpack.c.b16 %v2493, %v2490
        %v2626 = vpack.c.b16 %v2494, %v2491
        %v2627 = vpack.c.b16 %v2498, %v2495
        %v2628 = vpack.c.b16 %v2499, %v2496
        %v2629 = vpack.c.b16 %v2500, %v2497
        %v2630 = vpack.c.b16 %v2504, %v2501
        %v2631 = vpack.c.b16 %v2505, %v2502
        %v2632 = vpack.c.b16 %v2506, %v2503
        %v2633 = vpack.c.b16 %v2510, %v2507
        %v2634 = vpack.c.b16 %v2511, %v2508
        %v2635 = vpack.c.b16 %v2512, %v2509
        %v2636 = vpack.c.b16 %v2516, %v2513
        %v2637 = vpack.c.b16 %v2517, %v2514
        %v2638 = vpack.c.b16 %v2518, %v2515
        %v2639 = vpack.c.b16 %v2522, %v2519
        %v2640 = vpack.c.b16 %v2523, %v2520
        %v2641 = vpack.c.b16 %v2524, %v2521
        %v2642 = vpack.c.b16 %v2528, %v2525
        %v2643 = vpack.c.b16 %v2529, %v2526
        %v2644 = vpack.c.b16 %v2530, %v2527
        %v2645 = vpack.c.b16 %v2534, %v2531
        %v2646 = vpack.c.b16 %v2535, %v2532
        %v2647 = vpack.c.b16 %v2536, %v2533
        %v2648 = vpack.c.b16 %v2540, %v2537
        %v2649 = vpack.c.b16 %v2541, %v2538
        %v2650 = vpack.c.b16 %v2542, %v2539
        %v2651 = vpack.c.b16 %v2546, %v2543
        %v2652 = vpack.c.b16 %v2547, %v2544
        %v2653 = vpack.c.b16 %v2548, %v2545
        %v2654 = vpack.c.b16 %v2552, %v2549
        %v2655 = vpack.c.b16 %v2553, %v2550
        %v2656 = vpack.c.b16 %v2554, %v2551
        %v2657 = vpack.c.b16 %v2558, %v2555
        %v2658 = vpack.c.b16 %v2559, %v2556
        %v2659 = vpack.c.b16 %v2560, %v2557
        %v2660 = vpack.c.b16 %v2564, %v2561
        %v2661 = vpack.c.b16 %v2565, %v2562
        %v2662 = vpack.c.b16 %v2566, %v2563
        %v2663 = vpack.c.b16 %v2570, %v2567
        %v2664 = vpack.c.b16 %v2571, %v2568
        %v2665 = vpack.c.b16 %v2572, %v2569
        %v2666 = vpack.c.b16 %v2576, %v2573
        %v2667 = vpack.c.b16 %v2577, %v2574
        %v2668 = vpack.c.b16 %v2578, %v2575
        %v2669 = vpack.c.b16 %v2582, %v2579
        %v2670 = vpack.c.b16 %v2583, %v2580
        %v2671 = vpack.c.b16 %v2584, %v2581
        %v2672 = vpack.c.b16 %v2588, %v2585
        %v2673 = vpack.c.b16 %v2589, %v2586
        %v2674 = vpack.c.b16 %v2590, %v2587
        %v2675 = vpack.c.b16 %v2594, %v2591
        %v2676 = vpack.c.b16 %v2595, %v2592
        %v2677 = vpack.c.b16 %v2596, %v2593
        %v2678 = vpack.c.b16 %v2600, %v2597
        %v2679 = vpack.c.b16 %v2601, %v2598
        %v2680 = vpack.c.b16 %v2602, %v2599
        %v2681 = vpack.c.b16 %v2606, %v2603
        %v2682 = vpack.c.b16 %v2607, %v2604
        %v2683 = vpack.c.b16 %v2608, %v2605
        %v2684 = vpack.c.b16 %v2612, %v2609
        %v2685 = vpack.c.b16 %v2613, %v2610
        %v2686 = vpack.c.b16 %v2614, %v2611
        %2759 = vmatprep.subr.bf16.mxu0 %v2616
        %2760 = vmatpush1.bf16.msra.mxu0 %v2615
        %2761 = vmatprep.subr.bf16.mxu0 %v2619
        %2762 = vmatpush1.bf16.msra.mxu0 %v2618
        %2763 = vmatprep.subr.bf16.mxu0 %v2622
        %2764 = vmatpush1.bf16.msra.mxu0 %v2621
        %2765 = vmatprep.subr.bf16.mxu0 %v2625
        %2766 = vmatpush1.bf16.msra.mxu0 %v2624
        %2767 = vmatprep.subr.bf16.mxu0 %v2628
        %2768 = vmatpush1.bf16.msra.mxu0 %v2627
        %2769 = vmatprep.subr.bf16.mxu0 %v2631
        %2770 = vmatpush1.bf16.msra.mxu0 %v2630
        %2771 = vmatprep.subr.bf16.mxu0 %v2634
        %2772 = vmatpush1.bf16.msra.mxu0 %v2633
        %2773 = vmatprep.subr.bf16.mxu0 %v2637
        %2774 = vmatpush1.bf16.msra.mxu0 %v2636
        %2775 = vmatprep.subr.bf16.mxu0 %v2640
        %2776 = vmatpush1.bf16.msra.mxu0 %v2639
        %2777 = vmatprep.subr.bf16.mxu0 %v2643
        %2778 = vmatpush1.bf16.msra.mxu0 %v2642
        %2779 = vmatprep.subr.bf16.mxu0 %v2646
        %2780 = vmatpush1.bf16.msra.mxu0 %v2645
        %2781 = vmatprep.subr.bf16.mxu0 %v2649
        %2782 = vmatpush1.bf16.msra.mxu0 %v2648
        %2783 = vmatprep.subr.bf16.mxu0 %v2652
        %2784 = vmatpush1.bf16.msra.mxu0 %v2651
        %2785 = vmatprep.subr.bf16.mxu0 %v2655
        %2786 = vmatpush1.bf16.msra.mxu0 %v2654
        %2787 = vmatprep.subr.bf16.mxu0 %v2658
        %2788 = vmatpush1.bf16.msra.mxu0 %v2657
        %2789 = vmatprep.subr.bf16.mxu0 %v2661
        %2790 = vmatpush1.bf16.msra.mxu0 %v2660
        %2791 = vmatprep.mubr.bf16.mxu0 %v1586
        %2792 = vmatmul.mubr.bf16.gmra.mrb[0].mxu0 %v1585
        %v2793 = vpop.f32.mrb[0].mxu0
        %v2794 = vadd.f32 %v2363, %v2793
        %v2795 = vpop.f32.mrb[0].mxu0
        %v2796 = vadd.f32 %v2367, %v2795
        %v2797 = vpop.f32.mrb[0].mxu0
        %v2798 = vpop.f32.mrb[0].mxu0
        %2799 = vdwg.mxu0
        %2800 = vmatprep.subr.bf16.mxu0 %v2664
        %2801 = vmatpush1.bf16.msra.mxu0 %v2663
        %2802 = vmatprep.subr.bf16.mxu0 %v2667
        %2803 = vmatpush1.bf16.msra.mxu0 %v2666
        %2804 = vmatprep.subr.bf16.mxu0 %v2670
        %2805 = vmatpush1.bf16.msra.mxu0 %v2669
        %2806 = vmatprep.subr.bf16.mxu0 %v2673
        %2807 = vmatpush1.bf16.msra.mxu0 %v2672
        %2808 = vmatprep.subr.bf16.mxu0 %v2676
        %2809 = vmatpush1.bf16.msra.mxu0 %v2675
        %2810 = vmatprep.subr.bf16.mxu0 %v2679
        %2811 = vmatpush1.bf16.msra.mxu0 %v2678
        %2812 = vmatprep.subr.bf16.mxu0 %v2682
        %2813 = vmatpush1.bf16.msra.mxu0 %v2681
        %2814 = vmatprep.subr.bf16.mxu0 %v2685
        %2815 = vmatpush1.bf16.msra.mxu0 %v2684
        %2816 = vmatprep.subr.bf16.mxu0 0
        %2817 = vmatpush1.bf16.msra.mxu0 0
        %2818 = vmatprep.subr.bf16.mxu0 0
        %2819 = vmatpush1.bf16.msra.mxu0 0
        %2820 = vmatprep.subr.bf16.mxu0 0
        %2821 = vmatpush1.bf16.msra.mxu0 0
        %2822 = vmatprep.subr.bf16.mxu0 0
        %2823 = vmatpush1.bf16.msra.mxu0 0
        %2824 = vmatprep.subr.bf16.mxu0 0
        %2825 = vmatpush1.bf16.msra.mxu0 0
        %2826 = vmatprep.subr.bf16.mxu0 0
        %2827 = vmatpush1.bf16.msra.mxu0 0
        %2828 = vmatprep.subr.bf16.mxu0 0
        %2829 = vmatpush1.bf16.msra.mxu0 0
        %2830 = vmatprep.subr.bf16.mxu0 0
        %2831 = vmatpush1.bf16.msra.mxu0 0
        %2832 = vmatprep.mubr.bf16.mxu0 0
        %2833 = vmatmul.mubr.bf16.gmra.mrb[0].mxu0 %v1587
        %v2834 = vpop.f32.mrb[0].mxu0
        %v2835 = vadd.f32 %v2794, %v2834
        %v2836 = vpop.f32.mrb[0].mxu0
        %v2837 = vadd.f32 %v2796, %v2836
        %v2838 = vpop.f32.mrb[0].mxu0
        %v2839 = vpop.f32.mrb[0].mxu0
        %2840 = vdwg.mxu0
        %2841 = vmatprep.subr.bf16.mxu0 0
        %2842 = vmatpush1.bf16.msra.mxu0 %v2617
        %2843 = vmatprep.subr.bf16.mxu0 0
        %2844 = vmatpush1.bf16.msra.mxu0 %v2620
        %2845 = vmatprep.subr.bf16.mxu0 0
        %2846 = vmatpush1.bf16.msra.mxu0 %v2623
        %2847 = vmatprep.subr.bf16.mxu0 0
        %2848 = vmatpush1.bf16.msra.mxu0 %v2626
        %2849 = vmatprep.subr.bf16.mxu0 0
        %2850 = vmatpush1.bf16.msra.mxu0 %v2629
        %2851 = vmatprep.subr.bf16.mxu0 0
        %2852 = vmatpush1.bf16.msra.mxu0 %v2632
        %2853 = vmatprep.subr.bf16.mxu0 0
        %2854 = vmatpush1.bf16.msra.mxu0 %v2635
        %2855 = vmatprep.subr.bf16.mxu0 0
        %2856 = vmatpush1.bf16.msra.mxu0 %v2638
        %2857 = vmatprep.subr.bf16.mxu0 0
        %2858 = vmatpush1.bf16.msra.mxu0 %v2641
        %2859 = vmatprep.subr.bf16.mxu0 0
        %2860 = vmatpush1.bf16.msra.mxu0 %v2644
        %2861 = vmatprep.subr.bf16.mxu0 0
        %2862 = vmatpush1.bf16.msra.mxu0 %v2647
        %2863 = vmatprep.subr.bf16.mxu0 0
        %2864 = vmatpush1.bf16.msra.mxu0 %v2650
        %2865 = vmatprep.subr.bf16.mxu0 0
        %2866 = vmatpush1.bf16.msra.mxu0 %v2653
        %2867 = vmatprep.subr.bf16.mxu0 0
        %2868 = vmatpush1.bf16.msra.mxu0 %v2656
        %2869 = vmatprep.subr.bf16.mxu0 0
        %2870 = vmatpush1.bf16.msra.mxu0 %v2659
        %2871 = vmatprep.subr.bf16.mxu0 0
        %2872 = vmatpush1.bf16.msra.mxu0 %v2662
        %2873 = vmatprep.mubr.bf16.mxu0 %v1586
        %2874 = vmatmul.mubr.bf16.gmra.mrb[0].mxu0 %v1585
        %v2875 = vpop.f32.mrb[0].mxu0
        %v2876 = vadd.f32 %v2371, %v2875
        %v2877 = vpop.f32.mrb[0].mxu0
        %v2878 = vpop.f32.mrb[0].mxu0
        %v2879 = vpop.f32.mrb[0].mxu0
        %2880 = vdwg.mxu0
        %2881 = vmatprep.subr.bf16.mxu0 0
        %2882 = vmatpush1.bf16.msra.mxu0 %v2665
        %2883 = vmatprep.subr.bf16.mxu0 0
        %2884 = vmatpush1.bf16.msra.mxu0 %v2668
        %2885 = vmatprep.subr.bf16.mxu0 0
        %2886 = vmatpush1.bf16.msra.mxu0 %v2671
        %2887 = vmatprep.subr.bf16.mxu0 0
        %2888 = vmatpush1.bf16.msra.mxu0 %v2674
        %2889 = vmatprep.subr.bf16.mxu0 0
        %2890 = vmatpush1.bf16.msra.mxu0 %v2677
        %2891 = vmatprep.subr.bf16.mxu0 0
        %2892 = vmatpush1.bf16.msra.mxu0 %v2680
        %2893 = vmatprep.subr.bf16.mxu0 0
        %2894 = vmatpush1.bf16.msra.mxu0 %v2683
        %2895 = vmatprep.subr.bf16.mxu0 0
        %2896 = vmatpush1.bf16.msra.mxu0 %v2686
        %2897 = vmatprep.subr.bf16.mxu0 0
        %2898 = vmatpush1.bf16.msra.mxu0 0
        %2899 = vmatprep.subr.bf16.mxu0 0
        %2900 = vmatpush1.bf16.msra.mxu0 0
        %2901 = vmatprep.subr.bf16.mxu0 0
        %2902 = vmatpush1.bf16.msra.mxu0 0
        %2903 = vmatprep.subr.bf16.mxu0 0
        %2904 = vmatpush1.bf16.msra.mxu0 0
        %2905 = vmatprep.subr.bf16.mxu0 0
        %2906 = vmatpush1.bf16.msra.mxu0 0
        %2907 = vmatprep.subr.bf16.mxu0 0
        %2908 = vmatpush1.bf16.msra.mxu0 0
        %2909 = vmatprep.subr.bf16.mxu0 0
        %2910 = vmatpush1.bf16.msra.mxu0 0
        %2911 = vmatprep.subr.bf16.mxu0 0
        %2912 = vmatpush1.bf16.msra.mxu0 0
        %2913 = vmatprep.mubr.bf16.mxu0 0
        %2914 = vmatmul.mubr.bf16.gmra.mrb[0].mxu0 %v1587
        %v2915 = vpop.f32.mrb[0].mxu0
        %v2916 = vadd.f32 %v2876, %v2915
        %v2917 = vpop.f32.mrb[0].mxu0
        %v2918 = vpop.f32.mrb[0].mxu0
        %v2919 = vpop.f32.mrb[0].mxu0
        %2920 = vdwg.mxu0
        %v2921 = vpack.c.bf16 %v2835, %v2835
        %v2922 = vpack.c.bf16 %v2837, %v2837
        %v2923 = vpack.c.bf16 %v2916, %v2916
        %v2927 = vunpack.c.l.b16 %v2921
        %v2928 = vunpack.c.l.b16 %v2922
        %v2929 = vunpack.c.l.b16 %v2923
        %v2930 = vpack.c.b16 %v2928, %v2927
        %v2931 = vpack.c.b16 %v2929, %v2929
        %2934 = vst [vmem:[#allocation5] sm:$0xff] %v2930
        %2935 = vst [vmem:[#allocation5 + $0x8] sm:$0xf] %v2931
        %v2936 = vld [vmem:[#allocation4] sm:$0xf]
        %vm2937 = vcmask 93184
        %2938 = vst.msk [vmem:[#allocation6] sm:$0xf] %vm2937, %v2936
        %v2939 = vld [vmem:[#allocation5] sm:$0xf]
        %2940 = vst.msk [vmem:[#allocation7] sm:$0xf] %vm2937, %v2939
        %v2941 = vld [vmem:[#allocation4] sm:$0xf]
        %2943 = vrot.lane.b32.xlu0 %v2941, 116
        %v2944 = vpop.permute.xlu0 %2943
        %s2946 = scalar_lea.vmem [#allocation6], 4
        %2947 = vst.msk [vmem:[%s2946] sm:$0xf] %vm2937, %v2944
        %v2948 = vld [vmem:[#allocation5] sm:$0xf]
        %2950 = vrot.lane.b32.xlu0 %v2948, 116
        %v2951 = vpop.permute.xlu0 %2950
        %s2953 = scalar_lea.vmem [#allocation7], 4
        %2954 = vst.msk [vmem:[%s2953] sm:$0xf] %vm2937, %v2951
        %v2955 = vld [vmem:[#allocation4] sm:$0xf]
        %2957 = vrot.lane.b32.xlu0 %v2955, 104
        %v2958 = vpop.permute.xlu0 %2957
        %s2960 = scalar_lea.vmem [#allocation6], 8
        %2961 = vst.msk [vmem:[%s2960] sm:$0xf] %vm2937, %v2958
        %v2962 = vld [vmem:[#allocation5] sm:$0xf]
        %2964 = vrot.lane.b32.xlu0 %v2962, 104
        %v2965 = vpop.permute.xlu0 %2964
        %s2967 = scalar_lea.vmem [#allocation7], 8
        %2968 = vst.msk [vmem:[%s2967] sm:$0xf] %vm2937, %v2965
        %v2969 = vld [vmem:[#allocation4] sm:$0xf]
        %2971 = vrot.lane.b32.xlu0 %v2969, 92
        %v2972 = vpop.permute.xlu0 %2971
        %s2974 = scalar_lea.vmem [#allocation6], 12
        %2975 = vst.msk [vmem:[%s2974] sm:$0xf] %vm2937, %v2972
        %v2976 = vld [vmem:[#allocation5] sm:$0xf]
        %2978 = vrot.lane.b32.xlu0 %v2976, 92
        %v2979 = vpop.permute.xlu0 %2978
        %s2981 = scalar_lea.vmem [#allocation7], 12
        %2982 = vst.msk [vmem:[%s2981] sm:$0xf] %vm2937, %v2979
        %v2983 = vld [vmem:[#allocation4] sm:$0xf]
        %2985 = vrot.lane.b32.xlu0 %v2983, 80
        %v2986 = vpop.permute.xlu0 %2985
        %s2988 = scalar_lea.vmem [#allocation6], 16
        %2989 = vst.msk [vmem:[%s2988] sm:$0xf] %vm2937, %v2986
        %v2990 = vld [vmem:[#allocation5] sm:$0xf]
        %2992 = vrot.lane.b32.xlu0 %v2990, 80
        %v2993 = vpop.permute.xlu0 %2992
        %s2995 = scalar_lea.vmem [#allocation7], 16
        %2996 = vst.msk [vmem:[%s2995] sm:$0xf] %vm2937, %v2993
        %v2997 = vld [vmem:[#allocation4] sm:$0xf]
        %2999 = vrot.lane.b32.xlu0 %v2997, 68
        %v3000 = vpop.permute.xlu0 %2999
        %s3002 = scalar_lea.vmem [#allocation6], 20
        %3003 = vst.msk [vmem:[%s3002] sm:$0xf] %vm2937, %v3000
        %v3004 = vld [vmem:[#allocation5] sm:$0xf]
        %3006 = vrot.lane.b32.xlu0 %v3004, 68
        %v3007 = vpop.permute.xlu0 %3006
        %s3009 = scalar_lea.vmem [#allocation7], 20
        %3010 = vst.msk [vmem:[%s3009] sm:$0xf] %vm2937, %v3007
        %v3011 = vld [vmem:[#allocation4] sm:$0xf]
        %3013 = vrot.lane.b32.xlu0 %v3011, 56
        %v3014 = vpop.permute.xlu0 %3013
        %s3016 = scalar_lea.vmem [#allocation6], 24
        %3017 = vst.msk [vmem:[%s3016] sm:$0xf] %vm2937, %v3014
        %v3018 = vld [vmem:[#allocation5] sm:$0xf]
        %3020 = vrot.lane.b32.xlu0 %v3018, 56
        %v3021 = vpop.permute.xlu0 %3020
        %s3023 = scalar_lea.vmem [#allocation7], 24
        %3024 = vst.msk [vmem:[%s3023] sm:$0xf] %vm2937, %v3021
        %v3025 = vld [vmem:[#allocation4] sm:$0xf]
        %3027 = vrot.lane.b32.xlu0 %v3025, 44
        %v3028 = vpop.permute.xlu0 %3027
        %s3030 = scalar_lea.vmem [#allocation6], 28
        %3031 = vst.msk [vmem:[%s3030] sm:$0xf] %vm2937, %v3028
        %v3032 = vld [vmem:[#allocation5] sm:$0xf]
        %3034 = vrot.lane.b32.xlu0 %v3032, 44
        %v3035 = vpop.permute.xlu0 %3034
        %s3037 = scalar_lea.vmem [#allocation7], 28
        %3038 = vst.msk [vmem:[%s3037] sm:$0xf] %vm2937, %v3035
        %v3039 = vld [vmem:[#allocation4] sm:$0xf]
        %3041 = vrot.lane.b32.xlu0 %v3039, 32
        %v3042 = vpop.permute.xlu0 %3041
        %s3044 = scalar_lea.vmem [#allocation6], 32
        %3045 = vst.msk [vmem:[%s3044] sm:$0xf] %vm2937, %v3042
        %v3046 = vld [vmem:[#allocation5] sm:$0xf]
        %3048 = vrot.lane.b32.xlu0 %v3046, 32
        %v3049 = vpop.permute.xlu0 %3048
        %s3051 = scalar_lea.vmem [#allocation7], 32
        %3052 = vst.msk [vmem:[%s3051] sm:$0xf] %vm2937, %v3049
        %v3053 = vld [vmem:[#allocation4] sm:$0xf]
        %3055 = vrot.lane.b32.xlu0 %v3053, 20
        %v3056 = vpop.permute.xlu0 %3055
        %s3058 = scalar_lea.vmem [#allocation6], 36
        %3059 = vst.msk [vmem:[%s3058] sm:$0xf] %vm2937, %v3056
        %v3060 = vld [vmem:[#allocation5] sm:$0xf]
        %3062 = vrot.lane.b32.xlu0 %v3060, 20
        %v3063 = vpop.permute.xlu0 %3062
        %s3065 = scalar_lea.vmem [#allocation7], 36
        %3066 = vst.msk [vmem:[%s3065] sm:$0xf] %vm2937, %v3063
        %v3067 = vld [vmem:[#allocation4] sm:$0xff]
        %3069 = vrot.lane.b32.xlu0 %v3067, 8
        %v3070 = vpop.permute.xlu0 %3069
        %v3071 = vrot.slane %v3070, 4
        %vm3072 = vcmask 64512
        %v3073 = vsel %vm3072, %v3070, %v3071
        %s3075 = scalar_lea.vmem [#allocation6], 40
        %3076 = vst.msk [vmem:[%s3075] sm:$0xf] %vm2937, %v3073
        %v3077 = vld [vmem:[#allocation5] sm:$0xff]
        %3079 = vrot.lane.b32.xlu0 %v3077, 8
        %v3080 = vpop.permute.xlu0 %3079
        %v3081 = vrot.slane %v3080, 4
        %v3082 = vsel %vm3072, %v3080, %v3081
        %s3084 = scalar_lea.vmem [#allocation7], 40
        %3085 = vst.msk [vmem:[%s3084] sm:$0xf] %vm2937, %v3082
        %v3086 = vld [vmem:[#allocation4 + $0x4] sm:$0xf]
        %3088 = vrot.lane.b32.xlu0 %v3086, 124
        %v3089 = vpop.permute.xlu0 %3088
        %s3091 = scalar_lea.vmem [#allocation6], 44
        %3092 = vst.msk [vmem:[%s3091] sm:$0xf] %vm2937, %v3089
        %v3093 = vld [vmem:[#allocation5 + $0x4] sm:$0xf]
        %3095 = vrot.lane.b32.xlu0 %v3093, 124
        %v3096 = vpop.permute.xlu0 %3095
        %s3098 = scalar_lea.vmem [#allocation7], 44
        %3099 = vst.msk [vmem:[%s3098] sm:$0xf] %vm2937, %v3096
        %v3100 = vld [vmem:[#allocation4 + $0x4] sm:$0xf]
        %3102 = vrot.lane.b32.xlu0 %v3100, 112
        %v3103 = vpop.permute.xlu0 %3102
        %s3105 = scalar_lea.vmem [#allocation6], 48
        %3106 = vst.msk [vmem:[%s3105] sm:$0xf] %vm2937, %v3103
        %v3107 = vld [vmem:[#allocation5 + $0x4] sm:$0xf]
        %3109 = vrot.lane.b32.xlu0 %v3107, 112
        %v3110 = vpop.permute.xlu0 %3109
        %s3112 = scalar_lea.vmem [#allocation7], 48
        %3113 = vst.msk [vmem:[%s3112] sm:$0xf] %vm2937, %v3110
        %v3114 = vld [vmem:[#allocation4 + $0x4] sm:$0xf]
        %3116 = vrot.lane.b32.xlu0 %v3114, 100
        %v3117 = vpop.permute.xlu0 %3116
        %s3119 = scalar_lea.vmem [#allocation6], 52
        %3120 = vst.msk [vmem:[%s3119] sm:$0xf] %vm2937, %v3117
        %v3121 = vld [vmem:[#allocation5 + $0x4] sm:$0xf]
        %3123 = vrot.lane.b32.xlu0 %v3121, 100
        %v3124 = vpop.permute.xlu0 %3123
        %s3126 = scalar_lea.vmem [#allocation7], 52
        %3127 = vst.msk [vmem:[%s3126] sm:$0xf] %vm2937, %v3124
        %v3128 = vld [vmem:[#allocation4 + $0x4] sm:$0xf]
        %3130 = vrot.lane.b32.xlu0 %v3128, 88
        %v3131 = vpop.permute.xlu0 %3130
        %s3133 = scalar_lea.vmem [#allocation6], 56
        %3134 = vst.msk [vmem:[%s3133] sm:$0xf] %vm2937, %v3131
        %v3135 = vld [vmem:[#allocation5 + $0x4] sm:$0xf]
        %3137 = vrot.lane.b32.xlu0 %v3135, 88
        %v3138 = vpop.permute.xlu0 %3137
        %s3140 = scalar_lea.vmem [#allocation7], 56
        %3141 = vst.msk [vmem:[%s3140] sm:$0xf] %vm2937, %v3138
        %v3142 = vld [vmem:[#allocation4 + $0x4] sm:$0xf]
        %3144 = vrot.lane.b32.xlu0 %v3142, 76
        %v3145 = vpop.permute.xlu0 %3144
        %s3147 = scalar_lea.vmem [#allocation6], 60
        %3148 = vst.msk [vmem:[%s3147] sm:$0xf] %vm2937, %v3145
        %v3149 = vld [vmem:[#allocation5 + $0x4] sm:$0xf]
        %3151 = vrot.lane.b32.xlu0 %v3149, 76
        %v3152 = vpop.permute.xlu0 %3151
        %s3154 = scalar_lea.vmem [#allocation7], 60
        %3155 = vst.msk [vmem:[%s3154] sm:$0xf] %vm2937, %v3152
        %v3156 = vld [vmem:[#allocation4 + $0x4] sm:$0xf]
        %3158 = vrot.lane.b32.xlu0 %v3156, 64
        %v3159 = vpop.permute.xlu0 %3158
        %s3161 = scalar_lea.vmem [#allocation6], 64
        %3162 = vst.msk [vmem:[%s3161] sm:$0xf] %vm2937, %v3159
        %v3163 = vld [vmem:[#allocation5 + $0x4] sm:$0xf]
        %3165 = vrot.lane.b32.xlu0 %v3163, 64
        %v3166 = vpop.permute.xlu0 %3165
        %s3168 = scalar_lea.vmem [#allocation7], 64
        %3169 = vst.msk [vmem:[%s3168] sm:$0xf] %vm2937, %v3166
        %v3170 = vld [vmem:[#allocation4 + $0x4] sm:$0xf]
        %3172 = vrot.lane.b32.xlu0 %v3170, 52
        %v3173 = vpop.permute.xlu0 %3172
        %s3175 = scalar_lea.vmem [#allocation6], 68
        %3176 = vst.msk [vmem:[%s3175] sm:$0xf] %vm2937, %v3173
        %v3177 = vld [vmem:[#allocation5 + $0x4] sm:$0xf]
        %3179 = vrot.lane.b32.xlu0 %v3177, 52
        %v3180 = vpop.permute.xlu0 %3179
        %s3182 = scalar_lea.vmem [#allocation7], 68
        %3183 = vst.msk [vmem:[%s3182] sm:$0xf] %vm2937, %v3180
        %v3184 = vld [vmem:[#allocation4 + $0x4] sm:$0xf]
        %3186 = vrot.lane.b32.xlu0 %v3184, 40
        %v3187 = vpop.permute.xlu0 %3186
        %s3189 = scalar_lea.vmem [#allocation6], 72
        %3190 = vst.msk [vmem:[%s3189] sm:$0xf] %vm2937, %v3187
        %v3191 = vld [vmem:[#allocation5 + $0x4] sm:$0xf]
        %3193 = vrot.lane.b32.xlu0 %v3191, 40
        %v3194 = vpop.permute.xlu0 %3193
        %s3196 = scalar_lea.vmem [#allocation7], 72
        %3197 = vst.msk [vmem:[%s3196] sm:$0xf] %vm2937, %v3194
        %v3198 = vld [vmem:[#allocation4 + $0x4] sm:$0xf]
        %3200 = vrot.lane.b32.xlu0 %v3198, 28
        %v3201 = vpop.permute.xlu0 %3200
        %s3203 = scalar_lea.vmem [#allocation6], 76
        %3204 = vst.msk [vmem:[%s3203] sm:$0xf] %vm2937, %v3201
        %v3205 = vld [vmem:[#allocation5 + $0x4] sm:$0xf]
        %3207 = vrot.lane.b32.xlu0 %v3205, 28
        %v3208 = vpop.permute.xlu0 %3207
        %s3210 = scalar_lea.vmem [#allocation7], 76
        %3211 = vst.msk [vmem:[%s3210] sm:$0xf] %vm2937, %v3208
        %v3212 = vld [vmem:[#allocation4 + $0x4] sm:$0xf]
        %3214 = vrot.lane.b32.xlu0 %v3212, 16
        %v3215 = vpop.permute.xlu0 %3214
        %s3217 = scalar_lea.vmem [#allocation6], 80
        %3218 = vst.msk [vmem:[%s3217] sm:$0xf] %vm2937, %v3215
        %v3219 = vld [vmem:[#allocation5 + $0x4] sm:$0xf]
        %3221 = vrot.lane.b32.xlu0 %v3219, 16
        %v3222 = vpop.permute.xlu0 %3221
        %s3224 = scalar_lea.vmem [#allocation7], 80
        %3225 = vst.msk [vmem:[%s3224] sm:$0xf] %vm2937, %v3222
        %v3226 = vld [vmem:[#allocation4 + $0x4] sm:$0xff]
        %3228 = vrot.lane.b32.xlu0 %v3226, 4
        %v3229 = vpop.permute.xlu0 %3228
        %v3230 = vrot.slane %v3229, 4
        %vm3231 = vcmask 31744
        %v3232 = vsel %vm3231, %v3229, %v3230
        %s3234 = scalar_lea.vmem [#allocation6], 84
        %3235 = vst.msk [vmem:[%s3234] sm:$0xf] %vm2937, %v3232
        %v3236 = vld [vmem:[#allocation5 + $0x4] sm:$0xff]
        %3238 = vrot.lane.b32.xlu0 %v3236, 4
        %v3239 = vpop.permute.xlu0 %3238
        %v3240 = vrot.slane %v3239, 4
        %v3241 = vsel %vm3231, %v3239, %v3240
        %s3243 = scalar_lea.vmem [#allocation7], 84
        %3244 = vst.msk [vmem:[%s3243] sm:$0xf] %vm2937, %v3241
        %v3245 = vld [vmem:[#allocation4 + $0x8] sm:$0xf]
        %3247 = vrot.lane.b32.xlu0 %v3245, 120
        %v3248 = vpop.permute.xlu0 %3247
        %s3250 = scalar_lea.vmem [#allocation6], 88
        %3251 = vst.msk [vmem:[%s3250] sm:$0xf] %vm2937, %v3248
        %v3252 = vld [vmem:[#allocation5 + $0x8] sm:$0xf]
        %3254 = vrot.lane.b32.xlu0 %v3252, 120
        %v3255 = vpop.permute.xlu0 %3254
        %s3257 = scalar_lea.vmem [#allocation7], 88
        %3258 = vst.msk [vmem:[%s3257] sm:$0xf] %vm2937, %v3255
        %v3259 = vld [vmem:[#allocation4 + $0x8] sm:$0xf]
        %3261 = vrot.lane.b32.xlu0 %v3259, 108
        %v3262 = vpop.permute.xlu0 %3261
        %s3264 = scalar_lea.vmem [#allocation6], 92
        %3265 = vst.msk [vmem:[%s3264] sm:$0xf] %vm2937, %v3262
        %v3266 = vld [vmem:[#allocation5 + $0x8] sm:$0xf]
        %3268 = vrot.lane.b32.xlu0 %v3266, 108
        %v3269 = vpop.permute.xlu0 %3268
        %s3271 = scalar_lea.vmem [#allocation7], 92
        %3272 = vst.msk [vmem:[%s3271] sm:$0xf] %vm2937, %v3269
        %v3273 = vld [vmem:[#allocation4 + $0x8] sm:$0xf]
        %3275 = vrot.lane.b32.xlu0 %v3273, 96
        %v3276 = vpop.permute.xlu0 %3275
        %s3278 = scalar_lea.vmem [#allocation6], 96
        %3279 = vst.msk [vmem:[%s3278] sm:$0xf] %vm2937, %v3276
        %v3280 = vld [vmem:[#allocation5 + $0x8] sm:$0xf]
        %3282 = vrot.lane.b32.xlu0 %v3280, 96
        %v3283 = vpop.permute.xlu0 %3282
        %s3285 = scalar_lea.vmem [#allocation7], 96
        %3286 = vst.msk [vmem:[%s3285] sm:$0xf] %vm2937, %v3283
        %v3287 = vld [vmem:[#allocation4 + $0x8] sm:$0xf]
        %3289 = vrot.lane.b32.xlu0 %v3287, 84
        %v3290 = vpop.permute.xlu0 %3289
        %s3292 = scalar_lea.vmem [#allocation6], 100
        %3293 = vst.msk [vmem:[%s3292] sm:$0xf] %vm2937, %v3290
        %v3294 = vld [vmem:[#allocation5 + $0x8] sm:$0xf]
        %3296 = vrot.lane.b32.xlu0 %v3294, 84
        %v3297 = vpop.permute.xlu0 %3296
        %s3299 = scalar_lea.vmem [#allocation7], 100
        %3300 = vst.msk [vmem:[%s3299] sm:$0xf] %vm2937, %v3297
        %v3301 = vld [vmem:[#allocation4 + $0x8] sm:$0xf]
        %3303 = vrot.lane.b32.xlu0 %v3301, 72
        %v3304 = vpop.permute.xlu0 %3303
        %s3306 = scalar_lea.vmem [#allocation6], 104
        %3307 = vst.msk [vmem:[%s3306] sm:$0xf] %vm2937, %v3304
        %v3308 = vld [vmem:[#allocation5 + $0x8] sm:$0xf]
        %3310 = vrot.lane.b32.xlu0 %v3308, 72
        %v3311 = vpop.permute.xlu0 %3310
        %s3313 = scalar_lea.vmem [#allocation7], 104
        %3314 = vst.msk [vmem:[%s3313] sm:$0xf] %vm2937, %v3311
        %v3315 = vld [vmem:[#allocation4 + $0x8] sm:$0xf]
        %3317 = vrot.lane.b32.xlu0 %v3315, 60
        %v3318 = vpop.permute.xlu0 %3317
        %s3320 = scalar_lea.vmem [#allocation6], 108
        %3321 = vst.msk [vmem:[%s3320] sm:$0xf] %vm2937, %v3318
        %v3322 = vld [vmem:[#allocation5 + $0x8] sm:$0xf]
        %3324 = vrot.lane.b32.xlu0 %v3322, 60
        %v3325 = vpop.permute.xlu0 %3324
        %s3327 = scalar_lea.vmem [#allocation7], 108
        %3328 = vst.msk [vmem:[%s3327] sm:$0xf] %vm2937, %v3325
        %v3329 = vld [vmem:[#allocation4 + $0x8] sm:$0xf]
        %3331 = vrot.lane.b32.xlu0 %v3329, 48
        %v3332 = vpop.permute.xlu0 %3331
        %s3334 = scalar_lea.vmem [#allocation6], 112
        %3335 = vst.msk [vmem:[%s3334] sm:$0xf] %vm2937, %v3332
        %v3336 = vld [vmem:[#allocation5 + $0x8] sm:$0xf]
        %3338 = vrot.lane.b32.xlu0 %v3336, 48
        %v3339 = vpop.permute.xlu0 %3338
        %s3341 = scalar_lea.vmem [#allocation7], 112
        %3342 = vst.msk [vmem:[%s3341] sm:$0xf] %vm2937, %v3339
        %v3343 = vld [vmem:[#allocation4 + $0x8] sm:$0xf]
        %3345 = vrot.lane.b32.xlu0 %v3343, 36
        %v3346 = vpop.permute.xlu0 %3345
        %s3348 = scalar_lea.vmem [#allocation6], 116
        %3349 = vst.msk [vmem:[%s3348] sm:$0xf] %vm2937, %v3346
        %v3350 = vld [vmem:[#allocation5 + $0x8] sm:$0xf]
        %3352 = vrot.lane.b32.xlu0 %v3350, 36
        %v3353 = vpop.permute.xlu0 %3352
        %s3355 = scalar_lea.vmem [#allocation7], 116
        %3356 = vst.msk [vmem:[%s3355] sm:$0xf] %vm2937, %v3353
        %v3357 = vld [vmem:[#allocation4 + $0x8] sm:$0xf]
        %3359 = vrot.lane.b32.xlu0 %v3357, 24
        %v3360 = vpop.permute.xlu0 %3359
        %s3362 = scalar_lea.vmem [#allocation6], 120
        %3363 = vst.msk [vmem:[%s3362] sm:$0xf] %vm2937, %v3360
        %v3364 = vld [vmem:[#allocation5 + $0x8] sm:$0xf]
        %3366 = vrot.lane.b32.xlu0 %v3364, 24
        %v3367 = vpop.permute.xlu0 %3366
        %s3369 = scalar_lea.vmem [#allocation7], 120
        %3370 = vst.msk [vmem:[%s3369] sm:$0xf] %vm2937, %v3367
        %v3371 = vld [vmem:[#allocation4 + $0x8] sm:$0xf]
        %3373 = vrot.lane.b32.xlu0 %v3371, 12
        %v3374 = vpop.permute.xlu0 %3373
        %s3376 = scalar_lea.vmem [#allocation6], 124
        %3377 = vst.msk [vmem:[%s3376] sm:$0xf] %vm2937, %v3374
        %v3378 = vld [vmem:[#allocation5 + $0x8] sm:$0xf]
        %3380 = vrot.lane.b32.xlu0 %v3378, 12
        %v3381 = vpop.permute.xlu0 %3380
        %s3383 = scalar_lea.vmem [#allocation7], 124
        %3384 = vst.msk [vmem:[%s3383] sm:$0xf] %vm2937, %v3381
        %v3385 = vld [vmem:[#allocation3] sm:$0xf]
        %v3386 = vld [vmem:[#allocation3 + $0x4] sm:$0xf]
        %v3387 = vld [vmem:[#allocation3 + $0x8] sm:$0xf]
        %v3388 = vld [vmem:[#allocation3 + $0xc] sm:$0xf]
        %v3389 = vld [vmem:[#allocation3 + $0x10] sm:$0xf]
        %v3390 = vld [vmem:[#allocation3 + $0x14] sm:$0xf]
        %v3391 = vld [vmem:[#allocation3 + $0x18] sm:$0xf]
        %v3392 = vld [vmem:[#allocation3 + $0x1c] sm:$0xf]
        %v3393 = vld [vmem:[#allocation3 + $0x20] sm:$0xf]
        %v3394 = vld [vmem:[#allocation3 + $0x24] sm:$0xf]
        %v3395 = vld [vmem:[#allocation3 + $0x28] sm:$0xf]
        %v3396 = vld [vmem:[#allocation3 + $0x2c] sm:$0xf]
        %v3397 = vld [vmem:[#allocation3 + $0x30] sm:$0xf]
        %v3398 = vld [vmem:[#allocation3 + $0x34] sm:$0xf]
        %v3399 = vld [vmem:[#allocation3 + $0x38] sm:$0xf]
        %v3400 = vld [vmem:[#allocation3 + $0x3c] sm:$0xf]
        %v3401 = vld [vmem:[#allocation3 + $0x40] sm:$0xf]
        %v3402 = vld [vmem:[#allocation3 + $0x44] sm:$0xf]
        %v3403 = vld [vmem:[#allocation3 + $0x48] sm:$0xf]
        %v3404 = vld [vmem:[#allocation3 + $0x4c] sm:$0xf]
        %v3405 = vld [vmem:[#allocation3 + $0x50] sm:$0xf]
        %v3406 = vld [vmem:[#allocation3 + $0x54] sm:$0xf]
        %v3407 = vld [vmem:[#allocation3 + $0x58] sm:$0xf]
        %v3408 = vld [vmem:[#allocation3 + $0x5c] sm:$0xf]
        %v3409 = vld [vmem:[#allocation3 + $0x60] sm:$0xf]
        %v3410 = vld [vmem:[#allocation3 + $0x64] sm:$0xf]
        %v3411 = vld [vmem:[#allocation3 + $0x68] sm:$0xf]
        %v3412 = vld [vmem:[#allocation3 + $0x6c] sm:$0xf]
        %v3413 = vld [vmem:[#allocation3 + $0x70] sm:$0xf]
        %v3414 = vld [vmem:[#allocation3 + $0x74] sm:$0xf]
        %v3415 = vld [vmem:[#allocation3 + $0x78] sm:$0xf]
        %v3416 = vld [vmem:[#allocation3 + $0x7c] sm:$0xf]
        %v3417 = vld [vmem:[#allocation6] sm:$0xf]
        %v3418 = vld [vmem:[#allocation6 + $0x4] sm:$0xf]
        %v3419 = vld [vmem:[#allocation6 + $0x8] sm:$0xf]
        %v3420 = vld [vmem:[#allocation6 + $0xc] sm:$0xf]
        %v3421 = vld [vmem:[#allocation6 + $0x10] sm:$0xf]
        %v3422 = vld [vmem:[#allocation6 + $0x14] sm:$0xf]
        %v3423 = vld [vmem:[#allocation6 + $0x18] sm:$0xf]
        %v3424 = vld [vmem:[#allocation6 + $0x1c] sm:$0xf]
        %v3425 = vld [vmem:[#allocation6 + $0x20] sm:$0xf]
        %v3426 = vld [vmem:[#allocation6 + $0x24] sm:$0xf]
        %v3427 = vld [vmem:[#allocation6 + $0x28] sm:$0xf]
        %v3428 = vld [vmem:[#allocation6 + $0x2c] sm:$0xf]
        %v3429 = vld [vmem:[#allocation6 + $0x30] sm:$0xf]
        %v3430 = vld [vmem:[#allocation6 + $0x34] sm:$0xf]
        %v3431 = vld [vmem:[#allocation6 + $0x38] sm:$0xf]
        %v3432 = vld [vmem:[#allocation6 + $0x3c] sm:$0xf]
        %v3433 = vld [vmem:[#allocation6 + $0x40] sm:$0xf]
        %v3434 = vld [vmem:[#allocation6 + $0x44] sm:$0xf]
        %v3435 = vld [vmem:[#allocation6 + $0x48] sm:$0xf]
        %v3436 = vld [vmem:[#allocation6 + $0x4c] sm:$0xf]
        %v3437 = vld [vmem:[#allocation6 + $0x50] sm:$0xf]
        %v3438 = vld [vmem:[#allocation6 + $0x54] sm:$0xf]
        %v3439 = vld [vmem:[#allocation6 + $0x58] sm:$0xf]
        %v3440 = vld [vmem:[#allocation6 + $0x5c] sm:$0xf]
        %v3441 = vld [vmem:[#allocation6 + $0x60] sm:$0xf]
        %v3442 = vld [vmem:[#allocation6 + $0x64] sm:$0xf]
        %v3443 = vld [vmem:[#allocation6 + $0x68] sm:$0xf]
        %v3444 = vld [vmem:[#allocation6 + $0x6c] sm:$0xf]
        %v3445 = vld [vmem:[#allocation6 + $0x70] sm:$0xf]
        %v3446 = vld [vmem:[#allocation6 + $0x74] sm:$0xf]
        %v3447 = vld [vmem:[#allocation6 + $0x78] sm:$0xf]
        %v3448 = vld [vmem:[#allocation6 + $0x7c] sm:$0xf]
        %vm3449 = vcmask 97280
        %v3451 = vsel %vm3449, %v3385, 0
        %v3454 = vsel %vm3449, %v3417, 0
        %3456 = vmatprep.subr.bf16.mxu0 0
        %3457 = vmatpush1.bf16.xpose.msra.mxu0 %v3454
        %3458 = vmatprep.subr.bf16.mxu0 0
        %3459 = vmatpush1.bf16.xpose.msra.mxu0 0
        %3460 = vmatprep.subr.bf16.mxu0 0
        %3461 = vmatpush1.bf16.xpose.msra.mxu0 0
        %3462 = vmatprep.subr.bf16.mxu0 0
        %3463 = vmatpush1.bf16.xpose.msra.mxu0 0
        %3464 = vmatprep.subr.bf16.mxu0 0
        %3465 = vmatpush1.bf16.xpose.msra.mxu0 0
        %3466 = vmatprep.subr.bf16.mxu0 0
        %3467 = vmatpush1.bf16.xpose.msra.mxu0 0
        %3468 = vmatprep.subr.bf16.mxu0 0
        %3469 = vmatpush1.bf16.xpose.msra.mxu0 0
        %3470 = vmatprep.subr.bf16.mxu0 0
        %3471 = vmatpush1.bf16.xpose.msra.mxu0 0
        %3472 = vmatprep.subr.bf16.mxu0 0
        %3473 = vmatpush1.bf16.xpose.msra.mxu0 0
        %3474 = vmatprep.subr.bf16.mxu0 0
        %3475 = vmatpush1.bf16.xpose.msra.mxu0 0
        %3476 = vmatprep.subr.bf16.mxu0 0
        %3477 = vmatpush1.bf16.xpose.msra.mxu0 0
        %3478 = vmatprep.subr.bf16.mxu0 0
        %3479 = vmatpush1.bf16.xpose.msra.mxu0 0
        %3480 = vmatprep.subr.bf16.mxu0 0
        %3481 = vmatpush1.bf16.xpose.msra.mxu0 0
        %3482 = vmatprep.subr.bf16.mxu0 0
        %3483 = vmatpush1.bf16.xpose.msra.mxu0 0
        %3484 = vmatprep.subr.bf16.mxu0 0
        %3485 = vmatpush1.bf16.xpose.msra.mxu0 0
        %3486 = vmatprep.subr.bf16.mxu0 0
        %3487 = vmatpush1.bf16.xpose.msra.mxu0 0
        %3488 = vmatprep.mubr.bf16.mxu0 0
        %3489 = vmatmul.mubr.bf16.gmra.mrb[0].mxu0 %v3451
        %v3490 = vpop.f32.mrb[0].mxu0
        %v3491 = vadd.f32 0.0, %v3490
        %v3492 = vpop.f32.mrb[0].mxu0
        %v3493 = vpop.f32.mrb[0].mxu0
        %v3494 = vpop.f32.mrb[0].mxu0
        %3495 = vdwg.mxu0
        %v3497 = vsel %vm3449, %v3386, 0
        %v3500 = vsel %vm3449, %v3418, 0
        %3502 = vmatprep.subr.bf16.mxu0 0
        %3503 = vmatpush1.bf16.xpose.msra.mxu0 %v3500
        %3504 = vmatprep.subr.bf16.mxu0 0
        %3505 = vmatpush1.bf16.xpose.msra.mxu0 0
        %3506 = vmatprep.subr.bf16.mxu0 0
        %3507 = vmatpush1.bf16.xpose.msra.mxu0 0
        %3508 = vmatprep.subr.bf16.mxu0 0
        %3509 = vmatpush1.bf16.xpose.msra.mxu0 0
        %3510 = vmatprep.subr.bf16.mxu0 0
        %3511 = vmatpush1.bf16.xpose.msra.mxu0 0
        %3512 = vmatprep.subr.bf16.mxu0 0
        %3513 = vmatpush1.bf16.xpose.msra.mxu0 0
        %3514 = vmatprep.subr.bf16.mxu0 0
        %3515 = vmatpush1.bf16.xpose.msra.mxu0 0
        %3516 = vmatprep.subr.bf16.mxu0 0
        %3517 = vmatpush1.bf16.xpose.msra.mxu0 0
        %3518 = vmatprep.subr.bf16.mxu0 0
        %3519 = vmatpush1.bf16.xpose.msra.mxu0 0
        %3520 = vmatprep.subr.bf16.mxu0 0
        %3521 = vmatpush1.bf16.xpose.msra.mxu0 0
        %3522 = vmatprep.subr.bf16.mxu0 0
        %3523 = vmatpush1.bf16.xpose.msra.mxu0 0
        %3524 = vmatprep.subr.bf16.mxu0 0
        %3525 = vmatpush1.bf16.xpose.msra.mxu0 0
        %3526 = vmatprep.subr.bf16.mxu0 0
        %3527 = vmatpush1.bf16.xpose.msra.mxu0 0
        %3528 = vmatprep.subr.bf16.mxu0 0
        %3529 = vmatpush1.bf16.xpose.msra.mxu0 0
        %3530 = vmatprep.subr.bf16.mxu0 0
        %3531 = vmatpush1.bf16.xpose.msra.mxu0 0
        %3532 = vmatprep.subr.bf16.mxu0 0
        %3533 = vmatpush1.bf16.xpose.msra.mxu0 0
        %3534 = vmatprep.mubr.bf16.mxu0 0
        %3535 = vmatmul.mubr.bf16.gmra.mrb[0].mxu0 %v3497
        %v3536 = vpop.f32.mrb[0].mxu0
        %v3537 = vadd.f32 0.0, %v3536
        %v3538 = vpop.f32.mrb[0].mxu0
        %v3539 = vpop.f32.mrb[0].mxu0
        %v3540 = vpop.f32.mrb[0].mxu0
        %3541 = vdwg.mxu0
        %v3543 = vsel %vm3449, %v3387, 0
        %v3546 = vsel %vm3449, %v3419, 0
        %3548 = vmatprep.subr.bf16.mxu0 0
        %3549 = vmatpush1.bf16.xpose.msra.mxu0 %v3546
        %3550 = vmatprep.subr.bf16.mxu0 0
        %3551 = vmatpush1.bf16.xpose.msra.mxu0 0
        %3552 = vmatprep.subr.bf16.mxu0 0
        %3553 = vmatpush1.bf16.xpose.msra.mxu0 0
        %3554 = vmatprep.subr.bf16.mxu0 0
        %3555 = vmatpush1.bf16.xpose.msra.mxu0 0
        %3556 = vmatprep.subr.bf16.mxu0 0
        %3557 = vmatpush1.bf16.xpose.msra.mxu0 0
        %3558 = vmatprep.subr.bf16.mxu0 0
        %3559 = vmatpush1.bf16.xpose.msra.mxu0 0
        %3560 = vmatprep.subr.bf16.mxu0 0
        %3561 = vmatpush1.bf16.xpose.msra.mxu0 0
        %3562 = vmatprep.subr.bf16.mxu0 0
        %3563 = vmatpush1.bf16.xpose.msra.mxu0 0
        %3564 = vmatprep.subr.bf16.mxu0 0
        %3565 = vmatpush1.bf16.xpose.msra.mxu0 0
        %3566 = vmatprep.subr.bf16.mxu0 0
        %3567 = vmatpush1.bf16.xpose.msra.mxu0 0
        %3568 = vmatprep.subr.bf16.mxu0 0
        %3569 = vmatpush1.bf16.xpose.msra.mxu0 0
        %3570 = vmatprep.subr.bf16.mxu0 0
        %3571 = vmatpush1.bf16.xpose.msra.mxu0 0
        %3572 = vmatprep.subr.bf16.mxu0 0
        %3573 = vmatpush1.bf16.xpose.msra.mxu0 0
        %3574 = vmatprep.subr.bf16.mxu0 0
        %3575 = vmatpush1.bf16.xpose.msra.mxu0 0
        %3576 = vmatprep.subr.bf16.mxu0 0
        %3577 = vmatpush1.bf16.xpose.msra.mxu0 0
        %3578 = vmatprep.subr.bf16.mxu0 0
        %3579 = vmatpush1.bf16.xpose.msra.mxu0 0
        %3580 = vmatprep.mubr.bf16.mxu0 0
        %3581 = vmatmul.mubr.bf16.gmra.mrb[0].mxu0 %v3543
        %v3582 = vpop.f32.mrb[0].mxu0
        %v3583 = vadd.f32 0.0, %v3582
        %v3584 = vpop.f32.mrb[0].mxu0
        %v3585 = vpop.f32.mrb[0].mxu0
        %v3586 = vpop.f32.mrb[0].mxu0
        %3587 = vdwg.mxu0
        %v3589 = vsel %vm3449, %v3388, 0
        %v3592 = vsel %vm3449, %v3420, 0
        %3594 = vmatprep.subr.bf16.mxu0 0
        %3595 = vmatpush1.bf16.xpose.msra.mxu0 %v3592
        %3596 = vmatprep.subr.bf16.mxu0 0
        %3597 = vmatpush1.bf16.xpose.msra.mxu0 0
        %3598 = vmatprep.subr.bf16.mxu0 0
        %3599 = vmatpush1.bf16.xpose.msra.mxu0 0
        %3600 = vmatprep.subr.bf16.mxu0 0
        %3601 = vmatpush1.bf16.xpose.msra.mxu0 0
        %3602 = vmatprep.subr.bf16.mxu0 0
        %3603 = vmatpush1.bf16.xpose.msra.mxu0 0
        %3604 = vmatprep.subr.bf16.mxu0 0
        %3605 = vmatpush1.bf16.xpose.msra.mxu0 0
        %3606 = vmatprep.subr.bf16.mxu0 0
        %3607 = vmatpush1.bf16.xpose.msra.mxu0 0
        %3608 = vmatprep.subr.bf16.mxu0 0
        %3609 = vmatpush1.bf16.xpose.msra.mxu0 0
        %3610 = vmatprep.subr.bf16.mxu0 0
        %3611 = vmatpush1.bf16.xpose.msra.mxu0 0
        %3612 = vmatprep.subr.bf16.mxu0 0
        %3613 = vmatpush1.bf16.xpose.msra.mxu0 0
        %3614 = vmatprep.subr.bf16.mxu0 0
        %3615 = vmatpush1.bf16.xpose.msra.mxu0 0
        %3616 = vmatprep.subr.bf16.mxu0 0
        %3617 = vmatpush1.bf16.xpose.msra.mxu0 0
        %3618 = vmatprep.subr.bf16.mxu0 0
        %3619 = vmatpush1.bf16.xpose.msra.mxu0 0
        %3620 = vmatprep.subr.bf16.mxu0 0
        %3621 = vmatpush1.bf16.xpose.msra.mxu0 0
        %3622 = vmatprep.subr.bf16.mxu0 0
        %3623 = vmatpush1.bf16.xpose.msra.mxu0 0
        %3624 = vmatprep.subr.bf16.mxu0 0
        %3625 = vmatpush1.bf16.xpose.msra.mxu0 0
        %3626 = vmatprep.mubr.bf16.mxu0 0
        %3627 = vmatmul.mubr.bf16.gmra.mrb[0].mxu0 %v3589
        %v3628 = vpop.f32.mrb[0].mxu0
        %v3629 = vadd.f32 0.0, %v3628
        %v3630 = vpop.f32.mrb[0].mxu0
        %v3631 = vpop.f32.mrb[0].mxu0
        %v3632 = vpop.f32.mrb[0].mxu0
        %3633 = vdwg.mxu0
        %v3635 = vsel %vm3449, %v3389, 0
        %v3638 = vsel %vm3449, %v3421, 0
        %3640 = vmatprep.subr.bf16.mxu0 0
        %3641 = vmatpush1.bf16.xpose.msra.mxu0 %v3638
        %3642 = vmatprep.subr.bf16.mxu0 0
        %3643 = vmatpush1.bf16.xpose.msra.mxu0 0
        %3644 = vmatprep.subr.bf16.mxu0 0
        %3645 = vmatpush1.bf16.xpose.msra.mxu0 0
        %3646 = vmatprep.subr.bf16.mxu0 0
        %3647 = vmatpush1.bf16.xpose.msra.mxu0 0
        %3648 = vmatprep.subr.bf16.mxu0 0
        %3649 = vmatpush1.bf16.xpose.msra.mxu0 0
        %3650 = vmatprep.subr.bf16.mxu0 0
        %3651 = vmatpush1.bf16.xpose.msra.mxu0 0
        %3652 = vmatprep.subr.bf16.mxu0 0
        %3653 = vmatpush1.bf16.xpose.msra.mxu0 0
        %3654 = vmatprep.subr.bf16.mxu0 0
        %3655 = vmatpush1.bf16.xpose.msra.mxu0 0
        %3656 = vmatprep.subr.bf16.mxu0 0
        %3657 = vmatpush1.bf16.xpose.msra.mxu0 0
        %3658 = vmatprep.subr.bf16.mxu0 0
        %3659 = vmatpush1.bf16.xpose.msra.mxu0 0
        %3660 = vmatprep.subr.bf16.mxu0 0
        %3661 = vmatpush1.bf16.xpose.msra.mxu0 0
        %3662 = vmatprep.subr.bf16.mxu0 0
        %3663 = vmatpush1.bf16.xpose.msra.mxu0 0
        %3664 = vmatprep.subr.bf16.mxu0 0
        %3665 = vmatpush1.bf16.xpose.msra.mxu0 0
        %3666 = vmatprep.subr.bf16.mxu0 0
        %3667 = vmatpush1.bf16.xpose.msra.mxu0 0
        %3668 = vmatprep.subr.bf16.mxu0 0
        %3669 = vmatpush1.bf16.xpose.msra.mxu0 0
        %3670 = vmatprep.subr.bf16.mxu0 0
        %3671 = vmatpush1.bf16.xpose.msra.mxu0 0
        %3672 = vmatprep.mubr.bf16.mxu0 0
        %3673 = vmatmul.mubr.bf16.gmra.mrb[0].mxu0 %v3635
        %v3674 = vpop.f32.mrb[0].mxu0
        %v3675 = vadd.f32 0.0, %v3674
        %v3676 = vpop.f32.mrb[0].mxu0
        %v3677 = vpop.f32.mrb[0].mxu0
        %v3678 = vpop.f32.mrb[0].mxu0
        %3679 = vdwg.mxu0
        %v3681 = vsel %vm3449, %v3390, 0
        %v3684 = vsel %vm3449, %v3422, 0
        %3686 = vmatprep.subr.bf16.mxu0 0
        %3687 = vmatpush1.bf16.xpose.msra.mxu0 %v3684
        %3688 = vmatprep.subr.bf16.mxu0 0
        %3689 = vmatpush1.bf16.xpose.msra.mxu0 0
        %3690 = vmatprep.subr.bf16.mxu0 0
        %3691 = vmatpush1.bf16.xpose.msra.mxu0 0
        %3692 = vmatprep.subr.bf16.mxu0 0
        %3693 = vmatpush1.bf16.xpose.msra.mxu0 0
        %3694 = vmatprep.subr.bf16.mxu0 0
        %3695 = vmatpush1.bf16.xpose.msra.mxu0 0
        %3696 = vmatprep.subr.bf16.mxu0 0
        %3697 = vmatpush1.bf16.xpose.msra.mxu0 0
        %3698 = vmatprep.subr.bf16.mxu0 0
        %3699 = vmatpush1.bf16.xpose.msra.mxu0 0
        %3700 = vmatprep.subr.bf16.mxu0 0
        %3701 = vmatpush1.bf16.xpose.msra.mxu0 0
        %3702 = vmatprep.subr.bf16.mxu0 0
        %3703 = vmatpush1.bf16.xpose.msra.mxu0 0
        %3704 = vmatprep.subr.bf16.mxu0 0
        %3705 = vmatpush1.bf16.xpose.msra.mxu0 0
        %3706 = vmatprep.subr.bf16.mxu0 0
        %3707 = vmatpush1.bf16.xpose.msra.mxu0 0
        %3708 = vmatprep.subr.bf16.mxu0 0
        %3709 = vmatpush1.bf16.xpose.msra.mxu0 0
        %3710 = vmatprep.subr.bf16.mxu0 0
        %3711 = vmatpush1.bf16.xpose.msra.mxu0 0
        %3712 = vmatprep.subr.bf16.mxu0 0
        %3713 = vmatpush1.bf16.xpose.msra.mxu0 0
        %3714 = vmatprep.subr.bf16.mxu0 0
        %3715 = vmatpush1.bf16.xpose.msra.mxu0 0
        %3716 = vmatprep.subr.bf16.mxu0 0
        %3717 = vmatpush1.bf16.xpose.msra.mxu0 0
        %3718 = vmatprep.mubr.bf16.mxu0 0
        %3719 = vmatmul.mubr.bf16.gmra.mrb[0].mxu0 %v3681
        %v3720 = vpop.f32.mrb[0].mxu0
        %v3721 = vadd.f32 0.0, %v3720
        %v3722 = vpop.f32.mrb[0].mxu0
        %v3723 = vpop.f32.mrb[0].mxu0
        %v3724 = vpop.f32.mrb[0].mxu0
        %3725 = vdwg.mxu0
        %v3727 = vsel %vm3449, %v3391, 0
        %v3730 = vsel %vm3449, %v3423, 0
        %3732 = vmatprep.subr.bf16.mxu0 0
        %3733 = vmatpush1.bf16.xpose.msra.mxu0 %v3730
        %3734 = vmatprep.subr.bf16.mxu0 0
        %3735 = vmatpush1.bf16.xpose.msra.mxu0 0
        %3736 = vmatprep.subr.bf16.mxu0 0
        %3737 = vmatpush1.bf16.xpose.msra.mxu0 0
        %3738 = vmatprep.subr.bf16.mxu0 0
        %3739 = vmatpush1.bf16.xpose.msra.mxu0 0
        %3740 = vmatprep.subr.bf16.mxu0 0
        %3741 = vmatpush1.bf16.xpose.msra.mxu0 0
        %3742 = vmatprep.subr.bf16.mxu0 0
        %3743 = vmatpush1.bf16.xpose.msra.mxu0 0
        %3744 = vmatprep.subr.bf16.mxu0 0
        %3745 = vmatpush1.bf16.xpose.msra.mxu0 0
        %3746 = vmatprep.subr.bf16.mxu0 0
        %3747 = vmatpush1.bf16.xpose.msra.mxu0 0
        %3748 = vmatprep.subr.bf16.mxu0 0
        %3749 = vmatpush1.bf16.xpose.msra.mxu0 0
        %3750 = vmatprep.subr.bf16.mxu0 0
        %3751 = vmatpush1.bf16.xpose.msra.mxu0 0
        %3752 = vmatprep.subr.bf16.mxu0 0
        %3753 = vmatpush1.bf16.xpose.msra.mxu0 0
        %3754 = vmatprep.subr.bf16.mxu0 0
        %3755 = vmatpush1.bf16.xpose.msra.mxu0 0
        %3756 = vmatprep.subr.bf16.mxu0 0
        %3757 = vmatpush1.bf16.xpose.msra.mxu0 0
        %3758 = vmatprep.subr.bf16.mxu0 0
        %3759 = vmatpush1.bf16.xpose.msra.mxu0 0
        %3760 = vmatprep.subr.bf16.mxu0 0
        %3761 = vmatpush1.bf16.xpose.msra.mxu0 0
        %3762 = vmatprep.subr.bf16.mxu0 0
        %3763 = vmatpush1.bf16.xpose.msra.mxu0 0
        %3764 = vmatprep.mubr.bf16.mxu0 0
        %3765 = vmatmul.mubr.bf16.gmra.mrb[0].mxu0 %v3727
        %v3766 = vpop.f32.mrb[0].mxu0
        %v3767 = vadd.f32 0.0, %v3766
        %v3768 = vpop.f32.mrb[0].mxu0
        %v3769 = vpop.f32.mrb[0].mxu0
        %v3770 = vpop.f32.mrb[0].mxu0
        %3771 = vdwg.mxu0
        %v3773 = vsel %vm3449, %v3392, 0
        %v3776 = vsel %vm3449, %v3424, 0
        %3778 = vmatprep.subr.bf16.mxu0 0
        %3779 = vmatpush1.bf16.xpose.msra.mxu0 %v3776
        %3780 = vmatprep.subr.bf16.mxu0 0
        %3781 = vmatpush1.bf16.xpose.msra.mxu0 0
        %3782 = vmatprep.subr.bf16.mxu0 0
        %3783 = vmatpush1.bf16.xpose.msra.mxu0 0
        %3784 = vmatprep.subr.bf16.mxu0 0
        %3785 = vmatpush1.bf16.xpose.msra.mxu0 0
        %3786 = vmatprep.subr.bf16.mxu0 0
        %3787 = vmatpush1.bf16.xpose.msra.mxu0 0
        %3788 = vmatprep.subr.bf16.mxu0 0
        %3789 = vmatpush1.bf16.xpose.msra.mxu0 0
        %3790 = vmatprep.subr.bf16.mxu0 0
        %3791 = vmatpush1.bf16.xpose.msra.mxu0 0
        %3792 = vmatprep.subr.bf16.mxu0 0
        %3793 = vmatpush1.bf16.xpose.msra.mxu0 0
        %3794 = vmatprep.subr.bf16.mxu0 0
        %3795 = vmatpush1.bf16.xpose.msra.mxu0 0
        %3796 = vmatprep.subr.bf16.mxu0 0
        %3797 = vmatpush1.bf16.xpose.msra.mxu0 0
        %3798 = vmatprep.subr.bf16.mxu0 0
        %3799 = vmatpush1.bf16.xpose.msra.mxu0 0
        %3800 = vmatprep.subr.bf16.mxu0 0
        %3801 = vmatpush1.bf16.xpose.msra.mxu0 0
        %3802 = vmatprep.subr.bf16.mxu0 0
        %3803 = vmatpush1.bf16.xpose.msra.mxu0 0
        %3804 = vmatprep.subr.bf16.mxu0 0
        %3805 = vmatpush1.bf16.xpose.msra.mxu0 0
        %3806 = vmatprep.subr.bf16.mxu0 0
        %3807 = vmatpush1.bf16.xpose.msra.mxu0 0
        %3808 = vmatprep.subr.bf16.mxu0 0
        %3809 = vmatpush1.bf16.xpose.msra.mxu0 0
        %3810 = vmatprep.mubr.bf16.mxu0 0
        %3811 = vmatmul.mubr.bf16.gmra.mrb[0].mxu0 %v3773
        %v3812 = vpop.f32.mrb[0].mxu0
        %v3813 = vadd.f32 0.0, %v3812
        %v3814 = vpop.f32.mrb[0].mxu0
        %v3815 = vpop.f32.mrb[0].mxu0
        %v3816 = vpop.f32.mrb[0].mxu0
        %3817 = vdwg.mxu0
        %v3819 = vsel %vm3449, %v3393, 0
        %v3822 = vsel %vm3449, %v3425, 0
        %3824 = vmatprep.subr.bf16.mxu0 0
        %3825 = vmatpush1.bf16.xpose.msra.mxu0 %v3822
        %3826 = vmatprep.subr.bf16.mxu0 0
        %3827 = vmatpush1.bf16.xpose.msra.mxu0 0
        %3828 = vmatprep.subr.bf16.mxu0 0
        %3829 = vmatpush1.bf16.xpose.msra.mxu0 0
        %3830 = vmatprep.subr.bf16.mxu0 0
        %3831 = vmatpush1.bf16.xpose.msra.mxu0 0
        %3832 = vmatprep.subr.bf16.mxu0 0
        %3833 = vmatpush1.bf16.xpose.msra.mxu0 0
        %3834 = vmatprep.subr.bf16.mxu0 0
        %3835 = vmatpush1.bf16.xpose.msra.mxu0 0
        %3836 = vmatprep.subr.bf16.mxu0 0
        %3837 = vmatpush1.bf16.xpose.msra.mxu0 0
        %3838 = vmatprep.subr.bf16.mxu0 0
        %3839 = vmatpush1.bf16.xpose.msra.mxu0 0
        %3840 = vmatprep.subr.bf16.mxu0 0
        %3841 = vmatpush1.bf16.xpose.msra.mxu0 0
        %3842 = vmatprep.subr.bf16.mxu0 0
        %3843 = vmatpush1.bf16.xpose.msra.mxu0 0
        %3844 = vmatprep.subr.bf16.mxu0 0
        %3845 = vmatpush1.bf16.xpose.msra.mxu0 0
        %3846 = vmatprep.subr.bf16.mxu0 0
        %3847 = vmatpush1.bf16.xpose.msra.mxu0 0
        %3848 = vmatprep.subr.bf16.mxu0 0
        %3849 = vmatpush1.bf16.xpose.msra.mxu0 0
        %3850 = vmatprep.subr.bf16.mxu0 0
        %3851 = vmatpush1.bf16.xpose.msra.mxu0 0
        %3852 = vmatprep.subr.bf16.mxu0 0
        %3853 = vmatpush1.bf16.xpose.msra.mxu0 0
        %3854 = vmatprep.subr.bf16.mxu0 0
        %3855 = vmatpush1.bf16.xpose.msra.mxu0 0
        %3856 = vmatprep.mubr.bf16.mxu0 0
        %3857 = vmatmul.mubr.bf16.gmra.mrb[0].mxu0 %v3819
        %v3858 = vpop.f32.mrb[0].mxu0
        %v3859 = vadd.f32 0.0, %v3858
        %v3860 = vpop.f32.mrb[0].mxu0
        %v3861 = vpop.f32.mrb[0].mxu0
        %v3862 = vpop.f32.mrb[0].mxu0
        %3863 = vdwg.mxu0
        %v3865 = vsel %vm3449, %v3394, 0
        %v3868 = vsel %vm3449, %v3426, 0
        %3870 = vmatprep.subr.bf16.mxu0 0
        %3871 = vmatpush1.bf16.xpose.msra.mxu0 %v3868
        %3872 = vmatprep.subr.bf16.mxu0 0
        %3873 = vmatpush1.bf16.xpose.msra.mxu0 0
        %3874 = vmatprep.subr.bf16.mxu0 0
        %3875 = vmatpush1.bf16.xpose.msra.mxu0 0
        %3876 = vmatprep.subr.bf16.mxu0 0
        %3877 = vmatpush1.bf16.xpose.msra.mxu0 0
        %3878 = vmatprep.subr.bf16.mxu0 0
        %3879 = vmatpush1.bf16.xpose.msra.mxu0 0
        %3880 = vmatprep.subr.bf16.mxu0 0
        %3881 = vmatpush1.bf16.xpose.msra.mxu0 0
        %3882 = vmatprep.subr.bf16.mxu0 0
        %3883 = vmatpush1.bf16.xpose.msra.mxu0 0
        %3884 = vmatprep.subr.bf16.mxu0 0
        %3885 = vmatpush1.bf16.xpose.msra.mxu0 0
        %3886 = vmatprep.subr.bf16.mxu0 0
        %3887 = vmatpush1.bf16.xpose.msra.mxu0 0
        %3888 = vmatprep.subr.bf16.mxu0 0
        %3889 = vmatpush1.bf16.xpose.msra.mxu0 0
        %3890 = vmatprep.subr.bf16.mxu0 0
        %3891 = vmatpush1.bf16.xpose.msra.mxu0 0
        %3892 = vmatprep.subr.bf16.mxu0 0
        %3893 = vmatpush1.bf16.xpose.msra.mxu0 0
        %3894 = vmatprep.subr.bf16.mxu0 0
        %3895 = vmatpush1.bf16.xpose.msra.mxu0 0
        %3896 = vmatprep.subr.bf16.mxu0 0
        %3897 = vmatpush1.bf16.xpose.msra.mxu0 0
        %3898 = vmatprep.subr.bf16.mxu0 0
        %3899 = vmatpush1.bf16.xpose.msra.mxu0 0
        %3900 = vmatprep.subr.bf16.mxu0 0
        %3901 = vmatpush1.bf16.xpose.msra.mxu0 0
        %3902 = vmatprep.mubr.bf16.mxu0 0
        %3903 = vmatmul.mubr.bf16.gmra.mrb[0].mxu0 %v3865
        %v3904 = vpop.f32.mrb[0].mxu0
        %v3905 = vadd.f32 0.0, %v3904
        %v3906 = vpop.f32.mrb[0].mxu0
        %v3907 = vpop.f32.mrb[0].mxu0
        %v3908 = vpop.f32.mrb[0].mxu0
        %3909 = vdwg.mxu0
        %v3911 = vsel %vm3449, %v3395, 0
        %v3914 = vsel %vm3449, %v3427, 0
        %3916 = vmatprep.subr.bf16.mxu0 0
        %3917 = vmatpush1.bf16.xpose.msra.mxu0 %v3914
        %3918 = vmatprep.subr.bf16.mxu0 0
        %3919 = vmatpush1.bf16.xpose.msra.mxu0 0
        %3920 = vmatprep.subr.bf16.mxu0 0
        %3921 = vmatpush1.bf16.xpose.msra.mxu0 0
        %3922 = vmatprep.subr.bf16.mxu0 0
        %3923 = vmatpush1.bf16.xpose.msra.mxu0 0
        %3924 = vmatprep.subr.bf16.mxu0 0
        %3925 = vmatpush1.bf16.xpose.msra.mxu0 0
        %3926 = vmatprep.subr.bf16.mxu0 0
        %3927 = vmatpush1.bf16.xpose.msra.mxu0 0
        %3928 = vmatprep.subr.bf16.mxu0 0
        %3929 = vmatpush1.bf16.xpose.msra.mxu0 0
        %3930 = vmatprep.subr.bf16.mxu0 0
        %3931 = vmatpush1.bf16.xpose.msra.mxu0 0
        %3932 = vmatprep.subr.bf16.mxu0 0
        %3933 = vmatpush1.bf16.xpose.msra.mxu0 0
        %3934 = vmatprep.subr.bf16.mxu0 0
        %3935 = vmatpush1.bf16.xpose.msra.mxu0 0
        %3936 = vmatprep.subr.bf16.mxu0 0
        %3937 = vmatpush1.bf16.xpose.msra.mxu0 0
        %3938 = vmatprep.subr.bf16.mxu0 0
        %3939 = vmatpush1.bf16.xpose.msra.mxu0 0
        %3940 = vmatprep.subr.bf16.mxu0 0
        %3941 = vmatpush1.bf16.xpose.msra.mxu0 0
        %3942 = vmatprep.subr.bf16.mxu0 0
        %3943 = vmatpush1.bf16.xpose.msra.mxu0 0
        %3944 = vmatprep.subr.bf16.mxu0 0
        %3945 = vmatpush1.bf16.xpose.msra.mxu0 0
        %3946 = vmatprep.subr.bf16.mxu0 0
        %3947 = vmatpush1.bf16.xpose.msra.mxu0 0
        %3948 = vmatprep.mubr.bf16.mxu0 0
        %3949 = vmatmul.mubr.bf16.gmra.mrb[0].mxu0 %v3911
        %v3950 = vpop.f32.mrb[0].mxu0
        %v3951 = vadd.f32 0.0, %v3950
        %v3952 = vpop.f32.mrb[0].mxu0
        %v3953 = vpop.f32.mrb[0].mxu0
        %v3954 = vpop.f32.mrb[0].mxu0
        %3955 = vdwg.mxu0
        %v3957 = vsel %vm3449, %v3396, 0
        %v3960 = vsel %vm3449, %v3428, 0
        %3962 = vmatprep.subr.bf16.mxu0 0
        %3963 = vmatpush1.bf16.xpose.msra.mxu0 %v3960
        %3964 = vmatprep.subr.bf16.mxu0 0
        %3965 = vmatpush1.bf16.xpose.msra.mxu0 0
        %3966 = vmatprep.subr.bf16.mxu0 0
        %3967 = vmatpush1.bf16.xpose.msra.mxu0 0
        %3968 = vmatprep.subr.bf16.mxu0 0
        %3969 = vmatpush1.bf16.xpose.msra.mxu0 0
        %3970 = vmatprep.subr.bf16.mxu0 0
        %3971 = vmatpush1.bf16.xpose.msra.mxu0 0
        %3972 = vmatprep.subr.bf16.mxu0 0
        %3973 = vmatpush1.bf16.xpose.msra.mxu0 0
        %3974 = vmatprep.subr.bf16.mxu0 0
        %3975 = vmatpush1.bf16.xpose.msra.mxu0 0
        %3976 = vmatprep.subr.bf16.mxu0 0
        %3977 = vmatpush1.bf16.xpose.msra.mxu0 0
        %3978 = vmatprep.subr.bf16.mxu0 0
        %3979 = vmatpush1.bf16.xpose.msra.mxu0 0
        %3980 = vmatprep.subr.bf16.mxu0 0
        %3981 = vmatpush1.bf16.xpose.msra.mxu0 0
        %3982 = vmatprep.subr.bf16.mxu0 0
        %3983 = vmatpush1.bf16.xpose.msra.mxu0 0
        %3984 = vmatprep.subr.bf16.mxu0 0
        %3985 = vmatpush1.bf16.xpose.msra.mxu0 0
        %3986 = vmatprep.subr.bf16.mxu0 0
        %3987 = vmatpush1.bf16.xpose.msra.mxu0 0
        %3988 = vmatprep.subr.bf16.mxu0 0
        %3989 = vmatpush1.bf16.xpose.msra.mxu0 0
        %3990 = vmatprep.subr.bf16.mxu0 0
        %3991 = vmatpush1.bf16.xpose.msra.mxu0 0
        %3992 = vmatprep.subr.bf16.mxu0 0
        %3993 = vmatpush1.bf16.xpose.msra.mxu0 0
        %3994 = vmatprep.mubr.bf16.mxu0 0
        %3995 = vmatmul.mubr.bf16.gmra.mrb[0].mxu0 %v3957
        %v3996 = vpop.f32.mrb[0].mxu0
        %v3997 = vadd.f32 0.0, %v3996
        %v3998 = vpop.f32.mrb[0].mxu0
        %v3999 = vpop.f32.mrb[0].mxu0
        %v4000 = vpop.f32.mrb[0].mxu0
        %4001 = vdwg.mxu0
        %v4003 = vsel %vm3449, %v3397, 0
        %v4006 = vsel %vm3449, %v3429, 0
        %4008 = vmatprep.subr.bf16.mxu0 0
        %4009 = vmatpush1.bf16.xpose.msra.mxu0 %v4006
        %4010 = vmatprep.subr.bf16.mxu0 0
        %4011 = vmatpush1.bf16.xpose.msra.mxu0 0
        %4012 = vmatprep.subr.bf16.mxu0 0
        %4013 = vmatpush1.bf16.xpose.msra.mxu0 0
        %4014 = vmatprep.subr.bf16.mxu0 0
        %4015 = vmatpush1.bf16.xpose.msra.mxu0 0
        %4016 = vmatprep.subr.bf16.mxu0 0
        %4017 = vmatpush1.bf16.xpose.msra.mxu0 0
        %4018 = vmatprep.subr.bf16.mxu0 0
        %4019 = vmatpush1.bf16.xpose.msra.mxu0 0
        %4020 = vmatprep.subr.bf16.mxu0 0
        %4021 = vmatpush1.bf16.xpose.msra.mxu0 0
        %4022 = vmatprep.subr.bf16.mxu0 0
        %4023 = vmatpush1.bf16.xpose.msra.mxu0 0
        %4024 = vmatprep.subr.bf16.mxu0 0
        %4025 = vmatpush1.bf16.xpose.msra.mxu0 0
        %4026 = vmatprep.subr.bf16.mxu0 0
        %4027 = vmatpush1.bf16.xpose.msra.mxu0 0
        %4028 = vmatprep.subr.bf16.mxu0 0
        %4029 = vmatpush1.bf16.xpose.msra.mxu0 0
        %4030 = vmatprep.subr.bf16.mxu0 0
        %4031 = vmatpush1.bf16.xpose.msra.mxu0 0
        %4032 = vmatprep.subr.bf16.mxu0 0
        %4033 = vmatpush1.bf16.xpose.msra.mxu0 0
        %4034 = vmatprep.subr.bf16.mxu0 0
        %4035 = vmatpush1.bf16.xpose.msra.mxu0 0
        %4036 = vmatprep.subr.bf16.mxu0 0
        %4037 = vmatpush1.bf16.xpose.msra.mxu0 0
        %4038 = vmatprep.subr.bf16.mxu0 0
        %4039 = vmatpush1.bf16.xpose.msra.mxu0 0
        %4040 = vmatprep.mubr.bf16.mxu0 0
        %4041 = vmatmul.mubr.bf16.gmra.mrb[0].mxu0 %v4003
        %v4042 = vpop.f32.mrb[0].mxu0
        %v4043 = vadd.f32 0.0, %v4042
        %v4044 = vpop.f32.mrb[0].mxu0
        %v4045 = vpop.f32.mrb[0].mxu0
        %v4046 = vpop.f32.mrb[0].mxu0
        %4047 = vdwg.mxu0
        %v4049 = vsel %vm3449, %v3398, 0
        %v4052 = vsel %vm3449, %v3430, 0
        %4054 = vmatprep.subr.bf16.mxu0 0
        %4055 = vmatpush1.bf16.xpose.msra.mxu0 %v4052
        %4056 = vmatprep.subr.bf16.mxu0 0
        %4057 = vmatpush1.bf16.xpose.msra.mxu0 0
        %4058 = vmatprep.subr.bf16.mxu0 0
        %4059 = vmatpush1.bf16.xpose.msra.mxu0 0
        %4060 = vmatprep.subr.bf16.mxu0 0
        %4061 = vmatpush1.bf16.xpose.msra.mxu0 0
        %4062 = vmatprep.subr.bf16.mxu0 0
        %4063 = vmatpush1.bf16.xpose.msra.mxu0 0
        %4064 = vmatprep.subr.bf16.mxu0 0
        %4065 = vmatpush1.bf16.xpose.msra.mxu0 0
        %4066 = vmatprep.subr.bf16.mxu0 0
        %4067 = vmatpush1.bf16.xpose.msra.mxu0 0
        %4068 = vmatprep.subr.bf16.mxu0 0
        %4069 = vmatpush1.bf16.xpose.msra.mxu0 0
        %4070 = vmatprep.subr.bf16.mxu0 0
        %4071 = vmatpush1.bf16.xpose.msra.mxu0 0
        %4072 = vmatprep.subr.bf16.mxu0 0
        %4073 = vmatpush1.bf16.xpose.msra.mxu0 0
        %4074 = vmatprep.subr.bf16.mxu0 0
        %4075 = vmatpush1.bf16.xpose.msra.mxu0 0
        %4076 = vmatprep.subr.bf16.mxu0 0
        %4077 = vmatpush1.bf16.xpose.msra.mxu0 0
        %4078 = vmatprep.subr.bf16.mxu0 0
        %4079 = vmatpush1.bf16.xpose.msra.mxu0 0
        %4080 = vmatprep.subr.bf16.mxu0 0
        %4081 = vmatpush1.bf16.xpose.msra.mxu0 0
        %4082 = vmatprep.subr.bf16.mxu0 0
        %4083 = vmatpush1.bf16.xpose.msra.mxu0 0
        %4084 = vmatprep.subr.bf16.mxu0 0
        %4085 = vmatpush1.bf16.xpose.msra.mxu0 0
        %4086 = vmatprep.mubr.bf16.mxu0 0
        %4087 = vmatmul.mubr.bf16.gmra.mrb[0].mxu0 %v4049
        %v4088 = vpop.f32.mrb[0].mxu0
        %v4089 = vadd.f32 0.0, %v4088
        %v4090 = vpop.f32.mrb[0].mxu0
        %v4091 = vpop.f32.mrb[0].mxu0
        %v4092 = vpop.f32.mrb[0].mxu0
        %4093 = vdwg.mxu0
        %v4095 = vsel %vm3449, %v3399, 0
        %v4098 = vsel %vm3449, %v3431, 0
        %4100 = vmatprep.subr.bf16.mxu0 0
        %4101 = vmatpush1.bf16.xpose.msra.mxu0 %v4098
        %4102 = vmatprep.subr.bf16.mxu0 0
        %4103 = vmatpush1.bf16.xpose.msra.mxu0 0
        %4104 = vmatprep.subr.bf16.mxu0 0
        %4105 = vmatpush1.bf16.xpose.msra.mxu0 0
        %4106 = vmatprep.subr.bf16.mxu0 0
        %4107 = vmatpush1.bf16.xpose.msra.mxu0 0
        %4108 = vmatprep.subr.bf16.mxu0 0
        %4109 = vmatpush1.bf16.xpose.msra.mxu0 0
        %4110 = vmatprep.subr.bf16.mxu0 0
        %4111 = vmatpush1.bf16.xpose.msra.mxu0 0
        %4112 = vmatprep.subr.bf16.mxu0 0
        %4113 = vmatpush1.bf16.xpose.msra.mxu0 0
        %4114 = vmatprep.subr.bf16.mxu0 0
        %4115 = vmatpush1.bf16.xpose.msra.mxu0 0
        %4116 = vmatprep.subr.bf16.mxu0 0
        %4117 = vmatpush1.bf16.xpose.msra.mxu0 0
        %4118 = vmatprep.subr.bf16.mxu0 0
        %4119 = vmatpush1.bf16.xpose.msra.mxu0 0
        %4120 = vmatprep.subr.bf16.mxu0 0
        %4121 = vmatpush1.bf16.xpose.msra.mxu0 0
        %4122 = vmatprep.subr.bf16.mxu0 0
        %4123 = vmatpush1.bf16.xpose.msra.mxu0 0
        %4124 = vmatprep.subr.bf16.mxu0 0
        %4125 = vmatpush1.bf16.xpose.msra.mxu0 0
        %4126 = vmatprep.subr.bf16.mxu0 0
        %4127 = vmatpush1.bf16.xpose.msra.mxu0 0
        %4128 = vmatprep.subr.bf16.mxu0 0
        %4129 = vmatpush1.bf16.xpose.msra.mxu0 0
        %4130 = vmatprep.subr.bf16.mxu0 0
        %4131 = vmatpush1.bf16.xpose.msra.mxu0 0
        %4132 = vmatprep.mubr.bf16.mxu0 0
        %4133 = vmatmul.mubr.bf16.gmra.mrb[0].mxu0 %v4095
        %v4134 = vpop.f32.mrb[0].mxu0
        %v4135 = vadd.f32 0.0, %v4134
        %v4136 = vpop.f32.mrb[0].mxu0
        %v4137 = vpop.f32.mrb[0].mxu0
        %v4138 = vpop.f32.mrb[0].mxu0
        %4139 = vdwg.mxu0
        %v4141 = vsel %vm3449, %v3400, 0
        %v4144 = vsel %vm3449, %v3432, 0
        %4146 = vmatprep.subr.bf16.mxu0 0
        %4147 = vmatpush1.bf16.xpose.msra.mxu0 %v4144
        %4148 = vmatprep.subr.bf16.mxu0 0
        %4149 = vmatpush1.bf16.xpose.msra.mxu0 0
        %4150 = vmatprep.subr.bf16.mxu0 0
        %4151 = vmatpush1.bf16.xpose.msra.mxu0 0
        %4152 = vmatprep.subr.bf16.mxu0 0
        %4153 = vmatpush1.bf16.xpose.msra.mxu0 0
        %4154 = vmatprep.subr.bf16.mxu0 0
        %4155 = vmatpush1.bf16.xpose.msra.mxu0 0
        %4156 = vmatprep.subr.bf16.mxu0 0
        %4157 = vmatpush1.bf16.xpose.msra.mxu0 0
        %4158 = vmatprep.subr.bf16.mxu0 0
        %4159 = vmatpush1.bf16.xpose.msra.mxu0 0
        %4160 = vmatprep.subr.bf16.mxu0 0
        %4161 = vmatpush1.bf16.xpose.msra.mxu0 0
        %4162 = vmatprep.subr.bf16.mxu0 0
        %4163 = vmatpush1.bf16.xpose.msra.mxu0 0
        %4164 = vmatprep.subr.bf16.mxu0 0
        %4165 = vmatpush1.bf16.xpose.msra.mxu0 0
        %4166 = vmatprep.subr.bf16.mxu0 0
        %4167 = vmatpush1.bf16.xpose.msra.mxu0 0
        %4168 = vmatprep.subr.bf16.mxu0 0
        %4169 = vmatpush1.bf16.xpose.msra.mxu0 0
        %4170 = vmatprep.subr.bf16.mxu0 0
        %4171 = vmatpush1.bf16.xpose.msra.mxu0 0
        %4172 = vmatprep.subr.bf16.mxu0 0
        %4173 = vmatpush1.bf16.xpose.msra.mxu0 0
        %4174 = vmatprep.subr.bf16.mxu0 0
        %4175 = vmatpush1.bf16.xpose.msra.mxu0 0
        %4176 = vmatprep.subr.bf16.mxu0 0
        %4177 = vmatpush1.bf16.xpose.msra.mxu0 0
        %4178 = vmatprep.mubr.bf16.mxu0 0
        %4179 = vmatmul.mubr.bf16.gmra.mrb[0].mxu0 %v4141
        %v4180 = vpop.f32.mrb[0].mxu0
        %v4181 = vadd.f32 0.0, %v4180
        %v4182 = vpop.f32.mrb[0].mxu0
        %v4183 = vpop.f32.mrb[0].mxu0
        %v4184 = vpop.f32.mrb[0].mxu0
        %4185 = vdwg.mxu0
        %v4187 = vsel %vm3449, %v3401, 0
        %v4190 = vsel %vm3449, %v3433, 0
        %4192 = vmatprep.subr.bf16.mxu0 0
        %4193 = vmatpush1.bf16.xpose.msra.mxu0 %v4190
        %4194 = vmatprep.subr.bf16.mxu0 0
        %4195 = vmatpush1.bf16.xpose.msra.mxu0 0
        %4196 = vmatprep.subr.bf16.mxu0 0
        %4197 = vmatpush1.bf16.xpose.msra.mxu0 0
        %4198 = vmatprep.subr.bf16.mxu0 0
        %4199 = vmatpush1.bf16.xpose.msra.mxu0 0
        %4200 = vmatprep.subr.bf16.mxu0 0
        %4201 = vmatpush1.bf16.xpose.msra.mxu0 0
        %4202 = vmatprep.subr.bf16.mxu0 0
        %4203 = vmatpush1.bf16.xpose.msra.mxu0 0
        %4204 = vmatprep.subr.bf16.mxu0 0
        %4205 = vmatpush1.bf16.xpose.msra.mxu0 0
        %4206 = vmatprep.subr.bf16.mxu0 0
        %4207 = vmatpush1.bf16.xpose.msra.mxu0 0
        %4208 = vmatprep.subr.bf16.mxu0 0
        %4209 = vmatpush1.bf16.xpose.msra.mxu0 0
        %4210 = vmatprep.subr.bf16.mxu0 0
        %4211 = vmatpush1.bf16.xpose.msra.mxu0 0
        %4212 = vmatprep.subr.bf16.mxu0 0
        %4213 = vmatpush1.bf16.xpose.msra.mxu0 0
        %4214 = vmatprep.subr.bf16.mxu0 0
        %4215 = vmatpush1.bf16.xpose.msra.mxu0 0
        %4216 = vmatprep.subr.bf16.mxu0 0
        %4217 = vmatpush1.bf16.xpose.msra.mxu0 0
        %4218 = vmatprep.subr.bf16.mxu0 0
        %4219 = vmatpush1.bf16.xpose.msra.mxu0 0
        %4220 = vmatprep.subr.bf16.mxu0 0
        %4221 = vmatpush1.bf16.xpose.msra.mxu0 0
        %4222 = vmatprep.subr.bf16.mxu0 0
        %4223 = vmatpush1.bf16.xpose.msra.mxu0 0
        %4224 = vmatprep.mubr.bf16.mxu0 0
        %4225 = vmatmul.mubr.bf16.gmra.mrb[0].mxu0 %v4187
        %v4226 = vpop.f32.mrb[0].mxu0
        %v4227 = vadd.f32 0.0, %v4226
        %v4228 = vpop.f32.mrb[0].mxu0
        %v4229 = vpop.f32.mrb[0].mxu0
        %v4230 = vpop.f32.mrb[0].mxu0
        %4231 = vdwg.mxu0
        %v4233 = vsel %vm3449, %v3402, 0
        %v4236 = vsel %vm3449, %v3434, 0
        %4238 = vmatprep.subr.bf16.mxu0 0
        %4239 = vmatpush1.bf16.xpose.msra.mxu0 %v4236
        %4240 = vmatprep.subr.bf16.mxu0 0
        %4241 = vmatpush1.bf16.xpose.msra.mxu0 0
        %4242 = vmatprep.subr.bf16.mxu0 0
        %4243 = vmatpush1.bf16.xpose.msra.mxu0 0
        %4244 = vmatprep.subr.bf16.mxu0 0
        %4245 = vmatpush1.bf16.xpose.msra.mxu0 0
        %4246 = vmatprep.subr.bf16.mxu0 0
        %4247 = vmatpush1.bf16.xpose.msra.mxu0 0
        %4248 = vmatprep.subr.bf16.mxu0 0
        %4249 = vmatpush1.bf16.xpose.msra.mxu0 0
        %4250 = vmatprep.subr.bf16.mxu0 0
        %4251 = vmatpush1.bf16.xpose.msra.mxu0 0
        %4252 = vmatprep.subr.bf16.mxu0 0
        %4253 = vmatpush1.bf16.xpose.msra.mxu0 0
        %4254 = vmatprep.subr.bf16.mxu0 0
        %4255 = vmatpush1.bf16.xpose.msra.mxu0 0
        %4256 = vmatprep.subr.bf16.mxu0 0
        %4257 = vmatpush1.bf16.xpose.msra.mxu0 0
        %4258 = vmatprep.subr.bf16.mxu0 0
        %4259 = vmatpush1.bf16.xpose.msra.mxu0 0
        %4260 = vmatprep.subr.bf16.mxu0 0
        %4261 = vmatpush1.bf16.xpose.msra.mxu0 0
        %4262 = vmatprep.subr.bf16.mxu0 0
        %4263 = vmatpush1.bf16.xpose.msra.mxu0 0
        %4264 = vmatprep.subr.bf16.mxu0 0
        %4265 = vmatpush1.bf16.xpose.msra.mxu0 0
        %4266 = vmatprep.subr.bf16.mxu0 0
        %4267 = vmatpush1.bf16.xpose.msra.mxu0 0
        %4268 = vmatprep.subr.bf16.mxu0 0
        %4269 = vmatpush1.bf16.xpose.msra.mxu0 0
        %4270 = vmatprep.mubr.bf16.mxu0 0
        %4271 = vmatmul.mubr.bf16.gmra.mrb[0].mxu0 %v4233
        %v4272 = vpop.f32.mrb[0].mxu0
        %v4273 = vadd.f32 0.0, %v4272
        %v4274 = vpop.f32.mrb[0].mxu0
        %v4275 = vpop.f32.mrb[0].mxu0
        %v4276 = vpop.f32.mrb[0].mxu0
        %4277 = vdwg.mxu0
        %v4279 = vsel %vm3449, %v3403, 0
        %v4282 = vsel %vm3449, %v3435, 0
        %4284 = vmatprep.subr.bf16.mxu0 0
        %4285 = vmatpush1.bf16.xpose.msra.mxu0 %v4282
        %4286 = vmatprep.subr.bf16.mxu0 0
        %4287 = vmatpush1.bf16.xpose.msra.mxu0 0
        %4288 = vmatprep.subr.bf16.mxu0 0
        %4289 = vmatpush1.bf16.xpose.msra.mxu0 0
        %4290 = vmatprep.subr.bf16.mxu0 0
        %4291 = vmatpush1.bf16.xpose.msra.mxu0 0
        %4292 = vmatprep.subr.bf16.mxu0 0
        %4293 = vmatpush1.bf16.xpose.msra.mxu0 0
        %4294 = vmatprep.subr.bf16.mxu0 0
        %4295 = vmatpush1.bf16.xpose.msra.mxu0 0
        %4296 = vmatprep.subr.bf16.mxu0 0
        %4297 = vmatpush1.bf16.xpose.msra.mxu0 0
        %4298 = vmatprep.subr.bf16.mxu0 0
        %4299 = vmatpush1.bf16.xpose.msra.mxu0 0
        %4300 = vmatprep.subr.bf16.mxu0 0
        %4301 = vmatpush1.bf16.xpose.msra.mxu0 0
        %4302 = vmatprep.subr.bf16.mxu0 0
        %4303 = vmatpush1.bf16.xpose.msra.mxu0 0
        %4304 = vmatprep.subr.bf16.mxu0 0
        %4305 = vmatpush1.bf16.xpose.msra.mxu0 0
        %4306 = vmatprep.subr.bf16.mxu0 0
        %4307 = vmatpush1.bf16.xpose.msra.mxu0 0
        %4308 = vmatprep.subr.bf16.mxu0 0
        %4309 = vmatpush1.bf16.xpose.msra.mxu0 0
        %4310 = vmatprep.subr.bf16.mxu0 0
        %4311 = vmatpush1.bf16.xpose.msra.mxu0 0
        %4312 = vmatprep.subr.bf16.mxu0 0
        %4313 = vmatpush1.bf16.xpose.msra.mxu0 0
        %4314 = vmatprep.subr.bf16.mxu0 0
        %4315 = vmatpush1.bf16.xpose.msra.mxu0 0
        %4316 = vmatprep.mubr.bf16.mxu0 0
        %4317 = vmatmul.mubr.bf16.gmra.mrb[0].mxu0 %v4279
        %v4318 = vpop.f32.mrb[0].mxu0
        %v4319 = vadd.f32 0.0, %v4318
        %v4320 = vpop.f32.mrb[0].mxu0
        %v4321 = vpop.f32.mrb[0].mxu0
        %v4322 = vpop.f32.mrb[0].mxu0
        %4323 = vdwg.mxu0
        %v4325 = vsel %vm3449, %v3404, 0
        %v4328 = vsel %vm3449, %v3436, 0
        %4330 = vmatprep.subr.bf16.mxu0 0
        %4331 = vmatpush1.bf16.xpose.msra.mxu0 %v4328
        %4332 = vmatprep.subr.bf16.mxu0 0
        %4333 = vmatpush1.bf16.xpose.msra.mxu0 0
        %4334 = vmatprep.subr.bf16.mxu0 0
        %4335 = vmatpush1.bf16.xpose.msra.mxu0 0
        %4336 = vmatprep.subr.bf16.mxu0 0
        %4337 = vmatpush1.bf16.xpose.msra.mxu0 0
        %4338 = vmatprep.subr.bf16.mxu0 0
        %4339 = vmatpush1.bf16.xpose.msra.mxu0 0
        %4340 = vmatprep.subr.bf16.mxu0 0
        %4341 = vmatpush1.bf16.xpose.msra.mxu0 0
        %4342 = vmatprep.subr.bf16.mxu0 0
        %4343 = vmatpush1.bf16.xpose.msra.mxu0 0
        %4344 = vmatprep.subr.bf16.mxu0 0
        %4345 = vmatpush1.bf16.xpose.msra.mxu0 0
        %4346 = vmatprep.subr.bf16.mxu0 0
        %4347 = vmatpush1.bf16.xpose.msra.mxu0 0
        %4348 = vmatprep.subr.bf16.mxu0 0
        %4349 = vmatpush1.bf16.xpose.msra.mxu0 0
        %4350 = vmatprep.subr.bf16.mxu0 0
        %4351 = vmatpush1.bf16.xpose.msra.mxu0 0
        %4352 = vmatprep.subr.bf16.mxu0 0
        %4353 = vmatpush1.bf16.xpose.msra.mxu0 0
        %4354 = vmatprep.subr.bf16.mxu0 0
        %4355 = vmatpush1.bf16.xpose.msra.mxu0 0
        %4356 = vmatprep.subr.bf16.mxu0 0
        %4357 = vmatpush1.bf16.xpose.msra.mxu0 0
        %4358 = vmatprep.subr.bf16.mxu0 0
        %4359 = vmatpush1.bf16.xpose.msra.mxu0 0
        %4360 = vmatprep.subr.bf16.mxu0 0
        %4361 = vmatpush1.bf16.xpose.msra.mxu0 0
        %4362 = vmatprep.mubr.bf16.mxu0 0
        %4363 = vmatmul.mubr.bf16.gmra.mrb[0].mxu0 %v4325
        %v4364 = vpop.f32.mrb[0].mxu0
        %v4365 = vadd.f32 0.0, %v4364
        %v4366 = vpop.f32.mrb[0].mxu0
        %v4367 = vpop.f32.mrb[0].mxu0
        %v4368 = vpop.f32.mrb[0].mxu0
        %4369 = vdwg.mxu0
        %v4371 = vsel %vm3449, %v3405, 0
        %v4374 = vsel %vm3449, %v3437, 0
        %4376 = vmatprep.subr.bf16.mxu0 0
        %4377 = vmatpush1.bf16.xpose.msra.mxu0 %v4374
        %4378 = vmatprep.subr.bf16.mxu0 0
        %4379 = vmatpush1.bf16.xpose.msra.mxu0 0
        %4380 = vmatprep.subr.bf16.mxu0 0
        %4381 = vmatpush1.bf16.xpose.msra.mxu0 0
        %4382 = vmatprep.subr.bf16.mxu0 0
        %4383 = vmatpush1.bf16.xpose.msra.mxu0 0
        %4384 = vmatprep.subr.bf16.mxu0 0
        %4385 = vmatpush1.bf16.xpose.msra.mxu0 0
        %4386 = vmatprep.subr.bf16.mxu0 0
        %4387 = vmatpush1.bf16.xpose.msra.mxu0 0
        %4388 = vmatprep.subr.bf16.mxu0 0
        %4389 = vmatpush1.bf16.xpose.msra.mxu0 0
        %4390 = vmatprep.subr.bf16.mxu0 0
        %4391 = vmatpush1.bf16.xpose.msra.mxu0 0
        %4392 = vmatprep.subr.bf16.mxu0 0
        %4393 = vmatpush1.bf16.xpose.msra.mxu0 0
        %4394 = vmatprep.subr.bf16.mxu0 0
        %4395 = vmatpush1.bf16.xpose.msra.mxu0 0
        %4396 = vmatprep.subr.bf16.mxu0 0
        %4397 = vmatpush1.bf16.xpose.msra.mxu0 0
        %4398 = vmatprep.subr.bf16.mxu0 0
        %4399 = vmatpush1.bf16.xpose.msra.mxu0 0
        %4400 = vmatprep.subr.bf16.mxu0 0
        %4401 = vmatpush1.bf16.xpose.msra.mxu0 0
        %4402 = vmatprep.subr.bf16.mxu0 0
        %4403 = vmatpush1.bf16.xpose.msra.mxu0 0
        %4404 = vmatprep.subr.bf16.mxu0 0
        %4405 = vmatpush1.bf16.xpose.msra.mxu0 0
        %4406 = vmatprep.subr.bf16.mxu0 0
        %4407 = vmatpush1.bf16.xpose.msra.mxu0 0
        %4408 = vmatprep.mubr.bf16.mxu0 0
        %4409 = vmatmul.mubr.bf16.gmra.mrb[0].mxu0 %v4371
        %v4410 = vpop.f32.mrb[0].mxu0
        %v4411 = vadd.f32 0.0, %v4410
        %v4412 = vpop.f32.mrb[0].mxu0
        %v4413 = vpop.f32.mrb[0].mxu0
        %v4414 = vpop.f32.mrb[0].mxu0
        %4415 = vdwg.mxu0
        %v4417 = vsel %vm3449, %v3406, 0
        %v4420 = vsel %vm3449, %v3438, 0
        %4422 = vmatprep.subr.bf16.mxu0 0
        %4423 = vmatpush1.bf16.xpose.msra.mxu0 %v4420
        %4424 = vmatprep.subr.bf16.mxu0 0
        %4425 = vmatpush1.bf16.xpose.msra.mxu0 0
        %4426 = vmatprep.subr.bf16.mxu0 0
        %4427 = vmatpush1.bf16.xpose.msra.mxu0 0
        %4428 = vmatprep.subr.bf16.mxu0 0
        %4429 = vmatpush1.bf16.xpose.msra.mxu0 0
        %4430 = vmatprep.subr.bf16.mxu0 0
        %4431 = vmatpush1.bf16.xpose.msra.mxu0 0
        %4432 = vmatprep.subr.bf16.mxu0 0
        %4433 = vmatpush1.bf16.xpose.msra.mxu0 0
        %4434 = vmatprep.subr.bf16.mxu0 0
        %4435 = vmatpush1.bf16.xpose.msra.mxu0 0
        %4436 = vmatprep.subr.bf16.mxu0 0
        %4437 = vmatpush1.bf16.xpose.msra.mxu0 0
        %4438 = vmatprep.subr.bf16.mxu0 0
        %4439 = vmatpush1.bf16.xpose.msra.mxu0 0
        %4440 = vmatprep.subr.bf16.mxu0 0
        %4441 = vmatpush1.bf16.xpose.msra.mxu0 0
        %4442 = vmatprep.subr.bf16.mxu0 0
        %4443 = vmatpush1.bf16.xpose.msra.mxu0 0
        %4444 = vmatprep.subr.bf16.mxu0 0
        %4445 = vmatpush1.bf16.xpose.msra.mxu0 0
        %4446 = vmatprep.subr.bf16.mxu0 0
        %4447 = vmatpush1.bf16.xpose.msra.mxu0 0
        %4448 = vmatprep.subr.bf16.mxu0 0
        %4449 = vmatpush1.bf16.xpose.msra.mxu0 0
        %4450 = vmatprep.subr.bf16.mxu0 0
        %4451 = vmatpush1.bf16.xpose.msra.mxu0 0
        %4452 = vmatprep.subr.bf16.mxu0 0
        %4453 = vmatpush1.bf16.xpose.msra.mxu0 0
        %4454 = vmatprep.mubr.bf16.mxu0 0
        %4455 = vmatmul.mubr.bf16.gmra.mrb[0].mxu0 %v4417
        %v4456 = vpop.f32.mrb[0].mxu0
        %v4457 = vadd.f32 0.0, %v4456
        %v4458 = vpop.f32.mrb[0].mxu0
        %v4459 = vpop.f32.mrb[0].mxu0
        %v4460 = vpop.f32.mrb[0].mxu0
        %4461 = vdwg.mxu0
        %v4463 = vsel %vm3449, %v3407, 0
        %v4466 = vsel %vm3449, %v3439, 0
        %4468 = vmatprep.subr.bf16.mxu0 0
        %4469 = vmatpush1.bf16.xpose.msra.mxu0 %v4466
        %4470 = vmatprep.subr.bf16.mxu0 0
        %4471 = vmatpush1.bf16.xpose.msra.mxu0 0
        %4472 = vmatprep.subr.bf16.mxu0 0
        %4473 = vmatpush1.bf16.xpose.msra.mxu0 0
        %4474 = vmatprep.subr.bf16.mxu0 0
        %4475 = vmatpush1.bf16.xpose.msra.mxu0 0
        %4476 = vmatprep.subr.bf16.mxu0 0
        %4477 = vmatpush1.bf16.xpose.msra.mxu0 0
        %4478 = vmatprep.subr.bf16.mxu0 0
        %4479 = vmatpush1.bf16.xpose.msra.mxu0 0
        %4480 = vmatprep.subr.bf16.mxu0 0
        %4481 = vmatpush1.bf16.xpose.msra.mxu0 0
        %4482 = vmatprep.subr.bf16.mxu0 0
        %4483 = vmatpush1.bf16.xpose.msra.mxu0 0
        %4484 = vmatprep.subr.bf16.mxu0 0
        %4485 = vmatpush1.bf16.xpose.msra.mxu0 0
        %4486 = vmatprep.subr.bf16.mxu0 0
        %4487 = vmatpush1.bf16.xpose.msra.mxu0 0
        %4488 = vmatprep.subr.bf16.mxu0 0
        %4489 = vmatpush1.bf16.xpose.msra.mxu0 0
        %4490 = vmatprep.subr.bf16.mxu0 0
        %4491 = vmatpush1.bf16.xpose.msra.mxu0 0
        %4492 = vmatprep.subr.bf16.mxu0 0
        %4493 = vmatpush1.bf16.xpose.msra.mxu0 0
        %4494 = vmatprep.subr.bf16.mxu0 0
        %4495 = vmatpush1.bf16.xpose.msra.mxu0 0
        %4496 = vmatprep.subr.bf16.mxu0 0
        %4497 = vmatpush1.bf16.xpose.msra.mxu0 0
        %4498 = vmatprep.subr.bf16.mxu0 0
        %4499 = vmatpush1.bf16.xpose.msra.mxu0 0
        %4500 = vmatprep.mubr.bf16.mxu0 0
        %4501 = vmatmul.mubr.bf16.gmra.mrb[0].mxu0 %v4463
        %v4502 = vpop.f32.mrb[0].mxu0
        %v4503 = vadd.f32 0.0, %v4502
        %v4504 = vpop.f32.mrb[0].mxu0
        %v4505 = vpop.f32.mrb[0].mxu0
        %v4506 = vpop.f32.mrb[0].mxu0
        %4507 = vdwg.mxu0
        %v4509 = vsel %vm3449, %v3408, 0
        %v4512 = vsel %vm3449, %v3440, 0
        %4514 = vmatprep.subr.bf16.mxu0 0
        %4515 = vmatpush1.bf16.xpose.msra.mxu0 %v4512
        %4516 = vmatprep.subr.bf16.mxu0 0
        %4517 = vmatpush1.bf16.xpose.msra.mxu0 0
        %4518 = vmatprep.subr.bf16.mxu0 0
        %4519 = vmatpush1.bf16.xpose.msra.mxu0 0
        %4520 = vmatprep.subr.bf16.mxu0 0
        %4521 = vmatpush1.bf16.xpose.msra.mxu0 0
        %4522 = vmatprep.subr.bf16.mxu0 0
        %4523 = vmatpush1.bf16.xpose.msra.mxu0 0
        %4524 = vmatprep.subr.bf16.mxu0 0
        %4525 = vmatpush1.bf16.xpose.msra.mxu0 0
        %4526 = vmatprep.subr.bf16.mxu0 0
        %4527 = vmatpush1.bf16.xpose.msra.mxu0 0
        %4528 = vmatprep.subr.bf16.mxu0 0
        %4529 = vmatpush1.bf16.xpose.msra.mxu0 0
        %4530 = vmatprep.subr.bf16.mxu0 0
        %4531 = vmatpush1.bf16.xpose.msra.mxu0 0
        %4532 = vmatprep.subr.bf16.mxu0 0
        %4533 = vmatpush1.bf16.xpose.msra.mxu0 0
        %4534 = vmatprep.subr.bf16.mxu0 0
        %4535 = vmatpush1.bf16.xpose.msra.mxu0 0
        %4536 = vmatprep.subr.bf16.mxu0 0
        %4537 = vmatpush1.bf16.xpose.msra.mxu0 0
        %4538 = vmatprep.subr.bf16.mxu0 0
        %4539 = vmatpush1.bf16.xpose.msra.mxu0 0
        %4540 = vmatprep.subr.bf16.mxu0 0
        %4541 = vmatpush1.bf16.xpose.msra.mxu0 0
        %4542 = vmatprep.subr.bf16.mxu0 0
        %4543 = vmatpush1.bf16.xpose.msra.mxu0 0
        %4544 = vmatprep.subr.bf16.mxu0 0
        %4545 = vmatpush1.bf16.xpose.msra.mxu0 0
        %4546 = vmatprep.mubr.bf16.mxu0 0
        %4547 = vmatmul.mubr.bf16.gmra.mrb[0].mxu0 %v4509
        %v4548 = vpop.f32.mrb[0].mxu0
        %v4549 = vadd.f32 0.0, %v4548
        %v4550 = vpop.f32.mrb[0].mxu0
        %v4551 = vpop.f32.mrb[0].mxu0
        %v4552 = vpop.f32.mrb[0].mxu0
        %4553 = vdwg.mxu0
        %v4555 = vsel %vm3449, %v3409, 0
        %v4558 = vsel %vm3449, %v3441, 0
        %4560 = vmatprep.subr.bf16.mxu0 0
        %4561 = vmatpush1.bf16.xpose.msra.mxu0 %v4558
        %4562 = vmatprep.subr.bf16.mxu0 0
        %4563 = vmatpush1.bf16.xpose.msra.mxu0 0
        %4564 = vmatprep.subr.bf16.mxu0 0
        %4565 = vmatpush1.bf16.xpose.msra.mxu0 0
        %4566 = vmatprep.subr.bf16.mxu0 0
        %4567 = vmatpush1.bf16.xpose.msra.mxu0 0
        %4568 = vmatprep.subr.bf16.mxu0 0
        %4569 = vmatpush1.bf16.xpose.msra.mxu0 0
        %4570 = vmatprep.subr.bf16.mxu0 0
        %4571 = vmatpush1.bf16.xpose.msra.mxu0 0
        %4572 = vmatprep.subr.bf16.mxu0 0
        %4573 = vmatpush1.bf16.xpose.msra.mxu0 0
        %4574 = vmatprep.subr.bf16.mxu0 0
        %4575 = vmatpush1.bf16.xpose.msra.mxu0 0
        %4576 = vmatprep.subr.bf16.mxu0 0
        %4577 = vmatpush1.bf16.xpose.msra.mxu0 0
        %4578 = vmatprep.subr.bf16.mxu0 0
        %4579 = vmatpush1.bf16.xpose.msra.mxu0 0
        %4580 = vmatprep.subr.bf16.mxu0 0
        %4581 = vmatpush1.bf16.xpose.msra.mxu0 0
        %4582 = vmatprep.subr.bf16.mxu0 0
        %4583 = vmatpush1.bf16.xpose.msra.mxu0 0
        %4584 = vmatprep.subr.bf16.mxu0 0
        %4585 = vmatpush1.bf16.xpose.msra.mxu0 0
        %4586 = vmatprep.subr.bf16.mxu0 0
        %4587 = vmatpush1.bf16.xpose.msra.mxu0 0
        %4588 = vmatprep.subr.bf16.mxu0 0
        %4589 = vmatpush1.bf16.xpose.msra.mxu0 0
        %4590 = vmatprep.subr.bf16.mxu0 0
        %4591 = vmatpush1.bf16.xpose.msra.mxu0 0
        %4592 = vmatprep.mubr.bf16.mxu0 0
        %4593 = vmatmul.mubr.bf16.gmra.mrb[0].mxu0 %v4555
        %v4594 = vpop.f32.mrb[0].mxu0
        %v4595 = vadd.f32 0.0, %v4594
        %v4596 = vpop.f32.mrb[0].mxu0
        %v4597 = vpop.f32.mrb[0].mxu0
        %v4598 = vpop.f32.mrb[0].mxu0
        %4599 = vdwg.mxu0
        %v4601 = vsel %vm3449, %v3410, 0
        %v4604 = vsel %vm3449, %v3442, 0
        %4606 = vmatprep.subr.bf16.mxu0 0
        %4607 = vmatpush1.bf16.xpose.msra.mxu0 %v4604
        %4608 = vmatprep.subr.bf16.mxu0 0
        %4609 = vmatpush1.bf16.xpose.msra.mxu0 0
        %4610 = vmatprep.subr.bf16.mxu0 0
        %4611 = vmatpush1.bf16.xpose.msra.mxu0 0
        %4612 = vmatprep.subr.bf16.mxu0 0
        %4613 = vmatpush1.bf16.xpose.msra.mxu0 0
        %4614 = vmatprep.subr.bf16.mxu0 0
        %4615 = vmatpush1.bf16.xpose.msra.mxu0 0
        %4616 = vmatprep.subr.bf16.mxu0 0
        %4617 = vmatpush1.bf16.xpose.msra.mxu0 0
        %4618 = vmatprep.subr.bf16.mxu0 0
        %4619 = vmatpush1.bf16.xpose.msra.mxu0 0
        %4620 = vmatprep.subr.bf16.mxu0 0
        %4621 = vmatpush1.bf16.xpose.msra.mxu0 0
        %4622 = vmatprep.subr.bf16.mxu0 0
        %4623 = vmatpush1.bf16.xpose.msra.mxu0 0
        %4624 = vmatprep.subr.bf16.mxu0 0
        %4625 = vmatpush1.bf16.xpose.msra.mxu0 0
        %4626 = vmatprep.subr.bf16.mxu0 0
        %4627 = vmatpush1.bf16.xpose.msra.mxu0 0
        %4628 = vmatprep.subr.bf16.mxu0 0
        %4629 = vmatpush1.bf16.xpose.msra.mxu0 0
        %4630 = vmatprep.subr.bf16.mxu0 0
        %4631 = vmatpush1.bf16.xpose.msra.mxu0 0
        %4632 = vmatprep.subr.bf16.mxu0 0
        %4633 = vmatpush1.bf16.xpose.msra.mxu0 0
        %4634 = vmatprep.subr.bf16.mxu0 0
        %4635 = vmatpush1.bf16.xpose.msra.mxu0 0
        %4636 = vmatprep.subr.bf16.mxu0 0
        %4637 = vmatpush1.bf16.xpose.msra.mxu0 0
        %4638 = vmatprep.mubr.bf16.mxu0 0
        %4639 = vmatmul.mubr.bf16.gmra.mrb[0].mxu0 %v4601
        %v4640 = vpop.f32.mrb[0].mxu0
        %v4641 = vadd.f32 0.0, %v4640
        %v4642 = vpop.f32.mrb[0].mxu0
        %v4643 = vpop.f32.mrb[0].mxu0
        %v4644 = vpop.f32.mrb[0].mxu0
        %4645 = vdwg.mxu0
        %v4647 = vsel %vm3449, %v3411, 0
        %v4650 = vsel %vm3449, %v3443, 0
        %4652 = vmatprep.subr.bf16.mxu0 0
        %4653 = vmatpush1.bf16.xpose.msra.mxu0 %v4650
        %4654 = vmatprep.subr.bf16.mxu0 0
        %4655 = vmatpush1.bf16.xpose.msra.mxu0 0
        %4656 = vmatprep.subr.bf16.mxu0 0
        %4657 = vmatpush1.bf16.xpose.msra.mxu0 0
        %4658 = vmatprep.subr.bf16.mxu0 0
        %4659 = vmatpush1.bf16.xpose.msra.mxu0 0
        %4660 = vmatprep.subr.bf16.mxu0 0
        %4661 = vmatpush1.bf16.xpose.msra.mxu0 0
        %4662 = vmatprep.subr.bf16.mxu0 0
        %4663 = vmatpush1.bf16.xpose.msra.mxu0 0
        %4664 = vmatprep.subr.bf16.mxu0 0
        %4665 = vmatpush1.bf16.xpose.msra.mxu0 0
        %4666 = vmatprep.subr.bf16.mxu0 0
        %4667 = vmatpush1.bf16.xpose.msra.mxu0 0
        %4668 = vmatprep.subr.bf16.mxu0 0
        %4669 = vmatpush1.bf16.xpose.msra.mxu0 0
        %4670 = vmatprep.subr.bf16.mxu0 0
        %4671 = vmatpush1.bf16.xpose.msra.mxu0 0
        %4672 = vmatprep.subr.bf16.mxu0 0
        %4673 = vmatpush1.bf16.xpose.msra.mxu0 0
        %4674 = vmatprep.subr.bf16.mxu0 0
        %4675 = vmatpush1.bf16.xpose.msra.mxu0 0
        %4676 = vmatprep.subr.bf16.mxu0 0
        %4677 = vmatpush1.bf16.xpose.msra.mxu0 0
        %4678 = vmatprep.subr.bf16.mxu0 0
        %4679 = vmatpush1.bf16.xpose.msra.mxu0 0
        %4680 = vmatprep.subr.bf16.mxu0 0
        %4681 = vmatpush1.bf16.xpose.msra.mxu0 0
        %4682 = vmatprep.subr.bf16.mxu0 0
        %4683 = vmatpush1.bf16.xpose.msra.mxu0 0
        %4684 = vmatprep.mubr.bf16.mxu0 0
        %4685 = vmatmul.mubr.bf16.gmra.mrb[0].mxu0 %v4647
        %v4686 = vpop.f32.mrb[0].mxu0
        %v4687 = vadd.f32 0.0, %v4686
        %v4688 = vpop.f32.mrb[0].mxu0
        %v4689 = vpop.f32.mrb[0].mxu0
        %v4690 = vpop.f32.mrb[0].mxu0
        %4691 = vdwg.mxu0
        %v4693 = vsel %vm3449, %v3412, 0
        %v4696 = vsel %vm3449, %v3444, 0
        %4698 = vmatprep.subr.bf16.mxu0 0
        %4699 = vmatpush1.bf16.xpose.msra.mxu0 %v4696
        %4700 = vmatprep.subr.bf16.mxu0 0
        %4701 = vmatpush1.bf16.xpose.msra.mxu0 0
        %4702 = vmatprep.subr.bf16.mxu0 0
        %4703 = vmatpush1.bf16.xpose.msra.mxu0 0
        %4704 = vmatprep.subr.bf16.mxu0 0
        %4705 = vmatpush1.bf16.xpose.msra.mxu0 0
        %4706 = vmatprep.subr.bf16.mxu0 0
        %4707 = vmatpush1.bf16.xpose.msra.mxu0 0
        %4708 = vmatprep.subr.bf16.mxu0 0
        %4709 = vmatpush1.bf16.xpose.msra.mxu0 0
        %4710 = vmatprep.subr.bf16.mxu0 0
        %4711 = vmatpush1.bf16.xpose.msra.mxu0 0
        %4712 = vmatprep.subr.bf16.mxu0 0
        %4713 = vmatpush1.bf16.xpose.msra.mxu0 0
        %4714 = vmatprep.subr.bf16.mxu0 0
        %4715 = vmatpush1.bf16.xpose.msra.mxu0 0
        %4716 = vmatprep.subr.bf16.mxu0 0
        %4717 = vmatpush1.bf16.xpose.msra.mxu0 0
        %4718 = vmatprep.subr.bf16.mxu0 0
        %4719 = vmatpush1.bf16.xpose.msra.mxu0 0
        %4720 = vmatprep.subr.bf16.mxu0 0
        %4721 = vmatpush1.bf16.xpose.msra.mxu0 0
        %4722 = vmatprep.subr.bf16.mxu0 0
        %4723 = vmatpush1.bf16.xpose.msra.mxu0 0
        %4724 = vmatprep.subr.bf16.mxu0 0
        %4725 = vmatpush1.bf16.xpose.msra.mxu0 0
        %4726 = vmatprep.subr.bf16.mxu0 0
        %4727 = vmatpush1.bf16.xpose.msra.mxu0 0
        %4728 = vmatprep.subr.bf16.mxu0 0
        %4729 = vmatpush1.bf16.xpose.msra.mxu0 0
        %4730 = vmatprep.mubr.bf16.mxu0 0
        %4731 = vmatmul.mubr.bf16.gmra.mrb[0].mxu0 %v4693
        %v4732 = vpop.f32.mrb[0].mxu0
        %v4733 = vadd.f32 0.0, %v4732
        %v4734 = vpop.f32.mrb[0].mxu0
        %v4735 = vpop.f32.mrb[0].mxu0
        %v4736 = vpop.f32.mrb[0].mxu0
        %4737 = vdwg.mxu0
        %v4739 = vsel %vm3449, %v3413, 0
        %v4742 = vsel %vm3449, %v3445, 0
        %4744 = vmatprep.subr.bf16.mxu0 0
        %4745 = vmatpush1.bf16.xpose.msra.mxu0 %v4742
        %4746 = vmatprep.subr.bf16.mxu0 0
        %4747 = vmatpush1.bf16.xpose.msra.mxu0 0
        %4748 = vmatprep.subr.bf16.mxu0 0
        %4749 = vmatpush1.bf16.xpose.msra.mxu0 0
        %4750 = vmatprep.subr.bf16.mxu0 0
        %4751 = vmatpush1.bf16.xpose.msra.mxu0 0
        %4752 = vmatprep.subr.bf16.mxu0 0
        %4753 = vmatpush1.bf16.xpose.msra.mxu0 0
        %4754 = vmatprep.subr.bf16.mxu0 0
        %4755 = vmatpush1.bf16.xpose.msra.mxu0 0
        %4756 = vmatprep.subr.bf16.mxu0 0
        %4757 = vmatpush1.bf16.xpose.msra.mxu0 0
        %4758 = vmatprep.subr.bf16.mxu0 0
        %4759 = vmatpush1.bf16.xpose.msra.mxu0 0
        %4760 = vmatprep.subr.bf16.mxu0 0
        %4761 = vmatpush1.bf16.xpose.msra.mxu0 0
        %4762 = vmatprep.subr.bf16.mxu0 0
        %4763 = vmatpush1.bf16.xpose.msra.mxu0 0
        %4764 = vmatprep.subr.bf16.mxu0 0
        %4765 = vmatpush1.bf16.xpose.msra.mxu0 0
        %4766 = vmatprep.subr.bf16.mxu0 0
        %4767 = vmatpush1.bf16.xpose.msra.mxu0 0
        %4768 = vmatprep.subr.bf16.mxu0 0
        %4769 = vmatpush1.bf16.xpose.msra.mxu0 0
        %4770 = vmatprep.subr.bf16.mxu0 0
        %4771 = vmatpush1.bf16.xpose.msra.mxu0 0
        %4772 = vmatprep.subr.bf16.mxu0 0
        %4773 = vmatpush1.bf16.xpose.msra.mxu0 0
        %4774 = vmatprep.subr.bf16.mxu0 0
        %4775 = vmatpush1.bf16.xpose.msra.mxu0 0
        %4776 = vmatprep.mubr.bf16.mxu0 0
        %4777 = vmatmul.mubr.bf16.gmra.mrb[0].mxu0 %v4739
        %v4778 = vpop.f32.mrb[0].mxu0
        %v4779 = vadd.f32 0.0, %v4778
        %v4780 = vpop.f32.mrb[0].mxu0
        %v4781 = vpop.f32.mrb[0].mxu0
        %v4782 = vpop.f32.mrb[0].mxu0
        %4783 = vdwg.mxu0
        %v4785 = vsel %vm3449, %v3414, 0
        %v4788 = vsel %vm3449, %v3446, 0
        %4790 = vmatprep.subr.bf16.mxu0 0
        %4791 = vmatpush1.bf16.xpose.msra.mxu0 %v4788
        %4792 = vmatprep.subr.bf16.mxu0 0
        %4793 = vmatpush1.bf16.xpose.msra.mxu0 0
        %4794 = vmatprep.subr.bf16.mxu0 0
        %4795 = vmatpush1.bf16.xpose.msra.mxu0 0
        %4796 = vmatprep.subr.bf16.mxu0 0
        %4797 = vmatpush1.bf16.xpose.msra.mxu0 0
        %4798 = vmatprep.subr.bf16.mxu0 0
        %4799 = vmatpush1.bf16.xpose.msra.mxu0 0
        %4800 = vmatprep.subr.bf16.mxu0 0
        %4801 = vmatpush1.bf16.xpose.msra.mxu0 0
        %4802 = vmatprep.subr.bf16.mxu0 0
        %4803 = vmatpush1.bf16.xpose.msra.mxu0 0
        %4804 = vmatprep.subr.bf16.mxu0 0
        %4805 = vmatpush1.bf16.xpose.msra.mxu0 0
        %4806 = vmatprep.subr.bf16.mxu0 0
        %4807 = vmatpush1.bf16.xpose.msra.mxu0 0
        %4808 = vmatprep.subr.bf16.mxu0 0
        %4809 = vmatpush1.bf16.xpose.msra.mxu0 0
        %4810 = vmatprep.subr.bf16.mxu0 0
        %4811 = vmatpush1.bf16.xpose.msra.mxu0 0
        %4812 = vmatprep.subr.bf16.mxu0 0
        %4813 = vmatpush1.bf16.xpose.msra.mxu0 0
        %4814 = vmatprep.subr.bf16.mxu0 0
        %4815 = vmatpush1.bf16.xpose.msra.mxu0 0
        %4816 = vmatprep.subr.bf16.mxu0 0
        %4817 = vmatpush1.bf16.xpose.msra.mxu0 0
        %4818 = vmatprep.subr.bf16.mxu0 0
        %4819 = vmatpush1.bf16.xpose.msra.mxu0 0
        %4820 = vmatprep.subr.bf16.mxu0 0
        %4821 = vmatpush1.bf16.xpose.msra.mxu0 0
        %4822 = vmatprep.mubr.bf16.mxu0 0
        %4823 = vmatmul.mubr.bf16.gmra.mrb[0].mxu0 %v4785
        %v4824 = vpop.f32.mrb[0].mxu0
        %v4825 = vadd.f32 0.0, %v4824
        %v4826 = vpop.f32.mrb[0].mxu0
        %v4827 = vpop.f32.mrb[0].mxu0
        %v4828 = vpop.f32.mrb[0].mxu0
        %4829 = vdwg.mxu0
        %v4831 = vsel %vm3449, %v3415, 0
        %v4834 = vsel %vm3449, %v3447, 0
        %4836 = vmatprep.subr.bf16.mxu0 0
        %4837 = vmatpush1.bf16.xpose.msra.mxu0 %v4834
        %4838 = vmatprep.subr.bf16.mxu0 0
        %4839 = vmatpush1.bf16.xpose.msra.mxu0 0
        %4840 = vmatprep.subr.bf16.mxu0 0
        %4841 = vmatpush1.bf16.xpose.msra.mxu0 0
        %4842 = vmatprep.subr.bf16.mxu0 0
        %4843 = vmatpush1.bf16.xpose.msra.mxu0 0
        %4844 = vmatprep.subr.bf16.mxu0 0
        %4845 = vmatpush1.bf16.xpose.msra.mxu0 0
        %4846 = vmatprep.subr.bf16.mxu0 0
        %4847 = vmatpush1.bf16.xpose.msra.mxu0 0
        %4848 = vmatprep.subr.bf16.mxu0 0
        %4849 = vmatpush1.bf16.xpose.msra.mxu0 0
        %4850 = vmatprep.subr.bf16.mxu0 0
        %4851 = vmatpush1.bf16.xpose.msra.mxu0 0
        %4852 = vmatprep.subr.bf16.mxu0 0
        %4853 = vmatpush1.bf16.xpose.msra.mxu0 0
        %4854 = vmatprep.subr.bf16.mxu0 0
        %4855 = vmatpush1.bf16.xpose.msra.mxu0 0
        %4856 = vmatprep.subr.bf16.mxu0 0
        %4857 = vmatpush1.bf16.xpose.msra.mxu0 0
        %4858 = vmatprep.subr.bf16.mxu0 0
        %4859 = vmatpush1.bf16.xpose.msra.mxu0 0
        %4860 = vmatprep.subr.bf16.mxu0 0
        %4861 = vmatpush1.bf16.xpose.msra.mxu0 0
        %4862 = vmatprep.subr.bf16.mxu0 0
        %4863 = vmatpush1.bf16.xpose.msra.mxu0 0
        %4864 = vmatprep.subr.bf16.mxu0 0
        %4865 = vmatpush1.bf16.xpose.msra.mxu0 0
        %4866 = vmatprep.subr.bf16.mxu0 0
        %4867 = vmatpush1.bf16.xpose.msra.mxu0 0
        %4868 = vmatprep.mubr.bf16.mxu0 0
        %4869 = vmatmul.mubr.bf16.gmra.mrb[0].mxu0 %v4831
        %v4870 = vpop.f32.mrb[0].mxu0
        %v4871 = vadd.f32 0.0, %v4870
        %v4872 = vpop.f32.mrb[0].mxu0
        %v4873 = vpop.f32.mrb[0].mxu0
        %v4874 = vpop.f32.mrb[0].mxu0
        %4875 = vdwg.mxu0
        %v4877 = vsel %vm3449, %v3416, 0
        %v4880 = vsel %vm3449, %v3448, 0
        %4882 = vmatprep.subr.bf16.mxu0 0
        %4883 = vmatpush1.bf16.xpose.msra.mxu0 %v4880
        %4884 = vmatprep.subr.bf16.mxu0 0
        %4885 = vmatpush1.bf16.xpose.msra.mxu0 0
        %4886 = vmatprep.subr.bf16.mxu0 0
        %4887 = vmatpush1.bf16.xpose.msra.mxu0 0
        %4888 = vmatprep.subr.bf16.mxu0 0
        %4889 = vmatpush1.bf16.xpose.msra.mxu0 0
        %4890 = vmatprep.subr.bf16.mxu0 0
        %4891 = vmatpush1.bf16.xpose.msra.mxu0 0
        %4892 = vmatprep.subr.bf16.mxu0 0
        %4893 = vmatpush1.bf16.xpose.msra.mxu0 0
        %4894 = vmatprep.subr.bf16.mxu0 0
        %4895 = vmatpush1.bf16.xpose.msra.mxu0 0
        %4896 = vmatprep.subr.bf16.mxu0 0
        %4897 = vmatpush1.bf16.xpose.msra.mxu0 0
        %4898 = vmatprep.subr.bf16.mxu0 0
        %4899 = vmatpush1.bf16.xpose.msra.mxu0 0
        %4900 = vmatprep.subr.bf16.mxu0 0
        %4901 = vmatpush1.bf16.xpose.msra.mxu0 0
        %4902 = vmatprep.subr.bf16.mxu0 0
        %4903 = vmatpush1.bf16.xpose.msra.mxu0 0
        %4904 = vmatprep.subr.bf16.mxu0 0
        %4905 = vmatpush1.bf16.xpose.msra.mxu0 0
        %4906 = vmatprep.subr.bf16.mxu0 0
        %4907 = vmatpush1.bf16.xpose.msra.mxu0 0
        %4908 = vmatprep.subr.bf16.mxu0 0
        %4909 = vmatpush1.bf16.xpose.msra.mxu0 0
        %4910 = vmatprep.subr.bf16.mxu0 0
        %4911 = vmatpush1.bf16.xpose.msra.mxu0 0
        %4912 = vmatprep.subr.bf16.mxu0 0
        %4913 = vmatpush1.bf16.xpose.msra.mxu0 0
        %4914 = vmatprep.mubr.bf16.mxu0 0
        %4915 = vmatmul.mubr.bf16.gmra.mrb[0].mxu0 %v4877
        %v4916 = vpop.f32.mrb[0].mxu0
        %v4917 = vadd.f32 0.0, %v4916
        %v4918 = vpop.f32.mrb[0].mxu0
        %v4919 = vpop.f32.mrb[0].mxu0
        %v4920 = vpop.f32.mrb[0].mxu0
        %4921 = vdwg.mxu0
        %v4922 = vld [vmem:[#allocation8] sm:$0xff]
        %v4923 = vld [vmem:[#allocation8 + $0x8] sm:$0xff]
        %v4924 = vld [vmem:[#allocation8 + $0x10] sm:$0xff]
        %v4925 = vld [vmem:[#allocation8 + $0x18] sm:$0xff]
        %v4926 = vld [vmem:[#allocation8 + $0x20] sm:$0xff]
        %v4927 = vld [vmem:[#allocation8 + $0x28] sm:$0xff]
        %v4928 = vld [vmem:[#allocation8 + $0x30] sm:$0xff]
        %v4929 = vld [vmem:[#allocation8 + $0x38] sm:$0xff]
        %v4930 = vld [vmem:[#allocation8 + $0x40] sm:$0xff]
        %v4931 = vld [vmem:[#allocation8 + $0x48] sm:$0xff]
        %v4932 = vld [vmem:[#allocation8 + $0x50] sm:$0xff]
        %v4933 = vld [vmem:[#allocation8 + $0x58] sm:$0xff]
        %v4934 = vld [vmem:[#allocation8 + $0x60] sm:$0xff]
        %v4935 = vld [vmem:[#allocation8 + $0x68] sm:$0xff]
        %v4936 = vld [vmem:[#allocation8 + $0x70] sm:$0xff]
        %v4937 = vld [vmem:[#allocation8 + $0x78] sm:$0xff]
        %v4938 = vld [vmem:[#allocation8 + $0x80] sm:$0xff]
        %v4939 = vld [vmem:[#allocation8 + $0x88] sm:$0xff]
        %v4940 = vld [vmem:[#allocation8 + $0x90] sm:$0xff]
        %v4941 = vld [vmem:[#allocation8 + $0x98] sm:$0xff]
        %v4942 = vld [vmem:[#allocation8 + $0xa0] sm:$0xff]
        %v4943 = vld [vmem:[#allocation8 + $0xa8] sm:$0xff]
        %v4944 = vld [vmem:[#allocation8 + $0xb0] sm:$0xff]
        %v4945 = vld [vmem:[#allocation8 + $0xb8] sm:$0xff]
        %v4946 = vld [vmem:[#allocation8 + $0xc0] sm:$0xff]
        %v4947 = vld [vmem:[#allocation8 + $0xc8] sm:$0xff]
        %v4948 = vld [vmem:[#allocation8 + $0xd0] sm:$0xff]
        %v4949 = vld [vmem:[#allocation8 + $0xd8] sm:$0xff]
        %v4950 = vld [vmem:[#allocation8 + $0xe0] sm:$0xff]
        %v4951 = vld [vmem:[#allocation8 + $0xe8] sm:$0xff]
        %v4952 = vld [vmem:[#allocation8 + $0xf0] sm:$0xff]
        %v4953 = vld [vmem:[#allocation8 + $0xf8] sm:$0xff]
        %vm4954 = vcmask 64512
        %v4955 = vsel %vm4954, %v3491, -inf
        %4956 = vmax.xlane.f32.xlu0 %v4955
        %v4957 = vpop.xlane.xlu0 %4956
        %v4958 = vsel %vm4954, %v3537, -inf
        %4959 = vmax.xlane.f32.xlu0 %v4958
        %v4960 = vpop.xlane.xlu0 %4959
        %v4961 = vsel %vm4954, %v3583, -inf
        %4962 = vmax.xlane.f32.xlu0 %v4961
        %v4963 = vpop.xlane.xlu0 %4962
        %v4964 = vsel %vm4954, %v3629, -inf
        %4965 = vmax.xlane.f32.xlu0 %v4964
        %v4966 = vpop.xlane.xlu0 %4965
        %v4967 = vsel %vm4954, %v3675, -inf
        %4968 = vmax.xlane.f32.xlu0 %v4967
        %v4969 = vpop.xlane.xlu0 %4968
        %v4970 = vsel %vm4954, %v3721, -inf
        %4971 = vmax.xlane.f32.xlu0 %v4970
        %v4972 = vpop.xlane.xlu0 %4971
        %v4973 = vsel %vm4954, %v3767, -inf
        %4974 = vmax.xlane.f32.xlu0 %v4973
        %v4975 = vpop.xlane.xlu0 %4974
        %v4976 = vsel %vm4954, %v3813, -inf
        %4977 = vmax.xlane.f32.xlu0 %v4976
        %v4978 = vpop.xlane.xlu0 %4977
        %v4979 = vsel %vm4954, %v3859, -inf
        %4980 = vmax.xlane.f32.xlu0 %v4979
        %v4981 = vpop.xlane.xlu0 %4980
        %v4982 = vsel %vm4954, %v3905, -inf
        %4983 = vmax.xlane.f32.xlu0 %v4982
        %v4984 = vpop.xlane.xlu0 %4983
        %v4985 = vsel %vm4954, %v3951, -inf
        %4986 = vmax.xlane.f32.xlu0 %v4985
        %v4987 = vpop.xlane.xlu0 %4986
        %v4988 = vsel %vm4954, %v3997, -inf
        %4989 = vmax.xlane.f32.xlu0 %v4988
        %v4990 = vpop.xlane.xlu0 %4989
        %v4991 = vsel %vm4954, %v4043, -inf
        %4992 = vmax.xlane.f32.xlu0 %v4991
        %v4993 = vpop.xlane.xlu0 %4992
        %v4994 = vsel %vm4954, %v4089, -inf
        %4995 = vmax.xlane.f32.xlu0 %v4994
        %v4996 = vpop.xlane.xlu0 %4995
        %v4997 = vsel %vm4954, %v4135, -inf
        %4998 = vmax.xlane.f32.xlu0 %v4997
        %v4999 = vpop.xlane.xlu0 %4998
        %v5000 = vsel %vm4954, %v4181, -inf
        %5001 = vmax.xlane.f32.xlu0 %v5000
        %v5002 = vpop.xlane.xlu0 %5001
        %v5003 = vsel %vm4954, %v4227, -inf
        %5004 = vmax.xlane.f32.xlu0 %v5003
        %v5005 = vpop.xlane.xlu0 %5004
        %v5006 = vsel %vm4954, %v4273, -inf
        %5007 = vmax.xlane.f32.xlu0 %v5006
        %v5008 = vpop.xlane.xlu0 %5007
        %v5009 = vsel %vm4954, %v4319, -inf
        %5010 = vmax.xlane.f32.xlu0 %v5009
        %v5011 = vpop.xlane.xlu0 %5010
        %v5012 = vsel %vm4954, %v4365, -inf
        %5013 = vmax.xlane.f32.xlu0 %v5012
        %v5014 = vpop.xlane.xlu0 %5013
        %v5015 = vsel %vm4954, %v4411, -inf
        %5016 = vmax.xlane.f32.xlu0 %v5015
        %v5017 = vpop.xlane.xlu0 %5016
        %v5018 = vsel %vm4954, %v4457, -inf
        %5019 = vmax.xlane.f32.xlu0 %v5018
        %v5020 = vpop.xlane.xlu0 %5019
        %v5021 = vsel %vm4954, %v4503, -inf
        %5022 = vmax.xlane.f32.xlu0 %v5021
        %v5023 = vpop.xlane.xlu0 %5022
        %v5024 = vsel %vm4954, %v4549, -inf
        %5025 = vmax.xlane.f32.xlu0 %v5024
        %v5026 = vpop.xlane.xlu0 %5025
        %v5027 = vsel %vm4954, %v4595, -inf
        %5028 = vmax.xlane.f32.xlu0 %v5027
        %v5029 = vpop.xlane.xlu0 %5028
        %v5030 = vsel %vm4954, %v4641, -inf
        %5031 = vmax.xlane.f32.xlu0 %v5030
        %v5032 = vpop.xlane.xlu0 %5031
        %v5033 = vsel %vm4954, %v4687, -inf
        %5034 = vmax.xlane.f32.xlu0 %v5033
        %v5035 = vpop.xlane.xlu0 %5034
        %v5036 = vsel %vm4954, %v4733, -inf
        %5037 = vmax.xlane.f32.xlu0 %v5036
        %v5038 = vpop.xlane.xlu0 %5037
        %v5039 = vsel %vm4954, %v4779, -inf
        %5040 = vmax.xlane.f32.xlu0 %v5039
        %v5041 = vpop.xlane.xlu0 %5040
        %v5042 = vsel %vm4954, %v4825, -inf
        %5043 = vmax.xlane.f32.xlu0 %v5042
        %v5044 = vpop.xlane.xlu0 %5043
        %v5045 = vsel %vm4954, %v4871, -inf
        %5046 = vmax.xlane.f32.xlu0 %v5045
        %v5047 = vpop.xlane.xlu0 %5046
        %v5048 = vsel %vm4954, %v4917, -inf
        %5049 = vmax.xlane.f32.xlu0 %v5048
        %v5050 = vpop.xlane.xlu0 %5049
        %v5051 = vmax.f32 %v4922, %v4957
        %v5052 = vmax.f32 %v4923, %v4960
        %v5053 = vmax.f32 %v4924, %v4963
        %v5054 = vmax.f32 %v4925, %v4966
        %v5055 = vmax.f32 %v4926, %v4969
        %v5056 = vmax.f32 %v4927, %v4972
        %v5057 = vmax.f32 %v4928, %v4975
        %v5058 = vmax.f32 %v4929, %v4978
        %v5059 = vmax.f32 %v4930, %v4981
        %v5060 = vmax.f32 %v4931, %v4984
        %v5061 = vmax.f32 %v4932, %v4987
        %v5062 = vmax.f32 %v4933, %v4990
        %v5063 = vmax.f32 %v4934, %v4993
        %v5064 = vmax.f32 %v4935, %v4996
        %v5065 = vmax.f32 %v4936, %v4999
        %v5066 = vmax.f32 %v4937, %v5002
        %v5067 = vmax.f32 %v4938, %v5005
        %v5068 = vmax.f32 %v4939, %v5008
        %v5069 = vmax.f32 %v4940, %v5011
        %v5070 = vmax.f32 %v4941, %v5014
        %v5071 = vmax.f32 %v4942, %v5017
        %v5072 = vmax.f32 %v4943, %v5020
        %v5073 = vmax.f32 %v4944, %v5023
        %v5074 = vmax.f32 %v4945, %v5026
        %v5075 = vmax.f32 %v4946, %v5029
        %v5076 = vmax.f32 %v4947, %v5032
        %v5077 = vmax.f32 %v4948, %v5035
        %v5078 = vmax.f32 %v4949, %v5038
        %v5079 = vmax.f32 %v4950, %v5041
        %v5080 = vmax.f32 %v4951, %v5044
        %v5081 = vmax.f32 %v4952, %v5047
        %v5082 = vmax.f32 %v4953, %v5050
        %v5083 = vsub.f32 %v4922, %v5051
        %v5084 = vsub.f32 %v4923, %v5052
        %v5085 = vsub.f32 %v4924, %v5053
        %v5086 = vsub.f32 %v4925, %v5054
        %v5087 = vsub.f32 %v4926, %v5055
        %v5088 = vsub.f32 %v4927, %v5056
        %v5089 = vsub.f32 %v4928, %v5057
        %v5090 = vsub.f32 %v4929, %v5058
        %v5091 = vsub.f32 %v4930, %v5059
        %v5092 = vsub.f32 %v4931, %v5060
        %v5093 = vsub.f32 %v4932, %v5061
        %v5094 = vsub.f32 %v4933, %v5062
        %v5095 = vsub.f32 %v4934, %v5063
        %v5096 = vsub.f32 %v4935, %v5064
        %v5097 = vsub.f32 %v4936, %v5065
        %v5098 = vsub.f32 %v4937, %v5066
        %v5099 = vsub.f32 %v4938, %v5067
        %v5100 = vsub.f32 %v4939, %v5068
        %v5101 = vsub.f32 %v4940, %v5069
        %v5102 = vsub.f32 %v4941, %v5070
        %v5103 = vsub.f32 %v4942, %v5071
        %v5104 = vsub.f32 %v4943, %v5072
        %v5105 = vsub.f32 %v4944, %v5073
        %v5106 = vsub.f32 %v4945, %v5074
        %v5107 = vsub.f32 %v4946, %v5075
        %v5108 = vsub.f32 %v4947, %v5076
        %v5109 = vsub.f32 %v4948, %v5077
        %v5110 = vsub.f32 %v4949, %v5078
        %v5111 = vsub.f32 %v4950, %v5079
        %v5112 = vsub.f32 %v4951, %v5080
        %v5113 = vsub.f32 %v4952, %v5081
        %v5114 = vsub.f32 %v4953, %v5082
        %v5115 = vmul.f32 %v5083, 1.442695
        %v5116 = vpow.pop %v5115
        %v5117 = vmul.f32 %v5084, 1.442695
        %v5118 = vpow.pop %v5117
        %v5119 = vmul.f32 %v5085, 1.442695
        %v5120 = vpow.pop %v5119
        %v5121 = vmul.f32 %v5086, 1.442695
        %v5122 = vpow.pop %v5121
        %v5123 = vmul.f32 %v5087, 1.442695
        %v5124 = vpow.pop %v5123
        %v5125 = vmul.f32 %v5088, 1.442695
        %v5126 = vpow.pop %v5125
        %v5127 = vmul.f32 %v5089, 1.442695
        %v5128 = vpow.pop %v5127
        %v5129 = vmul.f32 %v5090, 1.442695
        %v5130 = vpow.pop %v5129
        %v5131 = vmul.f32 %v5091, 1.442695
        %v5132 = vpow.pop %v5131
        %v5133 = vmul.f32 %v5092, 1.442695
        %v5134 = vpow.pop %v5133
        %v5135 = vmul.f32 %v5093, 1.442695
        %v5136 = vpow.pop %v5135
        %v5137 = vmul.f32 %v5094, 1.442695
        %v5138 = vpow.pop %v5137
        %v5139 = vmul.f32 %v5095, 1.442695
        %v5140 = vpow.pop %v5139
        %v5141 = vmul.f32 %v5096, 1.442695
        %v5142 = vpow.pop %v5141
        %v5143 = vmul.f32 %v5097, 1.442695
        %v5144 = vpow.pop %v5143
        %v5145 = vmul.f32 %v5098, 1.442695
        %v5146 = vpow.pop %v5145
        %v5147 = vmul.f32 %v5099, 1.442695
        %v5148 = vpow.pop %v5147
        %v5149 = vmul.f32 %v5100, 1.442695
        %v5150 = vpow.pop %v5149
        %v5151 = vmul.f32 %v5101, 1.442695
        %v5152 = vpow.pop %v5151
        %v5153 = vmul.f32 %v5102, 1.442695
        %v5154 = vpow.pop %v5153
        %v5155 = vmul.f32 %v5103, 1.442695
        %v5156 = vpow.pop %v5155
        %v5157 = vmul.f32 %v5104, 1.442695
        %v5158 = vpow.pop %v5157
        %v5159 = vmul.f32 %v5105, 1.442695
        %v5160 = vpow.pop %v5159
        %v5161 = vmul.f32 %v5106, 1.442695
        %v5162 = vpow.pop %v5161
        %v5163 = vmul.f32 %v5107, 1.442695
        %v5164 = vpow.pop %v5163
        %v5165 = vmul.f32 %v5108, 1.442695
        %v5166 = vpow.pop %v5165
        %v5167 = vmul.f32 %v5109, 1.442695
        %v5168 = vpow.pop %v5167
        %v5169 = vmul.f32 %v5110, 1.442695
        %v5170 = vpow.pop %v5169
        %v5171 = vmul.f32 %v5111, 1.442695
        %v5172 = vpow.pop %v5171
        %v5173 = vmul.f32 %v5112, 1.442695
        %v5174 = vpow.pop %v5173
        %v5175 = vmul.f32 %v5113, 1.442695
        %v5176 = vpow.pop %v5175
        %v5177 = vmul.f32 %v5114, 1.442695
        %v5178 = vpow.pop %v5177
        %5180 = vset.pattern.permute.xlu0 0
        %5181 = vperm.xlu0 %5180, %v5051
        %v5182 = vpop.permute.xlu0 %5181
        %5185 = vset.pattern.permute.xlu0 0
        %5186 = vperm.xlu0 %5185, %v5052
        %v5187 = vpop.permute.xlu0 %5186
        %5190 = vset.pattern.permute.xlu0 0
        %5191 = vperm.xlu0 %5190, %v5053
        %v5192 = vpop.permute.xlu0 %5191
        %5195 = vset.pattern.permute.xlu0 0
        %5196 = vperm.xlu0 %5195, %v5054
        %v5197 = vpop.permute.xlu0 %5196
        %5200 = vset.pattern.permute.xlu0 0
        %5201 = vperm.xlu0 %5200, %v5055
        %v5202 = vpop.permute.xlu0 %5201
        %5205 = vset.pattern.permute.xlu0 0
        %5206 = vperm.xlu0 %5205, %v5056
        %v5207 = vpop.permute.xlu0 %5206
        %5210 = vset.pattern.permute.xlu0 0
        %5211 = vperm.xlu0 %5210, %v5057
        %v5212 = vpop.permute.xlu0 %5211
        %5215 = vset.pattern.permute.xlu0 0
        %5216 = vperm.xlu0 %5215, %v5058
        %v5217 = vpop.permute.xlu0 %5216
        %5220 = vset.pattern.permute.xlu0 0
        %5221 = vperm.xlu0 %5220, %v5059
        %v5222 = vpop.permute.xlu0 %5221
        %5225 = vset.pattern.permute.xlu0 0
        %5226 = vperm.xlu0 %5225, %v5060
        %v5227 = vpop.permute.xlu0 %5226
        %5230 = vset.pattern.permute.xlu0 0
        %5231 = vperm.xlu0 %5230, %v5061
        %v5232 = vpop.permute.xlu0 %5231
        %5235 = vset.pattern.permute.xlu0 0
        %5236 = vperm.xlu0 %5235, %v5062
        %v5237 = vpop.permute.xlu0 %5236
        %5240 = vset.pattern.permute.xlu0 0
        %5241 = vperm.xlu0 %5240, %v5063
        %v5242 = vpop.permute.xlu0 %5241
        %5245 = vset.pattern.permute.xlu0 0
        %5246 = vperm.xlu0 %5245, %v5064
        %v5247 = vpop.permute.xlu0 %5246
        %5250 = vset.pattern.permute.xlu0 0
        %5251 = vperm.xlu0 %5250, %v5065
        %v5252 = vpop.permute.xlu0 %5251
        %5255 = vset.pattern.permute.xlu0 0
        %5256 = vperm.xlu0 %5255, %v5066
        %v5257 = vpop.permute.xlu0 %5256
        %5260 = vset.pattern.permute.xlu0 0
        %5261 = vperm.xlu0 %5260, %v5067
        %v5262 = vpop.permute.xlu0 %5261
        %5265 = vset.pattern.permute.xlu0 0
        %5266 = vperm.xlu0 %5265, %v5068
        %v5267 = vpop.permute.xlu0 %5266
        %5270 = vset.pattern.permute.xlu0 0
        %5271 = vperm.xlu0 %5270, %v5069
        %v5272 = vpop.permute.xlu0 %5271
        %5275 = vset.pattern.permute.xlu0 0
        %5276 = vperm.xlu0 %5275, %v5070
        %v5277 = vpop.permute.xlu0 %5276
        %5280 = vset.pattern.permute.xlu0 0
        %5281 = vperm.xlu0 %5280, %v5071
        %v5282 = vpop.permute.xlu0 %5281
        %5285 = vset.pattern.permute.xlu0 0
        %5286 = vperm.xlu0 %5285, %v5072
        %v5287 = vpop.permute.xlu0 %5286
        %5290 = vset.pattern.permute.xlu0 0
        %5291 = vperm.xlu0 %5290, %v5073
        %v5292 = vpop.permute.xlu0 %5291
        %5295 = vset.pattern.permute.xlu0 0
        %5296 = vperm.xlu0 %5295, %v5074
        %v5297 = vpop.permute.xlu0 %5296
        %5300 = vset.pattern.permute.xlu0 0
        %5301 = vperm.xlu0 %5300, %v5075
        %v5302 = vpop.permute.xlu0 %5301
        %5305 = vset.pattern.permute.xlu0 0
        %5306 = vperm.xlu0 %5305, %v5076
        %v5307 = vpop.permute.xlu0 %5306
        %5310 = vset.pattern.permute.xlu0 0
        %5311 = vperm.xlu0 %5310, %v5077
        %v5312 = vpop.permute.xlu0 %5311
        %5315 = vset.pattern.permute.xlu0 0
        %5316 = vperm.xlu0 %5315, %v5078
        %v5317 = vpop.permute.xlu0 %5316
        %5320 = vset.pattern.permute.xlu0 0
        %5321 = vperm.xlu0 %5320, %v5079
        %v5322 = vpop.permute.xlu0 %5321
        %5325 = vset.pattern.permute.xlu0 0
        %5326 = vperm.xlu0 %5325, %v5080
        %v5327 = vpop.permute.xlu0 %5326
        %5330 = vset.pattern.permute.xlu0 0
        %5331 = vperm.xlu0 %5330, %v5081
        %v5332 = vpop.permute.xlu0 %5331
        %5335 = vset.pattern.permute.xlu0 0
        %5336 = vperm.xlu0 %5335, %v5082
        %v5337 = vpop.permute.xlu0 %5336
        %v5339 = vsub.f32 %v3491, %v5182
        %v5340 = vsub.f32 %v3537, %v5187
        %v5341 = vsub.f32 %v3583, %v5192
        %v5342 = vsub.f32 %v3629, %v5197
        %v5343 = vsub.f32 %v3675, %v5202
        %v5344 = vsub.f32 %v3721, %v5207
        %v5345 = vsub.f32 %v3767, %v5212
        %v5346 = vsub.f32 %v3813, %v5217
        %v5347 = vsub.f32 %v3859, %v5222
        %v5348 = vsub.f32 %v3905, %v5227
        %v5349 = vsub.f32 %v3951, %v5232
        %v5350 = vsub.f32 %v3997, %v5237
        %v5351 = vsub.f32 %v4043, %v5242
        %v5352 = vsub.f32 %v4089, %v5247
        %v5353 = vsub.f32 %v4135, %v5252
        %v5354 = vsub.f32 %v4181, %v5257
        %v5355 = vsub.f32 %v4227, %v5262
        %v5356 = vsub.f32 %v4273, %v5267
        %v5357 = vsub.f32 %v4319, %v5272
        %v5358 = vsub.f32 %v4365, %v5277
        %v5359 = vsub.f32 %v4411, %v5282
        %v5360 = vsub.f32 %v4457, %v5287
        %v5361 = vsub.f32 %v4503, %v5292
        %v5362 = vsub.f32 %v4549, %v5297
        %v5363 = vsub.f32 %v4595, %v5302
        %v5364 = vsub.f32 %v4641, %v5307
        %v5365 = vsub.f32 %v4687, %v5312
        %v5366 = vsub.f32 %v4733, %v5317
        %v5367 = vsub.f32 %v4779, %v5322
        %v5368 = vsub.f32 %v4825, %v5327
        %v5369 = vsub.f32 %v4871, %v5332
        %v5370 = vsub.f32 %v4917, %v5337
        %v5371 = vmul.f32 %v5339, 1.442695
        %v5372 = vpow.pop %v5371
        %v5373 = vmul.f32 %v5340, 1.442695
        %v5374 = vpow.pop %v5373
        %v5375 = vmul.f32 %v5341, 1.442695
        %v5376 = vpow.pop %v5375
        %v5377 = vmul.f32 %v5342, 1.442695
        %v5378 = vpow.pop %v5377
        %v5379 = vmul.f32 %v5343, 1.442695
        %v5380 = vpow.pop %v5379
        %v5381 = vmul.f32 %v5344, 1.442695
        %v5382 = vpow.pop %v5381
        %v5383 = vmul.f32 %v5345, 1.442695
        %v5384 = vpow.pop %v5383
        %v5385 = vmul.f32 %v5346, 1.442695
        %v5386 = vpow.pop %v5385
        %v5387 = vmul.f32 %v5347, 1.442695
        %v5388 = vpow.pop %v5387
        %v5389 = vmul.f32 %v5348, 1.442695
        %v5390 = vpow.pop %v5389
        %v5391 = vmul.f32 %v5349, 1.442695
        %v5392 = vpow.pop %v5391
        %v5393 = vmul.f32 %v5350, 1.442695
        %v5394 = vpow.pop %v5393
        %v5395 = vmul.f32 %v5351, 1.442695
        %v5396 = vpow.pop %v5395
        %v5397 = vmul.f32 %v5352, 1.442695
        %v5398 = vpow.pop %v5397
        %v5399 = vmul.f32 %v5353, 1.442695
        %v5400 = vpow.pop %v5399
        %v5401 = vmul.f32 %v5354, 1.442695
        %v5402 = vpow.pop %v5401
        %v5403 = vmul.f32 %v5355, 1.442695
        %v5404 = vpow.pop %v5403
        %v5405 = vmul.f32 %v5356, 1.442695
        %v5406 = vpow.pop %v5405
        %v5407 = vmul.f32 %v5357, 1.442695
        %v5408 = vpow.pop %v5407
        %v5409 = vmul.f32 %v5358, 1.442695
        %v5410 = vpow.pop %v5409
        %v5411 = vmul.f32 %v5359, 1.442695
        %v5412 = vpow.pop %v5411
        %v5413 = vmul.f32 %v5360, 1.442695
        %v5414 = vpow.pop %v5413
        %v5415 = vmul.f32 %v5361, 1.442695
        %v5416 = vpow.pop %v5415
        %v5417 = vmul.f32 %v5362, 1.442695
        %v5418 = vpow.pop %v5417
        %v5419 = vmul.f32 %v5363, 1.442695
        %v5420 = vpow.pop %v5419
        %v5421 = vmul.f32 %v5364, 1.442695
        %v5422 = vpow.pop %v5421
        %v5423 = vmul.f32 %v5365, 1.442695
        %v5424 = vpow.pop %v5423
        %v5425 = vmul.f32 %v5366, 1.442695
        %v5426 = vpow.pop %v5425
        %v5427 = vmul.f32 %v5367, 1.442695
        %v5428 = vpow.pop %v5427
        %v5429 = vmul.f32 %v5368, 1.442695
        %v5430 = vpow.pop %v5429
        %v5431 = vmul.f32 %v5369, 1.442695
        %v5432 = vpow.pop %v5431
        %v5433 = vmul.f32 %v5370, 1.442695
        %v5434 = vpow.pop %v5433
        %v5435 = vld [vmem:[#allocation9] sm:$0xff]
        %v5436 = vld [vmem:[#allocation9 + $0x8] sm:$0xff]
        %v5437 = vld [vmem:[#allocation9 + $0x10] sm:$0xff]
        %v5438 = vld [vmem:[#allocation9 + $0x18] sm:$0xff]
        %v5439 = vld [vmem:[#allocation9 + $0x20] sm:$0xff]
        %v5440 = vld [vmem:[#allocation9 + $0x28] sm:$0xff]
        %v5441 = vld [vmem:[#allocation9 + $0x30] sm:$0xff]
        %v5442 = vld [vmem:[#allocation9 + $0x38] sm:$0xff]
        %v5443 = vld [vmem:[#allocation9 + $0x40] sm:$0xff]
        %v5444 = vld [vmem:[#allocation9 + $0x48] sm:$0xff]
        %v5445 = vld [vmem:[#allocation9 + $0x50] sm:$0xff]
        %v5446 = vld [vmem:[#allocation9 + $0x58] sm:$0xff]
        %v5447 = vld [vmem:[#allocation9 + $0x60] sm:$0xff]
        %v5448 = vld [vmem:[#allocation9 + $0x68] sm:$0xff]
        %v5449 = vld [vmem:[#allocation9 + $0x70] sm:$0xff]
        %v5450 = vld [vmem:[#allocation9 + $0x78] sm:$0xff]
        %v5451 = vld [vmem:[#allocation9 + $0x80] sm:$0xff]
        %v5452 = vld [vmem:[#allocation9 + $0x88] sm:$0xff]
        %v5453 = vld [vmem:[#allocation9 + $0x90] sm:$0xff]
        %v5454 = vld [vmem:[#allocation9 + $0x98] sm:$0xff]
        %v5455 = vld [vmem:[#allocation9 + $0xa0] sm:$0xff]
        %v5456 = vld [vmem:[#allocation9 + $0xa8] sm:$0xff]
        %v5457 = vld [vmem:[#allocation9 + $0xb0] sm:$0xff]
        %v5458 = vld [vmem:[#allocation9 + $0xb8] sm:$0xff]
        %v5459 = vld [vmem:[#allocation9 + $0xc0] sm:$0xff]
        %v5460 = vld [vmem:[#allocation9 + $0xc8] sm:$0xff]
        %v5461 = vld [vmem:[#allocation9 + $0xd0] sm:$0xff]
        %v5462 = vld [vmem:[#allocation9 + $0xd8] sm:$0xff]
        %v5463 = vld [vmem:[#allocation9 + $0xe0] sm:$0xff]
        %v5464 = vld [vmem:[#allocation9 + $0xe8] sm:$0xff]
        %v5465 = vld [vmem:[#allocation9 + $0xf0] sm:$0xff]
        %v5466 = vld [vmem:[#allocation9 + $0xf8] sm:$0xff]
        %v5467 = vmul.f32 %v5116, %v5435
        %v5468 = vmul.f32 %v5118, %v5436
        %v5469 = vmul.f32 %v5120, %v5437
        %v5470 = vmul.f32 %v5122, %v5438
        %v5471 = vmul.f32 %v5124, %v5439
        %v5472 = vmul.f32 %v5126, %v5440
        %v5473 = vmul.f32 %v5128, %v5441
        %v5474 = vmul.f32 %v5130, %v5442
        %v5475 = vmul.f32 %v5132, %v5443
        %v5476 = vmul.f32 %v5134, %v5444
        %v5477 = vmul.f32 %v5136, %v5445
        %v5478 = vmul.f32 %v5138, %v5446
        %v5479 = vmul.f32 %v5140, %v5447
        %v5480 = vmul.f32 %v5142, %v5448
        %v5481 = vmul.f32 %v5144, %v5449
        %v5482 = vmul.f32 %v5146, %v5450
        %v5483 = vmul.f32 %v5148, %v5451
        %v5484 = vmul.f32 %v5150, %v5452
        %v5485 = vmul.f32 %v5152, %v5453
        %v5486 = vmul.f32 %v5154, %v5454
        %v5487 = vmul.f32 %v5156, %v5455
        %v5488 = vmul.f32 %v5158, %v5456
        %v5489 = vmul.f32 %v5160, %v5457
        %v5490 = vmul.f32 %v5162, %v5458
        %v5491 = vmul.f32 %v5164, %v5459
        %v5492 = vmul.f32 %v5166, %v5460
        %v5493 = vmul.f32 %v5168, %v5461
        %v5494 = vmul.f32 %v5170, %v5462
        %v5495 = vmul.f32 %v5172, %v5463
        %v5496 = vmul.f32 %v5174, %v5464
        %v5497 = vmul.f32 %v5176, %v5465
        %v5498 = vmul.f32 %v5178, %v5466
        %v5499 = vsel %vm4954, %v5372, 0.0
        %5500 = vadd.xlane.f32.xlu0 %v5499
        %v5501 = vpop.xlane.xlu0 %5500
        %v5502 = vsel %vm4954, %v5374, 0.0
        %5503 = vadd.xlane.f32.xlu0 %v5502
        %v5504 = vpop.xlane.xlu0 %5503
        %v5505 = vsel %vm4954, %v5376, 0.0
        %5506 = vadd.xlane.f32.xlu0 %v5505
        %v5507 = vpop.xlane.xlu0 %5506
        %v5508 = vsel %vm4954, %v5378, 0.0
        %5509 = vadd.xlane.f32.xlu0 %v5508
        %v5510 = vpop.xlane.xlu0 %5509
        %v5511 = vsel %vm4954, %v5380, 0.0
        %5512 = vadd.xlane.f32.xlu0 %v5511
        %v5513 = vpop.xlane.xlu0 %5512
        %v5514 = vsel %vm4954, %v5382, 0.0
        %5515 = vadd.xlane.f32.xlu0 %v5514
        %v5516 = vpop.xlane.xlu0 %5515
        %v5517 = vsel %vm4954, %v5384, 0.0
        %5518 = vadd.xlane.f32.xlu0 %v5517
        %v5519 = vpop.xlane.xlu0 %5518
        %v5520 = vsel %vm4954, %v5386, 0.0
        %5521 = vadd.xlane.f32.xlu0 %v5520
        %v5522 = vpop.xlane.xlu0 %5521
        %v5523 = vsel %vm4954, %v5388, 0.0
        %5524 = vadd.xlane.f32.xlu0 %v5523
        %v5525 = vpop.xlane.xlu0 %5524
        %v5526 = vsel %vm4954, %v5390, 0.0
        %5527 = vadd.xlane.f32.xlu0 %v5526
        %v5528 = vpop.xlane.xlu0 %5527
        %v5529 = vsel %vm4954, %v5392, 0.0
        %5530 = vadd.xlane.f32.xlu0 %v5529
        %v5531 = vpop.xlane.xlu0 %5530
        %v5532 = vsel %vm4954, %v5394, 0.0
        %5533 = vadd.xlane.f32.xlu0 %v5532
        %v5534 = vpop.xlane.xlu0 %5533
        %v5535 = vsel %vm4954, %v5396, 0.0
        %5536 = vadd.xlane.f32.xlu0 %v5535
        %v5537 = vpop.xlane.xlu0 %5536
        %v5538 = vsel %vm4954, %v5398, 0.0
        %5539 = vadd.xlane.f32.xlu0 %v5538
        %v5540 = vpop.xlane.xlu0 %5539
        %v5541 = vsel %vm4954, %v5400, 0.0
        %5542 = vadd.xlane.f32.xlu0 %v5541
        %v5543 = vpop.xlane.xlu0 %5542
        %v5544 = vsel %vm4954, %v5402, 0.0
        %5545 = vadd.xlane.f32.xlu0 %v5544
        %v5546 = vpop.xlane.xlu0 %5545
        %v5547 = vsel %vm4954, %v5404, 0.0
        %5548 = vadd.xlane.f32.xlu0 %v5547
        %v5549 = vpop.xlane.xlu0 %5548
        %v5550 = vsel %vm4954, %v5406, 0.0
        %5551 = vadd.xlane.f32.xlu0 %v5550
        %v5552 = vpop.xlane.xlu0 %5551
        %v5553 = vsel %vm4954, %v5408, 0.0
        %5554 = vadd.xlane.f32.xlu0 %v5553
        %v5555 = vpop.xlane.xlu0 %5554
        %v5556 = vsel %vm4954, %v5410, 0.0
        %5557 = vadd.xlane.f32.xlu0 %v5556
        %v5558 = vpop.xlane.xlu0 %5557
        %v5559 = vsel %vm4954, %v5412, 0.0
        %5560 = vadd.xlane.f32.xlu0 %v5559
        %v5561 = vpop.xlane.xlu0 %5560
        %v5562 = vsel %vm4954, %v5414, 0.0
        %5563 = vadd.xlane.f32.xlu0 %v5562
        %v5564 = vpop.xlane.xlu0 %5563
        %v5565 = vsel %vm4954, %v5416, 0.0
        %5566 = vadd.xlane.f32.xlu0 %v5565
        %v5567 = vpop.xlane.xlu0 %5566
        %v5568 = vsel %vm4954, %v5418, 0.0
        %5569 = vadd.xlane.f32.xlu0 %v5568
        %v5570 = vpop.xlane.xlu0 %5569
        %v5571 = vsel %vm4954, %v5420, 0.0
        %5572 = vadd.xlane.f32.xlu0 %v5571
        %v5573 = vpop.xlane.xlu0 %5572
        %v5574 = vsel %vm4954, %v5422, 0.0
        %5575 = vadd.xlane.f32.xlu0 %v5574
        %v5576 = vpop.xlane.xlu0 %5575
        %v5577 = vsel %vm4954, %v5424, 0.0
        %5578 = vadd.xlane.f32.xlu0 %v5577
        %v5579 = vpop.xlane.xlu0 %5578
        %v5580 = vsel %vm4954, %v5426, 0.0
        %5581 = vadd.xlane.f32.xlu0 %v5580
        %v5582 = vpop.xlane.xlu0 %5581
        %v5583 = vsel %vm4954, %v5428, 0.0
        %5584 = vadd.xlane.f32.xlu0 %v5583
        %v5585 = vpop.xlane.xlu0 %5584
        %v5586 = vsel %vm4954, %v5430, 0.0
        %5587 = vadd.xlane.f32.xlu0 %v5586
        %v5588 = vpop.xlane.xlu0 %5587
        %v5589 = vsel %vm4954, %v5432, 0.0
        %5590 = vadd.xlane.f32.xlu0 %v5589
        %v5591 = vpop.xlane.xlu0 %5590
        %v5592 = vsel %vm4954, %v5434, 0.0
        %5593 = vadd.xlane.f32.xlu0 %v5592
        %v5594 = vpop.xlane.xlu0 %5593
        %v5595 = vadd.f32 %v5467, %v5501
        %v5596 = vadd.f32 %v5468, %v5504
        %v5597 = vadd.f32 %v5469, %v5507
        %v5598 = vadd.f32 %v5470, %v5510
        %v5599 = vadd.f32 %v5471, %v5513
        %v5600 = vadd.f32 %v5472, %v5516
        %v5601 = vadd.f32 %v5473, %v5519
        %v5602 = vadd.f32 %v5474, %v5522
        %v5603 = vadd.f32 %v5475, %v5525
        %v5604 = vadd.f32 %v5476, %v5528
        %v5605 = vadd.f32 %v5477, %v5531
        %v5606 = vadd.f32 %v5478, %v5534
        %v5607 = vadd.f32 %v5479, %v5537
        %v5608 = vadd.f32 %v5480, %v5540
        %v5609 = vadd.f32 %v5481, %v5543
        %v5610 = vadd.f32 %v5482, %v5546
        %v5611 = vadd.f32 %v5483, %v5549
        %v5612 = vadd.f32 %v5484, %v5552
        %v5613 = vadd.f32 %v5485, %v5555
        %v5614 = vadd.f32 %v5486, %v5558
        %v5615 = vadd.f32 %v5487, %v5561
        %v5616 = vadd.f32 %v5488, %v5564
        %v5617 = vadd.f32 %v5489, %v5567
        %v5618 = vadd.f32 %v5490, %v5570
        %v5619 = vadd.f32 %v5491, %v5573
        %v5620 = vadd.f32 %v5492, %v5576
        %v5621 = vadd.f32 %v5493, %v5579
        %v5622 = vadd.f32 %v5494, %v5582
        %v5623 = vadd.f32 %v5495, %v5585
        %v5624 = vadd.f32 %v5496, %v5588
        %v5625 = vadd.f32 %v5497, %v5591
        %v5626 = vadd.f32 %v5498, %v5594
        %vm5627 = vcmask 7168
        %5628 = vst.msk [vmem:[#allocation9] sm:$0xff] %vm5627, %v5595
        %5629 = vst.msk [vmem:[#allocation9 + $0x8] sm:$0xff] %vm5627, %v5596
        %5630 = vst.msk [vmem:[#allocation9 + $0x10] sm:$0xff] %vm5627, %v5597
        %5631 = vst.msk [vmem:[#allocation9 + $0x18] sm:$0xff] %vm5627, %v5598
        %5632 = vst.msk [vmem:[#allocation9 + $0x20] sm:$0xff] %vm5627, %v5599
        %5633 = vst.msk [vmem:[#allocation9 + $0x28] sm:$0xff] %vm5627, %v5600
        %5634 = vst.msk [vmem:[#allocation9 + $0x30] sm:$0xff] %vm5627, %v5601
        %5635 = vst.msk [vmem:[#allocation9 + $0x38] sm:$0xff] %vm5627, %v5602
        %5636 = vst.msk [vmem:[#allocation9 + $0x40] sm:$0xff] %vm5627, %v5603
        %5637 = vst.msk [vmem:[#allocation9 + $0x48] sm:$0xff] %vm5627, %v5604
        %5638 = vst.msk [vmem:[#allocation9 + $0x50] sm:$0xff] %vm5627, %v5605
        %5639 = vst.msk [vmem:[#allocation9 + $0x58] sm:$0xff] %vm5627, %v5606
        %5640 = vst.msk [vmem:[#allocation9 + $0x60] sm:$0xff] %vm5627, %v5607
        %5641 = vst.msk [vmem:[#allocation9 + $0x68] sm:$0xff] %vm5627, %v5608
        %5642 = vst.msk [vmem:[#allocation9 + $0x70] sm:$0xff] %vm5627, %v5609
        %5643 = vst.msk [vmem:[#allocation9 + $0x78] sm:$0xff] %vm5627, %v5610
        %5644 = vst.msk [vmem:[#allocation9 + $0x80] sm:$0xff] %vm5627, %v5611
        %5645 = vst.msk [vmem:[#allocation9 + $0x88] sm:$0xff] %vm5627, %v5612
        %5646 = vst.msk [vmem:[#allocation9 + $0x90] sm:$0xff] %vm5627, %v5613
        %5647 = vst.msk [vmem:[#allocation9 + $0x98] sm:$0xff] %vm5627, %v5614
        %5648 = vst.msk [vmem:[#allocation9 + $0xa0] sm:$0xff] %vm5627, %v5615
        %5649 = vst.msk [vmem:[#allocation9 + $0xa8] sm:$0xff] %vm5627, %v5616
        %5650 = vst.msk [vmem:[#allocation9 + $0xb0] sm:$0xff] %vm5627, %v5617
        %5651 = vst.msk [vmem:[#allocation9 + $0xb8] sm:$0xff] %vm5627, %v5618
        %5652 = vst.msk [vmem:[#allocation9 + $0xc0] sm:$0xff] %vm5627, %v5619
        %5653 = vst.msk [vmem:[#allocation9 + $0xc8] sm:$0xff] %vm5627, %v5620
        %5654 = vst.msk [vmem:[#allocation9 + $0xd0] sm:$0xff] %vm5627, %v5621
        %5655 = vst.msk [vmem:[#allocation9 + $0xd8] sm:$0xff] %vm5627, %v5622
        %5656 = vst.msk [vmem:[#allocation9 + $0xe0] sm:$0xff] %vm5627, %v5623
        %5657 = vst.msk [vmem:[#allocation9 + $0xe8] sm:$0xff] %vm5627, %v5624
        %5658 = vst.msk [vmem:[#allocation9 + $0xf0] sm:$0xff] %vm5627, %v5625
        %5659 = vst.msk [vmem:[#allocation9 + $0xf8] sm:$0xff] %vm5627, %v5626
        %v5660 = vld [vmem:[#allocation10] sm:$0xff]
        %v5661 = vld [vmem:[#allocation10 + $0x8] sm:$0xff]
        %v5662 = vld [vmem:[#allocation10 + $0x10] sm:$0xff]
        %v5663 = vld [vmem:[#allocation10 + $0x18] sm:$0xff]
        %v5664 = vld [vmem:[#allocation10 + $0x20] sm:$0xff]
        %v5665 = vld [vmem:[#allocation10 + $0x28] sm:$0xff]
        %v5666 = vld [vmem:[#allocation10 + $0x30] sm:$0xff]
        %v5667 = vld [vmem:[#allocation10 + $0x38] sm:$0xff]
        %v5668 = vld [vmem:[#allocation10 + $0x40] sm:$0xff]
        %v5669 = vld [vmem:[#allocation10 + $0x48] sm:$0xff]
        %v5670 = vld [vmem:[#allocation10 + $0x50] sm:$0xff]
        %v5671 = vld [vmem:[#allocation10 + $0x58] sm:$0xff]
        %v5672 = vld [vmem:[#allocation10 + $0x60] sm:$0xff]
        %v5673 = vld [vmem:[#allocation10 + $0x68] sm:$0xff]
        %v5674 = vld [vmem:[#allocation10 + $0x70] sm:$0xff]
        %v5675 = vld [vmem:[#allocation10 + $0x78] sm:$0xff]
        %v5676 = vld [vmem:[#allocation10 + $0x80] sm:$0xff]
        %v5677 = vld [vmem:[#allocation10 + $0x88] sm:$0xff]
        %v5678 = vld [vmem:[#allocation10 + $0x90] sm:$0xff]
        %v5679 = vld [vmem:[#allocation10 + $0x98] sm:$0xff]
        %v5680 = vld [vmem:[#allocation10 + $0xa0] sm:$0xff]
        %v5681 = vld [vmem:[#allocation10 + $0xa8] sm:$0xff]
        %v5682 = vld [vmem:[#allocation10 + $0xb0] sm:$0xff]
        %v5683 = vld [vmem:[#allocation10 + $0xb8] sm:$0xff]
        %v5684 = vld [vmem:[#allocation10 + $0xc0] sm:$0xff]
        %v5685 = vld [vmem:[#allocation10 + $0xc8] sm:$0xff]
        %v5686 = vld [vmem:[#allocation10 + $0xd0] sm:$0xff]
        %v5687 = vld [vmem:[#allocation10 + $0xd8] sm:$0xff]
        %v5688 = vld [vmem:[#allocation10 + $0xe0] sm:$0xff]
        %v5689 = vld [vmem:[#allocation10 + $0xe8] sm:$0xff]
        %v5690 = vld [vmem:[#allocation10 + $0xf0] sm:$0xff]
        %v5691 = vld [vmem:[#allocation10 + $0xf8] sm:$0xff]
        %5693 = vset.pattern.permute.xlu0 0
        %5694 = vperm.xlu0 %5693, %v5116
        %v5695 = vpop.permute.xlu0 %5694
        %5698 = vset.pattern.permute.xlu0 0
        %5699 = vperm.xlu0 %5698, %v5118
        %v5700 = vpop.permute.xlu0 %5699
        %5703 = vset.pattern.permute.xlu0 0
        %5704 = vperm.xlu0 %5703, %v5120
        %v5705 = vpop.permute.xlu0 %5704
        %5708 = vset.pattern.permute.xlu0 0
        %5709 = vperm.xlu0 %5708, %v5122
        %v5710 = vpop.permute.xlu0 %5709
        %5713 = vset.pattern.permute.xlu0 0
        %5714 = vperm.xlu0 %5713, %v5124
        %v5715 = vpop.permute.xlu0 %5714
        %5718 = vset.pattern.permute.xlu0 0
        %5719 = vperm.xlu0 %5718, %v5126
        %v5720 = vpop.permute.xlu0 %5719
        %5723 = vset.pattern.permute.xlu0 0
        %5724 = vperm.xlu0 %5723, %v5128
        %v5725 = vpop.permute.xlu0 %5724
        %5728 = vset.pattern.permute.xlu0 0
        %5729 = vperm.xlu0 %5728, %v5130
        %v5730 = vpop.permute.xlu0 %5729
        %5733 = vset.pattern.permute.xlu0 0
        %5734 = vperm.xlu0 %5733, %v5132
        %v5735 = vpop.permute.xlu0 %5734
        %5738 = vset.pattern.permute.xlu0 0
        %5739 = vperm.xlu0 %5738, %v5134
        %v5740 = vpop.permute.xlu0 %5739
        %5743 = vset.pattern.permute.xlu0 0
        %5744 = vperm.xlu0 %5743, %v5136
        %v5745 = vpop.permute.xlu0 %5744
        %5748 = vset.pattern.permute.xlu0 0
        %5749 = vperm.xlu0 %5748, %v5138
        %v5750 = vpop.permute.xlu0 %5749
        %5753 = vset.pattern.permute.xlu0 0
        %5754 = vperm.xlu0 %5753, %v5140
        %v5755 = vpop.permute.xlu0 %5754
        %5758 = vset.pattern.permute.xlu0 0
        %5759 = vperm.xlu0 %5758, %v5142
        %v5760 = vpop.permute.xlu0 %5759
        %5763 = vset.pattern.permute.xlu0 0
        %5764 = vperm.xlu0 %5763, %v5144
        %v5765 = vpop.permute.xlu0 %5764
        %5768 = vset.pattern.permute.xlu0 0
        %5769 = vperm.xlu0 %5768, %v5146
        %v5770 = vpop.permute.xlu0 %5769
        %5773 = vset.pattern.permute.xlu0 0
        %5774 = vperm.xlu0 %5773, %v5148
        %v5775 = vpop.permute.xlu0 %5774
        %5778 = vset.pattern.permute.xlu0 0
        %5779 = vperm.xlu0 %5778, %v5150
        %v5780 = vpop.permute.xlu0 %5779
        %5783 = vset.pattern.permute.xlu0 0
        %5784 = vperm.xlu0 %5783, %v5152
        %v5785 = vpop.permute.xlu0 %5784
        %5788 = vset.pattern.permute.xlu0 0
        %5789 = vperm.xlu0 %5788, %v5154
        %v5790 = vpop.permute.xlu0 %5789
        %5793 = vset.pattern.permute.xlu0 0
        %5794 = vperm.xlu0 %5793, %v5156
        %v5795 = vpop.permute.xlu0 %5794
        %5798 = vset.pattern.permute.xlu0 0
        %5799 = vperm.xlu0 %5798, %v5158
        %v5800 = vpop.permute.xlu0 %5799
        %5803 = vset.pattern.permute.xlu0 0
        %5804 = vperm.xlu0 %5803, %v5160
        %v5805 = vpop.permute.xlu0 %5804
        %5808 = vset.pattern.permute.xlu0 0
        %5809 = vperm.xlu0 %5808, %v5162
        %v5810 = vpop.permute.xlu0 %5809
        %5813 = vset.pattern.permute.xlu0 0
        %5814 = vperm.xlu0 %5813, %v5164
        %v5815 = vpop.permute.xlu0 %5814
        %5818 = vset.pattern.permute.xlu0 0
        %5819 = vperm.xlu0 %5818, %v5166
        %v5820 = vpop.permute.xlu0 %5819
        %5823 = vset.pattern.permute.xlu0 0
        %5824 = vperm.xlu0 %5823, %v5168
        %v5825 = vpop.permute.xlu0 %5824
        %5828 = vset.pattern.permute.xlu0 0
        %5829 = vperm.xlu0 %5828, %v5170
        %v5830 = vpop.permute.xlu0 %5829
        %5833 = vset.pattern.permute.xlu0 0
        %5834 = vperm.xlu0 %5833, %v5172
        %v5835 = vpop.permute.xlu0 %5834
        %5838 = vset.pattern.permute.xlu0 0
        %5839 = vperm.xlu0 %5838, %v5174
        %v5840 = vpop.permute.xlu0 %5839
        %5843 = vset.pattern.permute.xlu0 0
        %5844 = vperm.xlu0 %5843, %v5176
        %v5845 = vpop.permute.xlu0 %5844
        %5848 = vset.pattern.permute.xlu0 0
        %5849 = vperm.xlu0 %5848, %v5178
        %v5850 = vpop.permute.xlu0 %5849
        %v5852 = vmul.f32 %v5695, %v5660
        %v5853 = vmul.f32 %v5700, %v5661
        %v5854 = vmul.f32 %v5705, %v5662
        %v5855 = vmul.f32 %v5710, %v5663
        %v5856 = vmul.f32 %v5715, %v5664
        %v5857 = vmul.f32 %v5720, %v5665
        %v5858 = vmul.f32 %v5725, %v5666
        %v5859 = vmul.f32 %v5730, %v5667
        %v5860 = vmul.f32 %v5735, %v5668
        %v5861 = vmul.f32 %v5740, %v5669
        %v5862 = vmul.f32 %v5745, %v5670
        %v5863 = vmul.f32 %v5750, %v5671
        %v5864 = vmul.f32 %v5755, %v5672
        %v5865 = vmul.f32 %v5760, %v5673
        %v5866 = vmul.f32 %v5765, %v5674
        %v5867 = vmul.f32 %v5770, %v5675
        %v5868 = vmul.f32 %v5775, %v5676
        %v5869 = vmul.f32 %v5780, %v5677
        %v5870 = vmul.f32 %v5785, %v5678
        %v5871 = vmul.f32 %v5790, %v5679
        %v5872 = vmul.f32 %v5795, %v5680
        %v5873 = vmul.f32 %v5800, %v5681
        %v5874 = vmul.f32 %v5805, %v5682
        %v5875 = vmul.f32 %v5810, %v5683
        %v5876 = vmul.f32 %v5815, %v5684
        %v5877 = vmul.f32 %v5820, %v5685
        %v5878 = vmul.f32 %v5825, %v5686
        %v5879 = vmul.f32 %v5830, %v5687
        %v5880 = vmul.f32 %v5835, %v5688
        %v5881 = vmul.f32 %v5840, %v5689
        %v5882 = vmul.f32 %v5845, %v5690
        %v5883 = vmul.f32 %v5850, %v5691
        %v5884 = vpack.c.bf16 %v5372, %v5372
        %v5885 = vpack.c.bf16 %v5374, %v5374
        %v5886 = vpack.c.bf16 %v5376, %v5376
        %v5887 = vpack.c.bf16 %v5378, %v5378
        %v5888 = vpack.c.bf16 %v5380, %v5380
        %v5889 = vpack.c.bf16 %v5382, %v5382
        %v5890 = vpack.c.bf16 %v5384, %v5384
        %v5891 = vpack.c.bf16 %v5386, %v5386
        %v5892 = vpack.c.bf16 %v5388, %v5388
        %v5893 = vpack.c.bf16 %v5390, %v5390
        %v5894 = vpack.c.bf16 %v5392, %v5392
        %v5895 = vpack.c.bf16 %v5394, %v5394
        %v5896 = vpack.c.bf16 %v5396, %v5396
        %v5897 = vpack.c.bf16 %v5398, %v5398
        %v5898 = vpack.c.bf16 %v5400, %v5400
        %v5899 = vpack.c.bf16 %v5402, %v5402
        %v5900 = vpack.c.bf16 %v5404, %v5404
        %v5901 = vpack.c.bf16 %v5406, %v5406
        %v5902 = vpack.c.bf16 %v5408, %v5408
        %v5903 = vpack.c.bf16 %v5410, %v5410
        %v5904 = vpack.c.bf16 %v5412, %v5412
        %v5905 = vpack.c.bf16 %v5414, %v5414
        %v5906 = vpack.c.bf16 %v5416, %v5416
        %v5907 = vpack.c.bf16 %v5418, %v5418
        %v5908 = vpack.c.bf16 %v5420, %v5420
        %v5909 = vpack.c.bf16 %v5422, %v5422
        %v5910 = vpack.c.bf16 %v5424, %v5424
        %v5911 = vpack.c.bf16 %v5426, %v5426
        %v5912 = vpack.c.bf16 %v5428, %v5428
        %v5913 = vpack.c.bf16 %v5430, %v5430
        %v5914 = vpack.c.bf16 %v5432, %v5432
        %v5915 = vpack.c.bf16 %v5434, %v5434
        %v5916 = vld [vmem:[#allocation7] sm:$0xf]
        %v5917 = vld [vmem:[#allocation7 + $0x4] sm:$0xf]
        %v5918 = vld [vmem:[#allocation7 + $0x8] sm:$0xf]
        %v5919 = vld [vmem:[#allocation7 + $0xc] sm:$0xf]
        %v5920 = vld [vmem:[#allocation7 + $0x10] sm:$0xf]
        %v5921 = vld [vmem:[#allocation7 + $0x14] sm:$0xf]
        %v5922 = vld [vmem:[#allocation7 + $0x18] sm:$0xf]
        %v5923 = vld [vmem:[#allocation7 + $0x1c] sm:$0xf]
        %v5924 = vld [vmem:[#allocation7 + $0x20] sm:$0xf]
        %v5925 = vld [vmem:[#allocation7 + $0x24] sm:$0xf]
        %v5926 = vld [vmem:[#allocation7 + $0x28] sm:$0xf]
        %v5927 = vld [vmem:[#allocation7 + $0x2c] sm:$0xf]
        %v5928 = vld [vmem:[#allocation7 + $0x30] sm:$0xf]
        %v5929 = vld [vmem:[#allocation7 + $0x34] sm:$0xf]
        %v5930 = vld [vmem:[#allocation7 + $0x38] sm:$0xf]
        %v5931 = vld [vmem:[#allocation7 + $0x3c] sm:$0xf]
        %v5932 = vld [vmem:[#allocation7 + $0x40] sm:$0xf]
        %v5933 = vld [vmem:[#allocation7 + $0x44] sm:$0xf]
        %v5934 = vld [vmem:[#allocation7 + $0x48] sm:$0xf]
        %v5935 = vld [vmem:[#allocation7 + $0x4c] sm:$0xf]
        %v5936 = vld [vmem:[#allocation7 + $0x50] sm:$0xf]
        %v5937 = vld [vmem:[#allocation7 + $0x54] sm:$0xf]
        %v5938 = vld [vmem:[#allocation7 + $0x58] sm:$0xf]
        %v5939 = vld [vmem:[#allocation7 + $0x5c] sm:$0xf]
        %v5940 = vld [vmem:[#allocation7 + $0x60] sm:$0xf]
        %v5941 = vld [vmem:[#allocation7 + $0x64] sm:$0xf]
        %v5942 = vld [vmem:[#allocation7 + $0x68] sm:$0xf]
        %v5943 = vld [vmem:[#allocation7 + $0x6c] sm:$0xf]
        %v5944 = vld [vmem:[#allocation7 + $0x70] sm:$0xf]
        %v5945 = vld [vmem:[#allocation7 + $0x74] sm:$0xf]
        %v5946 = vld [vmem:[#allocation7 + $0x78] sm:$0xf]
        %v5947 = vld [vmem:[#allocation7 + $0x7c] sm:$0xf]
        %v5949 = vsel %vm4954, %v5884, 0
        %vm5951 = vcmask 1043456
        %v5953 = vsel %vm5951, %v5916, 0
        %5955 = vmatprep.subr.bf16.mxu0 0
        %5956 = vmatpush1.bf16.msra.mxu0 %v5953
        %5957 = vmatprep.subr.bf16.mxu0 0
        %5958 = vmatpush1.bf16.msra.mxu0 0
        %5959 = vmatprep.subr.bf16.mxu0 0
        %5960 = vmatpush1.bf16.msra.mxu0 0
        %5961 = vmatprep.subr.bf16.mxu0 0
        %5962 = vmatpush1.bf16.msra.mxu0 0
        %5963 = vmatprep.subr.bf16.mxu0 0
        %5964 = vmatpush1.bf16.msra.mxu0 0
        %5965 = vmatprep.subr.bf16.mxu0 0
        %5966 = vmatpush1.bf16.msra.mxu0 0
        %5967 = vmatprep.subr.bf16.mxu0 0
        %5968 = vmatpush1.bf16.msra.mxu0 0
        %5969 = vmatprep.subr.bf16.mxu0 0
        %5970 = vmatpush1.bf16.msra.mxu0 0
        %5971 = vmatprep.subr.bf16.mxu0 0
        %5972 = vmatpush1.bf16.msra.mxu0 0
        %5973 = vmatprep.subr.bf16.mxu0 0
        %5974 = vmatpush1.bf16.msra.mxu0 0
        %5975 = vmatprep.subr.bf16.mxu0 0
        %5976 = vmatpush1.bf16.msra.mxu0 0
        %5977 = vmatprep.subr.bf16.mxu0 0
        %5978 = vmatpush1.bf16.msra.mxu0 0
        %5979 = vmatprep.subr.bf16.mxu0 0
        %5980 = vmatpush1.bf16.msra.mxu0 0
        %5981 = vmatprep.subr.bf16.mxu0 0
        %5982 = vmatpush1.bf16.msra.mxu0 0
        %5983 = vmatprep.subr.bf16.mxu0 0
        %5984 = vmatpush1.bf16.msra.mxu0 0
        %5985 = vmatprep.subr.bf16.mxu0 0
        %5986 = vmatpush1.bf16.msra.mxu0 0
        %5987 = vmatprep.mubr.bf16.mxu0 0
        %5988 = vmatmul.mubr.bf16.gmra.mrb[0].mxu0 %v5949
        %v5989 = vpop.f32.mrb[0].mxu0
        %v5990 = vadd.f32 0.0, %v5989
        %v5991 = vpop.f32.mrb[0].mxu0
        %v5992 = vpop.f32.mrb[0].mxu0
        %v5993 = vpop.f32.mrb[0].mxu0
        %5994 = vdwg.mxu0
        %v5996 = vsel %vm4954, %v5885, 0
        %v5999 = vsel %vm5951, %v5917, 0
        %6001 = vmatprep.subr.bf16.mxu0 0
        %6002 = vmatpush1.bf16.msra.mxu0 %v5999
        %6003 = vmatprep.subr.bf16.mxu0 0
        %6004 = vmatpush1.bf16.msra.mxu0 0
        %6005 = vmatprep.subr.bf16.mxu0 0
        %6006 = vmatpush1.bf16.msra.mxu0 0
        %6007 = vmatprep.subr.bf16.mxu0 0
        %6008 = vmatpush1.bf16.msra.mxu0 0
        %6009 = vmatprep.subr.bf16.mxu0 0
        %6010 = vmatpush1.bf16.msra.mxu0 0
        %6011 = vmatprep.subr.bf16.mxu0 0
        %6012 = vmatpush1.bf16.msra.mxu0 0
        %6013 = vmatprep.subr.bf16.mxu0 0
        %6014 = vmatpush1.bf16.msra.mxu0 0
        %6015 = vmatprep.subr.bf16.mxu0 0
        %6016 = vmatpush1.bf16.msra.mxu0 0
        %6017 = vmatprep.subr.bf16.mxu0 0
        %6018 = vmatpush1.bf16.msra.mxu0 0
        %6019 = vmatprep.subr.bf16.mxu0 0
        %6020 = vmatpush1.bf16.msra.mxu0 0
        %6021 = vmatprep.subr.bf16.mxu0 0
        %6022 = vmatpush1.bf16.msra.mxu0 0
        %6023 = vmatprep.subr.bf16.mxu0 0
        %6024 = vmatpush1.bf16.msra.mxu0 0
        %6025 = vmatprep.subr.bf16.mxu0 0
        %6026 = vmatpush1.bf16.msra.mxu0 0
        %6027 = vmatprep.subr.bf16.mxu0 0
        %6028 = vmatpush1.bf16.msra.mxu0 0
        %6029 = vmatprep.subr.bf16.mxu0 0
        %6030 = vmatpush1.bf16.msra.mxu0 0
        %6031 = vmatprep.subr.bf16.mxu0 0
        %6032 = vmatpush1.bf16.msra.mxu0 0
        %6033 = vmatprep.mubr.bf16.mxu0 0
        %6034 = vmatmul.mubr.bf16.gmra.mrb[0].mxu0 %v5996
        %v6035 = vpop.f32.mrb[0].mxu0
        %v6036 = vadd.f32 0.0, %v6035
        %v6037 = vpop.f32.mrb[0].mxu0
        %v6038 = vpop.f32.mrb[0].mxu0
        %v6039 = vpop.f32.mrb[0].mxu0
        %6040 = vdwg.mxu0
        %v6042 = vsel %vm4954, %v5886, 0
        %v6045 = vsel %vm5951, %v5918, 0
        %6047 = vmatprep.subr.bf16.mxu0 0
        %6048 = vmatpush1.bf16.msra.mxu0 %v6045
        %6049 = vmatprep.subr.bf16.mxu0 0
        %6050 = vmatpush1.bf16.msra.mxu0 0
        %6051 = vmatprep.subr.bf16.mxu0 0
        %6052 = vmatpush1.bf16.msra.mxu0 0
        %6053 = vmatprep.subr.bf16.mxu0 0
        %6054 = vmatpush1.bf16.msra.mxu0 0
        %6055 = vmatprep.subr.bf16.mxu0 0
        %6056 = vmatpush1.bf16.msra.mxu0 0
        %6057 = vmatprep.subr.bf16.mxu0 0
        %6058 = vmatpush1.bf16.msra.mxu0 0
        %6059 = vmatprep.subr.bf16.mxu0 0
        %6060 = vmatpush1.bf16.msra.mxu0 0
        %6061 = vmatprep.subr.bf16.mxu0 0
        %6062 = vmatpush1.bf16.msra.mxu0 0
        %6063 = vmatprep.subr.bf16.mxu0 0
        %6064 = vmatpush1.bf16.msra.mxu0 0
        %6065 = vmatprep.subr.bf16.mxu0 0
        %6066 = vmatpush1.bf16.msra.mxu0 0
        %6067 = vmatprep.subr.bf16.mxu0 0
        %6068 = vmatpush1.bf16.msra.mxu0 0
        %6069 = vmatprep.subr.bf16.mxu0 0
        %6070 = vmatpush1.bf16.msra.mxu0 0
        %6071 = vmatprep.subr.bf16.mxu0 0
        %6072 = vmatpush1.bf16.msra.mxu0 0
        %6073 = vmatprep.subr.bf16.mxu0 0
        %6074 = vmatpush1.bf16.msra.mxu0 0
        %6075 = vmatprep.subr.bf16.mxu0 0
        %6076 = vmatpush1.bf16.msra.mxu0 0
        %6077 = vmatprep.subr.bf16.mxu0 0
        %6078 = vmatpush1.bf16.msra.mxu0 0
        %6079 = vmatprep.mubr.bf16.mxu0 0
        %6080 = vmatmul.mubr.bf16.gmra.mrb[0].mxu0 %v6042
        %v6081 = vpop.f32.mrb[0].mxu0
        %v6082 = vadd.f32 0.0, %v6081
        %v6083 = vpop.f32.mrb[0].mxu0
        %v6084 = vpop.f32.mrb[0].mxu0
        %v6085 = vpop.f32.mrb[0].mxu0
        %6086 = vdwg.mxu0
        %v6088 = vsel %vm4954, %v5887, 0
        %v6091 = vsel %vm5951, %v5919, 0
        %6093 = vmatprep.subr.bf16.mxu0 0
        %6094 = vmatpush1.bf16.msra.mxu0 %v6091
        %6095 = vmatprep.subr.bf16.mxu0 0
        %6096 = vmatpush1.bf16.msra.mxu0 0
        %6097 = vmatprep.subr.bf16.mxu0 0
        %6098 = vmatpush1.bf16.msra.mxu0 0
        %6099 = vmatprep.subr.bf16.mxu0 0
        %6100 = vmatpush1.bf16.msra.mxu0 0
        %6101 = vmatprep.subr.bf16.mxu0 0
        %6102 = vmatpush1.bf16.msra.mxu0 0
        %6103 = vmatprep.subr.bf16.mxu0 0
        %6104 = vmatpush1.bf16.msra.mxu0 0
        %6105 = vmatprep.subr.bf16.mxu0 0
        %6106 = vmatpush1.bf16.msra.mxu0 0
        %6107 = vmatprep.subr.bf16.mxu0 0
        %6108 = vmatpush1.bf16.msra.mxu0 0
        %6109 = vmatprep.subr.bf16.mxu0 0
        %6110 = vmatpush1.bf16.msra.mxu0 0
        %6111 = vmatprep.subr.bf16.mxu0 0
        %6112 = vmatpush1.bf16.msra.mxu0 0
        %6113 = vmatprep.subr.bf16.mxu0 0
        %6114 = vmatpush1.bf16.msra.mxu0 0
        %6115 = vmatprep.subr.bf16.mxu0 0
        %6116 = vmatpush1.bf16.msra.mxu0 0
        %6117 = vmatprep.subr.bf16.mxu0 0
        %6118 = vmatpush1.bf16.msra.mxu0 0
        %6119 = vmatprep.subr.bf16.mxu0 0
        %6120 = vmatpush1.bf16.msra.mxu0 0
        %6121 = vmatprep.subr.bf16.mxu0 0
        %6122 = vmatpush1.bf16.msra.mxu0 0
        %6123 = vmatprep.subr.bf16.mxu0 0
        %6124 = vmatpush1.bf16.msra.mxu0 0
        %6125 = vmatprep.mubr.bf16.mxu0 0
        %6126 = vmatmul.mubr.bf16.gmra.mrb[0].mxu0 %v6088
        %v6127 = vpop.f32.mrb[0].mxu0
        %v6128 = vadd.f32 0.0, %v6127
        %v6129 = vpop.f32.mrb[0].mxu0
        %v6130 = vpop.f32.mrb[0].mxu0
        %v6131 = vpop.f32.mrb[0].mxu0
        %6132 = vdwg.mxu0
        %v6134 = vsel %vm4954, %v5888, 0
        %v6137 = vsel %vm5951, %v5920, 0
        %6139 = vmatprep.subr.bf16.mxu0 0
        %6140 = vmatpush1.bf16.msra.mxu0 %v6137
        %6141 = vmatprep.subr.bf16.mxu0 0
        %6142 = vmatpush1.bf16.msra.mxu0 0
        %6143 = vmatprep.subr.bf16.mxu0 0
        %6144 = vmatpush1.bf16.msra.mxu0 0
        %6145 = vmatprep.subr.bf16.mxu0 0
        %6146 = vmatpush1.bf16.msra.mxu0 0
        %6147 = vmatprep.subr.bf16.mxu0 0
        %6148 = vmatpush1.bf16.msra.mxu0 0
        %6149 = vmatprep.subr.bf16.mxu0 0
        %6150 = vmatpush1.bf16.msra.mxu0 0
        %6151 = vmatprep.subr.bf16.mxu0 0
        %6152 = vmatpush1.bf16.msra.mxu0 0
        %6153 = vmatprep.subr.bf16.mxu0 0
        %6154 = vmatpush1.bf16.msra.mxu0 0
        %6155 = vmatprep.subr.bf16.mxu0 0
        %6156 = vmatpush1.bf16.msra.mxu0 0
        %6157 = vmatprep.subr.bf16.mxu0 0
        %6158 = vmatpush1.bf16.msra.mxu0 0
        %6159 = vmatprep.subr.bf16.mxu0 0
        %6160 = vmatpush1.bf16.msra.mxu0 0
        %6161 = vmatprep.subr.bf16.mxu0 0
        %6162 = vmatpush1.bf16.msra.mxu0 0
        %6163 = vmatprep.subr.bf16.mxu0 0
        %6164 = vmatpush1.bf16.msra.mxu0 0
        %6165 = vmatprep.subr.bf16.mxu0 0
        %6166 = vmatpush1.bf16.msra.mxu0 0
        %6167 = vmatprep.subr.bf16.mxu0 0
        %6168 = vmatpush1.bf16.msra.mxu0 0
        %6169 = vmatprep.subr.bf16.mxu0 0
        %6170 = vmatpush1.bf16.msra.mxu0 0
        %6171 = vmatprep.mubr.bf16.mxu0 0
        %6172 = vmatmul.mubr.bf16.gmra.mrb[0].mxu0 %v6134
        %v6173 = vpop.f32.mrb[0].mxu0
        %v6174 = vadd.f32 0.0, %v6173
        %v6175 = vpop.f32.mrb[0].mxu0
        %v6176 = vpop.f32.mrb[0].mxu0
        %v6177 = vpop.f32.mrb[0].mxu0
        %6178 = vdwg.mxu0
        %v6180 = vsel %vm4954, %v5889, 0
        %v6183 = vsel %vm5951, %v5921, 0
        %6185 = vmatprep.subr.bf16.mxu0 0
        %6186 = vmatpush1.bf16.msra.mxu0 %v6183
        %6187 = vmatprep.subr.bf16.mxu0 0
        %6188 = vmatpush1.bf16.msra.mxu0 0
        %6189 = vmatprep.subr.bf16.mxu0 0
        %6190 = vmatpush1.bf16.msra.mxu0 0
        %6191 = vmatprep.subr.bf16.mxu0 0
        %6192 = vmatpush1.bf16.msra.mxu0 0
        %6193 = vmatprep.subr.bf16.mxu0 0
        %6194 = vmatpush1.bf16.msra.mxu0 0
        %6195 = vmatprep.subr.bf16.mxu0 0
        %6196 = vmatpush1.bf16.msra.mxu0 0
        %6197 = vmatprep.subr.bf16.mxu0 0
        %6198 = vmatpush1.bf16.msra.mxu0 0
        %6199 = vmatprep.subr.bf16.mxu0 0
        %6200 = vmatpush1.bf16.msra.mxu0 0
        %6201 = vmatprep.subr.bf16.mxu0 0
        %6202 = vmatpush1.bf16.msra.mxu0 0
        %6203 = vmatprep.subr.bf16.mxu0 0
        %6204 = vmatpush1.bf16.msra.mxu0 0
        %6205 = vmatprep.subr.bf16.mxu0 0
        %6206 = vmatpush1.bf16.msra.mxu0 0
        %6207 = vmatprep.subr.bf16.mxu0 0
        %6208 = vmatpush1.bf16.msra.mxu0 0
        %6209 = vmatprep.subr.bf16.mxu0 0
        %6210 = vmatpush1.bf16.msra.mxu0 0
        %6211 = vmatprep.subr.bf16.mxu0 0
        %6212 = vmatpush1.bf16.msra.mxu0 0
        %6213 = vmatprep.subr.bf16.mxu0 0
        %6214 = vmatpush1.bf16.msra.mxu0 0
        %6215 = vmatprep.subr.bf16.mxu0 0
        %6216 = vmatpush1.bf16.msra.mxu0 0
        %6217 = vmatprep.mubr.bf16.mxu0 0
        %6218 = vmatmul.mubr.bf16.gmra.mrb[0].mxu0 %v6180
        %v6219 = vpop.f32.mrb[0].mxu0
        %v6220 = vadd.f32 0.0, %v6219
        %v6221 = vpop.f32.mrb[0].mxu0
        %v6222 = vpop.f32.mrb[0].mxu0
        %v6223 = vpop.f32.mrb[0].mxu0
        %6224 = vdwg.mxu0
        %v6226 = vsel %vm4954, %v5890, 0
        %v6229 = vsel %vm5951, %v5922, 0
        %6231 = vmatprep.subr.bf16.mxu0 0
        %6232 = vmatpush1.bf16.msra.mxu0 %v6229
        %6233 = vmatprep.subr.bf16.mxu0 0
        %6234 = vmatpush1.bf16.msra.mxu0 0
        %6235 = vmatprep.subr.bf16.mxu0 0
        %6236 = vmatpush1.bf16.msra.mxu0 0
        %6237 = vmatprep.subr.bf16.mxu0 0
        %6238 = vmatpush1.bf16.msra.mxu0 0
        %6239 = vmatprep.subr.bf16.mxu0 0
        %6240 = vmatpush1.bf16.msra.mxu0 0
        %6241 = vmatprep.subr.bf16.mxu0 0
        %6242 = vmatpush1.bf16.msra.mxu0 0
        %6243 = vmatprep.subr.bf16.mxu0 0
        %6244 = vmatpush1.bf16.msra.mxu0 0
        %6245 = vmatprep.subr.bf16.mxu0 0
        %6246 = vmatpush1.bf16.msra.mxu0 0
        %6247 = vmatprep.subr.bf16.mxu0 0
        %6248 = vmatpush1.bf16.msra.mxu0 0
        %6249 = vmatprep.subr.bf16.mxu0 0
        %6250 = vmatpush1.bf16.msra.mxu0 0
        %6251 = vmatprep.subr.bf16.mxu0 0
        %6252 = vmatpush1.bf16.msra.mxu0 0
        %6253 = vmatprep.subr.bf16.mxu0 0
        %6254 = vmatpush1.bf16.msra.mxu0 0
        %6255 = vmatprep.subr.bf16.mxu0 0
        %6256 = vmatpush1.bf16.msra.mxu0 0
        %6257 = vmatprep.subr.bf16.mxu0 0
        %6258 = vmatpush1.bf16.msra.mxu0 0
        %6259 = vmatprep.subr.bf16.mxu0 0
        %6260 = vmatpush1.bf16.msra.mxu0 0
        %6261 = vmatprep.subr.bf16.mxu0 0
        %6262 = vmatpush1.bf16.msra.mxu0 0
        %6263 = vmatprep.mubr.bf16.mxu0 0
        %6264 = vmatmul.mubr.bf16.gmra.mrb[0].mxu0 %v6226
        %v6265 = vpop.f32.mrb[0].mxu0
        %v6266 = vadd.f32 0.0, %v6265
        %v6267 = vpop.f32.mrb[0].mxu0
        %v6268 = vpop.f32.mrb[0].mxu0
        %v6269 = vpop.f32.mrb[0].mxu0
        %6270 = vdwg.mxu0
        %v6272 = vsel %vm4954, %v5891, 0
        %v6275 = vsel %vm5951, %v5923, 0
        %6277 = vmatprep.subr.bf16.mxu0 0
        %6278 = vmatpush1.bf16.msra.mxu0 %v6275
        %6279 = vmatprep.subr.bf16.mxu0 0
        %6280 = vmatpush1.bf16.msra.mxu0 0
        %6281 = vmatprep.subr.bf16.mxu0 0
        %6282 = vmatpush1.bf16.msra.mxu0 0
        %6283 = vmatprep.subr.bf16.mxu0 0
        %6284 = vmatpush1.bf16.msra.mxu0 0
        %6285 = vmatprep.subr.bf16.mxu0 0
        %6286 = vmatpush1.bf16.msra.mxu0 0
        %6287 = vmatprep.subr.bf16.mxu0 0
        %6288 = vmatpush1.bf16.msra.mxu0 0
        %6289 = vmatprep.subr.bf16.mxu0 0
        %6290 = vmatpush1.bf16.msra.mxu0 0
        %6291 = vmatprep.subr.bf16.mxu0 0
        %6292 = vmatpush1.bf16.msra.mxu0 0
        %6293 = vmatprep.subr.bf16.mxu0 0
        %6294 = vmatpush1.bf16.msra.mxu0 0
        %6295 = vmatprep.subr.bf16.mxu0 0
        %6296 = vmatpush1.bf16.msra.mxu0 0
        %6297 = vmatprep.subr.bf16.mxu0 0
        %6298 = vmatpush1.bf16.msra.mxu0 0
        %6299 = vmatprep.subr.bf16.mxu0 0
        %6300 = vmatpush1.bf16.msra.mxu0 0
        %6301 = vmatprep.subr.bf16.mxu0 0
        %6302 = vmatpush1.bf16.msra.mxu0 0
        %6303 = vmatprep.subr.bf16.mxu0 0
        %6304 = vmatpush1.bf16.msra.mxu0 0
        %6305 = vmatprep.subr.bf16.mxu0 0
        %6306 = vmatpush1.bf16.msra.mxu0 0
        %6307 = vmatprep.subr.bf16.mxu0 0
        %6308 = vmatpush1.bf16.msra.mxu0 0
        %6309 = vmatprep.mubr.bf16.mxu0 0
        %6310 = vmatmul.mubr.bf16.gmra.mrb[0].mxu0 %v6272
        %v6311 = vpop.f32.mrb[0].mxu0
        %v6312 = vadd.f32 0.0, %v6311
        %v6313 = vpop.f32.mrb[0].mxu0
        %v6314 = vpop.f32.mrb[0].mxu0
        %v6315 = vpop.f32.mrb[0].mxu0
        %6316 = vdwg.mxu0
        %v6318 = vsel %vm4954, %v5892, 0
        %v6321 = vsel %vm5951, %v5924, 0
        %6323 = vmatprep.subr.bf16.mxu0 0
        %6324 = vmatpush1.bf16.msra.mxu0 %v6321
        %6325 = vmatprep.subr.bf16.mxu0 0
        %6326 = vmatpush1.bf16.msra.mxu0 0
        %6327 = vmatprep.subr.bf16.mxu0 0
        %6328 = vmatpush1.bf16.msra.mxu0 0
        %6329 = vmatprep.subr.bf16.mxu0 0
        %6330 = vmatpush1.bf16.msra.mxu0 0
        %6331 = vmatprep.subr.bf16.mxu0 0
        %6332 = vmatpush1.bf16.msra.mxu0 0
        %6333 = vmatprep.subr.bf16.mxu0 0
        %6334 = vmatpush1.bf16.msra.mxu0 0
        %6335 = vmatprep.subr.bf16.mxu0 0
        %6336 = vmatpush1.bf16.msra.mxu0 0
        %6337 = vmatprep.subr.bf16.mxu0 0
        %6338 = vmatpush1.bf16.msra.mxu0 0
        %6339 = vmatprep.subr.bf16.mxu0 0
        %6340 = vmatpush1.bf16.msra.mxu0 0
        %6341 = vmatprep.subr.bf16.mxu0 0
        %6342 = vmatpush1.bf16.msra.mxu0 0
        %6343 = vmatprep.subr.bf16.mxu0 0
        %6344 = vmatpush1.bf16.msra.mxu0 0
        %6345 = vmatprep.subr.bf16.mxu0 0
        %6346 = vmatpush1.bf16.msra.mxu0 0
        %6347 = vmatprep.subr.bf16.mxu0 0
        %6348 = vmatpush1.bf16.msra.mxu0 0
        %6349 = vmatprep.subr.bf16.mxu0 0
        %6350 = vmatpush1.bf16.msra.mxu0 0
        %6351 = vmatprep.subr.bf16.mxu0 0
        %6352 = vmatpush1.bf16.msra.mxu0 0
        %6353 = vmatprep.subr.bf16.mxu0 0
        %6354 = vmatpush1.bf16.msra.mxu0 0
        %6355 = vmatprep.mubr.bf16.mxu0 0
        %6356 = vmatmul.mubr.bf16.gmra.mrb[0].mxu0 %v6318
        %v6357 = vpop.f32.mrb[0].mxu0
        %v6358 = vadd.f32 0.0, %v6357
        %v6359 = vpop.f32.mrb[0].mxu0
        %v6360 = vpop.f32.mrb[0].mxu0
        %v6361 = vpop.f32.mrb[0].mxu0
        %6362 = vdwg.mxu0
        %v6364 = vsel %vm4954, %v5893, 0
        %v6367 = vsel %vm5951, %v5925, 0
        %6369 = vmatprep.subr.bf16.mxu0 0
        %6370 = vmatpush1.bf16.msra.mxu0 %v6367
        %6371 = vmatprep.subr.bf16.mxu0 0
        %6372 = vmatpush1.bf16.msra.mxu0 0
        %6373 = vmatprep.subr.bf16.mxu0 0
        %6374 = vmatpush1.bf16.msra.mxu0 0
        %6375 = vmatprep.subr.bf16.mxu0 0
        %6376 = vmatpush1.bf16.msra.mxu0 0
        %6377 = vmatprep.subr.bf16.mxu0 0
        %6378 = vmatpush1.bf16.msra.mxu0 0
        %6379 = vmatprep.subr.bf16.mxu0 0
        %6380 = vmatpush1.bf16.msra.mxu0 0
        %6381 = vmatprep.subr.bf16.mxu0 0
        %6382 = vmatpush1.bf16.msra.mxu0 0
        %6383 = vmatprep.subr.bf16.mxu0 0
        %6384 = vmatpush1.bf16.msra.mxu0 0
        %6385 = vmatprep.subr.bf16.mxu0 0
        %6386 = vmatpush1.bf16.msra.mxu0 0
        %6387 = vmatprep.subr.bf16.mxu0 0
        %6388 = vmatpush1.bf16.msra.mxu0 0
        %6389 = vmatprep.subr.bf16.mxu0 0
        %6390 = vmatpush1.bf16.msra.mxu0 0
        %6391 = vmatprep.subr.bf16.mxu0 0
        %6392 = vmatpush1.bf16.msra.mxu0 0
        %6393 = vmatprep.subr.bf16.mxu0 0
        %6394 = vmatpush1.bf16.msra.mxu0 0
        %6395 = vmatprep.subr.bf16.mxu0 0
        %6396 = vmatpush1.bf16.msra.mxu0 0
        %6397 = vmatprep.subr.bf16.mxu0 0
        %6398 = vmatpush1.bf16.msra.mxu0 0
        %6399 = vmatprep.subr.bf16.mxu0 0
        %6400 = vmatpush1.bf16.msra.mxu0 0
        %6401 = vmatprep.mubr.bf16.mxu0 0
        %6402 = vmatmul.mubr.bf16.gmra.mrb[0].mxu0 %v6364
        %v6403 = vpop.f32.mrb[0].mxu0
        %v6404 = vadd.f32 0.0, %v6403
        %v6405 = vpop.f32.mrb[0].mxu0
        %v6406 = vpop.f32.mrb[0].mxu0
        %v6407 = vpop.f32.mrb[0].mxu0
        %6408 = vdwg.mxu0
        %v6410 = vsel %vm4954, %v5894, 0
        %v6413 = vsel %vm5951, %v5926, 0
        %6415 = vmatprep.subr.bf16.mxu0 0
        %6416 = vmatpush1.bf16.msra.mxu0 %v6413
        %6417 = vmatprep.subr.bf16.mxu0 0
        %6418 = vmatpush1.bf16.msra.mxu0 0
        %6419 = vmatprep.subr.bf16.mxu0 0
        %6420 = vmatpush1.bf16.msra.mxu0 0
        %6421 = vmatprep.subr.bf16.mxu0 0
        %6422 = vmatpush1.bf16.msra.mxu0 0
        %6423 = vmatprep.subr.bf16.mxu0 0
        %6424 = vmatpush1.bf16.msra.mxu0 0
        %6425 = vmatprep.subr.bf16.mxu0 0
        %6426 = vmatpush1.bf16.msra.mxu0 0
        %6427 = vmatprep.subr.bf16.mxu0 0
        %6428 = vmatpush1.bf16.msra.mxu0 0
        %6429 = vmatprep.subr.bf16.mxu0 0
        %6430 = vmatpush1.bf16.msra.mxu0 0
        %6431 = vmatprep.subr.bf16.mxu0 0
        %6432 = vmatpush1.bf16.msra.mxu0 0
        %6433 = vmatprep.subr.bf16.mxu0 0
        %6434 = vmatpush1.bf16.msra.mxu0 0
        %6435 = vmatprep.subr.bf16.mxu0 0
        %6436 = vmatpush1.bf16.msra.mxu0 0
        %6437 = vmatprep.subr.bf16.mxu0 0
        %6438 = vmatpush1.bf16.msra.mxu0 0
        %6439 = vmatprep.subr.bf16.mxu0 0
        %6440 = vmatpush1.bf16.msra.mxu0 0
        %6441 = vmatprep.subr.bf16.mxu0 0
        %6442 = vmatpush1.bf16.msra.mxu0 0
        %6443 = vmatprep.subr.bf16.mxu0 0
        %6444 = vmatpush1.bf16.msra.mxu0 0
        %6445 = vmatprep.subr.bf16.mxu0 0
        %6446 = vmatpush1.bf16.msra.mxu0 0
        %6447 = vmatprep.mubr.bf16.mxu0 0
        %6448 = vmatmul.mubr.bf16.gmra.mrb[0].mxu0 %v6410
        %v6449 = vpop.f32.mrb[0].mxu0
        %v6450 = vadd.f32 0.0, %v6449
        %v6451 = vpop.f32.mrb[0].mxu0
        %v6452 = vpop.f32.mrb[0].mxu0
        %v6453 = vpop.f32.mrb[0].mxu0
        %6454 = vdwg.mxu0
        %v6456 = vsel %vm4954, %v5895, 0
        %v6459 = vsel %vm5951, %v5927, 0
        %6461 = vmatprep.subr.bf16.mxu0 0
        %6462 = vmatpush1.bf16.msra.mxu0 %v6459
        %6463 = vmatprep.subr.bf16.mxu0 0
        %6464 = vmatpush1.bf16.msra.mxu0 0
        %6465 = vmatprep.subr.bf16.mxu0 0
        %6466 = vmatpush1.bf16.msra.mxu0 0
        %6467 = vmatprep.subr.bf16.mxu0 0
        %6468 = vmatpush1.bf16.msra.mxu0 0
        %6469 = vmatprep.subr.bf16.mxu0 0
        %6470 = vmatpush1.bf16.msra.mxu0 0
        %6471 = vmatprep.subr.bf16.mxu0 0
        %6472 = vmatpush1.bf16.msra.mxu0 0
        %6473 = vmatprep.subr.bf16.mxu0 0
        %6474 = vmatpush1.bf16.msra.mxu0 0
        %6475 = vmatprep.subr.bf16.mxu0 0
        %6476 = vmatpush1.bf16.msra.mxu0 0
        %6477 = vmatprep.subr.bf16.mxu0 0
        %6478 = vmatpush1.bf16.msra.mxu0 0
        %6479 = vmatprep.subr.bf16.mxu0 0
        %6480 = vmatpush1.bf16.msra.mxu0 0
        %6481 = vmatprep.subr.bf16.mxu0 0
        %6482 = vmatpush1.bf16.msra.mxu0 0
        %6483 = vmatprep.subr.bf16.mxu0 0
        %6484 = vmatpush1.bf16.msra.mxu0 0
        %6485 = vmatprep.subr.bf16.mxu0 0
        %6486 = vmatpush1.bf16.msra.mxu0 0
        %6487 = vmatprep.subr.bf16.mxu0 0
        %6488 = vmatpush1.bf16.msra.mxu0 0
        %6489 = vmatprep.subr.bf16.mxu0 0
        %6490 = vmatpush1.bf16.msra.mxu0 0
        %6491 = vmatprep.subr.bf16.mxu0 0
        %6492 = vmatpush1.bf16.msra.mxu0 0
        %6493 = vmatprep.mubr.bf16.mxu0 0
        %6494 = vmatmul.mubr.bf16.gmra.mrb[0].mxu0 %v6456
        %v6495 = vpop.f32.mrb[0].mxu0
        %v6496 = vadd.f32 0.0, %v6495
        %v6497 = vpop.f32.mrb[0].mxu0
        %v6498 = vpop.f32.mrb[0].mxu0
        %v6499 = vpop.f32.mrb[0].mxu0
        %6500 = vdwg.mxu0
        %v6502 = vsel %vm4954, %v5896, 0
        %v6505 = vsel %vm5951, %v5928, 0
        %6507 = vmatprep.subr.bf16.mxu0 0
        %6508 = vmatpush1.bf16.msra.mxu0 %v6505
        %6509 = vmatprep.subr.bf16.mxu0 0
        %6510 = vmatpush1.bf16.msra.mxu0 0
        %6511 = vmatprep.subr.bf16.mxu0 0
        %6512 = vmatpush1.bf16.msra.mxu0 0
        %6513 = vmatprep.subr.bf16.mxu0 0
        %6514 = vmatpush1.bf16.msra.mxu0 0
        %6515 = vmatprep.subr.bf16.mxu0 0
        %6516 = vmatpush1.bf16.msra.mxu0 0
        %6517 = vmatprep.subr.bf16.mxu0 0
        %6518 = vmatpush1.bf16.msra.mxu0 0
        %6519 = vmatprep.subr.bf16.mxu0 0
        %6520 = vmatpush1.bf16.msra.mxu0 0
        %6521 = vmatprep.subr.bf16.mxu0 0
        %6522 = vmatpush1.bf16.msra.mxu0 0
        %6523 = vmatprep.subr.bf16.mxu0 0
        %6524 = vmatpush1.bf16.msra.mxu0 0
        %6525 = vmatprep.subr.bf16.mxu0 0
        %6526 = vmatpush1.bf16.msra.mxu0 0
        %6527 = vmatprep.subr.bf16.mxu0 0
        %6528 = vmatpush1.bf16.msra.mxu0 0
        %6529 = vmatprep.subr.bf16.mxu0 0
        %6530 = vmatpush1.bf16.msra.mxu0 0
        %6531 = vmatprep.subr.bf16.mxu0 0
        %6532 = vmatpush1.bf16.msra.mxu0 0
        %6533 = vmatprep.subr.bf16.mxu0 0
        %6534 = vmatpush1.bf16.msra.mxu0 0
        %6535 = vmatprep.subr.bf16.mxu0 0
        %6536 = vmatpush1.bf16.msra.mxu0 0
        %6537 = vmatprep.subr.bf16.mxu0 0
        %6538 = vmatpush1.bf16.msra.mxu0 0
        %6539 = vmatprep.mubr.bf16.mxu0 0
        %6540 = vmatmul.mubr.bf16.gmra.mrb[0].mxu0 %v6502
        %v6541 = vpop.f32.mrb[0].mxu0
        %v6542 = vadd.f32 0.0, %v6541
        %v6543 = vpop.f32.mrb[0].mxu0
        %v6544 = vpop.f32.mrb[0].mxu0
        %v6545 = vpop.f32.mrb[0].mxu0
        %6546 = vdwg.mxu0
        %v6548 = vsel %vm4954, %v5897, 0
        %v6551 = vsel %vm5951, %v5929, 0
        %6553 = vmatprep.subr.bf16.mxu0 0
        %6554 = vmatpush1.bf16.msra.mxu0 %v6551
        %6555 = vmatprep.subr.bf16.mxu0 0
        %6556 = vmatpush1.bf16.msra.mxu0 0
        %6557 = vmatprep.subr.bf16.mxu0 0
        %6558 = vmatpush1.bf16.msra.mxu0 0
        %6559 = vmatprep.subr.bf16.mxu0 0
        %6560 = vmatpush1.bf16.msra.mxu0 0
        %6561 = vmatprep.subr.bf16.mxu0 0
        %6562 = vmatpush1.bf16.msra.mxu0 0
        %6563 = vmatprep.subr.bf16.mxu0 0
        %6564 = vmatpush1.bf16.msra.mxu0 0
        %6565 = vmatprep.subr.bf16.mxu0 0
        %6566 = vmatpush1.bf16.msra.mxu0 0
        %6567 = vmatprep.subr.bf16.mxu0 0
        %6568 = vmatpush1.bf16.msra.mxu0 0
        %6569 = vmatprep.subr.bf16.mxu0 0
        %6570 = vmatpush1.bf16.msra.mxu0 0
        %6571 = vmatprep.subr.bf16.mxu0 0
        %6572 = vmatpush1.bf16.msra.mxu0 0
        %6573 = vmatprep.subr.bf16.mxu0 0
        %6574 = vmatpush1.bf16.msra.mxu0 0
        %6575 = vmatprep.subr.bf16.mxu0 0
        %6576 = vmatpush1.bf16.msra.mxu0 0
        %6577 = vmatprep.subr.bf16.mxu0 0
        %6578 = vmatpush1.bf16.msra.mxu0 0
        %6579 = vmatprep.subr.bf16.mxu0 0
        %6580 = vmatpush1.bf16.msra.mxu0 0
        %6581 = vmatprep.subr.bf16.mxu0 0
        %6582 = vmatpush1.bf16.msra.mxu0 0
        %6583 = vmatprep.subr.bf16.mxu0 0
        %6584 = vmatpush1.bf16.msra.mxu0 0
        %6585 = vmatprep.mubr.bf16.mxu0 0
        %6586 = vmatmul.mubr.bf16.gmra.mrb[0].mxu0 %v6548
        %v6587 = vpop.f32.mrb[0].mxu0
        %v6588 = vadd.f32 0.0, %v6587
        %v6589 = vpop.f32.mrb[0].mxu0
        %v6590 = vpop.f32.mrb[0].mxu0
        %v6591 = vpop.f32.mrb[0].mxu0
        %6592 = vdwg.mxu0
        %v6594 = vsel %vm4954, %v5898, 0
        %v6597 = vsel %vm5951, %v5930, 0
        %6599 = vmatprep.subr.bf16.mxu0 0
        %6600 = vmatpush1.bf16.msra.mxu0 %v6597
        %6601 = vmatprep.subr.bf16.mxu0 0
        %6602 = vmatpush1.bf16.msra.mxu0 0
        %6603 = vmatprep.subr.bf16.mxu0 0
        %6604 = vmatpush1.bf16.msra.mxu0 0
        %6605 = vmatprep.subr.bf16.mxu0 0
        %6606 = vmatpush1.bf16.msra.mxu0 0
        %6607 = vmatprep.subr.bf16.mxu0 0
        %6608 = vmatpush1.bf16.msra.mxu0 0
        %6609 = vmatprep.subr.bf16.mxu0 0
        %6610 = vmatpush1.bf16.msra.mxu0 0
        %6611 = vmatprep.subr.bf16.mxu0 0
        %6612 = vmatpush1.bf16.msra.mxu0 0
        %6613 = vmatprep.subr.bf16.mxu0 0
        %6614 = vmatpush1.bf16.msra.mxu0 0
        %6615 = vmatprep.subr.bf16.mxu0 0
        %6616 = vmatpush1.bf16.msra.mxu0 0
        %6617 = vmatprep.subr.bf16.mxu0 0
        %6618 = vmatpush1.bf16.msra.mxu0 0
        %6619 = vmatprep.subr.bf16.mxu0 0
        %6620 = vmatpush1.bf16.msra.mxu0 0
        %6621 = vmatprep.subr.bf16.mxu0 0
        %6622 = vmatpush1.bf16.msra.mxu0 0
        %6623 = vmatprep.subr.bf16.mxu0 0
        %6624 = vmatpush1.bf16.msra.mxu0 0
        %6625 = vmatprep.subr.bf16.mxu0 0
        %6626 = vmatpush1.bf16.msra.mxu0 0
        %6627 = vmatprep.subr.bf16.mxu0 0
        %6628 = vmatpush1.bf16.msra.mxu0 0
        %6629 = vmatprep.subr.bf16.mxu0 0
        %6630 = vmatpush1.bf16.msra.mxu0 0
        %6631 = vmatprep.mubr.bf16.mxu0 0
        %6632 = vmatmul.mubr.bf16.gmra.mrb[0].mxu0 %v6594
        %v6633 = vpop.f32.mrb[0].mxu0
        %v6634 = vadd.f32 0.0, %v6633
        %v6635 = vpop.f32.mrb[0].mxu0
        %v6636 = vpop.f32.mrb[0].mxu0
        %v6637 = vpop.f32.mrb[0].mxu0
        %6638 = vdwg.mxu0
        %v6640 = vsel %vm4954, %v5899, 0
        %v6643 = vsel %vm5951, %v5931, 0
        %6645 = vmatprep.subr.bf16.mxu0 0
        %6646 = vmatpush1.bf16.msra.mxu0 %v6643
        %6647 = vmatprep.subr.bf16.mxu0 0
        %6648 = vmatpush1.bf16.msra.mxu0 0
        %6649 = vmatprep.subr.bf16.mxu0 0
        %6650 = vmatpush1.bf16.msra.mxu0 0
        %6651 = vmatprep.subr.bf16.mxu0 0
        %6652 = vmatpush1.bf16.msra.mxu0 0
        %6653 = vmatprep.subr.bf16.mxu0 0
        %6654 = vmatpush1.bf16.msra.mxu0 0
        %6655 = vmatprep.subr.bf16.mxu0 0
        %6656 = vmatpush1.bf16.msra.mxu0 0
        %6657 = vmatprep.subr.bf16.mxu0 0
        %6658 = vmatpush1.bf16.msra.mxu0 0
        %6659 = vmatprep.subr.bf16.mxu0 0
        %6660 = vmatpush1.bf16.msra.mxu0 0
        %6661 = vmatprep.subr.bf16.mxu0 0
        %6662 = vmatpush1.bf16.msra.mxu0 0
        %6663 = vmatprep.subr.bf16.mxu0 0
        %6664 = vmatpush1.bf16.msra.mxu0 0
        %6665 = vmatprep.subr.bf16.mxu0 0
        %6666 = vmatpush1.bf16.msra.mxu0 0
        %6667 = vmatprep.subr.bf16.mxu0 0
        %6668 = vmatpush1.bf16.msra.mxu0 0
        %6669 = vmatprep.subr.bf16.mxu0 0
        %6670 = vmatpush1.bf16.msra.mxu0 0
        %6671 = vmatprep.subr.bf16.mxu0 0
        %6672 = vmatpush1.bf16.msra.mxu0 0
        %6673 = vmatprep.subr.bf16.mxu0 0
        %6674 = vmatpush1.bf16.msra.mxu0 0
        %6675 = vmatprep.subr.bf16.mxu0 0
        %6676 = vmatpush1.bf16.msra.mxu0 0
        %6677 = vmatprep.mubr.bf16.mxu0 0
        %6678 = vmatmul.mubr.bf16.gmra.mrb[0].mxu0 %v6640
        %v6679 = vpop.f32.mrb[0].mxu0
        %v6680 = vadd.f32 0.0, %v6679
        %v6681 = vpop.f32.mrb[0].mxu0
        %v6682 = vpop.f32.mrb[0].mxu0
        %v6683 = vpop.f32.mrb[0].mxu0
        %6684 = vdwg.mxu0
        %v6686 = vsel %vm4954, %v5900, 0
        %v6689 = vsel %vm5951, %v5932, 0
        %6691 = vmatprep.subr.bf16.mxu0 0
        %6692 = vmatpush1.bf16.msra.mxu0 %v6689
        %6693 = vmatprep.subr.bf16.mxu0 0
        %6694 = vmatpush1.bf16.msra.mxu0 0
        %6695 = vmatprep.subr.bf16.mxu0 0
        %6696 = vmatpush1.bf16.msra.mxu0 0
        %6697 = vmatprep.subr.bf16.mxu0 0
        %6698 = vmatpush1.bf16.msra.mxu0 0
        %6699 = vmatprep.subr.bf16.mxu0 0
        %6700 = vmatpush1.bf16.msra.mxu0 0
        %6701 = vmatprep.subr.bf16.mxu0 0
        %6702 = vmatpush1.bf16.msra.mxu0 0
        %6703 = vmatprep.subr.bf16.mxu0 0
        %6704 = vmatpush1.bf16.msra.mxu0 0
        %6705 = vmatprep.subr.bf16.mxu0 0
        %6706 = vmatpush1.bf16.msra.mxu0 0
        %6707 = vmatprep.subr.bf16.mxu0 0
        %6708 = vmatpush1.bf16.msra.mxu0 0
        %6709 = vmatprep.subr.bf16.mxu0 0
        %6710 = vmatpush1.bf16.msra.mxu0 0
        %6711 = vmatprep.subr.bf16.mxu0 0
        %6712 = vmatpush1.bf16.msra.mxu0 0
        %6713 = vmatprep.subr.bf16.mxu0 0
        %6714 = vmatpush1.bf16.msra.mxu0 0
        %6715 = vmatprep.subr.bf16.mxu0 0
        %6716 = vmatpush1.bf16.msra.mxu0 0
        %6717 = vmatprep.subr.bf16.mxu0 0
        %6718 = vmatpush1.bf16.msra.mxu0 0
        %6719 = vmatprep.subr.bf16.mxu0 0
        %6720 = vmatpush1.bf16.msra.mxu0 0
        %6721 = vmatprep.subr.bf16.mxu0 0
        %6722 = vmatpush1.bf16.msra.mxu0 0
        %6723 = vmatprep.mubr.bf16.mxu0 0
        %6724 = vmatmul.mubr.bf16.gmra.mrb[0].mxu0 %v6686
        %v6725 = vpop.f32.mrb[0].mxu0
        %v6726 = vadd.f32 0.0, %v6725
        %v6727 = vpop.f32.mrb[0].mxu0
        %v6728 = vpop.f32.mrb[0].mxu0
        %v6729 = vpop.f32.mrb[0].mxu0
        %6730 = vdwg.mxu0
        %v6732 = vsel %vm4954, %v5901, 0
        %v6735 = vsel %vm5951, %v5933, 0
        %6737 = vmatprep.subr.bf16.mxu0 0
        %6738 = vmatpush1.bf16.msra.mxu0 %v6735
        %6739 = vmatprep.subr.bf16.mxu0 0
        %6740 = vmatpush1.bf16.msra.mxu0 0
        %6741 = vmatprep.subr.bf16.mxu0 0
        %6742 = vmatpush1.bf16.msra.mxu0 0
        %6743 = vmatprep.subr.bf16.mxu0 0
        %6744 = vmatpush1.bf16.msra.mxu0 0
        %6745 = vmatprep.subr.bf16.mxu0 0
        %6746 = vmatpush1.bf16.msra.mxu0 0
        %6747 = vmatprep.subr.bf16.mxu0 0
        %6748 = vmatpush1.bf16.msra.mxu0 0
        %6749 = vmatprep.subr.bf16.mxu0 0
        %6750 = vmatpush1.bf16.msra.mxu0 0
        %6751 = vmatprep.subr.bf16.mxu0 0
        %6752 = vmatpush1.bf16.msra.mxu0 0
        %6753 = vmatprep.subr.bf16.mxu0 0
        %6754 = vmatpush1.bf16.msra.mxu0 0
        %6755 = vmatprep.subr.bf16.mxu0 0
        %6756 = vmatpush1.bf16.msra.mxu0 0
        %6757 = vmatprep.subr.bf16.mxu0 0
        %6758 = vmatpush1.bf16.msra.mxu0 0
        %6759 = vmatprep.subr.bf16.mxu0 0
        %6760 = vmatpush1.bf16.msra.mxu0 0
        %6761 = vmatprep.subr.bf16.mxu0 0
        %6762 = vmatpush1.bf16.msra.mxu0 0
        %6763 = vmatprep.subr.bf16.mxu0 0
        %6764 = vmatpush1.bf16.msra.mxu0 0
        %6765 = vmatprep.subr.bf16.mxu0 0
        %6766 = vmatpush1.bf16.msra.mxu0 0
        %6767 = vmatprep.subr.bf16.mxu0 0
        %6768 = vmatpush1.bf16.msra.mxu0 0
        %6769 = vmatprep.mubr.bf16.mxu0 0
        %6770 = vmatmul.mubr.bf16.gmra.mrb[0].mxu0 %v6732
        %v6771 = vpop.f32.mrb[0].mxu0
        %v6772 = vadd.f32 0.0, %v6771
        %v6773 = vpop.f32.mrb[0].mxu0
        %v6774 = vpop.f32.mrb[0].mxu0
        %v6775 = vpop.f32.mrb[0].mxu0
        %6776 = vdwg.mxu0
        %v6778 = vsel %vm4954, %v5902, 0
        %v6781 = vsel %vm5951, %v5934, 0
        %6783 = vmatprep.subr.bf16.mxu0 0
        %6784 = vmatpush1.bf16.msra.mxu0 %v6781
        %6785 = vmatprep.subr.bf16.mxu0 0
        %6786 = vmatpush1.bf16.msra.mxu0 0
        %6787 = vmatprep.subr.bf16.mxu0 0
        %6788 = vmatpush1.bf16.msra.mxu0 0
        %6789 = vmatprep.subr.bf16.mxu0 0
        %6790 = vmatpush1.bf16.msra.mxu0 0
        %6791 = vmatprep.subr.bf16.mxu0 0
        %6792 = vmatpush1.bf16.msra.mxu0 0
        %6793 = vmatprep.subr.bf16.mxu0 0
        %6794 = vmatpush1.bf16.msra.mxu0 0
        %6795 = vmatprep.subr.bf16.mxu0 0
        %6796 = vmatpush1.bf16.msra.mxu0 0
        %6797 = vmatprep.subr.bf16.mxu0 0
        %6798 = vmatpush1.bf16.msra.mxu0 0
        %6799 = vmatprep.subr.bf16.mxu0 0
        %6800 = vmatpush1.bf16.msra.mxu0 0
        %6801 = vmatprep.subr.bf16.mxu0 0
        %6802 = vmatpush1.bf16.msra.mxu0 0
        %6803 = vmatprep.subr.bf16.mxu0 0
        %6804 = vmatpush1.bf16.msra.mxu0 0
        %6805 = vmatprep.subr.bf16.mxu0 0
        %6806 = vmatpush1.bf16.msra.mxu0 0
        %6807 = vmatprep.subr.bf16.mxu0 0
        %6808 = vmatpush1.bf16.msra.mxu0 0
        %6809 = vmatprep.subr.bf16.mxu0 0
        %6810 = vmatpush1.bf16.msra.mxu0 0
        %6811 = vmatprep.subr.bf16.mxu0 0
        %6812 = vmatpush1.bf16.msra.mxu0 0
        %6813 = vmatprep.subr.bf16.mxu0 0
        %6814 = vmatpush1.bf16.msra.mxu0 0
        %6815 = vmatprep.mubr.bf16.mxu0 0
        %6816 = vmatmul.mubr.bf16.gmra.mrb[0].mxu0 %v6778
        %v6817 = vpop.f32.mrb[0].mxu0
        %v6818 = vadd.f32 0.0, %v6817
        %v6819 = vpop.f32.mrb[0].mxu0
        %v6820 = vpop.f32.mrb[0].mxu0
        %v6821 = vpop.f32.mrb[0].mxu0
        %6822 = vdwg.mxu0
        %v6824 = vsel %vm4954, %v5903, 0
        %v6827 = vsel %vm5951, %v5935, 0
        %6829 = vmatprep.subr.bf16.mxu0 0
        %6830 = vmatpush1.bf16.msra.mxu0 %v6827
        %6831 = vmatprep.subr.bf16.mxu0 0
        %6832 = vmatpush1.bf16.msra.mxu0 0
        %6833 = vmatprep.subr.bf16.mxu0 0
        %6834 = vmatpush1.bf16.msra.mxu0 0
        %6835 = vmatprep.subr.bf16.mxu0 0
        %6836 = vmatpush1.bf16.msra.mxu0 0
        %6837 = vmatprep.subr.bf16.mxu0 0
        %6838 = vmatpush1.bf16.msra.mxu0 0
        %6839 = vmatprep.subr.bf16.mxu0 0
        %6840 = vmatpush1.bf16.msra.mxu0 0
        %6841 = vmatprep.subr.bf16.mxu0 0
        %6842 = vmatpush1.bf16.msra.mxu0 0
        %6843 = vmatprep.subr.bf16.mxu0 0
        %6844 = vmatpush1.bf16.msra.mxu0 0
        %6845 = vmatprep.subr.bf16.mxu0 0
        %6846 = vmatpush1.bf16.msra.mxu0 0
        %6847 = vmatprep.subr.bf16.mxu0 0
        %6848 = vmatpush1.bf16.msra.mxu0 0
        %6849 = vmatprep.subr.bf16.mxu0 0
        %6850 = vmatpush1.bf16.msra.mxu0 0
        %6851 = vmatprep.subr.bf16.mxu0 0
        %6852 = vmatpush1.bf16.msra.mxu0 0
        %6853 = vmatprep.subr.bf16.mxu0 0
        %6854 = vmatpush1.bf16.msra.mxu0 0
        %6855 = vmatprep.subr.bf16.mxu0 0
        %6856 = vmatpush1.bf16.msra.mxu0 0
        %6857 = vmatprep.subr.bf16.mxu0 0
        %6858 = vmatpush1.bf16.msra.mxu0 0
        %6859 = vmatprep.subr.bf16.mxu0 0
        %6860 = vmatpush1.bf16.msra.mxu0 0
        %6861 = vmatprep.mubr.bf16.mxu0 0
        %6862 = vmatmul.mubr.bf16.gmra.mrb[0].mxu0 %v6824
        %v6863 = vpop.f32.mrb[0].mxu0
        %v6864 = vadd.f32 0.0, %v6863
        %v6865 = vpop.f32.mrb[0].mxu0
        %v6866 = vpop.f32.mrb[0].mxu0
        %v6867 = vpop.f32.mrb[0].mxu0
        %6868 = vdwg.mxu0
        %v6870 = vsel %vm4954, %v5904, 0
        %v6873 = vsel %vm5951, %v5936, 0
        %6875 = vmatprep.subr.bf16.mxu0 0
        %6876 = vmatpush1.bf16.msra.mxu0 %v6873
        %6877 = vmatprep.subr.bf16.mxu0 0
        %6878 = vmatpush1.bf16.msra.mxu0 0
        %6879 = vmatprep.subr.bf16.mxu0 0
        %6880 = vmatpush1.bf16.msra.mxu0 0
        %6881 = vmatprep.subr.bf16.mxu0 0
        %6882 = vmatpush1.bf16.msra.mxu0 0
        %6883 = vmatprep.subr.bf16.mxu0 0
        %6884 = vmatpush1.bf16.msra.mxu0 0
        %6885 = vmatprep.subr.bf16.mxu0 0
        %6886 = vmatpush1.bf16.msra.mxu0 0
        %6887 = vmatprep.subr.bf16.mxu0 0
        %6888 = vmatpush1.bf16.msra.mxu0 0
        %6889 = vmatprep.subr.bf16.mxu0 0
        %6890 = vmatpush1.bf16.msra.mxu0 0
        %6891 = vmatprep.subr.bf16.mxu0 0
        %6892 = vmatpush1.bf16.msra.mxu0 0
        %6893 = vmatprep.subr.bf16.mxu0 0
        %6894 = vmatpush1.bf16.msra.mxu0 0
        %6895 = vmatprep.subr.bf16.mxu0 0
        %6896 = vmatpush1.bf16.msra.mxu0 0
        %6897 = vmatprep.subr.bf16.mxu0 0
        %6898 = vmatpush1.bf16.msra.mxu0 0
        %6899 = vmatprep.subr.bf16.mxu0 0
        %6900 = vmatpush1.bf16.msra.mxu0 0
        %6901 = vmatprep.subr.bf16.mxu0 0
        %6902 = vmatpush1.bf16.msra.mxu0 0
        %6903 = vmatprep.subr.bf16.mxu0 0
        %6904 = vmatpush1.bf16.msra.mxu0 0
        %6905 = vmatprep.subr.bf16.mxu0 0
        %6906 = vmatpush1.bf16.msra.mxu0 0
        %6907 = vmatprep.mubr.bf16.mxu0 0
        %6908 = vmatmul.mubr.bf16.gmra.mrb[0].mxu0 %v6870
        %v6909 = vpop.f32.mrb[0].mxu0
        %v6910 = vadd.f32 0.0, %v6909
        %v6911 = vpop.f32.mrb[0].mxu0
        %v6912 = vpop.f32.mrb[0].mxu0
        %v6913 = vpop.f32.mrb[0].mxu0
        %6914 = vdwg.mxu0
        %v6916 = vsel %vm4954, %v5905, 0
        %v6919 = vsel %vm5951, %v5937, 0
        %6921 = vmatprep.subr.bf16.mxu0 0
        %6922 = vmatpush1.bf16.msra.mxu0 %v6919
        %6923 = vmatprep.subr.bf16.mxu0 0
        %6924 = vmatpush1.bf16.msra.mxu0 0
        %6925 = vmatprep.subr.bf16.mxu0 0
        %6926 = vmatpush1.bf16.msra.mxu0 0
        %6927 = vmatprep.subr.bf16.mxu0 0
        %6928 = vmatpush1.bf16.msra.mxu0 0
        %6929 = vmatprep.subr.bf16.mxu0 0
        %6930 = vmatpush1.bf16.msra.mxu0 0
        %6931 = vmatprep.subr.bf16.mxu0 0
        %6932 = vmatpush1.bf16.msra.mxu0 0
        %6933 = vmatprep.subr.bf16.mxu0 0
        %6934 = vmatpush1.bf16.msra.mxu0 0
        %6935 = vmatprep.subr.bf16.mxu0 0
        %6936 = vmatpush1.bf16.msra.mxu0 0
        %6937 = vmatprep.subr.bf16.mxu0 0
        %6938 = vmatpush1.bf16.msra.mxu0 0
        %6939 = vmatprep.subr.bf16.mxu0 0
        %6940 = vmatpush1.bf16.msra.mxu0 0
        %6941 = vmatprep.subr.bf16.mxu0 0
        %6942 = vmatpush1.bf16.msra.mxu0 0
        %6943 = vmatprep.subr.bf16.mxu0 0
        %6944 = vmatpush1.bf16.msra.mxu0 0
        %6945 = vmatprep.subr.bf16.mxu0 0
        %6946 = vmatpush1.bf16.msra.mxu0 0
        %6947 = vmatprep.subr.bf16.mxu0 0
        %6948 = vmatpush1.bf16.msra.mxu0 0
        %6949 = vmatprep.subr.bf16.mxu0 0
        %6950 = vmatpush1.bf16.msra.mxu0 0
        %6951 = vmatprep.subr.bf16.mxu0 0
        %6952 = vmatpush1.bf16.msra.mxu0 0
        %6953 = vmatprep.mubr.bf16.mxu0 0
        %6954 = vmatmul.mubr.bf16.gmra.mrb[0].mxu0 %v6916
        %v6955 = vpop.f32.mrb[0].mxu0
        %v6956 = vadd.f32 0.0, %v6955
        %v6957 = vpop.f32.mrb[0].mxu0
        %v6958 = vpop.f32.mrb[0].mxu0
        %v6959 = vpop.f32.mrb[0].mxu0
        %6960 = vdwg.mxu0
        %v6962 = vsel %vm4954, %v5906, 0
        %v6965 = vsel %vm5951, %v5938, 0
        %6967 = vmatprep.subr.bf16.mxu0 0
        %6968 = vmatpush1.bf16.msra.mxu0 %v6965
        %6969 = vmatprep.subr.bf16.mxu0 0
        %6970 = vmatpush1.bf16.msra.mxu0 0
        %6971 = vmatprep.subr.bf16.mxu0 0
        %6972 = vmatpush1.bf16.msra.mxu0 0
        %6973 = vmatprep.subr.bf16.mxu0 0
        %6974 = vmatpush1.bf16.msra.mxu0 0
        %6975 = vmatprep.subr.bf16.mxu0 0
        %6976 = vmatpush1.bf16.msra.mxu0 0
        %6977 = vmatprep.subr.bf16.mxu0 0
        %6978 = vmatpush1.bf16.msra.mxu0 0
        %6979 = vmatprep.subr.bf16.mxu0 0
        %6980 = vmatpush1.bf16.msra.mxu0 0
        %6981 = vmatprep.subr.bf16.mxu0 0
        %6982 = vmatpush1.bf16.msra.mxu0 0
        %6983 = vmatprep.subr.bf16.mxu0 0
        %6984 = vmatpush1.bf16.msra.mxu0 0
        %6985 = vmatprep.subr.bf16.mxu0 0
        %6986 = vmatpush1.bf16.msra.mxu0 0
        %6987 = vmatprep.subr.bf16.mxu0 0
        %6988 = vmatpush1.bf16.msra.mxu0 0
        %6989 = vmatprep.subr.bf16.mxu0 0
        %6990 = vmatpush1.bf16.msra.mxu0 0
        %6991 = vmatprep.subr.bf16.mxu0 0
        %6992 = vmatpush1.bf16.msra.mxu0 0
        %6993 = vmatprep.subr.bf16.mxu0 0
        %6994 = vmatpush1.bf16.msra.mxu0 0
        %6995 = vmatprep.subr.bf16.mxu0 0
        %6996 = vmatpush1.bf16.msra.mxu0 0
        %6997 = vmatprep.subr.bf16.mxu0 0
        %6998 = vmatpush1.bf16.msra.mxu0 0
        %6999 = vmatprep.mubr.bf16.mxu0 0
        %7000 = vmatmul.mubr.bf16.gmra.mrb[0].mxu0 %v6962
        %v7001 = vpop.f32.mrb[0].mxu0
        %v7002 = vadd.f32 0.0, %v7001
        %v7003 = vpop.f32.mrb[0].mxu0
        %v7004 = vpop.f32.mrb[0].mxu0
        %v7005 = vpop.f32.mrb[0].mxu0
        %7006 = vdwg.mxu0
        %v7008 = vsel %vm4954, %v5907, 0
        %v7011 = vsel %vm5951, %v5939, 0
        %7013 = vmatprep.subr.bf16.mxu0 0
        %7014 = vmatpush1.bf16.msra.mxu0 %v7011
        %7015 = vmatprep.subr.bf16.mxu0 0
        %7016 = vmatpush1.bf16.msra.mxu0 0
        %7017 = vmatprep.subr.bf16.mxu0 0
        %7018 = vmatpush1.bf16.msra.mxu0 0
        %7019 = vmatprep.subr.bf16.mxu0 0
        %7020 = vmatpush1.bf16.msra.mxu0 0
        %7021 = vmatprep.subr.bf16.mxu0 0
        %7022 = vmatpush1.bf16.msra.mxu0 0
        %7023 = vmatprep.subr.bf16.mxu0 0
        %7024 = vmatpush1.bf16.msra.mxu0 0
        %7025 = vmatprep.subr.bf16.mxu0 0
        %7026 = vmatpush1.bf16.msra.mxu0 0
        %7027 = vmatprep.subr.bf16.mxu0 0
        %7028 = vmatpush1.bf16.msra.mxu0 0
        %7029 = vmatprep.subr.bf16.mxu0 0
        %7030 = vmatpush1.bf16.msra.mxu0 0
        %7031 = vmatprep.subr.bf16.mxu0 0
        %7032 = vmatpush1.bf16.msra.mxu0 0
        %7033 = vmatprep.subr.bf16.mxu0 0
        %7034 = vmatpush1.bf16.msra.mxu0 0
        %7035 = vmatprep.subr.bf16.mxu0 0
        %7036 = vmatpush1.bf16.msra.mxu0 0
        %7037 = vmatprep.subr.bf16.mxu0 0
        %7038 = vmatpush1.bf16.msra.mxu0 0
        %7039 = vmatprep.subr.bf16.mxu0 0
        %7040 = vmatpush1.bf16.msra.mxu0 0
        %7041 = vmatprep.subr.bf16.mxu0 0
        %7042 = vmatpush1.bf16.msra.mxu0 0
        %7043 = vmatprep.subr.bf16.mxu0 0
        %7044 = vmatpush1.bf16.msra.mxu0 0
        %7045 = vmatprep.mubr.bf16.mxu0 0
        %7046 = vmatmul.mubr.bf16.gmra.mrb[0].mxu0 %v7008
        %v7047 = vpop.f32.mrb[0].mxu0
        %v7048 = vadd.f32 0.0, %v7047
        %v7049 = vpop.f32.mrb[0].mxu0
        %v7050 = vpop.f32.mrb[0].mxu0
        %v7051 = vpop.f32.mrb[0].mxu0
        %7052 = vdwg.mxu0
        %v7054 = vsel %vm4954, %v5908, 0
        %v7057 = vsel %vm5951, %v5940, 0
        %7059 = vmatprep.subr.bf16.mxu0 0
        %7060 = vmatpush1.bf16.msra.mxu0 %v7057
        %7061 = vmatprep.subr.bf16.mxu0 0
        %7062 = vmatpush1.bf16.msra.mxu0 0
        %7063 = vmatprep.subr.bf16.mxu0 0
        %7064 = vmatpush1.bf16.msra.mxu0 0
        %7065 = vmatprep.subr.bf16.mxu0 0
        %7066 = vmatpush1.bf16.msra.mxu0 0
        %7067 = vmatprep.subr.bf16.mxu0 0
        %7068 = vmatpush1.bf16.msra.mxu0 0
        %7069 = vmatprep.subr.bf16.mxu0 0
        %7070 = vmatpush1.bf16.msra.mxu0 0
        %7071 = vmatprep.subr.bf16.mxu0 0
        %7072 = vmatpush1.bf16.msra.mxu0 0
        %7073 = vmatprep.subr.bf16.mxu0 0
        %7074 = vmatpush1.bf16.msra.mxu0 0
        %7075 = vmatprep.subr.bf16.mxu0 0
        %7076 = vmatpush1.bf16.msra.mxu0 0
        %7077 = vmatprep.subr.bf16.mxu0 0
        %7078 = vmatpush1.bf16.msra.mxu0 0
        %7079 = vmatprep.subr.bf16.mxu0 0
        %7080 = vmatpush1.bf16.msra.mxu0 0
        %7081 = vmatprep.subr.bf16.mxu0 0
        %7082 = vmatpush1.bf16.msra.mxu0 0
        %7083 = vmatprep.subr.bf16.mxu0 0
        %7084 = vmatpush1.bf16.msra.mxu0 0
        %7085 = vmatprep.subr.bf16.mxu0 0
        %7086 = vmatpush1.bf16.msra.mxu0 0
        %7087 = vmatprep.subr.bf16.mxu0 0
        %7088 = vmatpush1.bf16.msra.mxu0 0
        %7089 = vmatprep.subr.bf16.mxu0 0
        %7090 = vmatpush1.bf16.msra.mxu0 0
        %7091 = vmatprep.mubr.bf16.mxu0 0
        %7092 = vmatmul.mubr.bf16.gmra.mrb[0].mxu0 %v7054
        %v7093 = vpop.f32.mrb[0].mxu0
        %v7094 = vadd.f32 0.0, %v7093
        %v7095 = vpop.f32.mrb[0].mxu0
        %v7096 = vpop.f32.mrb[0].mxu0
        %v7097 = vpop.f32.mrb[0].mxu0
        %7098 = vdwg.mxu0
        %v7100 = vsel %vm4954, %v5909, 0
        %v7103 = vsel %vm5951, %v5941, 0
        %7105 = vmatprep.subr.bf16.mxu0 0
        %7106 = vmatpush1.bf16.msra.mxu0 %v7103
        %7107 = vmatprep.subr.bf16.mxu0 0
        %7108 = vmatpush1.bf16.msra.mxu0 0
        %7109 = vmatprep.subr.bf16.mxu0 0
        %7110 = vmatpush1.bf16.msra.mxu0 0
        %7111 = vmatprep.subr.bf16.mxu0 0
        %7112 = vmatpush1.bf16.msra.mxu0 0
        %7113 = vmatprep.subr.bf16.mxu0 0
        %7114 = vmatpush1.bf16.msra.mxu0 0
        %7115 = vmatprep.subr.bf16.mxu0 0
        %7116 = vmatpush1.bf16.msra.mxu0 0
        %7117 = vmatprep.subr.bf16.mxu0 0
        %7118 = vmatpush1.bf16.msra.mxu0 0
        %7119 = vmatprep.subr.bf16.mxu0 0
        %7120 = vmatpush1.bf16.msra.mxu0 0
        %7121 = vmatprep.subr.bf16.mxu0 0
        %7122 = vmatpush1.bf16.msra.mxu0 0
        %7123 = vmatprep.subr.bf16.mxu0 0
        %7124 = vmatpush1.bf16.msra.mxu0 0
        %7125 = vmatprep.subr.bf16.mxu0 0
        %7126 = vmatpush1.bf16.msra.mxu0 0
        %7127 = vmatprep.subr.bf16.mxu0 0
        %7128 = vmatpush1.bf16.msra.mxu0 0
        %7129 = vmatprep.subr.bf16.mxu0 0
        %7130 = vmatpush1.bf16.msra.mxu0 0
        %7131 = vmatprep.subr.bf16.mxu0 0
        %7132 = vmatpush1.bf16.msra.mxu0 0
        %7133 = vmatprep.subr.bf16.mxu0 0
        %7134 = vmatpush1.bf16.msra.mxu0 0
        %7135 = vmatprep.subr.bf16.mxu0 0
        %7136 = vmatpush1.bf16.msra.mxu0 0
        %7137 = vmatprep.mubr.bf16.mxu0 0
        %7138 = vmatmul.mubr.bf16.gmra.mrb[0].mxu0 %v7100
        %v7139 = vpop.f32.mrb[0].mxu0
        %v7140 = vadd.f32 0.0, %v7139
        %v7141 = vpop.f32.mrb[0].mxu0
        %v7142 = vpop.f32.mrb[0].mxu0
        %v7143 = vpop.f32.mrb[0].mxu0
        %7144 = vdwg.mxu0
        %v7146 = vsel %vm4954, %v5910, 0
        %v7149 = vsel %vm5951, %v5942, 0
        %7151 = vmatprep.subr.bf16.mxu0 0
        %7152 = vmatpush1.bf16.msra.mxu0 %v7149
        %7153 = vmatprep.subr.bf16.mxu0 0
        %7154 = vmatpush1.bf16.msra.mxu0 0
        %7155 = vmatprep.subr.bf16.mxu0 0
        %7156 = vmatpush1.bf16.msra.mxu0 0
        %7157 = vmatprep.subr.bf16.mxu0 0
        %7158 = vmatpush1.bf16.msra.mxu0 0
        %7159 = vmatprep.subr.bf16.mxu0 0
        %7160 = vmatpush1.bf16.msra.mxu0 0
        %7161 = vmatprep.subr.bf16.mxu0 0
        %7162 = vmatpush1.bf16.msra.mxu0 0
        %7163 = vmatprep.subr.bf16.mxu0 0
        %7164 = vmatpush1.bf16.msra.mxu0 0
        %7165 = vmatprep.subr.bf16.mxu0 0
        %7166 = vmatpush1.bf16.msra.mxu0 0
        %7167 = vmatprep.subr.bf16.mxu0 0
        %7168 = vmatpush1.bf16.msra.mxu0 0
        %7169 = vmatprep.subr.bf16.mxu0 0
        %7170 = vmatpush1.bf16.msra.mxu0 0
        %7171 = vmatprep.subr.bf16.mxu0 0
        %7172 = vmatpush1.bf16.msra.mxu0 0
        %7173 = vmatprep.subr.bf16.mxu0 0
        %7174 = vmatpush1.bf16.msra.mxu0 0
        %7175 = vmatprep.subr.bf16.mxu0 0
        %7176 = vmatpush1.bf16.msra.mxu0 0
        %7177 = vmatprep.subr.bf16.mxu0 0
        %7178 = vmatpush1.bf16.msra.mxu0 0
        %7179 = vmatprep.subr.bf16.mxu0 0
        %7180 = vmatpush1.bf16.msra.mxu0 0
        %7181 = vmatprep.subr.bf16.mxu0 0
        %7182 = vmatpush1.bf16.msra.mxu0 0
        %7183 = vmatprep.mubr.bf16.mxu0 0
        %7184 = vmatmul.mubr.bf16.gmra.mrb[0].mxu0 %v7146
        %v7185 = vpop.f32.mrb[0].mxu0
        %v7186 = vadd.f32 0.0, %v7185
        %v7187 = vpop.f32.mrb[0].mxu0
        %v7188 = vpop.f32.mrb[0].mxu0
        %v7189 = vpop.f32.mrb[0].mxu0
        %7190 = vdwg.mxu0
        %v7192 = vsel %vm4954, %v5911, 0
        %v7195 = vsel %vm5951, %v5943, 0
        %7197 = vmatprep.subr.bf16.mxu0 0
        %7198 = vmatpush1.bf16.msra.mxu0 %v7195
        %7199 = vmatprep.subr.bf16.mxu0 0
        %7200 = vmatpush1.bf16.msra.mxu0 0
        %7201 = vmatprep.subr.bf16.mxu0 0
        %7202 = vmatpush1.bf16.msra.mxu0 0
        %7203 = vmatprep.subr.bf16.mxu0 0
        %7204 = vmatpush1.bf16.msra.mxu0 0
        %7205 = vmatprep.subr.bf16.mxu0 0
        %7206 = vmatpush1.bf16.msra.mxu0 0
        %7207 = vmatprep.subr.bf16.mxu0 0
        %7208 = vmatpush1.bf16.msra.mxu0 0
        %7209 = vmatprep.subr.bf16.mxu0 0
        %7210 = vmatpush1.bf16.msra.mxu0 0
        %7211 = vmatprep.subr.bf16.mxu0 0
        %7212 = vmatpush1.bf16.msra.mxu0 0
        %7213 = vmatprep.subr.bf16.mxu0 0
        %7214 = vmatpush1.bf16.msra.mxu0 0
        %7215 = vmatprep.subr.bf16.mxu0 0
        %7216 = vmatpush1.bf16.msra.mxu0 0
        %7217 = vmatprep.subr.bf16.mxu0 0
        %7218 = vmatpush1.bf16.msra.mxu0 0
        %7219 = vmatprep.subr.bf16.mxu0 0
        %7220 = vmatpush1.bf16.msra.mxu0 0
        %7221 = vmatprep.subr.bf16.mxu0 0
        %7222 = vmatpush1.bf16.msra.mxu0 0
        %7223 = vmatprep.subr.bf16.mxu0 0
        %7224 = vmatpush1.bf16.msra.mxu0 0
        %7225 = vmatprep.subr.bf16.mxu0 0
        %7226 = vmatpush1.bf16.msra.mxu0 0
        %7227 = vmatprep.subr.bf16.mxu0 0
        %7228 = vmatpush1.bf16.msra.mxu0 0
        %7229 = vmatprep.mubr.bf16.mxu0 0
        %7230 = vmatmul.mubr.bf16.gmra.mrb[0].mxu0 %v7192
        %v7231 = vpop.f32.mrb[0].mxu0
        %v7232 = vadd.f32 0.0, %v7231
        %v7233 = vpop.f32.mrb[0].mxu0
        %v7234 = vpop.f32.mrb[0].mxu0
        %v7235 = vpop.f32.mrb[0].mxu0
        %7236 = vdwg.mxu0
        %v7238 = vsel %vm4954, %v5912, 0
        %v7241 = vsel %vm5951, %v5944, 0
        %7243 = vmatprep.subr.bf16.mxu0 0
        %7244 = vmatpush1.bf16.msra.mxu0 %v7241
        %7245 = vmatprep.subr.bf16.mxu0 0
        %7246 = vmatpush1.bf16.msra.mxu0 0
        %7247 = vmatprep.subr.bf16.mxu0 0
        %7248 = vmatpush1.bf16.msra.mxu0 0
        %7249 = vmatprep.subr.bf16.mxu0 0
        %7250 = vmatpush1.bf16.msra.mxu0 0
        %7251 = vmatprep.subr.bf16.mxu0 0
        %7252 = vmatpush1.bf16.msra.mxu0 0
        %7253 = vmatprep.subr.bf16.mxu0 0
        %7254 = vmatpush1.bf16.msra.mxu0 0
        %7255 = vmatprep.subr.bf16.mxu0 0
        %7256 = vmatpush1.bf16.msra.mxu0 0
        %7257 = vmatprep.subr.bf16.mxu0 0
        %7258 = vmatpush1.bf16.msra.mxu0 0
        %7259 = vmatprep.subr.bf16.mxu0 0
        %7260 = vmatpush1.bf16.msra.mxu0 0
        %7261 = vmatprep.subr.bf16.mxu0 0
        %7262 = vmatpush1.bf16.msra.mxu0 0
        %7263 = vmatprep.subr.bf16.mxu0 0
        %7264 = vmatpush1.bf16.msra.mxu0 0
        %7265 = vmatprep.subr.bf16.mxu0 0
        %7266 = vmatpush1.bf16.msra.mxu0 0
        %7267 = vmatprep.subr.bf16.mxu0 0
        %7268 = vmatpush1.bf16.msra.mxu0 0
        %7269 = vmatprep.subr.bf16.mxu0 0
        %7270 = vmatpush1.bf16.msra.mxu0 0
        %7271 = vmatprep.subr.bf16.mxu0 0
        %7272 = vmatpush1.bf16.msra.mxu0 0
        %7273 = vmatprep.subr.bf16.mxu0 0
        %7274 = vmatpush1.bf16.msra.mxu0 0
        %7275 = vmatprep.mubr.bf16.mxu0 0
        %7276 = vmatmul.mubr.bf16.gmra.mrb[0].mxu0 %v7238
        %v7277 = vpop.f32.mrb[0].mxu0
        %v7278 = vadd.f32 0.0, %v7277
        %v7279 = vpop.f32.mrb[0].mxu0
        %v7280 = vpop.f32.mrb[0].mxu0
        %v7281 = vpop.f32.mrb[0].mxu0
        %7282 = vdwg.mxu0
        %v7284 = vsel %vm4954, %v5913, 0
        %v7287 = vsel %vm5951, %v5945, 0
        %7289 = vmatprep.subr.bf16.mxu0 0
        %7290 = vmatpush1.bf16.msra.mxu0 %v7287
        %7291 = vmatprep.subr.bf16.mxu0 0
        %7292 = vmatpush1.bf16.msra.mxu0 0
        %7293 = vmatprep.subr.bf16.mxu0 0
        %7294 = vmatpush1.bf16.msra.mxu0 0
        %7295 = vmatprep.subr.bf16.mxu0 0
        %7296 = vmatpush1.bf16.msra.mxu0 0
        %7297 = vmatprep.subr.bf16.mxu0 0
        %7298 = vmatpush1.bf16.msra.mxu0 0
        %7299 = vmatprep.subr.bf16.mxu0 0
        %7300 = vmatpush1.bf16.msra.mxu0 0
        %7301 = vmatprep.subr.bf16.mxu0 0
        %7302 = vmatpush1.bf16.msra.mxu0 0
        %7303 = vmatprep.subr.bf16.mxu0 0
        %7304 = vmatpush1.bf16.msra.mxu0 0
        %7305 = vmatprep.subr.bf16.mxu0 0
        %7306 = vmatpush1.bf16.msra.mxu0 0
        %7307 = vmatprep.subr.bf16.mxu0 0
        %7308 = vmatpush1.bf16.msra.mxu0 0
        %7309 = vmatprep.subr.bf16.mxu0 0
        %7310 = vmatpush1.bf16.msra.mxu0 0
        %7311 = vmatprep.subr.bf16.mxu0 0
        %7312 = vmatpush1.bf16.msra.mxu0 0
        %7313 = vmatprep.subr.bf16.mxu0 0
        %7314 = vmatpush1.bf16.msra.mxu0 0
        %7315 = vmatprep.subr.bf16.mxu0 0
        %7316 = vmatpush1.bf16.msra.mxu0 0
        %7317 = vmatprep.subr.bf16.mxu0 0
        %7318 = vmatpush1.bf16.msra.mxu0 0
        %7319 = vmatprep.subr.bf16.mxu0 0
        %7320 = vmatpush1.bf16.msra.mxu0 0
        %7321 = vmatprep.mubr.bf16.mxu0 0
        %7322 = vmatmul.mubr.bf16.gmra.mrb[0].mxu0 %v7284
        %v7323 = vpop.f32.mrb[0].mxu0
        %v7324 = vadd.f32 0.0, %v7323
        %v7325 = vpop.f32.mrb[0].mxu0
        %v7326 = vpop.f32.mrb[0].mxu0
        %v7327 = vpop.f32.mrb[0].mxu0
        %7328 = vdwg.mxu0
        %v7330 = vsel %vm4954, %v5914, 0
        %v7333 = vsel %vm5951, %v5946, 0
        %7335 = vmatprep.subr.bf16.mxu0 0
        %7336 = vmatpush1.bf16.msra.mxu0 %v7333
        %7337 = vmatprep.subr.bf16.mxu0 0
        %7338 = vmatpush1.bf16.msra.mxu0 0
        %7339 = vmatprep.subr.bf16.mxu0 0
        %7340 = vmatpush1.bf16.msra.mxu0 0
        %7341 = vmatprep.subr.bf16.mxu0 0
        %7342 = vmatpush1.bf16.msra.mxu0 0
        %7343 = vmatprep.subr.bf16.mxu0 0
        %7344 = vmatpush1.bf16.msra.mxu0 0
        %7345 = vmatprep.subr.bf16.mxu0 0
        %7346 = vmatpush1.bf16.msra.mxu0 0
        %7347 = vmatprep.subr.bf16.mxu0 0
        %7348 = vmatpush1.bf16.msra.mxu0 0
        %7349 = vmatprep.subr.bf16.mxu0 0
        %7350 = vmatpush1.bf16.msra.mxu0 0
        %7351 = vmatprep.subr.bf16.mxu0 0
        %7352 = vmatpush1.bf16.msra.mxu0 0
        %7353 = vmatprep.subr.bf16.mxu0 0
        %7354 = vmatpush1.bf16.msra.mxu0 0
        %7355 = vmatprep.subr.bf16.mxu0 0
        %7356 = vmatpush1.bf16.msra.mxu0 0
        %7357 = vmatprep.subr.bf16.mxu0 0
        %7358 = vmatpush1.bf16.msra.mxu0 0
        %7359 = vmatprep.subr.bf16.mxu0 0
        %7360 = vmatpush1.bf16.msra.mxu0 0
        %7361 = vmatprep.subr.bf16.mxu0 0
        %7362 = vmatpush1.bf16.msra.mxu0 0
        %7363 = vmatprep.subr.bf16.mxu0 0
        %7364 = vmatpush1.bf16.msra.mxu0 0
        %7365 = vmatprep.subr.bf16.mxu0 0
        %7366 = vmatpush1.bf16.msra.mxu0 0
        %7367 = vmatprep.mubr.bf16.mxu0 0
        %7368 = vmatmul.mubr.bf16.gmra.mrb[0].mxu0 %v7330
        %v7369 = vpop.f32.mrb[0].mxu0
        %v7370 = vadd.f32 0.0, %v7369
        %v7371 = vpop.f32.mrb[0].mxu0
        %v7372 = vpop.f32.mrb[0].mxu0
        %v7373 = vpop.f32.mrb[0].mxu0
        %7374 = vdwg.mxu0
        %v7376 = vsel %vm4954, %v5915, 0
        %v7379 = vsel %vm5951, %v5947, 0
        %7381 = vmatprep.subr.bf16.mxu0 0
        %7382 = vmatpush1.bf16.msra.mxu0 %v7379
        %7383 = vmatprep.subr.bf16.mxu0 0
        %7384 = vmatpush1.bf16.msra.mxu0 0
        %7385 = vmatprep.subr.bf16.mxu0 0
        %7386 = vmatpush1.bf16.msra.mxu0 0
        %7387 = vmatprep.subr.bf16.mxu0 0
        %7388 = vmatpush1.bf16.msra.mxu0 0
        %7389 = vmatprep.subr.bf16.mxu0 0
        %7390 = vmatpush1.bf16.msra.mxu0 0
        %7391 = vmatprep.subr.bf16.mxu0 0
        %7392 = vmatpush1.bf16.msra.mxu0 0
        %7393 = vmatprep.subr.bf16.mxu0 0
        %7394 = vmatpush1.bf16.msra.mxu0 0
        %7395 = vmatprep.subr.bf16.mxu0 0
        %7396 = vmatpush1.bf16.msra.mxu0 0
        %7397 = vmatprep.subr.bf16.mxu0 0
        %7398 = vmatpush1.bf16.msra.mxu0 0
        %7399 = vmatprep.subr.bf16.mxu0 0
        %7400 = vmatpush1.bf16.msra.mxu0 0
        %7401 = vmatprep.subr.bf16.mxu0 0
        %7402 = vmatpush1.bf16.msra.mxu0 0
        %7403 = vmatprep.subr.bf16.mxu0 0
        %7404 = vmatpush1.bf16.msra.mxu0 0
        %7405 = vmatprep.subr.bf16.mxu0 0
        %7406 = vmatpush1.bf16.msra.mxu0 0
        %7407 = vmatprep.subr.bf16.mxu0 0
        %7408 = vmatpush1.bf16.msra.mxu0 0
        %7409 = vmatprep.subr.bf16.mxu0 0
        %7410 = vmatpush1.bf16.msra.mxu0 0
        %7411 = vmatprep.subr.bf16.mxu0 0
        %7412 = vmatpush1.bf16.msra.mxu0 0
        %7413 = vmatprep.mubr.bf16.mxu0 0
        %7414 = vmatmul.mubr.bf16.gmra.mrb[0].mxu0 %v7376
        %v7415 = vpop.f32.mrb[0].mxu0
        %v7416 = vadd.f32 0.0, %v7415
        %v7417 = vpop.f32.mrb[0].mxu0
        %v7418 = vpop.f32.mrb[0].mxu0
        %v7419 = vpop.f32.mrb[0].mxu0
        %7420 = vdwg.mxu0
        %v7421 = vadd.f32 %v5852, %v5990
        %v7422 = vadd.f32 %v5853, %v6036
        %v7423 = vadd.f32 %v5854, %v6082
        %v7424 = vadd.f32 %v5855, %v6128
        %v7425 = vadd.f32 %v5856, %v6174
        %v7426 = vadd.f32 %v5857, %v6220
        %v7427 = vadd.f32 %v5858, %v6266
        %v7428 = vadd.f32 %v5859, %v6312
        %v7429 = vadd.f32 %v5860, %v6358
        %v7430 = vadd.f32 %v5861, %v6404
        %v7431 = vadd.f32 %v5862, %v6450
        %v7432 = vadd.f32 %v5863, %v6496
        %v7433 = vadd.f32 %v5864, %v6542
        %v7434 = vadd.f32 %v5865, %v6588
        %v7435 = vadd.f32 %v5866, %v6634
        %v7436 = vadd.f32 %v5867, %v6680
        %v7437 = vadd.f32 %v5868, %v6726
        %v7438 = vadd.f32 %v5869, %v6772
        %v7439 = vadd.f32 %v5870, %v6818
        %v7440 = vadd.f32 %v5871, %v6864
        %v7441 = vadd.f32 %v5872, %v6910
        %v7442 = vadd.f32 %v5873, %v6956
        %v7443 = vadd.f32 %v5874, %v7002
        %v7444 = vadd.f32 %v5875, %v7048
        %v7445 = vadd.f32 %v5876, %v7094
        %v7446 = vadd.f32 %v5877, %v7140
        %v7447 = vadd.f32 %v5878, %v7186
        %v7448 = vadd.f32 %v5879, %v7232
        %v7449 = vadd.f32 %v5880, %v7278
        %v7450 = vadd.f32 %v5881, %v7324
        %v7451 = vadd.f32 %v5882, %v7370
        %v7452 = vadd.f32 %v5883, %v7416
        %7453 = vst.msk [vmem:[#allocation10] sm:$0xff] %vm3449, %v7421
        %7454 = vst.msk [vmem:[#allocation10 + $0x8] sm:$0xff] %vm3449, %v7422
        %7455 = vst.msk [vmem:[#allocation10 + $0x10] sm:$0xff] %vm3449, %v7423
        %7456 = vst.msk [vmem:[#allocation10 + $0x18] sm:$0xff] %vm3449, %v7424
        %7457 = vst.msk [vmem:[#allocation10 + $0x20] sm:$0xff] %vm3449, %v7425
        %7458 = vst.msk [vmem:[#allocation10 + $0x28] sm:$0xff] %vm3449, %v7426
        %7459 = vst.msk [vmem:[#allocation10 + $0x30] sm:$0xff] %vm3449, %v7427
        %7460 = vst.msk [vmem:[#allocation10 + $0x38] sm:$0xff] %vm3449, %v7428
        %7461 = vst.msk [vmem:[#allocation10 + $0x40] sm:$0xff] %vm3449, %v7429
        %7462 = vst.msk [vmem:[#allocation10 + $0x48] sm:$0xff] %vm3449, %v7430
        %7463 = vst.msk [vmem:[#allocation10 + $0x50] sm:$0xff] %vm3449, %v7431
        %7464 = vst.msk [vmem:[#allocation10 + $0x58] sm:$0xff] %vm3449, %v7432
        %7465 = vst.msk [vmem:[#allocation10 + $0x60] sm:$0xff] %vm3449, %v7433
        %7466 = vst.msk [vmem:[#allocation10 + $0x68] sm:$0xff] %vm3449, %v7434
        %7467 = vst.msk [vmem:[#allocation10 + $0x70] sm:$0xff] %vm3449, %v7435
        %7468 = vst.msk [vmem:[#allocation10 + $0x78] sm:$0xff] %vm3449, %v7436
        %7469 = vst.msk [vmem:[#allocation10 + $0x80] sm:$0xff] %vm3449, %v7437
        %7470 = vst.msk [vmem:[#allocation10 + $0x88] sm:$0xff] %vm3449, %v7438
        %7471 = vst.msk [vmem:[#allocation10 + $0x90] sm:$0xff] %vm3449, %v7439
        %7472 = vst.msk [vmem:[#allocation10 + $0x98] sm:$0xff] %vm3449, %v7440
        %7473 = vst.msk [vmem:[#allocation10 + $0xa0] sm:$0xff] %vm3449, %v7441
        %7474 = vst.msk [vmem:[#allocation10 + $0xa8] sm:$0xff] %vm3449, %v7442
        %7475 = vst.msk [vmem:[#allocation10 + $0xb0] sm:$0xff] %vm3449, %v7443
        %7476 = vst.msk [vmem:[#allocation10 + $0xb8] sm:$0xff] %vm3449, %v7444
        %7477 = vst.msk [vmem:[#allocation10 + $0xc0] sm:$0xff] %vm3449, %v7445
        %7478 = vst.msk [vmem:[#allocation10 + $0xc8] sm:$0xff] %vm3449, %v7446
        %7479 = vst.msk [vmem:[#allocation10 + $0xd0] sm:$0xff] %vm3449, %v7447
        %7480 = vst.msk [vmem:[#allocation10 + $0xd8] sm:$0xff] %vm3449, %v7448
        %7481 = vst.msk [vmem:[#allocation10 + $0xe0] sm:$0xff] %vm3449, %v7449
        %7482 = vst.msk [vmem:[#allocation10 + $0xe8] sm:$0xff] %vm3449, %v7450
        %7483 = vst.msk [vmem:[#allocation10 + $0xf0] sm:$0xff] %vm3449, %v7451
        %7484 = vst.msk [vmem:[#allocation10 + $0xf8] sm:$0xff] %vm3449, %v7452
        %7485 = vst.msk [vmem:[#allocation8] sm:$0xff] %vm5627, %v5051
        %7486 = vst.msk [vmem:[#allocation8 + $0x8] sm:$0xff] %vm5627, %v5052
        %7487 = vst.msk [vmem:[#allocation8 + $0x10] sm:$0xff] %vm5627, %v5053
        %7488 = vst.msk [vmem:[#allocation8 + $0x18] sm:$0xff] %vm5627, %v5054
        %7489 = vst.msk [vmem:[#allocation8 + $0x20] sm:$0xff] %vm5627, %v5055
        %7490 = vst.msk [vmem:[#allocation8 + $0x28] sm:$0xff] %vm5627, %v5056
        %7491 = vst.msk [vmem:[#allocation8 + $0x30] sm:$0xff] %vm5627, %v5057
        %7492 = vst.msk [vmem:[#allocation8 + $0x38] sm:$0xff] %vm5627, %v5058
        %7493 = vst.msk [vmem:[#allocation8 + $0x40] sm:$0xff] %vm5627, %v5059
        %7494 = vst.msk [vmem:[#allocation8 + $0x48] sm:$0xff] %vm5627, %v5060
        %7495 = vst.msk [vmem:[#allocation8 + $0x50] sm:$0xff] %vm5627, %v5061
        %7496 = vst.msk [vmem:[#allocation8 + $0x58] sm:$0xff] %vm5627, %v5062
        %7497 = vst.msk [vmem:[#allocation8 + $0x60] sm:$0xff] %vm5627, %v5063
        %7498 = vst.msk [vmem:[#allocation8 + $0x68] sm:$0xff] %vm5627, %v5064
        %7499 = vst.msk [vmem:[#allocation8 + $0x70] sm:$0xff] %vm5627, %v5065
        %7500 = vst.msk [vmem:[#allocation8 + $0x78] sm:$0xff] %vm5627, %v5066
        %7501 = vst.msk [vmem:[#allocation8 + $0x80] sm:$0xff] %vm5627, %v5067
        %7502 = vst.msk [vmem:[#allocation8 + $0x88] sm:$0xff] %vm5627, %v5068
        %7503 = vst.msk [vmem:[#allocation8 + $0x90] sm:$0xff] %vm5627, %v5069
        %7504 = vst.msk [vmem:[#allocation8 + $0x98] sm:$0xff] %vm5627, %v5070
        %7505 = vst.msk [vmem:[#allocation8 + $0xa0] sm:$0xff] %vm5627, %v5071
        %7506 = vst.msk [vmem:[#allocation8 + $0xa8] sm:$0xff] %vm5627, %v5072
        %7507 = vst.msk [vmem:[#allocation8 + $0xb0] sm:$0xff] %vm5627, %v5073
        %7508 = vst.msk [vmem:[#allocation8 + $0xb8] sm:$0xff] %vm5627, %v5074
        %7509 = vst.msk [vmem:[#allocation8 + $0xc0] sm:$0xff] %vm5627, %v5075
        %7510 = vst.msk [vmem:[#allocation8 + $0xc8] sm:$0xff] %vm5627, %v5076
        %7511 = vst.msk [vmem:[#allocation8 + $0xd0] sm:$0xff] %vm5627, %v5077
        %7512 = vst.msk [vmem:[#allocation8 + $0xd8] sm:$0xff] %vm5627, %v5078
        %7513 = vst.msk [vmem:[#allocation8 + $0xe0] sm:$0xff] %vm5627, %v5079
        %7514 = vst.msk [vmem:[#allocation8 + $0xe8] sm:$0xff] %vm5627, %v5080
        %7515 = vst.msk [vmem:[#allocation8 + $0xf0] sm:$0xff] %vm5627, %v5081
        %7516 = vst.msk [vmem:[#allocation8 + $0xf8] sm:$0xff] %vm5627, %v5082
        // Predicated region
        $region97: #{tpu_custom_call.1} parent=63 // pred_check
          %p7517 = pneg %p568
        $region98: #{tpu_custom_call.1} parent=63 // pred_check_branch
          %7519 = sbr.rel (%p7517) target = $region100
        $region99: #{tpu_custom_call.1} parent=63 // pred_region
          %v7520 = vld [vmem:[#allocation10] sm:$0xff]
          %v7521 = vld [vmem:[#allocation9] sm:$0xff]
          %7523 = vset.pattern.permute.xlu0 0
          %7524 = vperm.xlu0 %7523, %v7521
          %v7525 = vpop.permute.xlu0 %7524
          %v7527 = vrcp.pop %v7525
          %v7528 = vmul.f32 %v7520, %v7527
          %v7529 = vpack.c.bf16 %v7528, %v7528
          %7530 = vst.msk [vmem:[#allocation11] sm:$0xf] %vm2937, %v7529
          %s7531 = scalar_lea.vmem [#allocation10], 8
          %v7532 = vld [vmem:[%s7531] sm:$0xff]
          %s7533 = scalar_lea.vmem [#allocation9], 8
          %v7534 = vld [vmem:[%s7533] sm:$0xff]
          %7536 = vset.pattern.permute.xlu0 0
          %7537 = vperm.xlu0 %7536, %v7534
          %v7538 = vpop.permute.xlu0 %7537
          %v7540 = vrcp.pop %v7538
          %v7541 = vmul.f32 %v7532, %v7540
          %v7542 = vpack.c.bf16 %v7541, %v7541
          %v7544 = vunpack.c.l.b16 %v7542
          %v7545 = vpack.c.b16 %v7544, %v7544
          %7546 = vrot.lane.b32.xlu0 %v7545, 12
          %v7547 = vpop.permute.xlu0 %7546
          %vm7549 = vcmask 191584
          %7550 = vst.msk [vmem:[#allocation11] sm:$0xf] %vm7549, %v7547
          %s7551 = scalar_lea.vmem [#allocation10], 16
          %v7552 = vld [vmem:[%s7551] sm:$0xff]
          %s7553 = scalar_lea.vmem [#allocation9], 16
          %v7554 = vld [vmem:[%s7553] sm:$0xff]
          %7556 = vset.pattern.permute.xlu0 0
          %7557 = vperm.xlu0 %7556, %v7554
          %v7558 = vpop.permute.xlu0 %7557
          %v7560 = vrcp.pop %v7558
          %v7561 = vmul.f32 %v7552, %v7560
          %v7562 = vpack.c.bf16 %v7561, %v7561
          %v7564 = vunpack.c.l.b16 %v7562
          %v7565 = vpack.c.b16 %v7564, %v7564
          %7566 = vrot.lane.b32.xlu0 %v7565, 24
          %v7567 = vpop.permute.xlu0 %7566
          %vm7569 = vcmask 289984
          %7570 = vst.msk [vmem:[#allocation11] sm:$0xf] %vm7569, %v7567
          %s7571 = scalar_lea.vmem [#allocation10], 24
          %v7572 = vld [vmem:[%s7571] sm:$0xff]
          %s7573 = scalar_lea.vmem [#allocation9], 24
          %v7574 = vld [vmem:[%s7573] sm:$0xff]
          %7576 = vset.pattern.permute.xlu0 0
          %7577 = vperm.xlu0 %7576, %v7574
          %v7578 = vpop.permute.xlu0 %7577
          %v7580 = vrcp.pop %v7578
          %v7581 = vmul.f32 %v7572, %v7580
          %v7582 = vpack.c.bf16 %v7581, %v7581
          %v7584 = vunpack.c.l.b16 %v7582
          %v7585 = vpack.c.b16 %v7584, %v7584
          %7586 = vrot.lane.b32.xlu0 %v7585, 36
          %v7587 = vpop.permute.xlu0 %7586
          %vm7589 = vcmask 388384
          %7590 = vst.msk [vmem:[#allocation11] sm:$0xf] %vm7589, %v7587
          %s7591 = scalar_lea.vmem [#allocation10], 32
          %v7592 = vld [vmem:[%s7591] sm:$0xff]
          %s7593 = scalar_lea.vmem [#allocation9], 32
          %v7594 = vld [vmem:[%s7593] sm:$0xff]
          %7596 = vset.pattern.permute.xlu0 0
          %7597 = vperm.xlu0 %7596, %v7594
          %v7598 = vpop.permute.xlu0 %7597
          %v7600 = vrcp.pop %v7598
          %v7601 = vmul.f32 %v7592, %v7600
          %v7602 = vpack.c.bf16 %v7601, %v7601
          %v7604 = vunpack.c.l.b16 %v7602
          %v7605 = vpack.c.b16 %v7604, %v7604
          %7606 = vrot.lane.b32.xlu0 %v7605, 48
          %v7607 = vpop.permute.xlu0 %7606
          %vm7609 = vcmask 486784
          %7610 = vst.msk [vmem:[#allocation11] sm:$0xf] %vm7609, %v7607
          %s7611 = scalar_lea.vmem [#allocation10], 40
          %v7612 = vld [vmem:[%s7611] sm:$0xff]
          %s7613 = scalar_lea.vmem [#allocation9], 40
          %v7614 = vld [vmem:[%s7613] sm:$0xff]
          %7616 = vset.pattern.permute.xlu0 0
          %7617 = vperm.xlu0 %7616, %v7614
          %v7618 = vpop.permute.xlu0 %7617
          %v7620 = vrcp.pop %v7618
          %v7621 = vmul.f32 %v7612, %v7620
          %v7622 = vpack.c.bf16 %v7621, %v7621
          %v7624 = vunpack.c.l.b16 %v7622
          %v7625 = vpack.c.b16 %v7624, %v7624
          %7626 = vrot.lane.b32.xlu0 %v7625, 60
          %v7627 = vpop.permute.xlu0 %7626
          %vm7629 = vcmask 585184
          %7630 = vst.msk [vmem:[#allocation11] sm:$0xf] %vm7629, %v7627
          %s7631 = scalar_lea.vmem [#allocation10], 48
          %v7632 = vld [vmem:[%s7631] sm:$0xff]
          %s7633 = scalar_lea.vmem [#allocation9], 48
          %v7634 = vld [vmem:[%s7633] sm:$0xff]
          %7636 = vset.pattern.permute.xlu0 0
          %7637 = vperm.xlu0 %7636, %v7634
          %v7638 = vpop.permute.xlu0 %7637
          %v7640 = vrcp.pop %v7638
          %v7641 = vmul.f32 %v7632, %v7640
          %v7642 = vpack.c.bf16 %v7641, %v7641
          %v7644 = vunpack.c.l.b16 %v7642
          %v7645 = vpack.c.b16 %v7644, %v7644
          %7646 = vrot.lane.b32.xlu0 %v7645, 72
          %v7647 = vpop.permute.xlu0 %7646
          %vm7649 = vcmask 683584
          %7650 = vst.msk [vmem:[#allocation11] sm:$0xf] %vm7649, %v7647
          %s7651 = scalar_lea.vmem [#allocation10], 56
          %v7652 = vld [vmem:[%s7651] sm:$0xff]
          %s7653 = scalar_lea.vmem [#allocation9], 56
          %v7654 = vld [vmem:[%s7653] sm:$0xff]
          %7656 = vset.pattern.permute.xlu0 0
          %7657 = vperm.xlu0 %7656, %v7654
          %v7658 = vpop.permute.xlu0 %7657
          %v7660 = vrcp.pop %v7658
          %v7661 = vmul.f32 %v7652, %v7660
          %v7662 = vpack.c.bf16 %v7661, %v7661
          %v7664 = vunpack.c.l.b16 %v7662
          %v7665 = vpack.c.b16 %v7664, %v7664
          %7666 = vrot.lane.b32.xlu0 %v7665, 84
          %v7667 = vpop.permute.xlu0 %7666
          %vm7669 = vcmask 781984
          %7670 = vst.msk [vmem:[#allocation11] sm:$0xf] %vm7669, %v7667
          %s7671 = scalar_lea.vmem [#allocation10], 64
          %v7672 = vld [vmem:[%s7671] sm:$0xff]
          %s7673 = scalar_lea.vmem [#allocation9], 64
          %v7674 = vld [vmem:[%s7673] sm:$0xff]
          %7676 = vset.pattern.permute.xlu0 0
          %7677 = vperm.xlu0 %7676, %v7674
          %v7678 = vpop.permute.xlu0 %7677
          %v7680 = vrcp.pop %v7678
          %v7681 = vmul.f32 %v7672, %v7680
          %v7682 = vpack.c.bf16 %v7681, %v7681
          %v7684 = vunpack.c.l.b16 %v7682
          %v7685 = vpack.c.b16 %v7684, %v7684
          %7686 = vrot.lane.b32.xlu0 %v7685, 96
          %v7687 = vpop.permute.xlu0 %7686
          %vm7689 = vcmask 880384
          %7690 = vst.msk [vmem:[#allocation11] sm:$0xf] %vm7689, %v7687
          %s7691 = scalar_lea.vmem [#allocation10], 72
          %v7692 = vld [vmem:[%s7691] sm:$0xff]
          %s7693 = scalar_lea.vmem [#allocation9], 72
          %v7694 = vld [vmem:[%s7693] sm:$0xff]
          %7696 = vset.pattern.permute.xlu0 0
          %7697 = vperm.xlu0 %7696, %v7694
          %v7698 = vpop.permute.xlu0 %7697
          %v7700 = vrcp.pop %v7698
          %v7701 = vmul.f32 %v7692, %v7700
          %v7702 = vpack.c.bf16 %v7701, %v7701
          %v7704 = vunpack.c.l.b16 %v7702
          %v7705 = vpack.c.b16 %v7704, %v7704
          %7706 = vrot.lane.b32.xlu0 %v7705, 108
          %v7707 = vpop.permute.xlu0 %7706
          %vm7709 = vcmask 978784
          %7710 = vst.msk [vmem:[#allocation11] sm:$0xf] %vm7709, %v7707
          %s7711 = scalar_lea.vmem [#allocation10], 80
          %v7712 = vld [vmem:[%s7711] sm:$0xff]
          %s7713 = scalar_lea.vmem [#allocation9], 80
          %v7714 = vld [vmem:[%s7713] sm:$0xff]
          %7716 = vset.pattern.permute.xlu0 0
          %7717 = vperm.xlu0 %7716, %v7714
          %v7718 = vpop.permute.xlu0 %7717
          %v7720 = vrcp.pop %v7718
          %v7721 = vmul.f32 %v7712, %v7720
          %v7722 = vpack.c.bf16 %v7721, %v7721
          %v7724 = vunpack.c.l.b16 %v7722
          %v7725 = vpack.c.b16 %v7724, %v7724
          %7726 = vrot.lane.b32.xlu0 %v7725, 120
          %v7727 = vpop.permute.xlu0 %7726
          %v7728 = vrot.slane %v7727, 4
          %vm7729 = vcmask 982016
          %v7730 = vsel %vm7729, %v7728, %v7727
          %vm7732 = vcmask 1044416
          %vm7733 = vcmask 31748
          %vm7734 = vmor %vm7733, %vm7732
          %7735 = vst.msk [vmem:[#allocation11] sm:$0xff] %vm7734, %v7730
          %s7736 = scalar_lea.vmem [#allocation10], 88
          %v7737 = vld [vmem:[%s7736] sm:$0xff]
          %s7738 = scalar_lea.vmem [#allocation9], 88
          %v7739 = vld [vmem:[%s7738] sm:$0xff]
          %7741 = vset.pattern.permute.xlu0 0
          %7742 = vperm.xlu0 %7741, %v7739
          %v7743 = vpop.permute.xlu0 %7742
          %v7745 = vrcp.pop %v7743
          %v7746 = vmul.f32 %v7737, %v7745
          %v7747 = vpack.c.bf16 %v7746, %v7746
          %v7749 = vunpack.c.l.b16 %v7747
          %v7750 = vpack.c.b16 %v7749, %v7749
          %7751 = vrot.lane.b32.xlu0 %v7750, 4
          %v7752 = vpop.permute.xlu0 %7751
          %vm7754 = vcmask 125984
          %7755 = vst.msk [vmem:[#allocation11 + $0x4] sm:$0xf] %vm7754, %v7752
          %s7756 = scalar_lea.vmem [#allocation10], 96
          %v7757 = vld [vmem:[%s7756] sm:$0xff]
          %s7758 = scalar_lea.vmem [#allocation9], 96
          %v7759 = vld [vmem:[%s7758] sm:$0xff]
          %7761 = vset.pattern.permute.xlu0 0
          %7762 = vperm.xlu0 %7761, %v7759
          %v7763 = vpop.permute.xlu0 %7762
          %v7765 = vrcp.pop %v7763
          %v7766 = vmul.f32 %v7757, %v7765
          %v7767 = vpack.c.bf16 %v7766, %v7766
          %v7769 = vunpack.c.l.b16 %v7767
          %v7770 = vpack.c.b16 %v7769, %v7769
          %7771 = vrot.lane.b32.xlu0 %v7770, 16
          %v7772 = vpop.permute.xlu0 %7771
          %vm7774 = vcmask 224384
          %7775 = vst.msk [vmem:[#allocation11 + $0x4] sm:$0xf] %vm7774, %v7772
          %s7776 = scalar_lea.vmem [#allocation10], 104
          %v7777 = vld [vmem:[%s7776] sm:$0xff]
          %s7778 = scalar_lea.vmem [#allocation9], 104
          %v7779 = vld [vmem:[%s7778] sm:$0xff]
          %7781 = vset.pattern.permute.xlu0 0
          %7782 = vperm.xlu0 %7781, %v7779
          %v7783 = vpop.permute.xlu0 %7782
          %v7785 = vrcp.pop %v7783
          %v7786 = vmul.f32 %v7777, %v7785
          %v7787 = vpack.c.bf16 %v7786, %v7786
          %v7789 = vunpack.c.l.b16 %v7787
          %v7790 = vpack.c.b16 %v7789, %v7789
          %7791 = vrot.lane.b32.xlu0 %v7790, 28
          %v7792 = vpop.permute.xlu0 %7791
          %vm7794 = vcmask 322784
          %7795 = vst.msk [vmem:[#allocation11 + $0x4] sm:$0xf] %vm7794, %v7792
          %s7796 = scalar_lea.vmem [#allocation10], 112
          %v7797 = vld [vmem:[%s7796] sm:$0xff]
          %s7798 = scalar_lea.vmem [#allocation9], 112
          %v7799 = vld [vmem:[%s7798] sm:$0xff]
          %7801 = vset.pattern.permute.xlu0 0
          %7802 = vperm.xlu0 %7801, %v7799
          %v7803 = vpop.permute.xlu0 %7802
          %v7805 = vrcp.pop %v7803
          %v7806 = vmul.f32 %v7797, %v7805
          %v7807 = vpack.c.bf16 %v7806, %v7806
          %v7809 = vunpack.c.l.b16 %v7807
          %v7810 = vpack.c.b16 %v7809, %v7809
          %7811 = vrot.lane.b32.xlu0 %v7810, 40
          %v7812 = vpop.permute.xlu0 %7811
          %vm7814 = vcmask 421184
          %7815 = vst.msk [vmem:[#allocation11 + $0x4] sm:$0xf] %vm7814, %v7812
          %s7816 = scalar_lea.vmem [#allocation10], 120
          %v7817 = vld [vmem:[%s7816] sm:$0xff]
          %s7818 = scalar_lea.vmem [#allocation9], 120
          %v7819 = vld [vmem:[%s7818] sm:$0xff]
          %7821 = vset.pattern.permute.xlu0 0
          %7822 = vperm.xlu0 %7821, %v7819
          %v7823 = vpop.permute.xlu0 %7822
          %v7825 = vrcp.pop %v7823
          %v7826 = vmul.f32 %v7817, %v7825
          %v7827 = vpack.c.bf16 %v7826, %v7826
          %v7829 = vunpack.c.l.b16 %v7827
          %v7830 = vpack.c.b16 %v7829, %v7829
          %7831 = vrot.lane.b32.xlu0 %v7830, 52
          %v7832 = vpop.permute.xlu0 %7831
          %vm7834 = vcmask 519584
          %7835 = vst.msk [vmem:[#allocation11 + $0x4] sm:$0xf] %vm7834, %v7832
          %s7836 = scalar_lea.vmem [#allocation10], 128
          %v7837 = vld [vmem:[%s7836] sm:$0xff]
          %s7838 = scalar_lea.vmem [#allocation9], 128
          %v7839 = vld [vmem:[%s7838] sm:$0xff]
          %7841 = vset.pattern.permute.xlu0 0
          %7842 = vperm.xlu0 %7841, %v7839
          %v7843 = vpop.permute.xlu0 %7842
          %v7845 = vrcp.pop %v7843
          %v7846 = vmul.f32 %v7837, %v7845
          %v7847 = vpack.c.bf16 %v7846, %v7846
          %v7849 = vunpack.c.l.b16 %v7847
          %v7850 = vpack.c.b16 %v7849, %v7849
          %7851 = vrot.lane.b32.xlu0 %v7850, 64
          %v7852 = vpop.permute.xlu0 %7851
          %vm7854 = vcmask 617984
          %7855 = vst.msk [vmem:[#allocation11 + $0x4] sm:$0xf] %vm7854, %v7852
          %s7856 = scalar_lea.vmem [#allocation10], 136
          %v7857 = vld [vmem:[%s7856] sm:$0xff]
          %s7858 = scalar_lea.vmem [#allocation9], 136
          %v7859 = vld [vmem:[%s7858] sm:$0xff]
          %7861 = vset.pattern.permute.xlu0 0
          %7862 = vperm.xlu0 %7861, %v7859
          %v7863 = vpop.permute.xlu0 %7862
          %v7865 = vrcp.pop %v7863
          %v7866 = vmul.f32 %v7857, %v7865
          %v7867 = vpack.c.bf16 %v7866, %v7866
          %v7869 = vunpack.c.l.b16 %v7867
          %v7870 = vpack.c.b16 %v7869, %v7869
          %7871 = vrot.lane.b32.xlu0 %v7870, 76
          %v7872 = vpop.permute.xlu0 %7871
          %vm7874 = vcmask 716384
          %7875 = vst.msk [vmem:[#allocation11 + $0x4] sm:$0xf] %vm7874, %v7872
          %s7876 = scalar_lea.vmem [#allocation10], 144
          %v7877 = vld [vmem:[%s7876] sm:$0xff]
          %s7878 = scalar_lea.vmem [#allocation9], 144
          %v7879 = vld [vmem:[%s7878] sm:$0xff]
          %7881 = vset.pattern.permute.xlu0 0
          %7882 = vperm.xlu0 %7881, %v7879
          %v7883 = vpop.permute.xlu0 %7882
          %v7885 = vrcp.pop %v7883
          %v7886 = vmul.f32 %v7877, %v7885
          %v7887 = vpack.c.bf16 %v7886, %v7886
          %v7889 = vunpack.c.l.b16 %v7887
          %v7890 = vpack.c.b16 %v7889, %v7889
          %7891 = vrot.lane.b32.xlu0 %v7890, 88
          %v7892 = vpop.permute.xlu0 %7891
          %vm7894 = vcmask 814784
          %7895 = vst.msk [vmem:[#allocation11 + $0x4] sm:$0xf] %vm7894, %v7892
          %s7896 = scalar_lea.vmem [#allocation10], 152
          %v7897 = vld [vmem:[%s7896] sm:$0xff]
          %s7898 = scalar_lea.vmem [#allocation9], 152
          %v7899 = vld [vmem:[%s7898] sm:$0xff]
          %7901 = vset.pattern.permute.xlu0 0
          %7902 = vperm.xlu0 %7901, %v7899
          %v7903 = vpop.permute.xlu0 %7902
          %v7905 = vrcp.pop %v7903
          %v7906 = vmul.f32 %v7897, %v7905
          %v7907 = vpack.c.bf16 %v7906, %v7906
          %v7909 = vunpack.c.l.b16 %v7907
          %v7910 = vpack.c.b16 %v7909, %v7909
          %7911 = vrot.lane.b32.xlu0 %v7910, 100
          %v7912 = vpop.permute.xlu0 %7911
          %vm7914 = vcmask 913184
          %7915 = vst.msk [vmem:[#allocation11 + $0x4] sm:$0xf] %vm7914, %v7912
          %s7916 = scalar_lea.vmem [#allocation10], 160
          %v7917 = vld [vmem:[%s7916] sm:$0xff]
          %s7918 = scalar_lea.vmem [#allocation9], 160
          %v7919 = vld [vmem:[%s7918] sm:$0xff]
          %7921 = vset.pattern.permute.xlu0 0
          %7922 = vperm.xlu0 %7921, %v7919
          %v7923 = vpop.permute.xlu0 %7922
          %v7925 = vrcp.pop %v7923
          %v7926 = vmul.f32 %v7917, %v7925
          %v7927 = vpack.c.bf16 %v7926, %v7926
          %v7929 = vunpack.c.l.b16 %v7927
          %v7930 = vpack.c.b16 %v7929, %v7929
          %7931 = vrot.lane.b32.xlu0 %v7930, 112
          %v7932 = vpop.permute.xlu0 %7931
          %vm7934 = vcmask 1011584
          %7935 = vst.msk [vmem:[#allocation11 + $0x4] sm:$0xf] %vm7934, %v7932
          %s7936 = scalar_lea.vmem [#allocation10], 168
          %v7937 = vld [vmem:[%s7936] sm:$0xff]
          %s7938 = scalar_lea.vmem [#allocation9], 168
          %v7939 = vld [vmem:[%s7938] sm:$0xff]
          %7941 = vset.pattern.permute.xlu0 0
          %7942 = vperm.xlu0 %7941, %v7939
          %v7943 = vpop.permute.xlu0 %7942
          %v7945 = vrcp.pop %v7943
          %v7946 = vmul.f32 %v7937, %v7945
          %v7947 = vpack.c.bf16 %v7946, %v7946
          %v7949 = vunpack.c.l.b16 %v7947
          %v7950 = vpack.c.b16 %v7949, %v7949
          %7951 = vrot.lane.b32.xlu0 %v7950, 124
          %v7952 = vpop.permute.xlu0 %7951
          %v7953 = vrot.slane %v7952, 4
          %vm7954 = vcmask 1014784
          %v7955 = vsel %vm7954, %v7953, %v7952
          %vm7957 = vcmask 1044448
          %vm7958 = vcmask 64516
          %vm7959 = vmor %vm7958, %vm7957
          %7960 = vst.msk [vmem:[#allocation11 + $0x4] sm:$0xff] %vm7959, %v7955
          %s7961 = scalar_lea.vmem [#allocation10], 176
          %v7962 = vld [vmem:[%s7961] sm:$0xff]
          %s7963 = scalar_lea.vmem [#allocation9], 176
          %v7964 = vld [vmem:[%s7963] sm:$0xff]
          %7966 = vset.pattern.permute.xlu0 0
          %7967 = vperm.xlu0 %7966, %v7964
          %v7968 = vpop.permute.xlu0 %7967
          %v7970 = vrcp.pop %v7968
          %v7971 = vmul.f32 %v7962, %v7970
          %v7972 = vpack.c.bf16 %v7971, %v7971
          %v7974 = vunpack.c.l.b16 %v7972
          %v7975 = vpack.c.b16 %v7974, %v7974
          %7976 = vrot.lane.b32.xlu0 %v7975, 8
          %v7977 = vpop.permute.xlu0 %7976
          %vm7979 = vcmask 158784
          %7980 = vst.msk [vmem:[#allocation11 + $0x8] sm:$0xf] %vm7979, %v7977
          %s7981 = scalar_lea.vmem [#allocation10], 184
          %v7982 = vld [vmem:[%s7981] sm:$0xff]
          %s7983 = scalar_lea.vmem [#allocation9], 184
          %v7984 = vld [vmem:[%s7983] sm:$0xff]
          %7986 = vset.pattern.permute.xlu0 0
          %7987 = vperm.xlu0 %7986, %v7984
          %v7988 = vpop.permute.xlu0 %7987
          %v7990 = vrcp.pop %v7988
          %v7991 = vmul.f32 %v7982, %v7990
          %v7992 = vpack.c.bf16 %v7991, %v7991
          %v7994 = vunpack.c.l.b16 %v7992
          %v7995 = vpack.c.b16 %v7994, %v7994
          %7996 = vrot.lane.b32.xlu0 %v7995, 20
          %v7997 = vpop.permute.xlu0 %7996
          %vm7999 = vcmask 257184
          %8000 = vst.msk [vmem:[#allocation11 + $0x8] sm:$0xf] %vm7999, %v7997
          %s8001 = scalar_lea.vmem [#allocation10], 192
          %v8002 = vld [vmem:[%s8001] sm:$0xff]
          %s8003 = scalar_lea.vmem [#allocation9], 192
          %v8004 = vld [vmem:[%s8003] sm:$0xff]
          %8006 = vset.pattern.permute.xlu0 0
          %8007 = vperm.xlu0 %8006, %v8004
          %v8008 = vpop.permute.xlu0 %8007
          %v8010 = vrcp.pop %v8008
          %v8011 = vmul.f32 %v8002, %v8010
          %v8012 = vpack.c.bf16 %v8011, %v8011
          %v8014 = vunpack.c.l.b16 %v8012
          %v8015 = vpack.c.b16 %v8014, %v8014
          %8016 = vrot.lane.b32.xlu0 %v8015, 32
          %v8017 = vpop.permute.xlu0 %8016
          %vm8019 = vcmask 355584
          %8020 = vst.msk [vmem:[#allocation11 + $0x8] sm:$0xf] %vm8019, %v8017
          %s8021 = scalar_lea.vmem [#allocation10], 200
          %v8022 = vld [vmem:[%s8021] sm:$0xff]
          %s8023 = scalar_lea.vmem [#allocation9], 200
          %v8024 = vld [vmem:[%s8023] sm:$0xff]
          %8026 = vset.pattern.permute.xlu0 0
          %8027 = vperm.xlu0 %8026, %v8024
          %v8028 = vpop.permute.xlu0 %8027
          %v8030 = vrcp.pop %v8028
          %v8031 = vmul.f32 %v8022, %v8030
          %v8032 = vpack.c.bf16 %v8031, %v8031
          %v8034 = vunpack.c.l.b16 %v8032
          %v8035 = vpack.c.b16 %v8034, %v8034
          %8036 = vrot.lane.b32.xlu0 %v8035, 44
          %v8037 = vpop.permute.xlu0 %8036
          %vm8039 = vcmask 453984
          %8040 = vst.msk [vmem:[#allocation11 + $0x8] sm:$0xf] %vm8039, %v8037
          %s8041 = scalar_lea.vmem [#allocation10], 208
          %v8042 = vld [vmem:[%s8041] sm:$0xff]
          %s8043 = scalar_lea.vmem [#allocation9], 208
          %v8044 = vld [vmem:[%s8043] sm:$0xff]
          %8046 = vset.pattern.permute.xlu0 0
          %8047 = vperm.xlu0 %8046, %v8044
          %v8048 = vpop.permute.xlu0 %8047
          %v8050 = vrcp.pop %v8048
          %v8051 = vmul.f32 %v8042, %v8050
          %v8052 = vpack.c.bf16 %v8051, %v8051
          %v8054 = vunpack.c.l.b16 %v8052
          %v8055 = vpack.c.b16 %v8054, %v8054
          %8056 = vrot.lane.b32.xlu0 %v8055, 56
          %v8057 = vpop.permute.xlu0 %8056
          %vm8059 = vcmask 552384
          %8060 = vst.msk [vmem:[#allocation11 + $0x8] sm:$0xf] %vm8059, %v8057
          %s8061 = scalar_lea.vmem [#allocation10], 216
          %v8062 = vld [vmem:[%s8061] sm:$0xff]
          %s8063 = scalar_lea.vmem [#allocation9], 216
          %v8064 = vld [vmem:[%s8063] sm:$0xff]
          %8066 = vset.pattern.permute.xlu0 0
          %8067 = vperm.xlu0 %8066, %v8064
          %v8068 = vpop.permute.xlu0 %8067
          %v8070 = vrcp.pop %v8068
          %v8071 = vmul.f32 %v8062, %v8070
          %v8072 = vpack.c.bf16 %v8071, %v8071
          %v8074 = vunpack.c.l.b16 %v8072
          %v8075 = vpack.c.b16 %v8074, %v8074
          %8076 = vrot.lane.b32.xlu0 %v8075, 68
          %v8077 = vpop.permute.xlu0 %8076
          %vm8079 = vcmask 650784
          %8080 = vst.msk [vmem:[#allocation11 + $0x8] sm:$0xf] %vm8079, %v8077
          %s8081 = scalar_lea.vmem [#allocation10], 224
          %v8082 = vld [vmem:[%s8081] sm:$0xff]
          %s8083 = scalar_lea.vmem [#allocation9], 224
          %v8084 = vld [vmem:[%s8083] sm:$0xff]
          %8086 = vset.pattern.permute.xlu0 0
          %8087 = vperm.xlu0 %8086, %v8084
          %v8088 = vpop.permute.xlu0 %8087
          %v8090 = vrcp.pop %v8088
          %v8091 = vmul.f32 %v8082, %v8090
          %v8092 = vpack.c.bf16 %v8091, %v8091
          %v8094 = vunpack.c.l.b16 %v8092
          %v8095 = vpack.c.b16 %v8094, %v8094
          %8096 = vrot.lane.b32.xlu0 %v8095, 80
          %v8097 = vpop.permute.xlu0 %8096
          %vm8099 = vcmask 749184
          %8100 = vst.msk [vmem:[#allocation11 + $0x8] sm:$0xf] %vm8099, %v8097
          %s8101 = scalar_lea.vmem [#allocation10], 232
          %v8102 = vld [vmem:[%s8101] sm:$0xff]
          %s8103 = scalar_lea.vmem [#allocation9], 232
          %v8104 = vld [vmem:[%s8103] sm:$0xff]
          %8106 = vset.pattern.permute.xlu0 0
          %8107 = vperm.xlu0 %8106, %v8104
          %v8108 = vpop.permute.xlu0 %8107
          %v8110 = vrcp.pop %v8108
          %v8111 = vmul.f32 %v8102, %v8110
          %v8112 = vpack.c.bf16 %v8111, %v8111
          %v8114 = vunpack.c.l.b16 %v8112
          %v8115 = vpack.c.b16 %v8114, %v8114
          %8116 = vrot.lane.b32.xlu0 %v8115, 92
          %v8117 = vpop.permute.xlu0 %8116
          %vm8119 = vcmask 847584
          %8120 = vst.msk [vmem:[#allocation11 + $0x8] sm:$0xf] %vm8119, %v8117
          %s8121 = scalar_lea.vmem [#allocation10], 240
          %v8122 = vld [vmem:[%s8121] sm:$0xff]
          %s8123 = scalar_lea.vmem [#allocation9], 240
          %v8124 = vld [vmem:[%s8123] sm:$0xff]
          %8126 = vset.pattern.permute.xlu0 0
          %8127 = vperm.xlu0 %8126, %v8124
          %v8128 = vpop.permute.xlu0 %8127
          %v8130 = vrcp.pop %v8128
          %v8131 = vmul.f32 %v8122, %v8130
          %v8132 = vpack.c.bf16 %v8131, %v8131
          %v8134 = vunpack.c.l.b16 %v8132
          %v8135 = vpack.c.b16 %v8134, %v8134
          %8136 = vrot.lane.b32.xlu0 %v8135, 104
          %v8137 = vpop.permute.xlu0 %8136
          %vm8139 = vcmask 945984
          %8140 = vst.msk [vmem:[#allocation11 + $0x8] sm:$0xf] %vm8139, %v8137
          %s8141 = scalar_lea.vmem [#allocation10], 248
          %v8142 = vld [vmem:[%s8141] sm:$0xff]
          %s8143 = scalar_lea.vmem [#allocation9], 248
          %v8144 = vld [vmem:[%s8143] sm:$0xff]
          %8146 = vset.pattern.permute.xlu0 0
          %8147 = vperm.xlu0 %8146, %v8144
          %v8148 = vpop.permute.xlu0 %8147
          %v8150 = vrcp.pop %v8148
          %v8151 = vmul.f32 %v8142, %v8150
          %v8152 = vpack.c.bf16 %v8151, %v8151
          %v8154 = vunpack.c.l.b16 %v8152
          %v8155 = vpack.c.b16 %v8154, %v8154
          %8156 = vrot.lane.b32.xlu0 %v8155, 116
          %v8157 = vpop.permute.xlu0 %8156
          %vm8159 = vcmask 1044384
          %8160 = vst.msk [vmem:[#allocation11 + $0x8] sm:$0xf] %vm8159, %v8157
          %v8161 = vld [vmem:[#allocation11] sm:$0xff]
          %v8162 = vld [vmem:[#allocation11 + $0x8] sm:$0xf]
          %v8163 = vld [vmem:[#allocation23] sm:$0xff]
          %v8164 = vld [vmem:[#allocation23 + $0x8] sm:$0xf]
          %v8165 = vld [vmem:[#allocation23 + $0xc] sm:$0xff]
          %v8166 = vld [vmem:[#allocation23 + $0x14] sm:$0xf]
          %v8167 = vld [vmem:[#allocation23 + $0x18] sm:$0xff]
          %v8168 = vld [vmem:[#allocation23 + $0x20] sm:$0xf]
          %v8169 = vld [vmem:[#allocation23 + $0x24] sm:$0xff]
          %v8170 = vld [vmem:[#allocation23 + $0x2c] sm:$0xf]
          %v8171 = vld [vmem:[#allocation23 + $0x30] sm:$0xff]
          %v8172 = vld [vmem:[#allocation23 + $0x38] sm:$0xf]
          %v8173 = vld [vmem:[#allocation23 + $0x3c] sm:$0xff]
          %v8174 = vld [vmem:[#allocation23 + $0x44] sm:$0xf]
          %v8175 = vld [vmem:[#allocation23 + $0x48] sm:$0xff]
          %v8176 = vld [vmem:[#allocation23 + $0x50] sm:$0xf]
          %v8177 = vld [vmem:[#allocation23 + $0x54] sm:$0xff]
          %v8178 = vld [vmem:[#allocation23 + $0x5c] sm:$0xf]
          %v8179 = vld [vmem:[#allocation23 + $0x60] sm:$0xff]
          %v8180 = vld [vmem:[#allocation23 + $0x68] sm:$0xf]
          %v8181 = vld [vmem:[#allocation23 + $0x6c] sm:$0xff]
          %v8182 = vld [vmem:[#allocation23 + $0x74] sm:$0xf]
          %v8183 = vld [vmem:[#allocation23 + $0x78] sm:$0xff]
          %v8184 = vld [vmem:[#allocation23 + $0x80] sm:$0xf]
          %v8185 = vld [vmem:[#allocation23 + $0x84] sm:$0xff]
          %v8186 = vld [vmem:[#allocation23 + $0x8c] sm:$0xf]
          %v8187 = vld [vmem:[#allocation23 + $0x90] sm:$0xff]
          %v8188 = vld [vmem:[#allocation23 + $0x98] sm:$0xf]
          %v8189 = vld [vmem:[#allocation23 + $0x9c] sm:$0xff]
          %v8190 = vld [vmem:[#allocation23 + $0xa4] sm:$0xf]
          %v8191 = vld [vmem:[#allocation23 + $0xa8] sm:$0xff]
          %v8192 = vld [vmem:[#allocation23 + $0xb0] sm:$0xf]
          %v8193 = vld [vmem:[#allocation23 + $0xb4] sm:$0xff]
          %v8194 = vld [vmem:[#allocation23 + $0xbc] sm:$0xf]
          %v8195 = vld [vmem:[#allocation23 + $0xc0] sm:$0xff]
          %v8196 = vld [vmem:[#allocation23 + $0xc8] sm:$0xf]
          %v8197 = vld [vmem:[#allocation23 + $0xcc] sm:$0xff]
          %v8198 = vld [vmem:[#allocation23 + $0xd4] sm:$0xf]
          %v8199 = vld [vmem:[#allocation23 + $0xd8] sm:$0xff]
          %v8200 = vld [vmem:[#allocation23 + $0xe0] sm:$0xf]
          %v8201 = vld [vmem:[#allocation23 + $0xe4] sm:$0xff]
          %v8202 = vld [vmem:[#allocation23 + $0xec] sm:$0xf]
          %v8203 = vld [vmem:[#allocation23 + $0xf0] sm:$0xff]
          %v8204 = vld [vmem:[#allocation23 + $0xf8] sm:$0xf]
          %v8205 = vld [vmem:[#allocation23 + $0xfc] sm:$0xff]
          %v8206 = vld [vmem:[#allocation23 + $0x104] sm:$0xf]
          %v8207 = vld [vmem:[#allocation23 + $0x108] sm:$0xff]
          %v8208 = vld [vmem:[#allocation23 + $0x110] sm:$0xf]
          %v8209 = vld [vmem:[#allocation23 + $0x114] sm:$0xff]
          %v8210 = vld [vmem:[#allocation23 + $0x11c] sm:$0xf]
          %v8211 = vld [vmem:[#allocation23 + $0x120] sm:$0xff]
          %v8212 = vld [vmem:[#allocation23 + $0x128] sm:$0xf]
          %v8213 = vld [vmem:[#allocation23 + $0x12c] sm:$0xff]
          %v8214 = vld [vmem:[#allocation23 + $0x134] sm:$0xf]
          %v8215 = vld [vmem:[#allocation23 + $0x138] sm:$0xff]
          %v8216 = vld [vmem:[#allocation23 + $0x140] sm:$0xf]
          %v8217 = vld [vmem:[#allocation23 + $0x144] sm:$0xff]
          %v8218 = vld [vmem:[#allocation23 + $0x14c] sm:$0xf]
          %v8219 = vld [vmem:[#allocation23 + $0x150] sm:$0xff]
          %v8220 = vld [vmem:[#allocation23 + $0x158] sm:$0xf]
          %v8221 = vld [vmem:[#allocation23 + $0x15c] sm:$0xff]
          %v8222 = vld [vmem:[#allocation23 + $0x164] sm:$0xf]
          %v8223 = vld [vmem:[#allocation23 + $0x168] sm:$0xff]
          %v8224 = vld [vmem:[#allocation23 + $0x170] sm:$0xf]
          %v8225 = vld [vmem:[#allocation23 + $0x174] sm:$0xff]
          %v8226 = vld [vmem:[#allocation23 + $0x17c] sm:$0xf]
          %v8227 = vld [vmem:[#allocation23 + $0x180] sm:$0xff]
          %v8228 = vld [vmem:[#allocation23 + $0x188] sm:$0xf]
          %v8229 = vld [vmem:[#allocation23 + $0x18c] sm:$0xff]
          %v8230 = vld [vmem:[#allocation23 + $0x194] sm:$0xf]
          %v8231 = vld [vmem:[#allocation23 + $0x198] sm:$0xff]
          %v8232 = vld [vmem:[#allocation23 + $0x1a0] sm:$0xf]
          %v8233 = vld [vmem:[#allocation23 + $0x1a4] sm:$0xff]
          %v8234 = vld [vmem:[#allocation23 + $0x1ac] sm:$0xf]
          %v8235 = vld [vmem:[#allocation23 + $0x1b0] sm:$0xff]
          %v8236 = vld [vmem:[#allocation23 + $0x1b8] sm:$0xf]
          %v8237 = vld [vmem:[#allocation23 + $0x1bc] sm:$0xff]
          %v8238 = vld [vmem:[#allocation23 + $0x1c4] sm:$0xf]
          %v8239 = vld [vmem:[#allocation23 + $0x1c8] sm:$0xff]
          %v8240 = vld [vmem:[#allocation23 + $0x1d0] sm:$0xf]
          %v8241 = vld [vmem:[#allocation23 + $0x1d4] sm:$0xff]
          %v8242 = vld [vmem:[#allocation23 + $0x1dc] sm:$0xf]
          %v8243 = vld [vmem:[#allocation23 + $0x1e0] sm:$0xff]
          %v8244 = vld [vmem:[#allocation23 + $0x1e8] sm:$0xf]
          %v8245 = vld [vmem:[#allocation23 + $0x1ec] sm:$0xff]
          %v8246 = vld [vmem:[#allocation23 + $0x1f4] sm:$0xf]
          %v8247 = vld [vmem:[#allocation23 + $0x1f8] sm:$0xff]
          %v8248 = vld [vmem:[#allocation23 + $0x200] sm:$0xf]
          %v8249 = vld [vmem:[#allocation23 + $0x204] sm:$0xff]
          %v8250 = vld [vmem:[#allocation23 + $0x20c] sm:$0xf]
          %v8251 = vld [vmem:[#allocation23 + $0x210] sm:$0xff]
          %v8252 = vld [vmem:[#allocation23 + $0x218] sm:$0xf]
          %v8253 = vld [vmem:[#allocation23 + $0x21c] sm:$0xff]
          %v8254 = vld [vmem:[#allocation23 + $0x224] sm:$0xf]
          %v8255 = vld [vmem:[#allocation23 + $0x228] sm:$0xff]
          %v8256 = vld [vmem:[#allocation23 + $0x230] sm:$0xf]
          %v8257 = vld [vmem:[#allocation23 + $0x234] sm:$0xff]
          %v8258 = vld [vmem:[#allocation23 + $0x23c] sm:$0xf]
          %v8259 = vld [vmem:[%s10] sm:$0x7]
          %v8261 = vlaneseq
          %v8262 = vshrl.u32 %v8261, 7
          %v8263 = vsub.s32 0, %v8262
          %v8264 = vrot.slane %v8259, %v8263
          %v8265 = vlaneseq
          %v8266 = vshrl.u32 %v8265, 7
          %v8267 = vsub.s32 1, %v8266
          %v8268 = vrot.slane %v8259, %v8267
          %v8269 = vlaneseq
          %v8270 = vshrl.u32 %v8269, 7
          %v8271 = vsub.s32 2, %v8270
          %v8272 = vrot.slane %v8259, %v8271
          %v8278 = vunpack.c.l.b16 %v8161
          %v8279 = vunpack.c.h.b16 %v8161
          %v8280 = vunpack.c.l.b16 %v8162
          %v8281 = vpack.c.b16 %v8278, %v8278
          %v8282 = vpack.c.b16 %v8279, %v8279
          %v8283 = vpack.c.b16 %v8280, %v8280
          %v8383 = vunpack.c.l.b16 %v8163
          %v8384 = vunpack.c.h.b16 %v8163
          %v8385 = vunpack.c.l.b16 %v8164
          %v8386 = vunpack.c.l.b16 %v8165
          %v8387 = vunpack.c.h.b16 %v8165
          %v8388 = vunpack.c.l.b16 %v8166
          %v8389 = vunpack.c.l.b16 %v8167
          %v8390 = vunpack.c.h.b16 %v8167
          %v8391 = vunpack.c.l.b16 %v8168
          %v8392 = vunpack.c.l.b16 %v8169
          %v8393 = vunpack.c.h.b16 %v8169
          %v8394 = vunpack.c.l.b16 %v8170
          %v8395 = vunpack.c.l.b16 %v8171
          %v8396 = vunpack.c.h.b16 %v8171
          %v8397 = vunpack.c.l.b16 %v8172
          %v8398 = vunpack.c.l.b16 %v8173
          %v8399 = vunpack.c.h.b16 %v8173
          %v8400 = vunpack.c.l.b16 %v8174
          %v8401 = vunpack.c.l.b16 %v8175
          %v8402 = vunpack.c.h.b16 %v8175
          %v8403 = vunpack.c.l.b16 %v8176
          %v8404 = vunpack.c.l.b16 %v8177
          %v8405 = vunpack.c.h.b16 %v8177
          %v8406 = vunpack.c.l.b16 %v8178
          %v8407 = vunpack.c.l.b16 %v8179
          %v8408 = vunpack.c.h.b16 %v8179
          %v8409 = vunpack.c.l.b16 %v8180
          %v8410 = vunpack.c.l.b16 %v8181
          %v8411 = vunpack.c.h.b16 %v8181
          %v8412 = vunpack.c.l.b16 %v8182
          %v8413 = vunpack.c.l.b16 %v8183
          %v8414 = vunpack.c.h.b16 %v8183
          %v8415 = vunpack.c.l.b16 %v8184
          %v8416 = vunpack.c.l.b16 %v8185
          %v8417 = vunpack.c.h.b16 %v8185
          %v8418 = vunpack.c.l.b16 %v8186
          %v8419 = vunpack.c.l.b16 %v8187
          %v8420 = vunpack.c.h.b16 %v8187
          %v8421 = vunpack.c.l.b16 %v8188
          %v8422 = vunpack.c.l.b16 %v8189
          %v8423 = vunpack.c.h.b16 %v8189
          %v8424 = vunpack.c.l.b16 %v8190
          %v8425 = vunpack.c.l.b16 %v8191
          %v8426 = vunpack.c.h.b16 %v8191
          %v8427 = vunpack.c.l.b16 %v8192
          %v8428 = vunpack.c.l.b16 %v8193
          %v8429 = vunpack.c.h.b16 %v8193
          %v8430 = vunpack.c.l.b16 %v8194
          %v8431 = vunpack.c.l.b16 %v8195
          %v8432 = vunpack.c.h.b16 %v8195
          %v8433 = vunpack.c.l.b16 %v8196
          %v8434 = vunpack.c.l.b16 %v8197
          %v8435 = vunpack.c.h.b16 %v8197
          %v8436 = vunpack.c.l.b16 %v8198
          %v8437 = vunpack.c.l.b16 %v8199
          %v8438 = vunpack.c.h.b16 %v8199
          %v8439 = vunpack.c.l.b16 %v8200
          %v8440 = vunpack.c.l.b16 %v8201
          %v8441 = vunpack.c.h.b16 %v8201
          %v8442 = vunpack.c.l.b16 %v8202
          %v8443 = vunpack.c.l.b16 %v8203
          %v8444 = vunpack.c.h.b16 %v8203
          %v8445 = vunpack.c.l.b16 %v8204
          %v8446 = vunpack.c.l.b16 %v8205
          %v8447 = vunpack.c.h.b16 %v8205
          %v8448 = vunpack.c.l.b16 %v8206
          %v8449 = vunpack.c.l.b16 %v8207
          %v8450 = vunpack.c.h.b16 %v8207
          %v8451 = vunpack.c.l.b16 %v8208
          %v8452 = vunpack.c.l.b16 %v8209
          %v8453 = vunpack.c.h.b16 %v8209
          %v8454 = vunpack.c.l.b16 %v8210
          %v8455 = vunpack.c.l.b16 %v8211
          %v8456 = vunpack.c.h.b16 %v8211
          %v8457 = vunpack.c.l.b16 %v8212
          %v8458 = vunpack.c.l.b16 %v8213
          %v8459 = vunpack.c.h.b16 %v8213
          %v8460 = vunpack.c.l.b16 %v8214
          %v8461 = vunpack.c.l.b16 %v8215
          %v8462 = vunpack.c.h.b16 %v8215
          %v8463 = vunpack.c.l.b16 %v8216
          %v8464 = vunpack.c.l.b16 %v8217
          %v8465 = vunpack.c.h.b16 %v8217
          %v8466 = vunpack.c.l.b16 %v8218
          %v8467 = vunpack.c.l.b16 %v8219
          %v8468 = vunpack.c.h.b16 %v8219
          %v8469 = vunpack.c.l.b16 %v8220
          %v8470 = vunpack.c.l.b16 %v8221
          %v8471 = vunpack.c.h.b16 %v8221
          %v8472 = vunpack.c.l.b16 %v8222
          %v8473 = vunpack.c.l.b16 %v8223
          %v8474 = vunpack.c.h.b16 %v8223
          %v8475 = vunpack.c.l.b16 %v8224
          %v8476 = vunpack.c.l.b16 %v8225
          %v8477 = vunpack.c.h.b16 %v8225
          %v8478 = vunpack.c.l.b16 %v8226
          %v8479 = vunpack.c.l.b16 %v8227
          %v8480 = vunpack.c.h.b16 %v8227
          %v8481 = vunpack.c.l.b16 %v8228
          %v8482 = vunpack.c.l.b16 %v8229
          %v8483 = vunpack.c.h.b16 %v8229
          %v8484 = vunpack.c.l.b16 %v8230
          %v8485 = vunpack.c.l.b16 %v8231
          %v8486 = vunpack.c.h.b16 %v8231
          %v8487 = vunpack.c.l.b16 %v8232
          %v8488 = vunpack.c.l.b16 %v8233
          %v8489 = vunpack.c.h.b16 %v8233
          %v8490 = vunpack.c.l.b16 %v8234
          %v8491 = vunpack.c.l.b16 %v8235
          %v8492 = vunpack.c.h.b16 %v8235
          %v8493 = vunpack.c.l.b16 %v8236
          %v8494 = vunpack.c.l.b16 %v8237
          %v8495 = vunpack.c.h.b16 %v8237
          %v8496 = vunpack.c.l.b16 %v8238
          %v8497 = vunpack.c.l.b16 %v8239
          %v8498 = vunpack.c.h.b16 %v8239
          %v8499 = vunpack.c.l.b16 %v8240
          %v8500 = vunpack.c.l.b16 %v8241
          %v8501 = vunpack.c.h.b16 %v8241
          %v8502 = vunpack.c.l.b16 %v8242
          %v8503 = vunpack.c.l.b16 %v8243
          %v8504 = vunpack.c.h.b16 %v8243
          %v8505 = vunpack.c.l.b16 %v8244
          %v8506 = vunpack.c.l.b16 %v8245
          %v8507 = vunpack.c.h.b16 %v8245
          %v8508 = vunpack.c.l.b16 %v8246
          %v8509 = vunpack.c.l.b16 %v8247
          %v8510 = vunpack.c.h.b16 %v8247
          %v8511 = vunpack.c.l.b16 %v8248
          %v8512 = vunpack.c.l.b16 %v8249
          %v8513 = vunpack.c.h.b16 %v8249
          %v8514 = vunpack.c.l.b16 %v8250
          %v8515 = vunpack.c.l.b16 %v8251
          %v8516 = vunpack.c.h.b16 %v8251
          %v8517 = vunpack.c.l.b16 %v8252
          %v8518 = vunpack.c.l.b16 %v8253
          %v8519 = vunpack.c.h.b16 %v8253
          %v8520 = vunpack.c.l.b16 %v8254
          %v8521 = vunpack.c.l.b16 %v8255
          %v8522 = vunpack.c.h.b16 %v8255
          %v8523 = vunpack.c.l.b16 %v8256
          %v8524 = vunpack.c.l.b16 %v8257
          %v8525 = vunpack.c.h.b16 %v8257
          %v8526 = vunpack.c.l.b16 %v8258
          %v8527 = vpack.c.b16 %v8386, %v8383
          %v8528 = vpack.c.b16 %v8387, %v8384
          %v8529 = vpack.c.b16 %v8388, %v8385
          %v8530 = vpack.c.b16 %v8392, %v8389
          %v8531 = vpack.c.b16 %v8393, %v8390
          %v8532 = vpack.c.b16 %v8394, %v8391
          %v8533 = vpack.c.b16 %v8398, %v8395
          %v8534 = vpack.c.b16 %v8399, %v8396
          %v8535 = vpack.c.b16 %v8400, %v8397
          %v8536 = vpack.c.b16 %v8404, %v8401
          %v8537 = vpack.c.b16 %v8405, %v8402
          %v8538 = vpack.c.b16 %v8406, %v8403
          %v8539 = vpack.c.b16 %v8410, %v8407
          %v8540 = vpack.c.b16 %v8411, %v8408
          %v8541 = vpack.c.b16 %v8412, %v8409
          %v8542 = vpack.c.b16 %v8416, %v8413
          %v8543 = vpack.c.b16 %v8417, %v8414
          %v8544 = vpack.c.b16 %v8418, %v8415
          %v8545 = vpack.c.b16 %v8422, %v8419
          %v8546 = vpack.c.b16 %v8423, %v8420
          %v8547 = vpack.c.b16 %v8424, %v8421
          %v8548 = vpack.c.b16 %v8428, %v8425
          %v8549 = vpack.c.b16 %v8429, %v8426
          %v8550 = vpack.c.b16 %v8430, %v8427
          %v8551 = vpack.c.b16 %v8434, %v8431
          %v8552 = vpack.c.b16 %v8435, %v8432
          %v8553 = vpack.c.b16 %v8436, %v8433
          %v8554 = vpack.c.b16 %v8440, %v8437
          %v8555 = vpack.c.b16 %v8441, %v8438
          %v8556 = vpack.c.b16 %v8442, %v8439
          %v8557 = vpack.c.b16 %v8446, %v8443
          %v8558 = vpack.c.b16 %v8447, %v8444
          %v8559 = vpack.c.b16 %v8448, %v8445
          %v8560 = vpack.c.b16 %v8452, %v8449
          %v8561 = vpack.c.b16 %v8453, %v8450
          %v8562 = vpack.c.b16 %v8454, %v8451
          %v8563 = vpack.c.b16 %v8458, %v8455
          %v8564 = vpack.c.b16 %v8459, %v8456
          %v8565 = vpack.c.b16 %v8460, %v8457
          %v8566 = vpack.c.b16 %v8464, %v8461
          %v8567 = vpack.c.b16 %v8465, %v8462
          %v8568 = vpack.c.b16 %v8466, %v8463
          %v8569 = vpack.c.b16 %v8470, %v8467
          %v8570 = vpack.c.b16 %v8471, %v8468
          %v8571 = vpack.c.b16 %v8472, %v8469
          %v8572 = vpack.c.b16 %v8476, %v8473
          %v8573 = vpack.c.b16 %v8477, %v8474
          %v8574 = vpack.c.b16 %v8478, %v8475
          %v8575 = vpack.c.b16 %v8482, %v8479
          %v8576 = vpack.c.b16 %v8483, %v8480
          %v8577 = vpack.c.b16 %v8484, %v8481
          %v8578 = vpack.c.b16 %v8488, %v8485
          %v8579 = vpack.c.b16 %v8489, %v8486
          %v8580 = vpack.c.b16 %v8490, %v8487
          %v8581 = vpack.c.b16 %v8494, %v8491
          %v8582 = vpack.c.b16 %v8495, %v8492
          %v8583 = vpack.c.b16 %v8496, %v8493
          %v8584 = vpack.c.b16 %v8500, %v8497
          %v8585 = vpack.c.b16 %v8501, %v8498
          %v8586 = vpack.c.b16 %v8502, %v8499
          %v8587 = vpack.c.b16 %v8506, %v8503
          %v8588 = vpack.c.b16 %v8507, %v8504
          %v8589 = vpack.c.b16 %v8508, %v8505
          %v8590 = vpack.c.b16 %v8512, %v8509
          %v8591 = vpack.c.b16 %v8513, %v8510
          %v8592 = vpack.c.b16 %v8514, %v8511
          %v8593 = vpack.c.b16 %v8518, %v8515
          %v8594 = vpack.c.b16 %v8519, %v8516
          %v8595 = vpack.c.b16 %v8520, %v8517
          %v8596 = vpack.c.b16 %v8524, %v8521
          %v8597 = vpack.c.b16 %v8525, %v8522
          %v8598 = vpack.c.b16 %v8526, %v8523
          %8671 = vmatprep.subr.bf16.mxu0 %v8528
          %8672 = vmatpush1.bf16.msra.mxu0 %v8527
          %8673 = vmatprep.subr.bf16.mxu0 %v8531
          %8674 = vmatpush1.bf16.msra.mxu0 %v8530
          %8675 = vmatprep.subr.bf16.mxu0 %v8534
          %8676 = vmatpush1.bf16.msra.mxu0 %v8533
          %8677 = vmatprep.subr.bf16.mxu0 %v8537
          %8678 = vmatpush1.bf16.msra.mxu0 %v8536
          %8679 = vmatprep.subr.bf16.mxu0 %v8540
          %8680 = vmatpush1.bf16.msra.mxu0 %v8539
          %8681 = vmatprep.subr.bf16.mxu0 %v8543
          %8682 = vmatpush1.bf16.msra.mxu0 %v8542
          %8683 = vmatprep.subr.bf16.mxu0 %v8546
          %8684 = vmatpush1.bf16.msra.mxu0 %v8545
          %8685 = vmatprep.subr.bf16.mxu0 %v8549
          %8686 = vmatpush1.bf16.msra.mxu0 %v8548
          %8687 = vmatprep.subr.bf16.mxu0 %v8552
          %8688 = vmatpush1.bf16.msra.mxu0 %v8551
          %8689 = vmatprep.subr.bf16.mxu0 %v8555
          %8690 = vmatpush1.bf16.msra.mxu0 %v8554
          %8691 = vmatprep.subr.bf16.mxu0 %v8558
          %8692 = vmatpush1.bf16.msra.mxu0 %v8557
          %8693 = vmatprep.subr.bf16.mxu0 %v8561
          %8694 = vmatpush1.bf16.msra.mxu0 %v8560
          %8695 = vmatprep.subr.bf16.mxu0 %v8564
          %8696 = vmatpush1.bf16.msra.mxu0 %v8563
          %8697 = vmatprep.subr.bf16.mxu0 %v8567
          %8698 = vmatpush1.bf16.msra.mxu0 %v8566
          %8699 = vmatprep.subr.bf16.mxu0 %v8570
          %8700 = vmatpush1.bf16.msra.mxu0 %v8569
          %8701 = vmatprep.subr.bf16.mxu0 %v8573
          %8702 = vmatpush1.bf16.msra.mxu0 %v8572
          %8703 = vmatprep.mubr.bf16.mxu0 %v8282
          %8704 = vmatmul.mubr.bf16.gmra.mrb[0].mxu0 %v8281
          %v8705 = vpop.f32.mrb[0].mxu0
          %v8706 = vadd.f32 %v8264, %v8705
          %v8707 = vpop.f32.mrb[0].mxu0
          %v8708 = vadd.f32 %v8268, %v8707
          %v8709 = vpop.f32.mrb[0].mxu0
          %v8710 = vpop.f32.mrb[0].mxu0
          %8711 = vdwg.mxu0
          %8712 = vmatprep.subr.bf16.mxu0 %v8576
          %8713 = vmatpush1.bf16.msra.mxu0 %v8575
          %8714 = vmatprep.subr.bf16.mxu0 %v8579
          %8715 = vmatpush1.bf16.msra.mxu0 %v8578
          %8716 = vmatprep.subr.bf16.mxu0 %v8582
          %8717 = vmatpush1.bf16.msra.mxu0 %v8581
          %8718 = vmatprep.subr.bf16.mxu0 %v8585
          %8719 = vmatpush1.bf16.msra.mxu0 %v8584
          %8720 = vmatprep.subr.bf16.mxu0 %v8588
          %8721 = vmatpush1.bf16.msra.mxu0 %v8587
          %8722 = vmatprep.subr.bf16.mxu0 %v8591
          %8723 = vmatpush1.bf16.msra.mxu0 %v8590
          %8724 = vmatprep.subr.bf16.mxu0 %v8594
          %8725 = vmatpush1.bf16.msra.mxu0 %v8593
          %8726 = vmatprep.subr.bf16.mxu0 %v8597
          %8727 = vmatpush1.bf16.msra.mxu0 %v8596
          %8728 = vmatprep.subr.bf16.mxu0 0
          %8729 = vmatpush1.bf16.msra.mxu0 0
          %8730 = vmatprep.subr.bf16.mxu0 0
          %8731 = vmatpush1.bf16.msra.mxu0 0
          %8732 = vmatprep.subr.bf16.mxu0 0
          %8733 = vmatpush1.bf16.msra.mxu0 0
          %8734 = vmatprep.subr.bf16.mxu0 0
          %8735 = vmatpush1.bf16.msra.mxu0 0
          %8736 = vmatprep.subr.bf16.mxu0 0
          %8737 = vmatpush1.bf16.msra.mxu0 0
          %8738 = vmatprep.subr.bf16.mxu0 0
          %8739 = vmatpush1.bf16.msra.mxu0 0
          %8740 = vmatprep.subr.bf16.mxu0 0
          %8741 = vmatpush1.bf16.msra.mxu0 0
          %8742 = vmatprep.subr.bf16.mxu0 0
          %8743 = vmatpush1.bf16.msra.mxu0 0
          %8744 = vmatprep.mubr.bf16.mxu0 0
          %8745 = vmatmul.mubr.bf16.gmra.mrb[0].mxu0 %v8283
          %v8746 = vpop.f32.mrb[0].mxu0
          %v8747 = vadd.f32 %v8706, %v8746
          %v8748 = vpop.f32.mrb[0].mxu0
          %v8749 = vadd.f32 %v8708, %v8748
          %v8750 = vpop.f32.mrb[0].mxu0
          %v8751 = vpop.f32.mrb[0].mxu0
          %8752 = vdwg.mxu0
          %8753 = vmatprep.subr.bf16.mxu0 0
          %8754 = vmatpush1.bf16.msra.mxu0 %v8529
          %8755 = vmatprep.subr.bf16.mxu0 0
          %8756 = vmatpush1.bf16.msra.mxu0 %v8532
          %8757 = vmatprep.subr.bf16.mxu0 0
          %8758 = vmatpush1.bf16.msra.mxu0 %v8535
          %8759 = vmatprep.subr.bf16.mxu0 0
          %8760 = vmatpush1.bf16.msra.mxu0 %v8538
          %8761 = vmatprep.subr.bf16.mxu0 0
          %8762 = vmatpush1.bf16.msra.mxu0 %v8541
          %8763 = vmatprep.subr.bf16.mxu0 0
          %8764 = vmatpush1.bf16.msra.mxu0 %v8544
          %8765 = vmatprep.subr.bf16.mxu0 0
          %8766 = vmatpush1.bf16.msra.mxu0 %v8547
          %8767 = vmatprep.subr.bf16.mxu0 0
          %8768 = vmatpush1.bf16.msra.mxu0 %v8550
          %8769 = vmatprep.subr.bf16.mxu0 0
          %8770 = vmatpush1.bf16.msra.mxu0 %v8553
          %8771 = vmatprep.subr.bf16.mxu0 0
          %8772 = vmatpush1.bf16.msra.mxu0 %v8556
          %8773 = vmatprep.subr.bf16.mxu0 0
          %8774 = vmatpush1.bf16.msra.mxu0 %v8559
          %8775 = vmatprep.subr.bf16.mxu0 0
          %8776 = vmatpush1.bf16.msra.mxu0 %v8562
          %8777 = vmatprep.subr.bf16.mxu0 0
          %8778 = vmatpush1.bf16.msra.mxu0 %v8565
          %8779 = vmatprep.subr.bf16.mxu0 0
          %8780 = vmatpush1.bf16.msra.mxu0 %v8568
          %8781 = vmatprep.subr.bf16.mxu0 0
          %8782 = vmatpush1.bf16.msra.mxu0 %v8571
          %8783 = vmatprep.subr.bf16.mxu0 0
          %8784 = vmatpush1.bf16.msra.mxu0 %v8574
          %8785 = vmatprep.mubr.bf16.mxu0 %v8282
          %8786 = vmatmul.mubr.bf16.gmra.mrb[0].mxu0 %v8281
          %v8787 = vpop.f32.mrb[0].mxu0
          %v8788 = vadd.f32 %v8272, %v8787
          %v8789 = vpop.f32.mrb[0].mxu0
          %v8790 = vpop.f32.mrb[0].mxu0
          %v8791 = vpop.f32.mrb[0].mxu0
          %8792 = vdwg.mxu0
          %8793 = vmatprep.subr.bf16.mxu0 0
          %8794 = vmatpush1.bf16.msra.mxu0 %v8577
          %8795 = vmatprep.subr.bf16.mxu0 0
          %8796 = vmatpush1.bf16.msra.mxu0 %v8580
          %8797 = vmatprep.subr.bf16.mxu0 0
          %8798 = vmatpush1.bf16.msra.mxu0 %v8583
          %8799 = vmatprep.subr.bf16.mxu0 0
          %8800 = vmatpush1.bf16.msra.mxu0 %v8586
          %8801 = vmatprep.subr.bf16.mxu0 0
          %8802 = vmatpush1.bf16.msra.mxu0 %v8589
          %8803 = vmatprep.subr.bf16.mxu0 0
          %8804 = vmatpush1.bf16.msra.mxu0 %v8592
          %8805 = vmatprep.subr.bf16.mxu0 0
          %8806 = vmatpush1.bf16.msra.mxu0 %v8595
          %8807 = vmatprep.subr.bf16.mxu0 0
          %8808 = vmatpush1.bf16.msra.mxu0 %v8598
          %8809 = vmatprep.subr.bf16.mxu0 0
          %8810 = vmatpush1.bf16.msra.mxu0 0
          %8811 = vmatprep.subr.bf16.mxu0 0
          %8812 = vmatpush1.bf16.msra.mxu0 0
          %8813 = vmatprep.subr.bf16.mxu0 0
          %8814 = vmatpush1.bf16.msra.mxu0 0
          %8815 = vmatprep.subr.bf16.mxu0 0
          %8816 = vmatpush1.bf16.msra.mxu0 0
          %8817 = vmatprep.subr.bf16.mxu0 0
          %8818 = vmatpush1.bf16.msra.mxu0 0
          %8819 = vmatprep.subr.bf16.mxu0 0
          %8820 = vmatpush1.bf16.msra.mxu0 0
          %8821 = vmatprep.subr.bf16.mxu0 0
          %8822 = vmatpush1.bf16.msra.mxu0 0
          %8823 = vmatprep.subr.bf16.mxu0 0
          %8824 = vmatpush1.bf16.msra.mxu0 0
          %8825 = vmatprep.mubr.bf16.mxu0 0
          %8826 = vmatmul.mubr.bf16.gmra.mrb[0].mxu0 %v8283
          %v8827 = vpop.f32.mrb[0].mxu0
          %v8828 = vadd.f32 %v8788, %v8827
          %v8829 = vpop.f32.mrb[0].mxu0
          %v8830 = vpop.f32.mrb[0].mxu0
          %v8831 = vpop.f32.mrb[0].mxu0
          %8832 = vdwg.mxu0
          %8833 = vst [vmem:[%s566] sm:$0xff] %v8747
          %8834 = vst [vmem:[%s566 + $0x8] sm:$0xff] %v8749
          %8835 = vst [vmem:[%s566 + $0x10] sm:$0xff] %v8828
        $region100: #{tpu_custom_call.1} parent=63 // pred_fallthru
          _
        %s8836 = sand.u32 %s314, 1
        %s8837 = scalar_lea.sflag [#allocation14], %s8836
        %s8838 = sand.u32 %s314, 1
        %s8839 = smul.addr %s8838, 24
        %s8840 = scalar_lea.vmem [#allocation24], %s8839
        // Predicated region
        $region101: #{tpu_custom_call.1} parent=63 // pred_check
          %p8841 = pneg %p324
        $region102: #{tpu_custom_call.1} parent=63 // pred_check_branch
          %8843 = sbr.rel (%p8841) target = $region104
        $region103: #{tpu_custom_call.1} parent=63 // pred_region
          %s8845 = ssub.s32 384, 384
          %8846 = vsyncadd %s8837, %s8845
          %s8847 = smul.addr %s39, 3
          %s8848 = smul.addr %s38, 3
          %s8849 = sadd.s32 %s8847, %s8848
          %s8850 = smul.addr %s8849, 128
          %s8851 = scalar_lea.hbm %s11, %s8850
          %s8853 = sshll.u32 %s8840, 4
          %s8854 = int_to_ptr.vmem [resolvable:$true] %s8853
          %8856 = dma.vmem_to_hbm [thread:$0]  %s8854, 384, %s8851, %s8837
        $region104: #{tpu_custom_call.1} parent=63 // pred_fallthru
          _
      $region64: #{tpu_custom_call.1} parent=5 // pred_fallthru
        _
      %p8857 = scmp.le.s32.totalorder 2, %s28
      // Predicated region
      $region105: #{tpu_custom_call.1} parent=5 // pred_check
        %p8858 = pneg %p8857
      $region106: #{tpu_custom_call.1} parent=5 // pred_check_branch
        %8860 = sbr.rel (%p8858) target = $region108
      $region107: #{tpu_custom_call.1} parent=5 // pred_region
        %s8861 = ssub.s32 %s28, 2
        // Predicated region
        $region109: #{tpu_custom_call.1} parent=107 // pred_check
          %p8862 = pneg %p330
        $region110: #{tpu_custom_call.1} parent=107 // pred_check_branch
          %8864 = sbr.rel (%p8862) target = $region112
        $region111: #{tpu_custom_call.1} parent=107 // pred_region
          %s8865 = sand.u32 %s315, 1
          %s8866 = scalar_lea.sflag [#allocation14], %s8865
          %s8867 = sand.u32 %s315, 1
          %s8868 = smul.addr %s8867, 24
          %s8869 = scalar_lea.vmem [#allocation24], %s8868
          %8870 = dma.done %s8866, 384
        $region112: #{tpu_custom_call.1} parent=107 // pred_fallthru
          _
      $region108: #{tpu_custom_call.1} parent=5 // pred_fallthru
        _
    $region6: #{tpu_custom_call.1} parent=1 // loop_footer
      %s32 = sadd.s32 1, %s28
    $region7: #{tpu_custom_call.1} parent=1 // loop_footer_branch
      %27 = sbr.rel target = $region3
    $region8: #{tpu_custom_call.1} parent=1 // loop_exit
      _
    %8871 = vsyncpa [#allocation13], 1
    %s8872 = scalar_lea.sflag [#allocation13], 1
    %8873 = vsyncpa %s8872, 1
    %8874 = vsyncpa [#allocation16], 1
    %s8875 = scalar_lea.sflag [#allocation16], 1
    %8876 = vsyncpa %s8875, 1
    %8877 = vsyncpa [#allocation19], 1
    %8878 = vsyncpa [#allocation22], 1
    %8879 = vsyncpa [#allocation14], 1
    %s8880 = scalar_lea.sflag [#allocation14], 1
    %8881 = vsyncpa %s8880, 1

</llo_original>
